<compile_context>
chip_gen: v7x
topology: tpu7x:2x2x1
jax: 0.10.0
libtpu: 0.0.40
codegen_flags: <defaults>
</compile_context>

<pallas_src>
import functools
import math

import jax
import jax.numpy as jnp
from jax.experimental import pallas as pl
from jax.experimental.pallas import tpu as pltpu

_VMEM_LIMIT = 32 * 1024 * 1024   # safe on v5e/v6e/v7x; tiles stay well below


# ----------------------------------------------------------------------------
# Small helpers
# ----------------------------------------------------------------------------
def _round_up(x, m):
    return ((x + m - 1) // m) * m


def _pad2(a, M, N):
    m, n = a.shape
    if m == M and n == N:
        return a
    return jnp.pad(a, ((0, M - m), (0, N - n)))


def _pad1(a, N):
    n = a.shape[0]
    if n == N:
        return a
    return jnp.pad(a, ((0, N - n),))


# ----------------------------------------------------------------------------
# Tiled matmul kernel: o = act(x @ w + b) [+ residual]
# ----------------------------------------------------------------------------
def _mm_kernel(x_ref, w_ref, b_ref, *rest, activation, nk, has_res):
    if has_res:
        res_ref, o_ref, acc_ref = rest
    else:
        o_ref, acc_ref = rest
        res_ref = None

    @pl.when(pl.program_id(2) == 0)
    def _init():
        acc_ref[...] = jnp.zeros_like(acc_ref)

    acc_ref[...] += jnp.dot(x_ref[...], w_ref[...],
                            preferred_element_type=jnp.float32)

    @pl.when(pl.program_id(2) == nk - 1)
    def _finalize():
        acc = acc_ref[...] + b_ref[...]
        if activation == "relu":
            acc = jnp.maximum(acc, 0.0)
        elif activation == "relu6":
            acc = jnp.clip(acc, 0.0, 6.0)
        if has_res:
            acc = acc + res_ref[...]
        o_ref[...] = acc


def matmul_bias(x, w, b, activation="none", residual=None,
                tm=512, tn=512, tk=512):
    """o = act(x @ w + b) (+ residual).  x:(M,K)  w:(K,N)  b:(N,).

    bf16 MXU inputs, f32 accumulation and epilogue.  N/K are padded to
    multiples of 128 (lane-dense output); padded rows/cols are sliced off.
    """
    M, K = x.shape
    N = w.shape[1]
    tm = min(tm, _round_up(M, 8))
    tn = min(tn, _round_up(N, 128))
    tk = min(tk, _round_up(K, 128))
    Mp, Np, Kp = _round_up(M, tm), _round_up(N, tn), _round_up(K, tk)
    nk = Kp // tk

    xp = _pad2(x.astype(jnp.float32), Mp, Kp).astype(jnp.bfloat16)
    wp = _pad2(w.astype(jnp.float32), Kp, Np).astype(jnp.bfloat16)
    bp = _pad1(b.astype(jnp.float32), Np).reshape(1, Np)

    inputs = [xp, wp, bp]
    in_specs = [
        pl.BlockSpec((tm, tk), lambda i, j, k: (i, k)),
        pl.BlockSpec((tk, tn), lambda i, j, k: (k, j)),
        pl.BlockSpec((1, tn), lambda i, j, k: (0, j)),
    ]
    has_res = residual is not None
    if has_res:
        inputs.append(_pad2(residual.astype(jnp.float32), Mp, Np))
        in_specs.append(pl.BlockSpec((tm, tn), lambda i, j, k: (i, j)))

    bytes_accessed = (Mp * Kp + Kp * Np) * 2 + Mp * Np * 4
    if has_res:
        bytes_accessed += Mp * Np * 4

    out = pl.pallas_call(
        functools.partial(_mm_kernel, activation=activation, nk=nk,
                          has_res=has_res),
        grid=(Mp // tm, Np // tn, nk),
        in_specs=in_specs,
        out_specs=pl.BlockSpec((tm, tn), lambda i, j, k: (i, j)),
        out_shape=jax.ShapeDtypeStruct((Mp, Np), jnp.float32),
        scratch_shapes=[pltpu.VMEM((tm, tn), jnp.float32)],
        compiler_params=pltpu.CompilerParams(
            dimension_semantics=("parallel", "parallel", "arbitrary"),
            vmem_limit_bytes=_VMEM_LIMIT),
        cost_estimate=pl.CostEstimate(
            flops=2 * Mp * Np * Kp, transcendentals=0,
            bytes_accessed=int(bytes_accessed)),
    )(*inputs)
    return out[:M, :N]


# ----------------------------------------------------------------------------
# Fused LayerNorm -> matmul kernel (K kept whole; used for d_model-sized K)
# ----------------------------------------------------------------------------
def _ln_mm_kernel(x_ref, g_ref, bln_ref, w_ref, b_ref, *rest,
                  activation, has_res):
    if has_res:
        res_ref, o_ref = rest
    else:
        (o_ref,) = rest
        res_ref = None
    x = x_ref[...]                                   # f32 (tm, K)
    mean = jnp.mean(x, axis=-1, keepdims=True)
    xc = x - mean
    var = jnp.mean(xc * xc, axis=-1, keepdims=True)
    h = xc * jax.lax.rsqrt(var + 1e-5) * g_ref[...] + bln_ref[...]
    acc = jnp.dot(h.astype(jnp.bfloat16), w_ref[...],
                  preferred_element_type=jnp.float32) + b_ref[...]
    if activation == "relu":
        acc = jnp.maximum(acc, 0.0)
    elif activation == "relu6":
        acc = jnp.clip(acc, 0.0, 6.0)
    if has_res:
        acc = acc + res_ref[...]
    o_ref[...] = acc


def ln_matmul_bias(x, gamma, beta, w, b, activation="none", residual=None,
                   tm=512, tn=512):
    """o = act(LayerNorm(x) @ w + b) (+ residual).  x:(M,K)  w:(K,N)."""
    M, K = x.shape
    N = w.shape[1]
    tm = min(tm, _round_up(M, 8))
    tn = min(tn, _round_up(N, 128))
    Mp, Np = _round_up(M, tm), _round_up(N, tn)

    xp = _pad2(x.astype(jnp.float32), Mp, K)
    wp = _pad2(w.astype(jnp.float32), K, Np).astype(jnp.bfloat16)
    bp = _pad1(b.astype(jnp.float32), Np).reshape(1, Np)

    inputs = [xp, gamma.reshape(1, K).astype(jnp.float32),
              beta.reshape(1, K).astype(jnp.float32), wp, bp]
    in_specs = [
        pl.BlockSpec((tm, K), lambda i, j: (i, 0)),
        pl.BlockSpec((1, K), lambda i, j: (0, 0)),
        pl.BlockSpec((1, K), lambda i, j: (0, 0)),
        pl.BlockSpec((K, tn), lambda i, j: (0, j)),
        pl.BlockSpec((1, tn), lambda i, j: (0, j)),
    ]
    has_res = residual is not None
    if has_res:
        inputs.append(_pad2(residual.astype(jnp.float32), Mp, Np))
        in_specs.append(pl.BlockSpec((tm, tn), lambda i, j: (i, j)))

    out = pl.pallas_call(
        functools.partial(_ln_mm_kernel, activation=activation,
                          has_res=has_res),
        grid=(Mp // tm, Np // tn),
        in_specs=in_specs,
        out_specs=pl.BlockSpec((tm, tn), lambda i, j: (i, j)),
        out_shape=jax.ShapeDtypeStruct((Mp, Np), jnp.float32),
        compiler_params=pltpu.CompilerParams(
            dimension_semantics=("parallel", "parallel"),
            vmem_limit_bytes=_VMEM_LIMIT),
    )(*inputs)
    return out[:M, :N]


# ----------------------------------------------------------------------------
# LayerNorm (+ fused additive term, e.g. positional encoding)
# ----------------------------------------------------------------------------
def _ln_add_kernel(x_ref, g_ref, b_ref, a_ref, o_ref):
    x = x_ref[...]
    mean = jnp.mean(x, axis=-1, keepdims=True)
    xc = x - mean
    var = jnp.mean(xc * xc, axis=-1, keepdims=True)
    o_ref[...] = (xc * jax.lax.rsqrt(var + 1e-5) * g_ref[...]
                  + b_ref[...] + a_ref[...])


def layernorm_add(x, gamma, beta, add, tm=512):
    """LayerNorm over last dim (eps=1e-5) + add.  x,add:(M,D)."""
    M, D = x.shape
    tm = min(tm, _round_up(M, 8))
    Mp = _round_up(M, tm)
    out = pl.pallas_call(
        _ln_add_kernel,
        grid=(Mp // tm,),
        in_specs=[
            pl.BlockSpec((tm, D), lambda i: (i, 0)),
            pl.BlockSpec((1, D), lambda i: (0, 0)),
            pl.BlockSpec((1, D), lambda i: (0, 0)),
            pl.BlockSpec((tm, D), lambda i: (i, 0)),
        ],
        out_specs=pl.BlockSpec((tm, D), lambda i: (i, 0)),
        out_shape=jax.ShapeDtypeStruct((Mp, D), jnp.float32),
        compiler_params=pltpu.CompilerParams(
            dimension_semantics=("parallel",),
            vmem_limit_bytes=_VMEM_LIMIT),
    )(_pad2(x.astype(jnp.float32), Mp, D),
      gamma.reshape(1, D).astype(jnp.float32),
      beta.reshape(1, D).astype(jnp.float32),
      _pad2(add.astype(jnp.float32), Mp, D))
    return out[:M]


# ----------------------------------------------------------------------------
# Batched single-head attention (B,S,D layout, optional additive mask)
# ----------------------------------------------------------------------------
def _attn_kernel(q_ref, k_ref, v_ref, *rest, scale, masked):
    if masked:
        m_ref, o_ref = rest
    else:
        (o_ref,) = rest
    s = jnp.einsum("bqd,bkd->bqk", q_ref[...], k_ref[...],
                   preferred_element_type=jnp.float32) * scale
    if masked:
        s = s + m_ref[...]
    s = s - jnp.max(s, axis=-1, keepdims=True)
    p = jnp.exp(s)
    p = p / jnp.sum(p, axis=-1, keepdims=True)
    o_ref[...] = jnp.einsum("bqk,bkd->bqd", p.astype(v_ref.dtype), v_ref[...],
                            preferred_element_type=jnp.float32)


def attention(q, k, v, mask, scale):
    """softmax(q k^T * scale [+ mask]) v.  q:(B,Tq,D)  k,v:(B,Tk,D)."""
    B, Tq, D = q.shape
    Tk = k.shape[1]
    Dp = _round_up(D, 128)          # lane-dense head dim
    bb = min(8, B)                  # several batch rows per grid step
    Bp = _round_up(B, bb)

    def _pad(a):
        return jnp.pad(a, ((0, Bp - B), (0, 0), (0, Dp - D))).astype(jnp.bfloat16)

    masked = mask is not None
    inputs = [_pad(q), _pad(k), _pad(v)]
    in_specs = [
        pl.BlockSpec((bb, Tq, Dp), lambda b: (b, 0, 0)),
        pl.BlockSpec((bb, Tk, Dp), lambda b: (b, 0, 0)),
        pl.BlockSpec((bb, Tk, Dp), lambda b: (b, 0, 0)),
    ]
    if masked:
        inputs.append(mask.astype(jnp.float32))
        in_specs.append(pl.BlockSpec((Tq, Tk), lambda b: (0, 0)))

    out = pl.pallas_call(
        functools.partial(_attn_kernel, scale=scale, masked=masked),
        grid=(Bp // bb,),
        in_specs=in_specs,
        out_specs=pl.BlockSpec((bb, Tq, Dp), lambda b: (b, 0, 0)),
        out_shape=jax.ShapeDtypeStruct((Bp, Tq, Dp), jnp.float32),
        compiler_params=pltpu.CompilerParams(
            dimension_semantics=("parallel",),
            vmem_limit_bytes=_VMEM_LIMIT),
    )(*inputs)
    return out[:B, :, :D]


# ----------------------------------------------------------------------------
# Depthwise 3x3 conv (+ folded BN + ReLU6) without im2col materialization
# ----------------------------------------------------------------------------
def _dw_s1_kernel(x_ref, w_ref, b_ref, o_ref, *, Ho, Wo):
    x = x_ref[0]                       # (Ho+2, Wo+2, C) padded tile in VMEM
    wv = w_ref[...]                    # (9, C)
    acc = None
    for ki in range(3):
        for kj in range(3):
            tap = x[ki:ki + Ho, kj:kj + Wo, :]
            term = tap * wv[ki * 3 + kj]
            acc = term if acc is None else acc + term
    acc = acc + b_ref[0]
    o_ref[0] = jnp.clip(acc, 0.0, 6.0)


def _dw_s2_kernel(x00_ref, x01_ref, x10_ref, x11_ref, w_ref, b_ref, o_ref,
                  *, Ho, Wo):
    subs = ((x00_ref[0], x01_ref[0]), (x10_ref[0], x11_ref[0]))
    wv = w_ref[...]
    acc = None
    for ki in range(3):
        for kj in range(3):
            pi, oi = ki % 2, ki // 2
            pj, oj = kj % 2, kj // 2
            tap = subs[pi][pj][oi:oi + Ho, oj:oj + Wo, :]
            term = tap * wv[ki * 3 + kj]
            acc = term if acc is None else acc + term
    acc = acc + b_ref[0]
    o_ref[0] = jnp.clip(acc, 0.0, 6.0)


def dwconv3x3_bn_relu6(x, w, bn, stride):
    """Depthwise 3x3 conv (pad=1) + folded BN + ReLU6.  x NHWC, w:(C,1,3,3)."""
    B, H, W, C = x.shape
    scale, bias = bn_fold(bn)
    wk = (jnp.transpose(w.reshape(C, 9), (1, 0)) * scale[None, :]).astype(jnp.float32)
    b2 = bias.reshape(1, C).astype(jnp.float32)
    xp = jnp.pad(x.astype(jnp.float32), ((0, 0), (1, 1), (1, 1), (0, 0)))
    cp = pltpu.CompilerParams(dimension_semantics=("parallel",),
                              vmem_limit_bytes=_VMEM_LIMIT)
    if stride == 1:
        Ho, Wo = H, W
        return pl.pallas_call(
            functools.partial(_dw_s1_kernel, Ho=Ho, Wo=Wo),
            grid=(B,),
            in_specs=[
                pl.BlockSpec((1, H + 2, W + 2, C), lambda b: (b, 0, 0, 0)),
                pl.BlockSpec((9, C), lambda b: (0, 0)),
                pl.BlockSpec((1, C), lambda b: (0, 0)),
            ],
            out_specs=pl.BlockSpec((1, Ho, Wo, C), lambda b: (b, 0, 0, 0)),
            out_shape=jax.ShapeDtypeStruct((B, Ho, Wo, C), jnp.float32),
            compiler_params=cp,
        )(xp, wk, b2)

    assert stride == 2 and H % 2 == 0 and W % 2 == 0
    Ho, Wo = H // 2, W // 2
    # 4 parity sub-grids (total ~1x input volume, no 9x im2col duplication).
    subs = [xp[:, pi::2, pj::2, :] for pi in range(2) for pj in range(2)]
    Hs, Ws = Ho + 1, Wo + 1
    return pl.pallas_call(
        functools.partial(_dw_s2_kernel, Ho=Ho, Wo=Wo),
        grid=(B,),
        in_specs=[pl.BlockSpec((1, Hs, Ws, C), lambda b: (b, 0, 0, 0))] * 4 + [
            pl.BlockSpec((9, C), lambda b: (0, 0)),
            pl.BlockSpec((1, C), lambda b: (0, 0)),
        ],
        out_specs=pl.BlockSpec((1, Ho, Wo, C), lambda b: (b, 0, 0, 0)),
        out_shape=jax.ShapeDtypeStruct((B, Ho, Wo, C), jnp.float32),
        compiler_params=cp,
    )(*subs, wk, b2)


# ----------------------------------------------------------------------------
# Conv helpers (standard conv via im2col + tiled matmul), BN folding, PE
# ----------------------------------------------------------------------------
def extract_patches(x, stride):
    """x:(B,H,W,C) NHWC, 3x3 kernel, pad=1 -> (B,Ho,Wo,9,C)."""
    B, H, W, C = x.shape
    xp = jnp.pad(x, ((0, 0), (1, 1), (1, 1), (0, 0)))
    Ho = (H + 2 - 3) // stride + 1
    Wo = (W + 2 - 3) // stride + 1
    pats = []
    for ki in range(3):
        for kj in range(3):
            pats.append(xp[:, ki::stride, kj::stride, :][:, :Ho, :Wo, :])
    return jnp.stack(pats, axis=3)


def bn_fold(bn, eps=1e-5):
    gamma, beta, mean, var = bn
    scale = gamma / jnp.sqrt(var + eps)
    bias = beta - mean * scale
    return scale, bias


def conv3x3_bn(x, w, bn, stride, relu6=True):
    """Standard 3x3 conv (pad=1, no conv bias) + folded BN (+ReLU6)."""
    B, H, W, C = x.shape
    Cout = w.shape[0]
    pat = extract_patches(x, stride)                       # (B,Ho,Wo,9,C)
    Ho, Wo = pat.shape[1], pat.shape[2]
    pat2 = pat.reshape(B * Ho * Wo, 9 * C)
    scale, bias = bn_fold(bn)
    wk = jnp.transpose(w, (0, 2, 3, 1)).reshape(Cout, 9 * C) * scale[:, None]
    out = matmul_bias(pat2, wk.T, bias, activation="relu6" if relu6 else "none")
    return out.reshape(B, Ho, Wo, Cout)


def pwconv_bn(x, w, bn, relu6, residual=None):
    """1x1 conv + folded BN (+ReLU6) (+fused residual).  w:(Cout,Cin,1,1)."""
    B, H, W, C = x.shape
    Cout = w.shape[0]
    scale, bias = bn_fold(bn)
    wk = w.reshape(Cout, C) * scale[:, None]
    res2d = None if residual is None else residual.reshape(B * H * W, Cout)
    out = matmul_bias(x.reshape(B * H * W, C), wk.T, bias,
                      activation="relu6" if relu6 else "none", residual=res2d)
    return out.reshape(B, H, W, Cout)


def positional_encoding(d_model, max_len):
    position = jnp.arange(max_len, dtype=jnp.float32)[:, None]
    div_term = jnp.exp(jnp.arange(0, d_model, 2, dtype=jnp.float32)
                       * -(math.log(10000.0) / d_model))
    pe = jnp.zeros((max_len, d_model), jnp.float32)
    pe = pe.at[:, 0::2].set(jnp.sin(position * div_term))
    pe = pe.at[:, 1::2].set(jnp.cos(position * div_term))
    return pe


def causal_mask(sz):
    i = jnp.arange(sz)[:, None]
    j = jnp.arange(sz)[None, :]
    return jnp.where(j > i, -1e30, 0.0).astype(jnp.float32)


# ----------------------------------------------------------------------------
# Transformer blocks (norm_first=True, single head, eval-mode dropout),
# activations kept as (B*S, D) 2-D slabs (no seq-first transposes).
# ----------------------------------------------------------------------------
def self_attention_block(x2d, B, S, attn_p, norm_g, norm_b, mask=None):
    D = x2d.shape[1]
    # Fused LN -> QKV projection (one lane-dense matmul against (D, 3D)).
    qkv = ln_matmul_bias(x2d, norm_g, norm_b,
                         attn_p["in_proj_w"].T, attn_p["in_proj_b"])
    q = qkv[:, :D].reshape(B, S, D)
    k = qkv[:, D:2 * D].reshape(B, S, D)
    v = qkv[:, 2 * D:].reshape(B, S, D)
    o = attention(q, k, v, mask, scale=1.0 / math.sqrt(D))
    # out_proj with fused residual add.
    return matmul_bias(o.reshape(B * S, D), attn_p["out_proj_w"].T,
                       attn_p["out_proj_b"], residual=x2d)


def cross_attention_block(x2d, mem2d, B, T, S, attn_p, norm_g, norm_b):
    D = x2d.shape[1]
    wq, bq = attn_p["in_proj_w"][:D].T, attn_p["in_proj_b"][:D]
    wkv, bkv = attn_p["in_proj_w"][D:].T, attn_p["in_proj_b"][D:]
    q = ln_matmul_bias(x2d, norm_g, norm_b, wq, bq).reshape(B, T, D)
    kv = matmul_bias(mem2d, wkv, bkv)                 # fused K+V projection
    k = kv[:, :D].reshape(B, S, D)
    v = kv[:, D:].reshape(B, S, D)
    o = attention(q, k, v, None, scale=1.0 / math.sqrt(D))
    return matmul_bias(o.reshape(B * T, D), attn_p["out_proj_w"].T,
                       attn_p["out_proj_b"], residual=x2d)


def ffn_block(x2d, p, norm_g, norm_b):
    h = ln_matmul_bias(x2d, norm_g, norm_b, p["linear1_w"].T, p["linear1_b"],
                       activation="relu")
    return matmul_bias(h, p["linear2_w"].T, p["linear2_b"], residual=x2d)


def encoder_layer(x2d, B, S, p):
    x2d = self_attention_block(x2d, B, S, p["self_attn"],
                               p["norm1_g"], p["norm1_b"])
    return ffn_block(x2d, p, p["norm2_g"], p["norm2_b"])


def decoder_layer(x2d, mem2d, B, T, S, p, tgt_mask):
    x2d = self_attention_block(x2d, B, T, p["self_attn"],
                               p["norm1_g"], p["norm1_b"], mask=tgt_mask)
    x2d = cross_attention_block(x2d, mem2d, B, T, S, p["cross_attn"],
                                p["norm2_g"], p["norm2_b"])
    return ffn_block(x2d, p, p["norm3_g"], p["norm3_b"])


# ----------------------------------------------------------------------------
# Parameter init (deterministic, synthetic)
# ----------------------------------------------------------------------------
def init_params(key, input_size, vocab_size, d_model, dim_ff=2048):
    keys = iter(jax.random.split(key, 128))

    def w(shape, scale=0.05):
        return scale * jax.random.normal(next(keys), shape, jnp.float32)

    def bn(c):  # (gamma, beta, running_mean, running_var)
        return (1.0 + 0.1 * jax.random.normal(next(keys), (c,), jnp.float32),
                0.05 * jax.random.normal(next(keys), (c,), jnp.float32),
                0.05 * jax.random.normal(next(keys), (c,), jnp.float32),
                1.0 + 0.1 * jnp.abs(jax.random.normal(next(keys), (c,), jnp.float32)))

    def attn_params(d):
        return {"in_proj_w": w((3 * d, d)), "in_proj_b": w((3 * d,)),
                "out_proj_w": w((d, d)), "out_proj_b": w((d,))}

    params = {
        # MobileNetV2 features[:4]
        "cnn": {
            "f0_conv_w": w((32, 3, 3, 3)), "f0_bn": bn(32),
            "f1_dw_w": w((32, 1, 3, 3)), "f1_dw_bn": bn(32),
            "f1_pw_w": w((16, 32, 1, 1)), "f1_pw_bn": bn(16),
            "f2_pw1_w": w((96, 16, 1, 1)), "f2_pw1_bn": bn(96),
            "f2_dw_w": w((96, 1, 3, 3)), "f2_dw_bn": bn(96),
            "f2_pw2_w": w((24, 96, 1, 1)), "f2_pw2_bn": bn(24),
            "f3_pw1_w": w((144, 24, 1, 1)), "f3_pw1_bn": bn(144),
            "f3_dw_w": w((144, 1, 3, 3)), "f3_dw_bn": bn(144),
            "f3_pw2_w": w((24, 144, 1, 1)), "f3_pw2_bn": bn(24),
        },
        "input_size_w": w((d_model, input_size)), "input_size_b": w((d_model,)),
        "input_norm_g": jnp.ones((d_model,)), "input_norm_b": jnp.zeros((d_model,)),
        "encoder": {
            "self_attn": attn_params(d_model),
            "linear1_w": w((dim_ff, d_model)), "linear1_b": w((dim_ff,)),
            "linear2_w": w((d_model, dim_ff)), "linear2_b": w((d_model,)),
            "norm1_g": jnp.ones((d_model,)), "norm1_b": jnp.zeros((d_model,)),
            "norm2_g": jnp.ones((d_model,)), "norm2_b": jnp.zeros((d_model,)),
        },
        "decoder": {
            "self_attn": attn_params(d_model),
            "cross_attn": attn_params(d_model),
            "linear1_w": w((dim_ff, d_model)), "linear1_b": w((dim_ff,)),
            "linear2_w": w((d_model, dim_ff)), "linear2_b": w((d_model,)),
            "norm1_g": jnp.ones((d_model,)), "norm1_b": jnp.zeros((d_model,)),
            "norm2_g": jnp.ones((d_model,)), "norm2_b": jnp.zeros((d_model,)),
            "norm3_g": jnp.ones((d_model,)), "norm3_b": jnp.zeros((d_model,)),
        },
        "embedding": w((vocab_size, d_model), scale=0.1),
        "embedding_norm_g": jnp.ones((d_model,)),
        "embedding_norm_b": jnp.zeros((d_model,)),
        "output_w": w((vocab_size, d_model)), "output_b": w((vocab_size,)),
        "pe_enc": positional_encoding(d_model, 200),
        "pe_dec": positional_encoding(d_model, 20),
    }
    return params


# ----------------------------------------------------------------------------
# Forward pass (mirrors HandwritingTransformer.forward in eval mode)
# ----------------------------------------------------------------------------
def forward(params, src, tgt):
    # src: (B, C, H, W) NCHW (PyTorch convention); tgt: (B, T) int tokens.
    c = params["cnn"]
    x = jnp.stack([src[:, 0]] * 3, axis=1)          # (B,3,H,W)
    x = jnp.transpose(x, (0, 2, 3, 1))              # -> NHWC for conv kernels

    # MobileNetV2 features[:4]
    x = conv3x3_bn(x, c["f0_conv_w"], c["f0_bn"], stride=2, relu6=True)
    x = dwconv3x3_bn_relu6(x, c["f1_dw_w"], c["f1_dw_bn"], stride=1)
    x = pwconv_bn(x, c["f1_pw_w"], c["f1_pw_bn"], relu6=False)
    x = pwconv_bn(x, c["f2_pw1_w"], c["f2_pw1_bn"], relu6=True)
    x = dwconv3x3_bn_relu6(x, c["f2_dw_w"], c["f2_dw_bn"], stride=2)
    x = pwconv_bn(x, c["f2_pw2_w"], c["f2_pw2_bn"], relu6=False)
    res = x
    x = pwconv_bn(x, c["f3_pw1_w"], c["f3_pw1_bn"], relu6=True)
    x = dwconv3x3_bn_relu6(x, c["f3_dw_w"], c["f3_dw_bn"], stride=1)
    x = pwconv_bn(x, c["f3_pw2_w"], c["f3_pw2_bn"], relu6=False,
                  residual=res)                     # fused InvertedResidual skip

    # PyTorch: flatten(C,H) then permute(0,2,1) -> (B, W, C*H)
    B, H, W, C = x.shape
    feat = jnp.transpose(x, (0, 2, 3, 1)).reshape(B, W, C * H)
    S = W
    D = params["input_size_w"].shape[0]

    x2d = matmul_bias(feat.reshape(B * S, C * H), params["input_size_w"].T,
                      params["input_size_b"])
    # input_norm + input_dropout(identity) + positional encoding, fused.
    pe = jnp.broadcast_to(params["pe_enc"][None, :S, :], (B, S, D)).reshape(B * S, D)
    x2d = layernorm_add(x2d, params["input_norm_g"], params["input_norm_b"], pe)

    mem2d = encoder_layer(x2d, B, S, params["encoder"])

    T = tgt.shape[1]
    t2d = params["embedding"][tgt].reshape(B * T, D)        # gather stays in XLA
    pe_d = jnp.broadcast_to(params["pe_dec"][None, :T, :], (B, T, D)).reshape(B * T, D)
    t2d = layernorm_add(t2d, params["embedding_norm_g"],
                        params["embedding_norm_b"], pe_d)

    out2d = decoder_layer(t2d, mem2d, B, T, S, params["decoder"], causal_mask(T))
    logits = matmul_bias(out2d, params["output_w"].T, params["output_b"])
    return logits.reshape(B, T, -1)                  # (B, T, vocab)


if __name__ == "__main__":
    B, Cin, H, W = 2, 1, 16, 16
    T = 5
    vocab_size = 11
    d_model = 32
    input_size = 24 * (H // 4)   # C*H after MobileNetV2 features[:4]

    key = jax.random.PRNGKey(0)
    k_src, k_tgt, k_par = jax.random.split(key, 3)
    src = jax.random.normal(k_src, (B, Cin, H, W), jnp.float32)
    tgt = jax.random.randint(k_tgt, (B, T), 0, vocab_size)

    params = init_params(k_par, input_size, vocab_size, d_model)
    out = jax.jit(forward)(params, src, tgt)
    jax.block_until_ready(out)
    assert out.shape == (B, T, vocab_size), out.shape
    print("KERNEL_OK")
</pallas_src>

<mosaic_0001>
module attributes {stable_mosaic.version = 11 : i64} {
  func.func @_mm_kernel(%arg0: i32, %arg1: i32, %arg2: i32, %arg3: memref<128x128xbf16, #tpu.memory_space<vmem>>, %arg4: memref<128x128xbf16, #tpu.memory_space<vmem>>, %arg5: memref<1x128xf32, #tpu.memory_space<vmem>>, %arg6: memref<128x128xf32, #tpu.memory_space<vmem>>, %arg7: memref<128x128xf32, #tpu.memory_space<vmem>>) attributes {dimension_semantics = [#tpu.dimension_semantics<parallel>, #tpu.dimension_semantics<parallel>, #tpu.dimension_semantics<arbitrary>], iteration_bounds = array<i64: 1, 1, 1>, scalar_prefetch = 0 : i64, scratch_operands = 1 : i64, tpu.core_type = #tpu.core_type<tc>, window_params = [{transform_indices = @transform_0, window_bounds = array<i64: 128, 128>}, {transform_indices = @transform_1, window_bounds = array<i64: 128, 128>}, {transform_indices = @transform_2, window_bounds = array<i64: 1, 128>}, {transform_indices = @transform_3, window_bounds = array<i64: 128, 128>}]} {
    %c0_i32 = arith.constant 0 : i32
    %0 = arith.cmpi eq, %arg2, %c0_i32 : i32
    %1 = arith.extui %0 : i1 to i32
    %c0_i32_0 = arith.constant 0 : i32
    %2 = arith.cmpi ne, %1, %c0_i32_0 : i32
    scf.if %2 {
      %cst_10 = arith.constant 0.000000e+00 : f32
      %12 = vector.broadcast %cst_10 : f32 to vector<128x128xf32>
      %c0_11 = arith.constant 0 : index
      %c0_12 = arith.constant 0 : index
      %13 = vector.load %arg7[%c0_11, %c0_12] : memref<128x128xf32, #tpu.memory_space<vmem>>, vector<128x128xf32>
      tpu.vector_store %arg7[%c0_11, %c0_12], %12 {strides = array<i32>} : memref<128x128xf32, #tpu.memory_space<vmem>>, vector<128x128xf32>,
    } else {
    }
    %c0 = arith.constant 0 : index
    %c0_1 = arith.constant 0 : index
    %3 = vector.load %arg7[%c0, %c0_1] : memref<128x128xf32, #tpu.memory_space<vmem>>, vector<128x128xf32>
    %c0_2 = arith.constant 0 : index
    %c0_3 = arith.constant 0 : index
    %4 = vector.load %arg3[%c0_2, %c0_3] : memref<128x128xbf16, #tpu.memory_space<vmem>>, vector<128x128xbf16>
    %c0_4 = arith.constant 0 : index
    %c0_5 = arith.constant 0 : index
    %5 = vector.load %arg4[%c0_4, %c0_5] : memref<128x128xbf16, #tpu.memory_space<vmem>>, vector<128x128xbf16>
    %cst = arith.constant dense<0.000000e+00> : vector<128x128xf32>
    %6 = tpu.matmul %4, %5, %cst {dimension_numbers = #tpu.dot_dimension_numbers<[1], [0], [0], [1], [0, 0, 1, 1], [], []>} : vector<128x128xbf16>, vector<128x128xbf16>, vector<128x128xf32> -> vector<128x128xf32>
    %7 = arith.addf %3, %6 : vector<128x128xf32>
    %c0_6 = arith.constant 0 : index
    %c0_7 = arith.constant 0 : index
    %8 = vector.load %arg7[%c0_6, %c0_7] : memref<128x128xf32, #tpu.memory_space<vmem>>, vector<128x128xf32>
    tpu.vector_store %arg7[%c0_6, %c0_7], %7 {strides = array<i32>} : memref<128x128xf32, #tpu.memory_space<vmem>>, vector<128x128xf32>,
    %c0_i32_8 = arith.constant 0 : i32
    %9 = arith.cmpi eq, %arg2, %c0_i32_8 : i32
    %10 = arith.extui %9 : i1 to i32
    %c0_i32_9 = arith.constant 0 : i32
    %11 = arith.cmpi ne, %10, %c0_i32_9 : i32
    scf.if %11 {
      %c0_10 = arith.constant 0 : index
      %c0_11 = arith.constant 0 : index
      %12 = vector.load %arg7[%c0_10, %c0_11] : memref<128x128xf32, #tpu.memory_space<vmem>>, vector<128x128xf32>
      %c0_12 = arith.constant 0 : index
      %c0_13 = arith.constant 0 : index
      %13 = vector.load %arg5[%c0_12, %c0_13] : memref<1x128xf32, #tpu.memory_space<vmem>>, vector<1x128xf32>
      %14 = vector.broadcast %13 : vector<1x128xf32> to vector<128x128xf32>
      %15 = arith.addf %12, %14 : vector<128x128xf32>
      %cst_14 = arith.constant 0.000000e+00 : f32
      %cst_15 = arith.constant 6.000000e+00 : f32
      %16 = vector.broadcast %cst_14 : f32 to vector<128x128xf32>
      %17 = arith.maximumf %16, %15 : vector<128x128xf32>
      %18 = vector.broadcast %cst_15 : f32 to vector<128x128xf32>
      %19 = arith.minimumf %18, %17 : vector<128x128xf32>
      %c0_16 = arith.constant 0 : index
      %c0_17 = arith.constant 0 : index
      %20 = vector.load %arg6[%c0_16, %c0_17] : memref<128x128xf32, #tpu.memory_space<vmem>>, vector<128x128xf32>
      tpu.vector_store %arg6[%c0_16, %c0_17], %19 {strides = array<i32>} : memref<128x128xf32, #tpu.memory_space<vmem>>, vector<128x128xf32>,
    } else {
    }
    return
  }
  func.func @transform_0(%arg0: i32, %arg1: i32, %arg2: i32) -> (i32, i32) {
    %c0_i32 = arith.constant 0 : i32
    return %arg0, %arg2 : i32, i32
  }
  func.func @transform_1(%arg0: i32, %arg1: i32, %arg2: i32) -> (i32, i32) {
    %c0_i32 = arith.constant 0 : i32
    return %arg2, %arg1 : i32, i32
  }
  func.func @transform_2(%arg0: i32, %arg1: i32, %arg2: i32) -> (i32, i32) {
    %c0_i32 = arith.constant 0 : i32
    %c0_i32_0 = arith.constant 0 : i32
    return %c0_i32, %arg1 : i32, i32
  }
  func.func @transform_3(%arg0: i32, %arg1: i32, %arg2: i32) -> (i32, i32) {
    %c0_i32 = arith.constant 0 : i32
    return %arg0, %arg1 : i32, i32
  }
}

module attributes {stable_mosaic.version = 11 : i64} {
  func.func @_dw_s1_kernel(%arg0: i32, %arg1: memref<1x10x10x32xf32, #tpu.memory_space<vmem>>, %arg2: memref<9x32xf32, #tpu.memory_space<vmem>>, %arg3: memref<1x32xf32, #tpu.memory_space<vmem>>, %arg4: memref<1x8x8x32xf32, #tpu.memory_space<vmem>>) attributes {dimension_semantics = [#tpu.dimension_semantics<parallel>], iteration_bounds = array<i64: 2>, scalar_prefetch = 0 : i64, scratch_operands = 0 : i64, tpu.core_type = #tpu.core_type<tc>, window_params = [{transform_indices = @transform_0, window_bounds = array<i64: 1, 10, 10, 32>}, {pipeline_mode = #tpu.pipeline_mode<synchronous>, transform_indices = @transform_1, window_bounds = array<i64: 9, 32>}, {pipeline_mode = #tpu.pipeline_mode<synchronous>, transform_indices = @transform_2, window_bounds = array<i64: 1, 32>}, {transform_indices = @transform_3, window_bounds = array<i64: 1, 8, 8, 32>}]} {
    %c0 = arith.constant 0 : index
    %c0_0 = arith.constant 0 : index
    %c0_1 = arith.constant 0 : index
    %c0_2 = arith.constant 0 : index
    %0 = vector.load %arg1[%c0, %c0_0, %c0_1, %c0_2] : memref<1x10x10x32xf32, #tpu.memory_space<vmem>>, vector<1x10x10x32xf32>
    %1 = vector.shape_cast %0 : vector<1x10x10x32xf32> to vector<10x10x32xf32>
    %c0_3 = arith.constant 0 : index
    %c0_4 = arith.constant 0 : index
    %2 = vector.load %arg2[%c0_3, %c0_4] : memref<9x32xf32, #tpu.memory_space<vmem>>, vector<9x32xf32>
    %3 = vector.extract_strided_slice %1 {offsets = [0, 0, 0], sizes = [8, 8, 32], strides = [1, 1, 1]} : vector<10x10x32xf32> to vector<8x8x32xf32>
    %4 = vector.extract_strided_slice %2 {offsets = [0, 0], sizes = [1, 32], strides = [1, 1]} : vector<9x32xf32> to vector<1x32xf32>
    %5 = vector.shape_cast %4 : vector<1x32xf32> to vector<32xf32>
    %6 = vector.shape_cast %5 : vector<32xf32> to vector<1x1x32xf32>
    %7 = vector.broadcast %6 : vector<1x1x32xf32> to vector<8x8x32xf32>
    %8 = arith.mulf %3, %7 : vector<8x8x32xf32>
    %9 = vector.extract_strided_slice %1 {offsets = [0, 1, 0], sizes = [8, 8, 32], strides = [1, 1, 1]} : vector<10x10x32xf32> to vector<8x8x32xf32>
    %10 = vector.extract_strided_slice %2 {offsets = [1, 0], sizes = [1, 32], strides = [1, 1]} : vector<9x32xf32> to vector<1x32xf32>
    %11 = vector.shape_cast %10 : vector<1x32xf32> to vector<32xf32>
    %12 = vector.shape_cast %11 : vector<32xf32> to vector<1x1x32xf32>
    %13 = vector.broadcast %12 : vector<1x1x32xf32> to vector<8x8x32xf32>
    %14 = arith.mulf %9, %13 : vector<8x8x32xf32>
    %15 = arith.addf %8, %14 : vector<8x8x32xf32>
    %16 = vector.extract_strided_slice %1 {offsets = [0, 2, 0], sizes = [8, 8, 32], strides = [1, 1, 1]} : vector<10x10x32xf32> to vector<8x8x32xf32>
    %17 = vector.extract_strided_slice %2 {offsets = [2, 0], sizes = [1, 32], strides = [1, 1]} : vector<9x32xf32> to vector<1x32xf32>
    %18 = vector.shape_cast %17 : vector<1x32xf32> to vector<32xf32>
    %19 = vector.shape_cast %18 : vector<32xf32> to vector<1x1x32xf32>
    %20 = vector.broadcast %19 : vector<1x1x32xf32> to vector<8x8x32xf32>
    %21 = arith.mulf %16, %20 : vector<8x8x32xf32>
    %22 = arith.addf %15, %21 : vector<8x8x32xf32>
    %23 = vector.extract_strided_slice %1 {offsets = [1, 0, 0], sizes = [8, 8, 32], strides = [1, 1, 1]} : vector<10x10x32xf32> to vector<8x8x32xf32>
    %24 = vector.extract_strided_slice %2 {offsets = [3, 0], sizes = [1, 32], strides = [1, 1]} : vector<9x32xf32> to vector<1x32xf32>
    %25 = vector.shape_cast %24 : vector<1x32xf32> to vector<32xf32>
    %26 = vector.shape_cast %25 : vector<32xf32> to vector<1x1x32xf32>
    %27 = vector.broadcast %26 : vector<1x1x32xf32> to vector<8x8x32xf32>
    %28 = arith.mulf %23, %27 : vector<8x8x32xf32>
    %29 = arith.addf %22, %28 : vector<8x8x32xf32>
    %30 = vector.extract_strided_slice %1 {offsets = [1, 1, 0], sizes = [8, 8, 32], strides = [1, 1, 1]} : vector<10x10x32xf32> to vector<8x8x32xf32>
    %31 = vector.extract_strided_slice %2 {offsets = [4, 0], sizes = [1, 32], strides = [1, 1]} : vector<9x32xf32> to vector<1x32xf32>
    %32 = vector.shape_cast %31 : vector<1x32xf32> to vector<32xf32>
    %33 = vector.shape_cast %32 : vector<32xf32> to vector<1x1x32xf32>
    %34 = vector.broadcast %33 : vector<1x1x32xf32> to vector<8x8x32xf32>
    %35 = arith.mulf %30, %34 : vector<8x8x32xf32>
    %36 = arith.addf %29, %35 : vector<8x8x32xf32>
    %37 = vector.extract_strided_slice %1 {offsets = [1, 2, 0], sizes = [8, 8, 32], strides = [1, 1, 1]} : vector<10x10x32xf32> to vector<8x8x32xf32>
    %38 = vector.extract_strided_slice %2 {offsets = [5, 0], sizes = [1, 32], strides = [1, 1]} : vector<9x32xf32> to vector<1x32xf32>
    %39 = vector.shape_cast %38 : vector<1x32xf32> to vector<32xf32>
    %40 = vector.shape_cast %39 : vector<32xf32> to vector<1x1x32xf32>
    %41 = vector.broadcast %40 : vector<1x1x32xf32> to vector<8x8x32xf32>
    %42 = arith.mulf %37, %41 : vector<8x8x32xf32>
    %43 = arith.addf %36, %42 : vector<8x8x32xf32>
    %44 = vector.extract_strided_slice %1 {offsets = [2, 0, 0], sizes = [8, 8, 32], strides = [1, 1, 1]} : vector<10x10x32xf32> to vector<8x8x32xf32>
    %45 = vector.extract_strided_slice %2 {offsets = [6, 0], sizes = [1, 32], strides = [1, 1]} : vector<9x32xf32> to vector<1x32xf32>
    %46 = vector.shape_cast %45 : vector<1x32xf32> to vector<32xf32>
    %47 = vector.shape_cast %46 : vector<32xf32> to vector<1x1x32xf32>
    %48 = vector.broadcast %47 : vector<1x1x32xf32> to vector<8x8x32xf32>
    %49 = arith.mulf %44, %48 : vector<8x8x32xf32>
    %50 = arith.addf %43, %49 : vector<8x8x32xf32>
    %51 = vector.extract_strided_slice %1 {offsets = [2, 1, 0], sizes = [8, 8, 32], strides = [1, 1, 1]} : vector<10x10x32xf32> to vector<8x8x32xf32>
    %52 = vector.extract_strided_slice %2 {offsets = [7, 0], sizes = [1, 32], strides = [1, 1]} : vector<9x32xf32> to vector<1x32xf32>
    %53 = vector.shape_cast %52 : vector<1x32xf32> to vector<32xf32>
    %54 = vector.shape_cast %53 : vector<32xf32> to vector<1x1x32xf32>
    %55 = vector.broadcast %54 : vector<1x1x32xf32> to vector<8x8x32xf32>
    %56 = arith.mulf %51, %55 : vector<8x8x32xf32>
    %57 = arith.addf %50, %56 : vector<8x8x32xf32>
    %58 = vector.extract_strided_slice %1 {offsets = [2, 2, 0], sizes = [8, 8, 32], strides = [1, 1, 1]} : vector<10x10x32xf32> to vector<8x8x32xf32>
    %59 = vector.extract_strided_slice %2 {offsets = [8, 0], sizes = [1, 32], strides = [1, 1]} : vector<9x32xf32> to vector<1x32xf32>
    %60 = vector.shape_cast %59 : vector<1x32xf32> to vector<32xf32>
    %61 = vector.shape_cast %60 : vector<32xf32> to vector<1x1x32xf32>
    %62 = vector.broadcast %61 : vector<1x1x32xf32> to vector<8x8x32xf32>
    %63 = arith.mulf %58, %62 : vector<8x8x32xf32>
    %64 = arith.addf %57, %63 : vector<8x8x32xf32>
    %c0_5 = arith.constant 0 : index
    %c0_6 = arith.constant 0 : index
    %65 = vector.load %arg3[%c0_5, %c0_6] : memref<1x32xf32, #tpu.memory_space<vmem>>, vector<1x32xf32>
    %66 = vector.shape_cast %65 : vector<1x32xf32> to vector<32xf32>
    %67 = vector.shape_cast %66 : vector<32xf32> to vector<1x1x32xf32>
    %68 = vector.broadcast %67 : vector<1x1x32xf32> to vector<8x8x32xf32>
    %69 = arith.addf %64, %68 : vector<8x8x32xf32>
    %cst = arith.constant 0.000000e+00 : f32
    %cst_7 = arith.constant 6.000000e+00 : f32
    %70 = vector.broadcast %cst : f32 to vector<8x8x32xf32>
    %71 = arith.maximumf %70, %69 : vector<8x8x32xf32>
    %72 = vector.broadcast %cst_7 : f32 to vector<8x8x32xf32>
    %73 = arith.minimumf %72, %71 : vector<8x8x32xf32>
    %c0_8 = arith.constant 0 : index
    %c0_9 = arith.constant 0 : index
    %c0_10 = arith.constant 0 : index
    %c0_11 = arith.constant 0 : index
    %74 = vector.load %arg4[%c0_8, %c0_9, %c0_10, %c0_11] : memref<1x8x8x32xf32, #tpu.memory_space<vmem>>, vector<1x8x8x32xf32>
    %75 = vector.shape_cast %74 : vector<1x8x8x32xf32> to vector<8x8x32xf32>
    %76 = vector.shape_cast %73 : vector<8x8x32xf32> to vector<1x8x8x32xf32>
    tpu.vector_store %arg4[%c0_8, %c0_9, %c0_10, %c0_11], %76 {strides = array<i32>} : memref<1x8x8x32xf32, #tpu.memory_space<vmem>>, vector<1x8x8x32xf32>,
    return
  }
  func.func @transform_0(%arg0: i32) -> (i32, i32, i32, i32) {
    %c0_i32 = arith.constant 0 : i32
    %c0_i32_0 = arith.constant 0 : i32
    %c0_i32_1 = arith.constant 0 : i32
    %c0_i32_2 = arith.constant 0 : i32
    return %arg0, %c0_i32, %c0_i32_0, %c0_i32_1 : i32, i32, i32, i32
  }
  func.func @transform_1(%arg0: i32) -> (i32, i32) {
    %c0_i32 = arith.constant 0 : i32
    %c0_i32_0 = arith.constant 0 : i32
    %c0_i32_1 = arith.constant 0 : i32
    return %c0_i32, %c0_i32_0 : i32, i32
  }
  func.func @transform_2(%arg0: i32) -> (i32, i32) {
    %c0_i32 = arith.constant 0 : i32
    %c0_i32_0 = arith.constant 0 : i32
    %c0_i32_1 = arith.constant 0 : i32
    return %c0_i32, %c0_i32_0 : i32, i32
  }
  func.func @transform_3(%arg0: i32) -> (i32, i32, i32, i32) {
    %c0_i32 = arith.constant 0 : i32
    %c0_i32_0 = arith.constant 0 : i32
    %c0_i32_1 = arith.constant 0 : i32
    %c0_i32_2 = arith.constant 0 : i32
    return %arg0, %c0_i32, %c0_i32_0, %c0_i32_1 : i32, i32, i32, i32
  }
}

module attributes {stable_mosaic.version = 11 : i64} {
  func.func @_mm_kernel(%arg0: i32, %arg1: i32, %arg2: i32, %arg3: memref<128x128xbf16, #tpu.memory_space<vmem>>, %arg4: memref<128x128xbf16, #tpu.memory_space<vmem>>, %arg5: memref<1x128xf32, #tpu.memory_space<vmem>>, %arg6: memref<128x128xf32, #tpu.memory_space<vmem>>, %arg7: memref<128x128xf32, #tpu.memory_space<vmem>>) attributes {dimension_semantics = [#tpu.dimension_semantics<parallel>, #tpu.dimension_semantics<parallel>, #tpu.dimension_semantics<arbitrary>], iteration_bounds = array<i64: 1, 1, 1>, scalar_prefetch = 0 : i64, scratch_operands = 1 : i64, tpu.core_type = #tpu.core_type<tc>, window_params = [{transform_indices = @transform_0, window_bounds = array<i64: 128, 128>}, {transform_indices = @transform_1, window_bounds = array<i64: 128, 128>}, {transform_indices = @transform_2, window_bounds = array<i64: 1, 128>}, {transform_indices = @transform_3, window_bounds = array<i64: 128, 128>}]} {
    %c0_i32 = arith.constant 0 : i32
    %0 = arith.cmpi eq, %arg2, %c0_i32 : i32
    %1 = arith.extui %0 : i1 to i32
    %c0_i32_0 = arith.constant 0 : i32
    %2 = arith.cmpi ne, %1, %c0_i32_0 : i32
    scf.if %2 {
      %cst_10 = arith.constant 0.000000e+00 : f32
      %12 = vector.broadcast %cst_10 : f32 to vector<128x128xf32>
      %c0_11 = arith.constant 0 : index
      %c0_12 = arith.constant 0 : index
      %13 = vector.load %arg7[%c0_11, %c0_12] : memref<128x128xf32, #tpu.memory_space<vmem>>, vector<128x128xf32>
      tpu.vector_store %arg7[%c0_11, %c0_12], %12 {strides = array<i32>} : memref<128x128xf32, #tpu.memory_space<vmem>>, vector<128x128xf32>,
    } else {
    }
    %c0 = arith.constant 0 : index
    %c0_1 = arith.constant 0 : index
    %3 = vector.load %arg7[%c0, %c0_1] : memref<128x128xf32, #tpu.memory_space<vmem>>, vector<128x128xf32>
    %c0_2 = arith.constant 0 : index
    %c0_3 = arith.constant 0 : index
    %4 = vector.load %arg3[%c0_2, %c0_3] : memref<128x128xbf16, #tpu.memory_space<vmem>>, vector<128x128xbf16>
    %c0_4 = arith.constant 0 : index
    %c0_5 = arith.constant 0 : index
    %5 = vector.load %arg4[%c0_4, %c0_5] : memref<128x128xbf16, #tpu.memory_space<vmem>>, vector<128x128xbf16>
    %cst = arith.constant dense<0.000000e+00> : vector<128x128xf32>
    %6 = tpu.matmul %4, %5, %cst {dimension_numbers = #tpu.dot_dimension_numbers<[1], [0], [0], [1], [0, 0, 1, 1], [], []>} : vector<128x128xbf16>, vector<128x128xbf16>, vector<128x128xf32> -> vector<128x128xf32>
    %7 = arith.addf %3, %6 : vector<128x128xf32>
    %c0_6 = arith.constant 0 : index
    %c0_7 = arith.constant 0 : index
    %8 = vector.load %arg7[%c0_6, %c0_7] : memref<128x128xf32, #tpu.memory_space<vmem>>, vector<128x128xf32>
    tpu.vector_store %arg7[%c0_6, %c0_7], %7 {strides = array<i32>} : memref<128x128xf32, #tpu.memory_space<vmem>>, vector<128x128xf32>,
    %c0_i32_8 = arith.constant 0 : i32
    %9 = arith.cmpi eq, %arg2, %c0_i32_8 : i32
    %10 = arith.extui %9 : i1 to i32
    %c0_i32_9 = arith.constant 0 : i32
    %11 = arith.cmpi ne, %10, %c0_i32_9 : i32
    scf.if %11 {
      %c0_10 = arith.constant 0 : index
      %c0_11 = arith.constant 0 : index
      %12 = vector.load %arg7[%c0_10, %c0_11] : memref<128x128xf32, #tpu.memory_space<vmem>>, vector<128x128xf32>
      %c0_12 = arith.constant 0 : index
      %c0_13 = arith.constant 0 : index
      %13 = vector.load %arg5[%c0_12, %c0_13] : memref<1x128xf32, #tpu.memory_space<vmem>>, vector<1x128xf32>
      %14 = vector.broadcast %13 : vector<1x128xf32> to vector<128x128xf32>
      %15 = arith.addf %12, %14 : vector<128x128xf32>
      %c0_14 = arith.constant 0 : index
      %c0_15 = arith.constant 0 : index
      %16 = vector.load %arg6[%c0_14, %c0_15] : memref<128x128xf32, #tpu.memory_space<vmem>>, vector<128x128xf32>
      tpu.vector_store %arg6[%c0_14, %c0_15], %15 {strides = array<i32>} : memref<128x128xf32, #tpu.memory_space<vmem>>, vector<128x128xf32>,
    } else {
    }
    return
  }
  func.func @transform_0(%arg0: i32, %arg1: i32, %arg2: i32) -> (i32, i32) {
    %c0_i32 = arith.constant 0 : i32
    return %arg0, %arg2 : i32, i32
  }
  func.func @transform_1(%arg0: i32, %arg1: i32, %arg2: i32) -> (i32, i32) {
    %c0_i32 = arith.constant 0 : i32
    return %arg2, %arg1 : i32, i32
  }
  func.func @transform_2(%arg0: i32, %arg1: i32, %arg2: i32) -> (i32, i32) {
    %c0_i32 = arith.constant 0 : i32
    %c0_i32_0 = arith.constant 0 : i32
    return %c0_i32, %arg1 : i32, i32
  }
  func.func @transform_3(%arg0: i32, %arg1: i32, %arg2: i32) -> (i32, i32) {
    %c0_i32 = arith.constant 0 : i32
    return %arg0, %arg1 : i32, i32
  }
}

module attributes {stable_mosaic.version = 11 : i64} {
  func.func @_mm_kernel(%arg0: i32, %arg1: i32, %arg2: i32, %arg3: memref<32x128xbf16, #tpu.memory_space<vmem>>, %arg4: memref<128x128xbf16, #tpu.memory_space<vmem>>, %arg5: memref<1x128xf32, #tpu.memory_space<vmem>>, %arg6: memref<32x128xf32, #tpu.memory_space<vmem>>, %arg7: memref<32x128xf32, #tpu.memory_space<vmem>>) attributes {dimension_semantics = [#tpu.dimension_semantics<parallel>, #tpu.dimension_semantics<parallel>, #tpu.dimension_semantics<arbitrary>], iteration_bounds = array<i64: 1, 1, 1>, scalar_prefetch = 0 : i64, scratch_operands = 1 : i64, tpu.core_type = #tpu.core_type<tc>, window_params = [{transform_indices = @transform_0, window_bounds = array<i64: 32, 128>}, {transform_indices = @transform_1, window_bounds = array<i64: 128, 128>}, {transform_indices = @transform_2, window_bounds = array<i64: 1, 128>}, {transform_indices = @transform_3, window_bounds = array<i64: 32, 128>}]} {
    %c0_i32 = arith.constant 0 : i32
    %0 = arith.cmpi eq, %arg2, %c0_i32 : i32
    %1 = arith.extui %0 : i1 to i32
    %c0_i32_0 = arith.constant 0 : i32
    %2 = arith.cmpi ne, %1, %c0_i32_0 : i32
    scf.if %2 {
      %cst_10 = arith.constant 0.000000e+00 : f32
      %12 = vector.broadcast %cst_10 : f32 to vector<32x128xf32>
      %c0_11 = arith.constant 0 : index
      %c0_12 = arith.constant 0 : index
      %13 = vector.load %arg7[%c0_11, %c0_12] : memref<32x128xf32, #tpu.memory_space<vmem>>, vector<32x128xf32>
      tpu.vector_store %arg7[%c0_11, %c0_12], %12 {strides = array<i32>} : memref<32x128xf32, #tpu.memory_space<vmem>>, vector<32x128xf32>,
    } else {
    }
    %c0 = arith.constant 0 : index
    %c0_1 = arith.constant 0 : index
    %3 = vector.load %arg7[%c0, %c0_1] : memref<32x128xf32, #tpu.memory_space<vmem>>, vector<32x128xf32>
    %c0_2 = arith.constant 0 : index
    %c0_3 = arith.constant 0 : index
    %4 = vector.load %arg3[%c0_2, %c0_3] : memref<32x128xbf16, #tpu.memory_space<vmem>>, vector<32x128xbf16>
    %c0_4 = arith.constant 0 : index
    %c0_5 = arith.constant 0 : index
    %5 = vector.load %arg4[%c0_4, %c0_5] : memref<128x128xbf16, #tpu.memory_space<vmem>>, vector<128x128xbf16>
    %cst = arith.constant dense<0.000000e+00> : vector<32x128xf32>
    %6 = tpu.matmul %4, %5, %cst {dimension_numbers = #tpu.dot_dimension_numbers<[1], [0], [0], [1], [0, 0, 1, 1], [], []>} : vector<32x128xbf16>, vector<128x128xbf16>, vector<32x128xf32> -> vector<32x128xf32>
    %7 = arith.addf %3, %6 : vector<32x128xf32>
    %c0_6 = arith.constant 0 : index
    %c0_7 = arith.constant 0 : index
    %8 = vector.load %arg7[%c0_6, %c0_7] : memref<32x128xf32, #tpu.memory_space<vmem>>, vector<32x128xf32>
    tpu.vector_store %arg7[%c0_6, %c0_7], %7 {strides = array<i32>} : memref<32x128xf32, #tpu.memory_space<vmem>>, vector<32x128xf32>,
    %c0_i32_8 = arith.constant 0 : i32
    %9 = arith.cmpi eq, %arg2, %c0_i32_8 : i32
    %10 = arith.extui %9 : i1 to i32
    %c0_i32_9 = arith.constant 0 : i32
    %11 = arith.cmpi ne, %10, %c0_i32_9 : i32
    scf.if %11 {
      %c0_10 = arith.constant 0 : index
      %c0_11 = arith.constant 0 : index
      %12 = vector.load %arg7[%c0_10, %c0_11] : memref<32x128xf32, #tpu.memory_space<vmem>>, vector<32x128xf32>
      %c0_12 = arith.constant 0 : index
      %c0_13 = arith.constant 0 : index
      %13 = vector.load %arg5[%c0_12, %c0_13] : memref<1x128xf32, #tpu.memory_space<vmem>>, vector<1x128xf32>
      %14 = vector.broadcast %13 : vector<1x128xf32> to vector<32x128xf32>
      %15 = arith.addf %12, %14 : vector<32x128xf32>
      %c0_14 = arith.constant 0 : index
      %c0_15 = arith.constant 0 : index
      %16 = vector.load %arg6[%c0_14, %c0_15] : memref<32x128xf32, #tpu.memory_space<vmem>>, vector<32x128xf32>
      tpu.vector_store %arg6[%c0_14, %c0_15], %15 {strides = array<i32>} : memref<32x128xf32, #tpu.memory_space<vmem>>, vector<32x128xf32>,
    } else {
    }
    return
  }
  func.func @transform_0(%arg0: i32, %arg1: i32, %arg2: i32) -> (i32, i32) {
    %c0_i32 = arith.constant 0 : i32
    return %arg0, %arg2 : i32, i32
  }
  func.func @transform_1(%arg0: i32, %arg1: i32, %arg2: i32) -> (i32, i32) {
    %c0_i32 = arith.constant 0 : i32
    return %arg2, %arg1 : i32, i32
  }
  func.func @transform_2(%arg0: i32, %arg1: i32, %arg2: i32) -> (i32, i32) {
    %c0_i32 = arith.constant 0 : i32
    %c0_i32_0 = arith.constant 0 : i32
    return %c0_i32, %arg1 : i32, i32
  }
  func.func @transform_3(%arg0: i32, %arg1: i32, %arg2: i32) -> (i32, i32) {
    %c0_i32 = arith.constant 0 : i32
    return %arg0, %arg1 : i32, i32
  }
}

module attributes {stable_mosaic.version = 11 : i64} {
  func.func @_dw_s2_kernel(%arg0: i32, %arg1: memref<1x5x5x96xf32, #tpu.memory_space<vmem>>, %arg2: memref<1x5x5x96xf32, #tpu.memory_space<vmem>>, %arg3: memref<1x5x5x96xf32, #tpu.memory_space<vmem>>, %arg4: memref<1x5x5x96xf32, #tpu.memory_space<vmem>>, %arg5: memref<9x96xf32, #tpu.memory_space<vmem>>, %arg6: memref<1x96xf32, #tpu.memory_space<vmem>>, %arg7: memref<1x4x4x96xf32, #tpu.memory_space<vmem>>) attributes {dimension_semantics = [#tpu.dimension_semantics<parallel>], iteration_bounds = array<i64: 2>, scalar_prefetch = 0 : i64, scratch_operands = 0 : i64, tpu.core_type = #tpu.core_type<tc>, window_params = [{transform_indices = @transform_0, window_bounds = array<i64: 1, 5, 5, 96>}, {transform_indices = @transform_1, window_bounds = array<i64: 1, 5, 5, 96>}, {transform_indices = @transform_2, window_bounds = array<i64: 1, 5, 5, 96>}, {transform_indices = @transform_3, window_bounds = array<i64: 1, 5, 5, 96>}, {pipeline_mode = #tpu.pipeline_mode<synchronous>, transform_indices = @transform_4, window_bounds = array<i64: 9, 96>}, {pipeline_mode = #tpu.pipeline_mode<synchronous>, transform_indices = @transform_5, window_bounds = array<i64: 1, 96>}, {transform_indices = @transform_6, window_bounds = array<i64: 1, 4, 4, 96>}]} {
    %c0 = arith.constant 0 : index
    %c0_0 = arith.constant 0 : index
    %c0_1 = arith.constant 0 : index
    %c0_2 = arith.constant 0 : index
    %0 = vector.load %arg1[%c0, %c0_0, %c0_1, %c0_2] : memref<1x5x5x96xf32, #tpu.memory_space<vmem>>, vector<1x5x5x96xf32>
    %1 = vector.shape_cast %0 : vector<1x5x5x96xf32> to vector<5x5x96xf32>
    %c0_3 = arith.constant 0 : index
    %c0_4 = arith.constant 0 : index
    %c0_5 = arith.constant 0 : index
    %c0_6 = arith.constant 0 : index
    %2 = vector.load %arg2[%c0_3, %c0_4, %c0_5, %c0_6] : memref<1x5x5x96xf32, #tpu.memory_space<vmem>>, vector<1x5x5x96xf32>
    %3 = vector.shape_cast %2 : vector<1x5x5x96xf32> to vector<5x5x96xf32>
    %c0_7 = arith.constant 0 : index
    %c0_8 = arith.constant 0 : index
    %c0_9 = arith.constant 0 : index
    %c0_10 = arith.constant 0 : index
    %4 = vector.load %arg3[%c0_7, %c0_8, %c0_9, %c0_10] : memref<1x5x5x96xf32, #tpu.memory_space<vmem>>, vector<1x5x5x96xf32>
    %5 = vector.shape_cast %4 : vector<1x5x5x96xf32> to vector<5x5x96xf32>
    %c0_11 = arith.constant 0 : index
    %c0_12 = arith.constant 0 : index
    %c0_13 = arith.constant 0 : index
    %c0_14 = arith.constant 0 : index
    %6 = vector.load %arg4[%c0_11, %c0_12, %c0_13, %c0_14] : memref<1x5x5x96xf32, #tpu.memory_space<vmem>>, vector<1x5x5x96xf32>
    %7 = vector.shape_cast %6 : vector<1x5x5x96xf32> to vector<5x5x96xf32>
    %c0_15 = arith.constant 0 : index
    %c0_16 = arith.constant 0 : index
    %8 = vector.load %arg5[%c0_15, %c0_16] : memref<9x96xf32, #tpu.memory_space<vmem>>, vector<9x96xf32>
    %9 = vector.extract_strided_slice %1 {offsets = [0, 0, 0], sizes = [4, 4, 96], strides = [1, 1, 1]} : vector<5x5x96xf32> to vector<4x4x96xf32>
    %10 = vector.extract_strided_slice %8 {offsets = [0, 0], sizes = [1, 96], strides = [1, 1]} : vector<9x96xf32> to vector<1x96xf32>
    %11 = vector.shape_cast %10 : vector<1x96xf32> to vector<96xf32>
    %12 = vector.shape_cast %11 : vector<96xf32> to vector<1x1x96xf32>
    %13 = vector.broadcast %12 : vector<1x1x96xf32> to vector<4x4x96xf32>
    %14 = arith.mulf %9, %13 : vector<4x4x96xf32>
    %15 = vector.extract_strided_slice %3 {offsets = [0, 0, 0], sizes = [4, 4, 96], strides = [1, 1, 1]} : vector<5x5x96xf32> to vector<4x4x96xf32>
    %16 = vector.extract_strided_slice %8 {offsets = [1, 0], sizes = [1, 96], strides = [1, 1]} : vector<9x96xf32> to vector<1x96xf32>
    %17 = vector.shape_cast %16 : vector<1x96xf32> to vector<96xf32>
    %18 = vector.shape_cast %17 : vector<96xf32> to vector<1x1x96xf32>
    %19 = vector.broadcast %18 : vector<1x1x96xf32> to vector<4x4x96xf32>
    %20 = arith.mulf %15, %19 : vector<4x4x96xf32>
    %21 = arith.addf %14, %20 : vector<4x4x96xf32>
    %22 = vector.extract_strided_slice %1 {offsets = [0, 1, 0], sizes = [4, 4, 96], strides = [1, 1, 1]} : vector<5x5x96xf32> to vector<4x4x96xf32>
    %23 = vector.extract_strided_slice %8 {offsets = [2, 0], sizes = [1, 96], strides = [1, 1]} : vector<9x96xf32> to vector<1x96xf32>
    %24 = vector.shape_cast %23 : vector<1x96xf32> to vector<96xf32>
    %25 = vector.shape_cast %24 : vector<96xf32> to vector<1x1x96xf32>
    %26 = vector.broadcast %25 : vector<1x1x96xf32> to vector<4x4x96xf32>
    %27 = arith.mulf %22, %26 : vector<4x4x96xf32>
    %28 = arith.addf %21, %27 : vector<4x4x96xf32>
    %29 = vector.extract_strided_slice %5 {offsets = [0, 0, 0], sizes = [4, 4, 96], strides = [1, 1, 1]} : vector<5x5x96xf32> to vector<4x4x96xf32>
    %30 = vector.extract_strided_slice %8 {offsets = [3, 0], sizes = [1, 96], strides = [1, 1]} : vector<9x96xf32> to vector<1x96xf32>
    %31 = vector.shape_cast %30 : vector<1x96xf32> to vector<96xf32>
    %32 = vector.shape_cast %31 : vector<96xf32> to vector<1x1x96xf32>
    %33 = vector.broadcast %32 : vector<1x1x96xf32> to vector<4x4x96xf32>
    %34 = arith.mulf %29, %33 : vector<4x4x96xf32>
    %35 = arith.addf %28, %34 : vector<4x4x96xf32>
    %36 = vector.extract_strided_slice %7 {offsets = [0, 0, 0], sizes = [4, 4, 96], strides = [1, 1, 1]} : vector<5x5x96xf32> to vector<4x4x96xf32>
    %37 = vector.extract_strided_slice %8 {offsets = [4, 0], sizes = [1, 96], strides = [1, 1]} : vector<9x96xf32> to vector<1x96xf32>
    %38 = vector.shape_cast %37 : vector<1x96xf32> to vector<96xf32>
    %39 = vector.shape_cast %38 : vector<96xf32> to vector<1x1x96xf32>
    %40 = vector.broadcast %39 : vector<1x1x96xf32> to vector<4x4x96xf32>
    %41 = arith.mulf %36, %40 : vector<4x4x96xf32>
    %42 = arith.addf %35, %41 : vector<4x4x96xf32>
    %43 = vector.extract_strided_slice %5 {offsets = [0, 1, 0], sizes = [4, 4, 96], strides = [1, 1, 1]} : vector<5x5x96xf32> to vector<4x4x96xf32>
    %44 = vector.extract_strided_slice %8 {offsets = [5, 0], sizes = [1, 96], strides = [1, 1]} : vector<9x96xf32> to vector<1x96xf32>
    %45 = vector.shape_cast %44 : vector<1x96xf32> to vector<96xf32>
    %46 = vector.shape_cast %45 : vector<96xf32> to vector<1x1x96xf32>
    %47 = vector.broadcast %46 : vector<1x1x96xf32> to vector<4x4x96xf32>
    %48 = arith.mulf %43, %47 : vector<4x4x96xf32>
    %49 = arith.addf %42, %48 : vector<4x4x96xf32>
    %50 = vector.extract_strided_slice %1 {offsets = [1, 0, 0], sizes = [4, 4, 96], strides = [1, 1, 1]} : vector<5x5x96xf32> to vector<4x4x96xf32>
    %51 = vector.extract_strided_slice %8 {offsets = [6, 0], sizes = [1, 96], strides = [1, 1]} : vector<9x96xf32> to vector<1x96xf32>
    %52 = vector.shape_cast %51 : vector<1x96xf32> to vector<96xf32>
    %53 = vector.shape_cast %52 : vector<96xf32> to vector<1x1x96xf32>
    %54 = vector.broadcast %53 : vector<1x1x96xf32> to vector<4x4x96xf32>
    %55 = arith.mulf %50, %54 : vector<4x4x96xf32>
    %56 = arith.addf %49, %55 : vector<4x4x96xf32>
    %57 = vector.extract_strided_slice %3 {offsets = [1, 0, 0], sizes = [4, 4, 96], strides = [1, 1, 1]} : vector<5x5x96xf32> to vector<4x4x96xf32>
    %58 = vector.extract_strided_slice %8 {offsets = [7, 0], sizes = [1, 96], strides = [1, 1]} : vector<9x96xf32> to vector<1x96xf32>
    %59 = vector.shape_cast %58 : vector<1x96xf32> to vector<96xf32>
    %60 = vector.shape_cast %59 : vector<96xf32> to vector<1x1x96xf32>
    %61 = vector.broadcast %60 : vector<1x1x96xf32> to vector<4x4x96xf32>
    %62 = arith.mulf %57, %61 : vector<4x4x96xf32>
    %63 = arith.addf %56, %62 : vector<4x4x96xf32>
    %64 = vector.extract_strided_slice %1 {offsets = [1, 1, 0], sizes = [4, 4, 96], strides = [1, 1, 1]} : vector<5x5x96xf32> to vector<4x4x96xf32>
    %65 = vector.extract_strided_slice %8 {offsets = [8, 0], sizes = [1, 96], strides = [1, 1]} : vector<9x96xf32> to vector<1x96xf32>
    %66 = vector.shape_cast %65 : vector<1x96xf32> to vector<96xf32>
    %67 = vector.shape_cast %66 : vector<96xf32> to vector<1x1x96xf32>
    %68 = vector.broadcast %67 : vector<1x1x96xf32> to vector<4x4x96xf32>
    %69 = arith.mulf %64, %68 : vector<4x4x96xf32>
    %70 = arith.addf %63, %69 : vector<4x4x96xf32>
    %c0_17 = arith.constant 0 : index
    %c0_18 = arith.constant 0 : index
    %71 = vector.load %arg6[%c0_17, %c0_18] : memref<1x96xf32, #tpu.memory_space<vmem>>, vector<1x96xf32>
    %72 = vector.shape_cast %71 : vector<1x96xf32> to vector<96xf32>
    %73 = vector.shape_cast %72 : vector<96xf32> to vector<1x1x96xf32>
    %74 = vector.broadcast %73 : vector<1x1x96xf32> to vector<4x4x96xf32>
    %75 = arith.addf %70, %74 : vector<4x4x96xf32>
    %cst = arith.constant 0.000000e+00 : f32
    %cst_19 = arith.constant 6.000000e+00 : f32
    %76 = vector.broadcast %cst : f32 to vector<4x4x96xf32>
    %77 = arith.maximumf %76, %75 : vector<4x4x96xf32>
    %78 = vector.broadcast %cst_19 : f32 to vector<4x4x96xf32>
    %79 = arith.minimumf %78, %77 : vector<4x4x96xf32>
    %c0_20 = arith.constant 0 : index
    %c0_21 = arith.constant 0 : index
    %c0_22 = arith.constant 0 : index
    %c0_23 = arith.constant 0 : index
    %80 = vector.load %arg7[%c0_20, %c0_21, %c0_22, %c0_23] : memref<1x4x4x96xf32, #tpu.memory_space<vmem>>, vector<1x4x4x96xf32>
    %81 = vector.shape_cast %80 : vector<1x4x4x96xf32> to vector<4x4x96xf32>
    %82 = vector.shape_cast %79 : vector<4x4x96xf32> to vector<1x4x4x96xf32>
    tpu.vector_store %arg7[%c0_20, %c0_21, %c0_22, %c0_23], %82 {strides = array<i32>} : memref<1x4x4x96xf32, #tpu.memory_space<vmem>>, vector<1x4x4x96xf32>,
    return
  }
  func.func @transform_0(%arg0: i32) -> (i32, i32, i32, i32) {
    %c0_i32 = arith.constant 0 : i32
    %c0_i32_0 = arith.constant 0 : i32
    %c0_i32_1 = arith.constant 0 : i32
    %c0_i32_2 = arith.constant 0 : i32
    return %arg0, %c0_i32, %c0_i32_0, %c0_i32_1 : i32, i32, i32, i32
  }
  func.func @transform_1(%arg0: i32) -> (i32, i32, i32, i32) {
    %c0_i32 = arith.constant 0 : i32
    %c0_i32_0 = arith.constant 0 : i32
    %c0_i32_1 = arith.constant 0 : i32
    %c0_i32_2 = arith.constant 0 : i32
    return %arg0, %c0_i32, %c0_i32_0, %c0_i32_1 : i32, i32, i32, i32
  }
  func.func @transform_2(%arg0: i32) -> (i32, i32, i32, i32) {
    %c0_i32 = arith.constant 0 : i32
    %c0_i32_0 = arith.constant 0 : i32
    %c0_i32_1 = arith.constant 0 : i32
    %c0_i32_2 = arith.constant 0 : i32
    return %arg0, %c0_i32, %c0_i32_0, %c0_i32_1 : i32, i32, i32, i32
  }
  func.func @transform_3(%arg0: i32) -> (i32, i32, i32, i32) {
    %c0_i32 = arith.constant 0 : i32
    %c0_i32_0 = arith.constant 0 : i32
    %c0_i32_1 = arith.constant 0 : i32
    %c0_i32_2 = arith.constant 0 : i32
    return %arg0, %c0_i32, %c0_i32_0, %c0_i32_1 : i32, i32, i32, i32
  }
  func.func @transform_4(%arg0: i32) -> (i32, i32) {
    %c0_i32 = arith.constant 0 : i32
    %c0_i32_0 = arith.constant 0 : i32
    %c0_i32_1 = arith.constant 0 : i32
    return %c0_i32, %c0_i32_0 : i32, i32
  }
  func.func @transform_5(%arg0: i32) -> (i32, i32) {
    %c0_i32 = arith.constant 0 : i32
    %c0_i32_0 = arith.constant 0 : i32
    %c0_i32_1 = arith.constant 0 : i32
    return %c0_i32, %c0_i32_0 : i32, i32
  }
  func.func @transform_6(%arg0: i32) -> (i32, i32, i32, i32) {
    %c0_i32 = arith.constant 0 : i32
    %c0_i32_0 = arith.constant 0 : i32
    %c0_i32_1 = arith.constant 0 : i32
    %c0_i32_2 = arith.constant 0 : i32
    return %arg0, %c0_i32, %c0_i32_0, %c0_i32_1 : i32, i32, i32, i32
  }
}

module attributes {stable_mosaic.version = 11 : i64} {
  func.func @_mm_kernel(%arg0: i32, %arg1: i32, %arg2: i32, %arg3: memref<32x128xbf16, #tpu.memory_space<vmem>>, %arg4: memref<128x256xbf16, #tpu.memory_space<vmem>>, %arg5: memref<1x256xf32, #tpu.memory_space<vmem>>, %arg6: memref<32x256xf32, #tpu.memory_space<vmem>>, %arg7: memref<32x256xf32, #tpu.memory_space<vmem>>) attributes {dimension_semantics = [#tpu.dimension_semantics<parallel>, #tpu.dimension_semantics<parallel>, #tpu.dimension_semantics<arbitrary>], iteration_bounds = array<i64: 1, 1, 1>, scalar_prefetch = 0 : i64, scratch_operands = 1 : i64, tpu.core_type = #tpu.core_type<tc>, window_params = [{transform_indices = @transform_0, window_bounds = array<i64: 32, 128>}, {transform_indices = @transform_1, window_bounds = array<i64: 128, 256>}, {transform_indices = @transform_2, window_bounds = array<i64: 1, 256>}, {transform_indices = @transform_3, window_bounds = array<i64: 32, 256>}]} {
    %c0_i32 = arith.constant 0 : i32
    %0 = arith.cmpi eq, %arg2, %c0_i32 : i32
    %1 = arith.extui %0 : i1 to i32
    %c0_i32_0 = arith.constant 0 : i32
    %2 = arith.cmpi ne, %1, %c0_i32_0 : i32
    scf.if %2 {
      %cst_10 = arith.constant 0.000000e+00 : f32
      %12 = vector.broadcast %cst_10 : f32 to vector<32x256xf32>
      %c0_11 = arith.constant 0 : index
      %c0_12 = arith.constant 0 : index
      %13 = vector.load %arg7[%c0_11, %c0_12] : memref<32x256xf32, #tpu.memory_space<vmem>>, vector<32x256xf32>
      tpu.vector_store %arg7[%c0_11, %c0_12], %12 {strides = array<i32>} : memref<32x256xf32, #tpu.memory_space<vmem>>, vector<32x256xf32>,
    } else {
    }
    %c0 = arith.constant 0 : index
    %c0_1 = arith.constant 0 : index
    %3 = vector.load %arg7[%c0, %c0_1] : memref<32x256xf32, #tpu.memory_space<vmem>>, vector<32x256xf32>
    %c0_2 = arith.constant 0 : index
    %c0_3 = arith.constant 0 : index
    %4 = vector.load %arg3[%c0_2, %c0_3] : memref<32x128xbf16, #tpu.memory_space<vmem>>, vector<32x128xbf16>
    %c0_4 = arith.constant 0 : index
    %c0_5 = arith.constant 0 : index
    %5 = vector.load %arg4[%c0_4, %c0_5] : memref<128x256xbf16, #tpu.memory_space<vmem>>, vector<128x256xbf16>
    %cst = arith.constant dense<0.000000e+00> : vector<32x256xf32>
    %6 = tpu.matmul %4, %5, %cst {dimension_numbers = #tpu.dot_dimension_numbers<[1], [0], [0], [1], [0, 0, 1, 1], [], []>} : vector<32x128xbf16>, vector<128x256xbf16>, vector<32x256xf32> -> vector<32x256xf32>
    %7 = arith.addf %3, %6 : vector<32x256xf32>
    %c0_6 = arith.constant 0 : index
    %c0_7 = arith.constant 0 : index
    %8 = vector.load %arg7[%c0_6, %c0_7] : memref<32x256xf32, #tpu.memory_space<vmem>>, vector<32x256xf32>
    tpu.vector_store %arg7[%c0_6, %c0_7], %7 {strides = array<i32>} : memref<32x256xf32, #tpu.memory_space<vmem>>, vector<32x256xf32>,
    %c0_i32_8 = arith.constant 0 : i32
    %9 = arith.cmpi eq, %arg2, %c0_i32_8 : i32
    %10 = arith.extui %9 : i1 to i32
    %c0_i32_9 = arith.constant 0 : i32
    %11 = arith.cmpi ne, %10, %c0_i32_9 : i32
    scf.if %11 {
      %c0_10 = arith.constant 0 : index
      %c0_11 = arith.constant 0 : index
      %12 = vector.load %arg7[%c0_10, %c0_11] : memref<32x256xf32, #tpu.memory_space<vmem>>, vector<32x256xf32>
      %c0_12 = arith.constant 0 : index
      %c0_13 = arith.constant 0 : index
      %13 = vector.load %arg5[%c0_12, %c0_13] : memref<1x256xf32, #tpu.memory_space<vmem>>, vector<1x256xf32>
      %14 = vector.broadcast %13 : vector<1x256xf32> to vector<32x256xf32>
      %15 = arith.addf %12, %14 : vector<32x256xf32>
      %cst_14 = arith.constant 0.000000e+00 : f32
      %cst_15 = arith.constant 6.000000e+00 : f32
      %16 = vector.broadcast %cst_14 : f32 to vector<32x256xf32>
      %17 = arith.maximumf %16, %15 : vector<32x256xf32>
      %18 = vector.broadcast %cst_15 : f32 to vector<32x256xf32>
      %19 = arith.minimumf %18, %17 : vector<32x256xf32>
      %c0_16 = arith.constant 0 : index
      %c0_17 = arith.constant 0 : index
      %20 = vector.load %arg6[%c0_16, %c0_17] : memref<32x256xf32, #tpu.memory_space<vmem>>, vector<32x256xf32>
      tpu.vector_store %arg6[%c0_16, %c0_17], %19 {strides = array<i32>} : memref<32x256xf32, #tpu.memory_space<vmem>>, vector<32x256xf32>,
    } else {
    }
    return
  }
  func.func @transform_0(%arg0: i32, %arg1: i32, %arg2: i32) -> (i32, i32) {
    %c0_i32 = arith.constant 0 : i32
    return %arg0, %arg2 : i32, i32
  }
  func.func @transform_1(%arg0: i32, %arg1: i32, %arg2: i32) -> (i32, i32) {
    %c0_i32 = arith.constant 0 : i32
    return %arg2, %arg1 : i32, i32
  }
  func.func @transform_2(%arg0: i32, %arg1: i32, %arg2: i32) -> (i32, i32) {
    %c0_i32 = arith.constant 0 : i32
    %c0_i32_0 = arith.constant 0 : i32
    return %c0_i32, %arg1 : i32, i32
  }
  func.func @transform_3(%arg0: i32, %arg1: i32, %arg2: i32) -> (i32, i32) {
    %c0_i32 = arith.constant 0 : i32
    return %arg0, %arg1 : i32, i32
  }
}

module attributes {stable_mosaic.version = 11 : i64} {
  func.func @_dw_s1_kernel(%arg0: i32, %arg1: memref<1x6x6x144xf32, #tpu.memory_space<vmem>>, %arg2: memref<9x144xf32, #tpu.memory_space<vmem>>, %arg3: memref<1x144xf32, #tpu.memory_space<vmem>>, %arg4: memref<1x4x4x144xf32, #tpu.memory_space<vmem>>) attributes {dimension_semantics = [#tpu.dimension_semantics<parallel>], iteration_bounds = array<i64: 2>, scalar_prefetch = 0 : i64, scratch_operands = 0 : i64, tpu.core_type = #tpu.core_type<tc>, window_params = [{transform_indices = @transform_0, window_bounds = array<i64: 1, 6, 6, 144>}, {pipeline_mode = #tpu.pipeline_mode<synchronous>, transform_indices = @transform_1, window_bounds = array<i64: 9, 144>}, {pipeline_mode = #tpu.pipeline_mode<synchronous>, transform_indices = @transform_2, window_bounds = array<i64: 1, 144>}, {transform_indices = @transform_3, window_bounds = array<i64: 1, 4, 4, 144>}]} {
    %c0 = arith.constant 0 : index
    %c0_0 = arith.constant 0 : index
    %c0_1 = arith.constant 0 : index
    %c0_2 = arith.constant 0 : index
    %0 = vector.load %arg1[%c0, %c0_0, %c0_1, %c0_2] : memref<1x6x6x144xf32, #tpu.memory_space<vmem>>, vector<1x6x6x144xf32>
    %1 = vector.shape_cast %0 : vector<1x6x6x144xf32> to vector<6x6x144xf32>
    %c0_3 = arith.constant 0 : index
    %c0_4 = arith.constant 0 : index
    %2 = vector.load %arg2[%c0_3, %c0_4] : memref<9x144xf32, #tpu.memory_space<vmem>>, vector<9x144xf32>
    %3 = vector.extract_strided_slice %1 {offsets = [0, 0, 0], sizes = [4, 4, 144], strides = [1, 1, 1]} : vector<6x6x144xf32> to vector<4x4x144xf32>
    %4 = vector.extract_strided_slice %2 {offsets = [0, 0], sizes = [1, 144], strides = [1, 1]} : vector<9x144xf32> to vector<1x144xf32>
    %5 = vector.shape_cast %4 : vector<1x144xf32> to vector<144xf32>
    %6 = vector.shape_cast %5 : vector<144xf32> to vector<1x1x144xf32>
    %7 = vector.broadcast %6 : vector<1x1x144xf32> to vector<4x4x144xf32>
    %8 = arith.mulf %3, %7 : vector<4x4x144xf32>
    %9 = vector.extract_strided_slice %1 {offsets = [0, 1, 0], sizes = [4, 4, 144], strides = [1, 1, 1]} : vector<6x6x144xf32> to vector<4x4x144xf32>
    %10 = vector.extract_strided_slice %2 {offsets = [1, 0], sizes = [1, 144], strides = [1, 1]} : vector<9x144xf32> to vector<1x144xf32>
    %11 = vector.shape_cast %10 : vector<1x144xf32> to vector<144xf32>
    %12 = vector.shape_cast %11 : vector<144xf32> to vector<1x1x144xf32>
    %13 = vector.broadcast %12 : vector<1x1x144xf32> to vector<4x4x144xf32>
    %14 = arith.mulf %9, %13 : vector<4x4x144xf32>
    %15 = arith.addf %8, %14 : vector<4x4x144xf32>
    %16 = vector.extract_strided_slice %1 {offsets = [0, 2, 0], sizes = [4, 4, 144], strides = [1, 1, 1]} : vector<6x6x144xf32> to vector<4x4x144xf32>
    %17 = vector.extract_strided_slice %2 {offsets = [2, 0], sizes = [1, 144], strides = [1, 1]} : vector<9x144xf32> to vector<1x144xf32>
    %18 = vector.shape_cast %17 : vector<1x144xf32> to vector<144xf32>
    %19 = vector.shape_cast %18 : vector<144xf32> to vector<1x1x144xf32>
    %20 = vector.broadcast %19 : vector<1x1x144xf32> to vector<4x4x144xf32>
    %21 = arith.mulf %16, %20 : vector<4x4x144xf32>
    %22 = arith.addf %15, %21 : vector<4x4x144xf32>
    %23 = vector.extract_strided_slice %1 {offsets = [1, 0, 0], sizes = [4, 4, 144], strides = [1, 1, 1]} : vector<6x6x144xf32> to vector<4x4x144xf32>
    %24 = vector.extract_strided_slice %2 {offsets = [3, 0], sizes = [1, 144], strides = [1, 1]} : vector<9x144xf32> to vector<1x144xf32>
    %25 = vector.shape_cast %24 : vector<1x144xf32> to vector<144xf32>
    %26 = vector.shape_cast %25 : vector<144xf32> to vector<1x1x144xf32>
    %27 = vector.broadcast %26 : vector<1x1x144xf32> to vector<4x4x144xf32>
    %28 = arith.mulf %23, %27 : vector<4x4x144xf32>
    %29 = arith.addf %22, %28 : vector<4x4x144xf32>
    %30 = vector.extract_strided_slice %1 {offsets = [1, 1, 0], sizes = [4, 4, 144], strides = [1, 1, 1]} : vector<6x6x144xf32> to vector<4x4x144xf32>
    %31 = vector.extract_strided_slice %2 {offsets = [4, 0], sizes = [1, 144], strides = [1, 1]} : vector<9x144xf32> to vector<1x144xf32>
    %32 = vector.shape_cast %31 : vector<1x144xf32> to vector<144xf32>
    %33 = vector.shape_cast %32 : vector<144xf32> to vector<1x1x144xf32>
    %34 = vector.broadcast %33 : vector<1x1x144xf32> to vector<4x4x144xf32>
    %35 = arith.mulf %30, %34 : vector<4x4x144xf32>
    %36 = arith.addf %29, %35 : vector<4x4x144xf32>
    %37 = vector.extract_strided_slice %1 {offsets = [1, 2, 0], sizes = [4, 4, 144], strides = [1, 1, 1]} : vector<6x6x144xf32> to vector<4x4x144xf32>
    %38 = vector.extract_strided_slice %2 {offsets = [5, 0], sizes = [1, 144], strides = [1, 1]} : vector<9x144xf32> to vector<1x144xf32>
    %39 = vector.shape_cast %38 : vector<1x144xf32> to vector<144xf32>
    %40 = vector.shape_cast %39 : vector<144xf32> to vector<1x1x144xf32>
    %41 = vector.broadcast %40 : vector<1x1x144xf32> to vector<4x4x144xf32>
    %42 = arith.mulf %37, %41 : vector<4x4x144xf32>
    %43 = arith.addf %36, %42 : vector<4x4x144xf32>
    %44 = vector.extract_strided_slice %1 {offsets = [2, 0, 0], sizes = [4, 4, 144], strides = [1, 1, 1]} : vector<6x6x144xf32> to vector<4x4x144xf32>
    %45 = vector.extract_strided_slice %2 {offsets = [6, 0], sizes = [1, 144], strides = [1, 1]} : vector<9x144xf32> to vector<1x144xf32>
    %46 = vector.shape_cast %45 : vector<1x144xf32> to vector<144xf32>
    %47 = vector.shape_cast %46 : vector<144xf32> to vector<1x1x144xf32>
    %48 = vector.broadcast %47 : vector<1x1x144xf32> to vector<4x4x144xf32>
    %49 = arith.mulf %44, %48 : vector<4x4x144xf32>
    %50 = arith.addf %43, %49 : vector<4x4x144xf32>
    %51 = vector.extract_strided_slice %1 {offsets = [2, 1, 0], sizes = [4, 4, 144], strides = [1, 1, 1]} : vector<6x6x144xf32> to vector<4x4x144xf32>
    %52 = vector.extract_strided_slice %2 {offsets = [7, 0], sizes = [1, 144], strides = [1, 1]} : vector<9x144xf32> to vector<1x144xf32>
    %53 = vector.shape_cast %52 : vector<1x144xf32> to vector<144xf32>
    %54 = vector.shape_cast %53 : vector<144xf32> to vector<1x1x144xf32>
    %55 = vector.broadcast %54 : vector<1x1x144xf32> to vector<4x4x144xf32>
    %56 = arith.mulf %51, %55 : vector<4x4x144xf32>
    %57 = arith.addf %50, %56 : vector<4x4x144xf32>
    %58 = vector.extract_strided_slice %1 {offsets = [2, 2, 0], sizes = [4, 4, 144], strides = [1, 1, 1]} : vector<6x6x144xf32> to vector<4x4x144xf32>
    %59 = vector.extract_strided_slice %2 {offsets = [8, 0], sizes = [1, 144], strides = [1, 1]} : vector<9x144xf32> to vector<1x144xf32>
    %60 = vector.shape_cast %59 : vector<1x144xf32> to vector<144xf32>
    %61 = vector.shape_cast %60 : vector<144xf32> to vector<1x1x144xf32>
    %62 = vector.broadcast %61 : vector<1x1x144xf32> to vector<4x4x144xf32>
    %63 = arith.mulf %58, %62 : vector<4x4x144xf32>
    %64 = arith.addf %57, %63 : vector<4x4x144xf32>
    %c0_5 = arith.constant 0 : index
    %c0_6 = arith.constant 0 : index
    %65 = vector.load %arg3[%c0_5, %c0_6] : memref<1x144xf32, #tpu.memory_space<vmem>>, vector<1x144xf32>
    %66 = vector.shape_cast %65 : vector<1x144xf32> to vector<144xf32>
    %67 = vector.shape_cast %66 : vector<144xf32> to vector<1x1x144xf32>
    %68 = vector.broadcast %67 : vector<1x1x144xf32> to vector<4x4x144xf32>
    %69 = arith.addf %64, %68 : vector<4x4x144xf32>
    %cst = arith.constant 0.000000e+00 : f32
    %cst_7 = arith.constant 6.000000e+00 : f32
    %70 = vector.broadcast %cst : f32 to vector<4x4x144xf32>
    %71 = arith.maximumf %70, %69 : vector<4x4x144xf32>
    %72 = vector.broadcast %cst_7 : f32 to vector<4x4x144xf32>
    %73 = arith.minimumf %72, %71 : vector<4x4x144xf32>
    %c0_8 = arith.constant 0 : index
    %c0_9 = arith.constant 0 : index
    %c0_10 = arith.constant 0 : index
    %c0_11 = arith.constant 0 : index
    %74 = vector.load %arg4[%c0_8, %c0_9, %c0_10, %c0_11] : memref<1x4x4x144xf32, #tpu.memory_space<vmem>>, vector<1x4x4x144xf32>
    %75 = vector.shape_cast %74 : vector<1x4x4x144xf32> to vector<4x4x144xf32>
    %76 = vector.shape_cast %73 : vector<4x4x144xf32> to vector<1x4x4x144xf32>
    tpu.vector_store %arg4[%c0_8, %c0_9, %c0_10, %c0_11], %76 {strides = array<i32>} : memref<1x4x4x144xf32, #tpu.memory_space<vmem>>, vector<1x4x4x144xf32>,
    return
  }
  func.func @transform_0(%arg0: i32) -> (i32, i32, i32, i32) {
    %c0_i32 = arith.constant 0 : i32
    %c0_i32_0 = arith.constant 0 : i32
    %c0_i32_1 = arith.constant 0 : i32
    %c0_i32_2 = arith.constant 0 : i32
    return %arg0, %c0_i32, %c0_i32_0, %c0_i32_1 : i32, i32, i32, i32
  }
  func.func @transform_1(%arg0: i32) -> (i32, i32) {
    %c0_i32 = arith.constant 0 : i32
    %c0_i32_0 = arith.constant 0 : i32
    %c0_i32_1 = arith.constant 0 : i32
    return %c0_i32, %c0_i32_0 : i32, i32
  }
  func.func @transform_2(%arg0: i32) -> (i32, i32) {
    %c0_i32 = arith.constant 0 : i32
    %c0_i32_0 = arith.constant 0 : i32
    %c0_i32_1 = arith.constant 0 : i32
    return %c0_i32, %c0_i32_0 : i32, i32
  }
  func.func @transform_3(%arg0: i32) -> (i32, i32, i32, i32) {
    %c0_i32 = arith.constant 0 : i32
    %c0_i32_0 = arith.constant 0 : i32
    %c0_i32_1 = arith.constant 0 : i32
    %c0_i32_2 = arith.constant 0 : i32
    return %arg0, %c0_i32, %c0_i32_0, %c0_i32_1 : i32, i32, i32, i32
  }
}

module attributes {stable_mosaic.version = 11 : i64} {
  func.func @_mm_kernel(%arg0: i32, %arg1: i32, %arg2: i32, %arg3: memref<32x256xbf16, #tpu.memory_space<vmem>>, %arg4: memref<256x128xbf16, #tpu.memory_space<vmem>>, %arg5: memref<1x128xf32, #tpu.memory_space<vmem>>, %arg6: memref<32x128xf32, #tpu.memory_space<vmem>>, %arg7: memref<32x128xf32, #tpu.memory_space<vmem>>, %arg8: memref<32x128xf32, #tpu.memory_space<vmem>>) attributes {dimension_semantics = [#tpu.dimension_semantics<parallel>, #tpu.dimension_semantics<parallel>, #tpu.dimension_semantics<arbitrary>], iteration_bounds = array<i64: 1, 1, 1>, scalar_prefetch = 0 : i64, scratch_operands = 1 : i64, tpu.core_type = #tpu.core_type<tc>, window_params = [{transform_indices = @transform_0, window_bounds = array<i64: 32, 256>}, {transform_indices = @transform_1, window_bounds = array<i64: 256, 128>}, {transform_indices = @transform_2, window_bounds = array<i64: 1, 128>}, {transform_indices = @transform_3, window_bounds = array<i64: 32, 128>}, {transform_indices = @transform_4, window_bounds = array<i64: 32, 128>}]} {
    %c0_i32 = arith.constant 0 : i32
    %0 = arith.cmpi eq, %arg2, %c0_i32 : i32
    %1 = arith.extui %0 : i1 to i32
    %c0_i32_0 = arith.constant 0 : i32
    %2 = arith.cmpi ne, %1, %c0_i32_0 : i32
    scf.if %2 {
      %cst_10 = arith.constant 0.000000e+00 : f32
      %12 = vector.broadcast %cst_10 : f32 to vector<32x128xf32>
      %c0_11 = arith.constant 0 : index
      %c0_12 = arith.constant 0 : index
      %13 = vector.load %arg8[%c0_11, %c0_12] : memref<32x128xf32, #tpu.memory_space<vmem>>, vector<32x128xf32>
      tpu.vector_store %arg8[%c0_11, %c0_12], %12 {strides = array<i32>} : memref<32x128xf32, #tpu.memory_space<vmem>>, vector<32x128xf32>,
    } else {
    }
    %c0 = arith.constant 0 : index
    %c0_1 = arith.constant 0 : index
    %3 = vector.load %arg8[%c0, %c0_1] : memref<32x128xf32, #tpu.memory_space<vmem>>, vector<32x128xf32>
    %c0_2 = arith.constant 0 : index
    %c0_3 = arith.constant 0 : index
    %4 = vector.load %arg3[%c0_2, %c0_3] : memref<32x256xbf16, #tpu.memory_space<vmem>>, vector<32x256xbf16>
    %c0_4 = arith.constant 0 : index
    %c0_5 = arith.constant 0 : index
    %5 = vector.load %arg4[%c0_4, %c0_5] : memref<256x128xbf16, #tpu.memory_space<vmem>>, vector<256x128xbf16>
    %cst = arith.constant dense<0.000000e+00> : vector<32x128xf32>
    %6 = tpu.matmul %4, %5, %cst {dimension_numbers = #tpu.dot_dimension_numbers<[1], [0], [0], [1], [0, 0, 1, 1], [], []>} : vector<32x256xbf16>, vector<256x128xbf16>, vector<32x128xf32> -> vector<32x128xf32>
    %7 = arith.addf %3, %6 : vector<32x128xf32>
    %c0_6 = arith.constant 0 : index
    %c0_7 = arith.constant 0 : index
    %8 = vector.load %arg8[%c0_6, %c0_7] : memref<32x128xf32, #tpu.memory_space<vmem>>, vector<32x128xf32>
    tpu.vector_store %arg8[%c0_6, %c0_7], %7 {strides = array<i32>} : memref<32x128xf32, #tpu.memory_space<vmem>>, vector<32x128xf32>,
    %c0_i32_8 = arith.constant 0 : i32
    %9 = arith.cmpi eq, %arg2, %c0_i32_8 : i32
    %10 = arith.extui %9 : i1 to i32
    %c0_i32_9 = arith.constant 0 : i32
    %11 = arith.cmpi ne, %10, %c0_i32_9 : i32
    scf.if %11 {
      %c0_10 = arith.constant 0 : index
      %c0_11 = arith.constant 0 : index
      %12 = vector.load %arg8[%c0_10, %c0_11] : memref<32x128xf32, #tpu.memory_space<vmem>>, vector<32x128xf32>
      %c0_12 = arith.constant 0 : index
      %c0_13 = arith.constant 0 : index
      %13 = vector.load %arg5[%c0_12, %c0_13] : memref<1x128xf32, #tpu.memory_space<vmem>>, vector<1x128xf32>
      %14 = vector.broadcast %13 : vector<1x128xf32> to vector<32x128xf32>
      %15 = arith.addf %12, %14 : vector<32x128xf32>
      %c0_14 = arith.constant 0 : index
      %c0_15 = arith.constant 0 : index
      %16 = vector.load %arg6[%c0_14, %c0_15] : memref<32x128xf32, #tpu.memory_space<vmem>>, vector<32x128xf32>
      %17 = arith.addf %15, %16 : vector<32x128xf32>
      %c0_16 = arith.constant 0 : index
      %c0_17 = arith.constant 0 : index
      %18 = vector.load %arg7[%c0_16, %c0_17] : memref<32x128xf32, #tpu.memory_space<vmem>>, vector<32x128xf32>
      tpu.vector_store %arg7[%c0_16, %c0_17], %17 {strides = array<i32>} : memref<32x128xf32, #tpu.memory_space<vmem>>, vector<32x128xf32>,
    } else {
    }
    return
  }
  func.func @transform_0(%arg0: i32, %arg1: i32, %arg2: i32) -> (i32, i32) {
    %c0_i32 = arith.constant 0 : i32
    return %arg0, %arg2 : i32, i32
  }
  func.func @transform_1(%arg0: i32, %arg1: i32, %arg2: i32) -> (i32, i32) {
    %c0_i32 = arith.constant 0 : i32
    return %arg2, %arg1 : i32, i32
  }
  func.func @transform_2(%arg0: i32, %arg1: i32, %arg2: i32) -> (i32, i32) {
    %c0_i32 = arith.constant 0 : i32
    %c0_i32_0 = arith.constant 0 : i32
    return %c0_i32, %arg1 : i32, i32
  }
  func.func @transform_3(%arg0: i32, %arg1: i32, %arg2: i32) -> (i32, i32) {
    %c0_i32 = arith.constant 0 : i32
    return %arg0, %arg1 : i32, i32
  }
  func.func @transform_4(%arg0: i32, %arg1: i32, %arg2: i32) -> (i32, i32) {
    %c0_i32 = arith.constant 0 : i32
    return %arg0, %arg1 : i32, i32
  }
}

module attributes {stable_mosaic.version = 11 : i64} {
  func.func @_mm_kernel(%arg0: i32, %arg1: i32, %arg2: i32, %arg3: memref<8x128xbf16, #tpu.memory_space<vmem>>, %arg4: memref<128x128xbf16, #tpu.memory_space<vmem>>, %arg5: memref<1x128xf32, #tpu.memory_space<vmem>>, %arg6: memref<8x128xf32, #tpu.memory_space<vmem>>, %arg7: memref<8x128xf32, #tpu.memory_space<vmem>>) attributes {dimension_semantics = [#tpu.dimension_semantics<parallel>, #tpu.dimension_semantics<parallel>, #tpu.dimension_semantics<arbitrary>], iteration_bounds = array<i64: 1, 1, 1>, scalar_prefetch = 0 : i64, scratch_operands = 1 : i64, tpu.core_type = #tpu.core_type<tc>, window_params = [{transform_indices = @transform_0, window_bounds = array<i64: 8, 128>}, {transform_indices = @transform_1, window_bounds = array<i64: 128, 128>}, {transform_indices = @transform_2, window_bounds = array<i64: 1, 128>}, {transform_indices = @transform_3, window_bounds = array<i64: 8, 128>}]} {
    %c0_i32 = arith.constant 0 : i32
    %0 = arith.cmpi eq, %arg2, %c0_i32 : i32
    %1 = arith.extui %0 : i1 to i32
    %c0_i32_0 = arith.constant 0 : i32
    %2 = arith.cmpi ne, %1, %c0_i32_0 : i32
    scf.if %2 {
      %cst_10 = arith.constant 0.000000e+00 : f32
      %12 = vector.broadcast %cst_10 : f32 to vector<8x128xf32>
      %c0_11 = arith.constant 0 : index
      %c0_12 = arith.constant 0 : index
      %13 = vector.load %arg7[%c0_11, %c0_12] : memref<8x128xf32, #tpu.memory_space<vmem>>, vector<8x128xf32>
      tpu.vector_store %arg7[%c0_11, %c0_12], %12 {strides = array<i32>} : memref<8x128xf32, #tpu.memory_space<vmem>>, vector<8x128xf32>,
    } else {
    }
    %c0 = arith.constant 0 : index
    %c0_1 = arith.constant 0 : index
    %3 = vector.load %arg7[%c0, %c0_1] : memref<8x128xf32, #tpu.memory_space<vmem>>, vector<8x128xf32>
    %c0_2 = arith.constant 0 : index
    %c0_3 = arith.constant 0 : index
    %4 = vector.load %arg3[%c0_2, %c0_3] : memref<8x128xbf16, #tpu.memory_space<vmem>>, vector<8x128xbf16>
    %c0_4 = arith.constant 0 : index
    %c0_5 = arith.constant 0 : index
    %5 = vector.load %arg4[%c0_4, %c0_5] : memref<128x128xbf16, #tpu.memory_space<vmem>>, vector<128x128xbf16>
    %cst = arith.constant dense<0.000000e+00> : vector<8x128xf32>
    %6 = tpu.matmul %4, %5, %cst {dimension_numbers = #tpu.dot_dimension_numbers<[1], [0], [0], [1], [0, 0, 1, 1], [], []>} : vector<8x128xbf16>, vector<128x128xbf16>, vector<8x128xf32> -> vector<8x128xf32>
    %7 = arith.addf %3, %6 : vector<8x128xf32>
    %c0_6 = arith.constant 0 : index
    %c0_7 = arith.constant 0 : index
    %8 = vector.load %arg7[%c0_6, %c0_7] : memref<8x128xf32, #tpu.memory_space<vmem>>, vector<8x128xf32>
    tpu.vector_store %arg7[%c0_6, %c0_7], %7 {strides = array<i32>} : memref<8x128xf32, #tpu.memory_space<vmem>>, vector<8x128xf32>,
    %c0_i32_8 = arith.constant 0 : i32
    %9 = arith.cmpi eq, %arg2, %c0_i32_8 : i32
    %10 = arith.extui %9 : i1 to i32
    %c0_i32_9 = arith.constant 0 : i32
    %11 = arith.cmpi ne, %10, %c0_i32_9 : i32
    scf.if %11 {
      %c0_10 = arith.constant 0 : index
      %c0_11 = arith.constant 0 : index
      %12 = vector.load %arg7[%c0_10, %c0_11] : memref<8x128xf32, #tpu.memory_space<vmem>>, vector<8x128xf32>
      %c0_12 = arith.constant 0 : index
      %c0_13 = arith.constant 0 : index
      %13 = vector.load %arg5[%c0_12, %c0_13] : memref<1x128xf32, #tpu.memory_space<vmem>>, vector<1x128xf32>
      %14 = vector.broadcast %13 : vector<1x128xf32> to vector<8x128xf32>
      %15 = arith.addf %12, %14 : vector<8x128xf32>
      %c0_14 = arith.constant 0 : index
      %c0_15 = arith.constant 0 : index
      %16 = vector.load %arg6[%c0_14, %c0_15] : memref<8x128xf32, #tpu.memory_space<vmem>>, vector<8x128xf32>
      tpu.vector_store %arg6[%c0_14, %c0_15], %15 {strides = array<i32>} : memref<8x128xf32, #tpu.memory_space<vmem>>, vector<8x128xf32>,
    } else {
    }
    return
  }
  func.func @transform_0(%arg0: i32, %arg1: i32, %arg2: i32) -> (i32, i32) {
    %c0_i32 = arith.constant 0 : i32
    return %arg0, %arg2 : i32, i32
  }
  func.func @transform_1(%arg0: i32, %arg1: i32, %arg2: i32) -> (i32, i32) {
    %c0_i32 = arith.constant 0 : i32
    return %arg2, %arg1 : i32, i32
  }
  func.func @transform_2(%arg0: i32, %arg1: i32, %arg2: i32) -> (i32, i32) {
    %c0_i32 = arith.constant 0 : i32
    %c0_i32_0 = arith.constant 0 : i32
    return %c0_i32, %arg1 : i32, i32
  }
  func.func @transform_3(%arg0: i32, %arg1: i32, %arg2: i32) -> (i32, i32) {
    %c0_i32 = arith.constant 0 : i32
    return %arg0, %arg1 : i32, i32
  }
}

module attributes {stable_mosaic.version = 11 : i64} {
  func.func @_ln_add_kernel(%arg0: i32, %arg1: memref<8x32xf32, #tpu.memory_space<vmem>>, %arg2: memref<1x32xf32, #tpu.memory_space<vmem>>, %arg3: memref<1x32xf32, #tpu.memory_space<vmem>>, %arg4: memref<8x32xf32, #tpu.memory_space<vmem>>, %arg5: memref<8x32xf32, #tpu.memory_space<vmem>>) attributes {dimension_semantics = [#tpu.dimension_semantics<parallel>], iteration_bounds = array<i64: 1>, scalar_prefetch = 0 : i64, scratch_operands = 0 : i64, tpu.core_type = #tpu.core_type<tc>, window_params = [{transform_indices = @transform_0, window_bounds = array<i64: 8, 32>}, {pipeline_mode = #tpu.pipeline_mode<synchronous>, transform_indices = @transform_1, window_bounds = array<i64: 1, 32>}, {pipeline_mode = #tpu.pipeline_mode<synchronous>, transform_indices = @transform_2, window_bounds = array<i64: 1, 32>}, {transform_indices = @transform_3, window_bounds = array<i64: 8, 32>}, {transform_indices = @transform_4, window_bounds = array<i64: 8, 32>}]} {
    %c0 = arith.constant 0 : index
    %c0_0 = arith.constant 0 : index
    %0 = vector.load %arg1[%c0, %c0_0] : memref<8x32xf32, #tpu.memory_space<vmem>>, vector<8x32xf32>
    %cst = arith.constant dense<0.000000e+00> : vector<8xf32>
    %1 = vector.multi_reduction <add>, %0, %cst [1] : vector<8x32xf32> to vector<8xf32>
    %2 = vector.shape_cast %1 : vector<8xf32> to vector<8x1xf32>
    %cst_1 = arith.constant 3.200000e+01 : f32
    %3 = vector.broadcast %cst_1 : f32 to vector<8x1xf32>
    %4 = arith.divf %2, %3 : vector<8x1xf32>
    %5 = vector.broadcast %4 : vector<8x1xf32> to vector<8x32xf32>
    %6 = arith.subf %0, %5 : vector<8x32xf32>
    %7 = arith.mulf %6, %6 : vector<8x32xf32>
    %cst_2 = arith.constant dense<0.000000e+00> : vector<8xf32>
    %8 = vector.multi_reduction <add>, %7, %cst_2 [1] : vector<8x32xf32> to vector<8xf32>
    %9 = vector.shape_cast %8 : vector<8xf32> to vector<8x1xf32>
    %cst_3 = arith.constant 3.200000e+01 : f32
    %10 = vector.broadcast %cst_3 : f32 to vector<8x1xf32>
    %11 = arith.divf %9, %10 : vector<8x1xf32>
    %cst_4 = arith.constant 9.99999974E-6 : f32
    %12 = vector.broadcast %cst_4 : f32 to vector<8x1xf32>
    %13 = arith.addf %11, %12 : vector<8x1xf32>
    %14 = math.rsqrt %13 : vector<8x1xf32>
    %15 = vector.broadcast %14 : vector<8x1xf32> to vector<8x32xf32>
    %16 = arith.mulf %6, %15 : vector<8x32xf32>
    %c0_5 = arith.constant 0 : index
    %c0_6 = arith.constant 0 : index
    %17 = vector.load %arg2[%c0_5, %c0_6] : memref<1x32xf32, #tpu.memory_space<vmem>>, vector<1x32xf32>
    %18 = vector.broadcast %17 : vector<1x32xf32> to vector<8x32xf32>
    %19 = arith.mulf %16, %18 : vector<8x32xf32>
    %c0_7 = arith.constant 0 : index
    %c0_8 = arith.constant 0 : index
    %20 = vector.load %arg3[%c0_7, %c0_8] : memref<1x32xf32, #tpu.memory_space<vmem>>, vector<1x32xf32>
    %21 = vector.broadcast %20 : vector<1x32xf32> to vector<8x32xf32>
    %22 = arith.addf %19, %21 : vector<8x32xf32>
    %c0_9 = arith.constant 0 : index
    %c0_10 = arith.constant 0 : index
    %23 = vector.load %arg4[%c0_9, %c0_10] : memref<8x32xf32, #tpu.memory_space<vmem>>, vector<8x32xf32>
    %24 = arith.addf %22, %23 : vector<8x32xf32>
    %c0_11 = arith.constant 0 : index
    %c0_12 = arith.constant 0 : index
    %25 = vector.load %arg5[%c0_11, %c0_12] : memref<8x32xf32, #tpu.memory_space<vmem>>, vector<8x32xf32>
    tpu.vector_store %arg5[%c0_11, %c0_12], %24 {strides = array<i32>} : memref<8x32xf32, #tpu.memory_space<vmem>>, vector<8x32xf32>,
    return
  }
  func.func @transform_0(%arg0: i32) -> (i32, i32) {
    %c0_i32 = arith.constant 0 : i32
    %c0_i32_0 = arith.constant 0 : i32
    return %arg0, %c0_i32 : i32, i32
  }
  func.func @transform_1(%arg0: i32) -> (i32, i32) {
    %c0_i32 = arith.constant 0 : i32
    %c0_i32_0 = arith.constant 0 : i32
    %c0_i32_1 = arith.constant 0 : i32
    return %c0_i32, %c0_i32_0 : i32, i32
  }
  func.func @transform_2(%arg0: i32) -> (i32, i32) {
    %c0_i32 = arith.constant 0 : i32
    %c0_i32_0 = arith.constant 0 : i32
    %c0_i32_1 = arith.constant 0 : i32
    return %c0_i32, %c0_i32_0 : i32, i32
  }
  func.func @transform_3(%arg0: i32) -> (i32, i32) {
    %c0_i32 = arith.constant 0 : i32
    %c0_i32_0 = arith.constant 0 : i32
    return %arg0, %c0_i32 : i32, i32
  }
  func.func @transform_4(%arg0: i32) -> (i32, i32) {
    %c0_i32 = arith.constant 0 : i32
    %c0_i32_0 = arith.constant 0 : i32
    return %arg0, %c0_i32 : i32, i32
  }
}

module attributes {stable_mosaic.version = 11 : i64} {
  func.func @_ln_mm_kernel(%arg0: i32, %arg1: i32, %arg2: memref<8x32xf32, #tpu.memory_space<vmem>>, %arg3: memref<1x32xf32, #tpu.memory_space<vmem>>, %arg4: memref<1x32xf32, #tpu.memory_space<vmem>>, %arg5: memref<32x128xbf16, #tpu.memory_space<vmem>>, %arg6: memref<1x128xf32, #tpu.memory_space<vmem>>, %arg7: memref<8x128xf32, #tpu.memory_space<vmem>>) attributes {dimension_semantics = [#tpu.dimension_semantics<parallel>, #tpu.dimension_semantics<parallel>], iteration_bounds = array<i64: 1, 1>, scalar_prefetch = 0 : i64, scratch_operands = 0 : i64, tpu.core_type = #tpu.core_type<tc>, window_params = [{transform_indices = @transform_0, window_bounds = array<i64: 8, 32>}, {pipeline_mode = #tpu.pipeline_mode<synchronous>, transform_indices = @transform_1, window_bounds = array<i64: 1, 32>}, {pipeline_mode = #tpu.pipeline_mode<synchronous>, transform_indices = @transform_2, window_bounds = array<i64: 1, 32>}, {transform_indices = @transform_3, window_bounds = array<i64: 32, 128>}, {transform_indices = @transform_4, window_bounds = array<i64: 1, 128>}, {transform_indices = @transform_5, window_bounds = array<i64: 8, 128>}]} {
    %c0 = arith.constant 0 : index
    %c0_0 = arith.constant 0 : index
    %0 = vector.load %arg2[%c0, %c0_0] : memref<8x32xf32, #tpu.memory_space<vmem>>, vector<8x32xf32>
    %cst = arith.constant dense<0.000000e+00> : vector<8xf32>
    %1 = vector.multi_reduction <add>, %0, %cst [1] : vector<8x32xf32> to vector<8xf32>
    %2 = vector.shape_cast %1 : vector<8xf32> to vector<8x1xf32>
    %cst_1 = arith.constant 3.200000e+01 : f32
    %3 = vector.broadcast %cst_1 : f32 to vector<8x1xf32>
    %4 = arith.divf %2, %3 : vector<8x1xf32>
    %5 = vector.broadcast %4 : vector<8x1xf32> to vector<8x32xf32>
    %6 = arith.subf %0, %5 : vector<8x32xf32>
    %7 = arith.mulf %6, %6 : vector<8x32xf32>
    %cst_2 = arith.constant dense<0.000000e+00> : vector<8xf32>
    %8 = vector.multi_reduction <add>, %7, %cst_2 [1] : vector<8x32xf32> to vector<8xf32>
    %9 = vector.shape_cast %8 : vector<8xf32> to vector<8x1xf32>
    %cst_3 = arith.constant 3.200000e+01 : f32
    %10 = vector.broadcast %cst_3 : f32 to vector<8x1xf32>
    %11 = arith.divf %9, %10 : vector<8x1xf32>
    %cst_4 = arith.constant 9.99999974E-6 : f32
    %12 = vector.broadcast %cst_4 : f32 to vector<8x1xf32>
    %13 = arith.addf %11, %12 : vector<8x1xf32>
    %14 = math.rsqrt %13 : vector<8x1xf32>
    %15 = vector.broadcast %14 : vector<8x1xf32> to vector<8x32xf32>
    %16 = arith.mulf %6, %15 : vector<8x32xf32>
    %c0_5 = arith.constant 0 : index
    %c0_6 = arith.constant 0 : index
    %17 = vector.load %arg3[%c0_5, %c0_6] : memref<1x32xf32, #tpu.memory_space<vmem>>, vector<1x32xf32>
    %18 = vector.broadcast %17 : vector<1x32xf32> to vector<8x32xf32>
    %19 = arith.mulf %16, %18 : vector<8x32xf32>
    %c0_7 = arith.constant 0 : index
    %c0_8 = arith.constant 0 : index
    %20 = vector.load %arg4[%c0_7, %c0_8] : memref<1x32xf32, #tpu.memory_space<vmem>>, vector<1x32xf32>
    %21 = vector.broadcast %20 : vector<1x32xf32> to vector<8x32xf32>
    %22 = arith.addf %19, %21 : vector<8x32xf32>
    %23 = arith.truncf %22 : vector<8x32xf32> to vector<8x32xbf16>
    %c0_9 = arith.constant 0 : index
    %c0_10 = arith.constant 0 : index
    %24 = vector.load %arg5[%c0_9, %c0_10] : memref<32x128xbf16, #tpu.memory_space<vmem>>, vector<32x128xbf16>
    %cst_11 = arith.constant dense<0.000000e+00> : vector<8x128xf32>
    %25 = tpu.matmul %23, %24, %cst_11 {dimension_numbers = #tpu.dot_dimension_numbers<[1], [0], [0], [1], [0, 0, 1, 1], [], []>} : vector<8x32xbf16>, vector<32x128xbf16>, vector<8x128xf32> -> vector<8x128xf32>
    %c0_12 = arith.constant 0 : index
    %c0_13 = arith.constant 0 : index
    %26 = vector.load %arg6[%c0_12, %c0_13] : memref<1x128xf32, #tpu.memory_space<vmem>>, vector<1x128xf32>
    %27 = vector.broadcast %26 : vector<1x128xf32> to vector<8x128xf32>
    %28 = arith.addf %25, %27 : vector<8x128xf32>
    %c0_14 = arith.constant 0 : index
    %c0_15 = arith.constant 0 : index
    %29 = vector.load %arg7[%c0_14, %c0_15] : memref<8x128xf32, #tpu.memory_space<vmem>>, vector<8x128xf32>
    tpu.vector_store %arg7[%c0_14, %c0_15], %28 {strides = array<i32>} : memref<8x128xf32, #tpu.memory_space<vmem>>, vector<8x128xf32>,
    return
  }
  func.func @transform_0(%arg0: i32, %arg1: i32) -> (i32, i32) {
    %c0_i32 = arith.constant 0 : i32
    %c0_i32_0 = arith.constant 0 : i32
    return %arg0, %c0_i32 : i32, i32
  }
  func.func @transform_1(%arg0: i32, %arg1: i32) -> (i32, i32) {
    %c0_i32 = arith.constant 0 : i32
    %c0_i32_0 = arith.constant 0 : i32
    %c0_i32_1 = arith.constant 0 : i32
    return %c0_i32, %c0_i32_0 : i32, i32
  }
  func.func @transform_2(%arg0: i32, %arg1: i32) -> (i32, i32) {
    %c0_i32 = arith.constant 0 : i32
    %c0_i32_0 = arith.constant 0 : i32
    %c0_i32_1 = arith.constant 0 : i32
    return %c0_i32, %c0_i32_0 : i32, i32
  }
  func.func @transform_3(%arg0: i32, %arg1: i32) -> (i32, i32) {
    %c0_i32 = arith.constant 0 : i32
    %c0_i32_0 = arith.constant 0 : i32
    return %c0_i32, %arg1 : i32, i32
  }
  func.func @transform_4(%arg0: i32, %arg1: i32) -> (i32, i32) {
    %c0_i32 = arith.constant 0 : i32
    %c0_i32_0 = arith.constant 0 : i32
    return %c0_i32, %arg1 : i32, i32
  }
  func.func @transform_5(%arg0: i32, %arg1: i32) -> (i32, i32) {
    %c0_i32 = arith.constant 0 : i32
    return %arg0, %arg1 : i32, i32
  }
}

module attributes {stable_mosaic.version = 11 : i64} {
  func.func @_attn_kernel(%arg0: i32, %arg1: memref<2x4x128xbf16, #tpu.memory_space<vmem>>, %arg2: memref<2x4x128xbf16, #tpu.memory_space<vmem>>, %arg3: memref<2x4x128xbf16, #tpu.memory_space<vmem>>, %arg4: memref<2x4x128xf32, #tpu.memory_space<vmem>>) attributes {dimension_semantics = [#tpu.dimension_semantics<parallel>], iteration_bounds = array<i64: 1>, scalar_prefetch = 0 : i64, scratch_operands = 0 : i64, tpu.core_type = #tpu.core_type<tc>, window_params = [{transform_indices = @transform_0, window_bounds = array<i64: 2, 4, 128>}, {transform_indices = @transform_1, window_bounds = array<i64: 2, 4, 128>}, {transform_indices = @transform_2, window_bounds = array<i64: 2, 4, 128>}, {transform_indices = @transform_3, window_bounds = array<i64: 2, 4, 128>}]} {
    %c0 = arith.constant 0 : index
    %c0_0 = arith.constant 0 : index
    %c0_1 = arith.constant 0 : index
    %0 = vector.load %arg1[%c0, %c0_0, %c0_1] : memref<2x4x128xbf16, #tpu.memory_space<vmem>>, vector<2x4x128xbf16>
    %c0_2 = arith.constant 0 : index
    %c0_3 = arith.constant 0 : index
    %c0_4 = arith.constant 0 : index
    %1 = vector.load %arg2[%c0_2, %c0_3, %c0_4] : memref<2x4x128xbf16, #tpu.memory_space<vmem>>, vector<2x4x128xbf16>
    "tpu.trace_start"() <{level = 10 : i32, message = "bqd,bkd->bqk"}> : () -> ()
    %cst = arith.constant dense<0.000000e+00> : vector<2x4x4xf32>
    %2 = tpu.matmul %0, %1, %cst {dimension_numbers = #tpu.dot_dimension_numbers<[2], [2], [1], [1], [0, 0, 0, 1, 1, 1], [0], [0]>} : vector<2x4x128xbf16>, vector<2x4x128xbf16>, vector<2x4x4xf32> -> vector<2x4x4xf32>
    "tpu.trace_stop"() : () -> ()
    %cst_5 = arith.constant 0.176776692 : f32
    %3 = vector.broadcast %cst_5 : f32 to vector<2x4x4xf32>
    %4 = arith.mulf %2, %3 : vector<2x4x4xf32>
    %cst_6 = arith.constant dense<0xFF800000> : vector<2x4xf32>
    %5 = vector.multi_reduction <maximumf>, %4, %cst_6 [2] : vector<2x4x4xf32> to vector<2x4xf32>
    %6 = vector.shape_cast %5 : vector<2x4xf32> to vector<2x4x1xf32>
    %7 = vector.broadcast %6 : vector<2x4x1xf32> to vector<2x4x4xf32>
    %8 = arith.subf %4, %7 : vector<2x4x4xf32>
    %9 = math.exp %8 : vector<2x4x4xf32>
    %cst_7 = arith.constant dense<0.000000e+00> : vector<2x4xf32>
    %10 = vector.multi_reduction <add>, %9, %cst_7 [2] : vector<2x4x4xf32> to vector<2x4xf32>
    %11 = vector.shape_cast %10 : vector<2x4xf32> to vector<2x4x1xf32>
    %12 = vector.broadcast %11 : vector<2x4x1xf32> to vector<2x4x4xf32>
    %13 = arith.divf %9, %12 : vector<2x4x4xf32>
    %14 = arith.truncf %13 : vector<2x4x4xf32> to vector<2x4x4xbf16>
    %c0_8 = arith.constant 0 : index
    %c0_9 = arith.constant 0 : index
    %c0_10 = arith.constant 0 : index
    %15 = vector.load %arg3[%c0_8, %c0_9, %c0_10] : memref<2x4x128xbf16, #tpu.memory_space<vmem>>, vector<2x4x128xbf16>
    "tpu.trace_start"() <{level = 10 : i32, message = "bqk,bkd->bqd"}> : () -> ()
    %cst_11 = arith.constant dense<0.000000e+00> : vector<2x4x128xf32>
    %16 = tpu.matmul %14, %15, %cst_11 {dimension_numbers = #tpu.dot_dimension_numbers<[2], [1], [1], [2], [0, 0, 0, 1, 1, 2], [0], [0]>} : vector<2x4x4xbf16>, vector<2x4x128xbf16>, vector<2x4x128xf32> -> vector<2x4x128xf32>
    "tpu.trace_stop"() : () -> ()
    %c0_12 = arith.constant 0 : index
    %c0_13 = arith.constant 0 : index
    %c0_14 = arith.constant 0 : index
    %17 = vector.load %arg4[%c0_12, %c0_13, %c0_14] : memref<2x4x128xf32, #tpu.memory_space<vmem>>, vector<2x4x128xf32>
    tpu.vector_store %arg4[%c0_12, %c0_13, %c0_14], %16 {strides = array<i32>} : memref<2x4x128xf32, #tpu.memory_space<vmem>>, vector<2x4x128xf32>,
    return
  }
  func.func @transform_0(%arg0: i32) -> (i32, i32, i32) {
    %c0_i32 = arith.constant 0 : i32
    %c0_i32_0 = arith.constant 0 : i32
    %c0_i32_1 = arith.constant 0 : i32
    return %arg0, %c0_i32, %c0_i32_0 : i32, i32, i32
  }
  func.func @transform_1(%arg0: i32) -> (i32, i32, i32) {
    %c0_i32 = arith.constant 0 : i32
    %c0_i32_0 = arith.constant 0 : i32
    %c0_i32_1 = arith.constant 0 : i32
    return %arg0, %c0_i32, %c0_i32_0 : i32, i32, i32
  }
  func.func @transform_2(%arg0: i32) -> (i32, i32, i32) {
    %c0_i32 = arith.constant 0 : i32
    %c0_i32_0 = arith.constant 0 : i32
    %c0_i32_1 = arith.constant 0 : i32
    return %arg0, %c0_i32, %c0_i32_0 : i32, i32, i32
  }
  func.func @transform_3(%arg0: i32) -> (i32, i32, i32) {
    %c0_i32 = arith.constant 0 : i32
    %c0_i32_0 = arith.constant 0 : i32
    %c0_i32_1 = arith.constant 0 : i32
    return %arg0, %c0_i32, %c0_i32_0 : i32, i32, i32
  }
}

module attributes {stable_mosaic.version = 11 : i64} {
  func.func @_mm_kernel(%arg0: i32, %arg1: i32, %arg2: i32, %arg3: memref<8x128xbf16, #tpu.memory_space<vmem>>, %arg4: memref<128x128xbf16, #tpu.memory_space<vmem>>, %arg5: memref<1x128xf32, #tpu.memory_space<vmem>>, %arg6: memref<8x128xf32, #tpu.memory_space<vmem>>, %arg7: memref<8x128xf32, #tpu.memory_space<vmem>>, %arg8: memref<8x128xf32, #tpu.memory_space<vmem>>) attributes {dimension_semantics = [#tpu.dimension_semantics<parallel>, #tpu.dimension_semantics<parallel>, #tpu.dimension_semantics<arbitrary>], iteration_bounds = array<i64: 1, 1, 1>, scalar_prefetch = 0 : i64, scratch_operands = 1 : i64, tpu.core_type = #tpu.core_type<tc>, window_params = [{transform_indices = @transform_0, window_bounds = array<i64: 8, 128>}, {transform_indices = @transform_1, window_bounds = array<i64: 128, 128>}, {transform_indices = @transform_2, window_bounds = array<i64: 1, 128>}, {transform_indices = @transform_3, window_bounds = array<i64: 8, 128>}, {transform_indices = @transform_4, window_bounds = array<i64: 8, 128>}]} {
    %c0_i32 = arith.constant 0 : i32
    %0 = arith.cmpi eq, %arg2, %c0_i32 : i32
    %1 = arith.extui %0 : i1 to i32
    %c0_i32_0 = arith.constant 0 : i32
    %2 = arith.cmpi ne, %1, %c0_i32_0 : i32
    scf.if %2 {
      %cst_10 = arith.constant 0.000000e+00 : f32
      %12 = vector.broadcast %cst_10 : f32 to vector<8x128xf32>
      %c0_11 = arith.constant 0 : index
      %c0_12 = arith.constant 0 : index
      %13 = vector.load %arg8[%c0_11, %c0_12] : memref<8x128xf32, #tpu.memory_space<vmem>>, vector<8x128xf32>
      tpu.vector_store %arg8[%c0_11, %c0_12], %12 {strides = array<i32>} : memref<8x128xf32, #tpu.memory_space<vmem>>, vector<8x128xf32>,
    } else {
    }
    %c0 = arith.constant 0 : index
    %c0_1 = arith.constant 0 : index
    %3 = vector.load %arg8[%c0, %c0_1] : memref<8x128xf32, #tpu.memory_space<vmem>>, vector<8x128xf32>
    %c0_2 = arith.constant 0 : index
    %c0_3 = arith.constant 0 : index
    %4 = vector.load %arg3[%c0_2, %c0_3] : memref<8x128xbf16, #tpu.memory_space<vmem>>, vector<8x128xbf16>
    %c0_4 = arith.constant 0 : index
    %c0_5 = arith.constant 0 : index
    %5 = vector.load %arg4[%c0_4, %c0_5] : memref<128x128xbf16, #tpu.memory_space<vmem>>, vector<128x128xbf16>
    %cst = arith.constant dense<0.000000e+00> : vector<8x128xf32>
    %6 = tpu.matmul %4, %5, %cst {dimension_numbers = #tpu.dot_dimension_numbers<[1], [0], [0], [1], [0, 0, 1, 1], [], []>} : vector<8x128xbf16>, vector<128x128xbf16>, vector<8x128xf32> -> vector<8x128xf32>
    %7 = arith.addf %3, %6 : vector<8x128xf32>
    %c0_6 = arith.constant 0 : index
    %c0_7 = arith.constant 0 : index
    %8 = vector.load %arg8[%c0_6, %c0_7] : memref<8x128xf32, #tpu.memory_space<vmem>>, vector<8x128xf32>
    tpu.vector_store %arg8[%c0_6, %c0_7], %7 {strides = array<i32>} : memref<8x128xf32, #tpu.memory_space<vmem>>, vector<8x128xf32>,
    %c0_i32_8 = arith.constant 0 : i32
    %9 = arith.cmpi eq, %arg2, %c0_i32_8 : i32
    %10 = arith.extui %9 : i1 to i32
    %c0_i32_9 = arith.constant 0 : i32
    %11 = arith.cmpi ne, %10, %c0_i32_9 : i32
    scf.if %11 {
      %c0_10 = arith.constant 0 : index
      %c0_11 = arith.constant 0 : index
      %12 = vector.load %arg8[%c0_10, %c0_11] : memref<8x128xf32, #tpu.memory_space<vmem>>, vector<8x128xf32>
      %c0_12 = arith.constant 0 : index
      %c0_13 = arith.constant 0 : index
      %13 = vector.load %arg5[%c0_12, %c0_13] : memref<1x128xf32, #tpu.memory_space<vmem>>, vector<1x128xf32>
      %14 = vector.broadcast %13 : vector<1x128xf32> to vector<8x128xf32>
      %15 = arith.addf %12, %14 : vector<8x128xf32>
      %c0_14 = arith.constant 0 : index
      %c0_15 = arith.constant 0 : index
      %16 = vector.load %arg6[%c0_14, %c0_15] : memref<8x128xf32, #tpu.memory_space<vmem>>, vector<8x128xf32>
      %17 = arith.addf %15, %16 : vector<8x128xf32>
      %c0_16 = arith.constant 0 : index
      %c0_17 = arith.constant 0 : index
      %18 = vector.load %arg7[%c0_16, %c0_17] : memref<8x128xf32, #tpu.memory_space<vmem>>, vector<8x128xf32>
      tpu.vector_store %arg7[%c0_16, %c0_17], %17 {strides = array<i32>} : memref<8x128xf32, #tpu.memory_space<vmem>>, vector<8x128xf32>,
    } else {
    }
    return
  }
  func.func @transform_0(%arg0: i32, %arg1: i32, %arg2: i32) -> (i32, i32) {
    %c0_i32 = arith.constant 0 : i32
    return %arg0, %arg2 : i32, i32
  }
  func.func @transform_1(%arg0: i32, %arg1: i32, %arg2: i32) -> (i32, i32) {
    %c0_i32 = arith.constant 0 : i32
    return %arg2, %arg1 : i32, i32
  }
  func.func @transform_2(%arg0: i32, %arg1: i32, %arg2: i32) -> (i32, i32) {
    %c0_i32 = arith.constant 0 : i32
    %c0_i32_0 = arith.constant 0 : i32
    return %c0_i32, %arg1 : i32, i32
  }
  func.func @transform_3(%arg0: i32, %arg1: i32, %arg2: i32) -> (i32, i32) {
    %c0_i32 = arith.constant 0 : i32
    return %arg0, %arg1 : i32, i32
  }
  func.func @transform_4(%arg0: i32, %arg1: i32, %arg2: i32) -> (i32, i32) {
    %c0_i32 = arith.constant 0 : i32
    return %arg0, %arg1 : i32, i32
  }
}

module attributes {stable_mosaic.version = 11 : i64} {
  func.func @_ln_mm_kernel(%arg0: i32, %arg1: i32, %arg2: memref<8x32xf32, #tpu.memory_space<vmem>>, %arg3: memref<1x32xf32, #tpu.memory_space<vmem>>, %arg4: memref<1x32xf32, #tpu.memory_space<vmem>>, %arg5: memref<32x512xbf16, #tpu.memory_space<vmem>>, %arg6: memref<1x512xf32, #tpu.memory_space<vmem>>, %arg7: memref<8x512xf32, #tpu.memory_space<vmem>>) attributes {dimension_semantics = [#tpu.dimension_semantics<parallel>, #tpu.dimension_semantics<parallel>], iteration_bounds = array<i64: 1, 4>, scalar_prefetch = 0 : i64, scratch_operands = 0 : i64, tpu.core_type = #tpu.core_type<tc>, window_params = [{transform_indices = @transform_0, window_bounds = array<i64: 8, 32>}, {pipeline_mode = #tpu.pipeline_mode<synchronous>, transform_indices = @transform_1, window_bounds = array<i64: 1, 32>}, {pipeline_mode = #tpu.pipeline_mode<synchronous>, transform_indices = @transform_2, window_bounds = array<i64: 1, 32>}, {transform_indices = @transform_3, window_bounds = array<i64: 32, 512>}, {transform_indices = @transform_4, window_bounds = array<i64: 1, 512>}, {transform_indices = @transform_5, window_bounds = array<i64: 8, 512>}]} {
    %c0 = arith.constant 0 : index
    %c0_0 = arith.constant 0 : index
    %0 = vector.load %arg2[%c0, %c0_0] : memref<8x32xf32, #tpu.memory_space<vmem>>, vector<8x32xf32>
    %cst = arith.constant dense<0.000000e+00> : vector<8xf32>
    %1 = vector.multi_reduction <add>, %0, %cst [1] : vector<8x32xf32> to vector<8xf32>
    %2 = vector.shape_cast %1 : vector<8xf32> to vector<8x1xf32>
    %cst_1 = arith.constant 3.200000e+01 : f32
    %3 = vector.broadcast %cst_1 : f32 to vector<8x1xf32>
    %4 = arith.divf %2, %3 : vector<8x1xf32>
    %5 = vector.broadcast %4 : vector<8x1xf32> to vector<8x32xf32>
    %6 = arith.subf %0, %5 : vector<8x32xf32>
    %7 = arith.mulf %6, %6 : vector<8x32xf32>
    %cst_2 = arith.constant dense<0.000000e+00> : vector<8xf32>
    %8 = vector.multi_reduction <add>, %7, %cst_2 [1] : vector<8x32xf32> to vector<8xf32>
    %9 = vector.shape_cast %8 : vector<8xf32> to vector<8x1xf32>
    %cst_3 = arith.constant 3.200000e+01 : f32
    %10 = vector.broadcast %cst_3 : f32 to vector<8x1xf32>
    %11 = arith.divf %9, %10 : vector<8x1xf32>
    %cst_4 = arith.constant 9.99999974E-6 : f32
    %12 = vector.broadcast %cst_4 : f32 to vector<8x1xf32>
    %13 = arith.addf %11, %12 : vector<8x1xf32>
    %14 = math.rsqrt %13 : vector<8x1xf32>
    %15 = vector.broadcast %14 : vector<8x1xf32> to vector<8x32xf32>
    %16 = arith.mulf %6, %15 : vector<8x32xf32>
    %c0_5 = arith.constant 0 : index
    %c0_6 = arith.constant 0 : index
    %17 = vector.load %arg3[%c0_5, %c0_6] : memref<1x32xf32, #tpu.memory_space<vmem>>, vector<1x32xf32>
    %18 = vector.broadcast %17 : vector<1x32xf32> to vector<8x32xf32>
    %19 = arith.mulf %16, %18 : vector<8x32xf32>
    %c0_7 = arith.constant 0 : index
    %c0_8 = arith.constant 0 : index
    %20 = vector.load %arg4[%c0_7, %c0_8] : memref<1x32xf32, #tpu.memory_space<vmem>>, vector<1x32xf32>
    %21 = vector.broadcast %20 : vector<1x32xf32> to vector<8x32xf32>
    %22 = arith.addf %19, %21 : vector<8x32xf32>
    %23 = arith.truncf %22 : vector<8x32xf32> to vector<8x32xbf16>
    %c0_9 = arith.constant 0 : index
    %c0_10 = arith.constant 0 : index
    %24 = vector.load %arg5[%c0_9, %c0_10] : memref<32x512xbf16, #tpu.memory_space<vmem>>, vector<32x512xbf16>
    %cst_11 = arith.constant dense<0.000000e+00> : vector<8x512xf32>
    %25 = tpu.matmul %23, %24, %cst_11 {dimension_numbers = #tpu.dot_dimension_numbers<[1], [0], [0], [1], [0, 0, 1, 1], [], []>} : vector<8x32xbf16>, vector<32x512xbf16>, vector<8x512xf32> -> vector<8x512xf32>
    %c0_12 = arith.constant 0 : index
    %c0_13 = arith.constant 0 : index
    %26 = vector.load %arg6[%c0_12, %c0_13] : memref<1x512xf32, #tpu.memory_space<vmem>>, vector<1x512xf32>
    %27 = vector.broadcast %26 : vector<1x512xf32> to vector<8x512xf32>
    %28 = arith.addf %25, %27 : vector<8x512xf32>
    %cst_14 = arith.constant 0.000000e+00 : f32
    %29 = vector.broadcast %cst_14 : f32 to vector<8x512xf32>
    %30 = arith.maximumf %28, %29 : vector<8x512xf32>
    %c0_15 = arith.constant 0 : index
    %c0_16 = arith.constant 0 : index
    %31 = vector.load %arg7[%c0_15, %c0_16] : memref<8x512xf32, #tpu.memory_space<vmem>>, vector<8x512xf32>
    tpu.vector_store %arg7[%c0_15, %c0_16], %30 {strides = array<i32>} : memref<8x512xf32, #tpu.memory_space<vmem>>, vector<8x512xf32>,
    return
  }
  func.func @transform_0(%arg0: i32, %arg1: i32) -> (i32, i32) {
    %c0_i32 = arith.constant 0 : i32
    %c0_i32_0 = arith.constant 0 : i32
    return %arg0, %c0_i32 : i32, i32
  }
  func.func @transform_1(%arg0: i32, %arg1: i32) -> (i32, i32) {
    %c0_i32 = arith.constant 0 : i32
    %c0_i32_0 = arith.constant 0 : i32
    %c0_i32_1 = arith.constant 0 : i32
    return %c0_i32, %c0_i32_0 : i32, i32
  }
  func.func @transform_2(%arg0: i32, %arg1: i32) -> (i32, i32) {
    %c0_i32 = arith.constant 0 : i32
    %c0_i32_0 = arith.constant 0 : i32
    %c0_i32_1 = arith.constant 0 : i32
    return %c0_i32, %c0_i32_0 : i32, i32
  }
  func.func @transform_3(%arg0: i32, %arg1: i32) -> (i32, i32) {
    %c0_i32 = arith.constant 0 : i32
    %c0_i32_0 = arith.constant 0 : i32
    return %c0_i32, %arg1 : i32, i32
  }
  func.func @transform_4(%arg0: i32, %arg1: i32) -> (i32, i32) {
    %c0_i32 = arith.constant 0 : i32
    %c0_i32_0 = arith.constant 0 : i32
    return %c0_i32, %arg1 : i32, i32
  }
  func.func @transform_5(%arg0: i32, %arg1: i32) -> (i32, i32) {
    %c0_i32 = arith.constant 0 : i32
    return %arg0, %arg1 : i32, i32
  }
}

module attributes {stable_mosaic.version = 11 : i64} {
  func.func @_mm_kernel(%arg0: i32, %arg1: i32, %arg2: i32, %arg3: memref<8x512xbf16, #tpu.memory_space<vmem>>, %arg4: memref<512x128xbf16, #tpu.memory_space<vmem>>, %arg5: memref<1x128xf32, #tpu.memory_space<vmem>>, %arg6: memref<8x128xf32, #tpu.memory_space<vmem>>, %arg7: memref<8x128xf32, #tpu.memory_space<vmem>>, %arg8: memref<8x128xf32, #tpu.memory_space<vmem>>) attributes {dimension_semantics = [#tpu.dimension_semantics<parallel>, #tpu.dimension_semantics<parallel>, #tpu.dimension_semantics<arbitrary>], iteration_bounds = array<i64: 1, 1, 4>, scalar_prefetch = 0 : i64, scratch_operands = 1 : i64, tpu.core_type = #tpu.core_type<tc>, window_params = [{transform_indices = @transform_0, window_bounds = array<i64: 8, 512>}, {transform_indices = @transform_1, window_bounds = array<i64: 512, 128>}, {transform_indices = @transform_2, window_bounds = array<i64: 1, 128>}, {transform_indices = @transform_3, window_bounds = array<i64: 8, 128>}, {transform_indices = @transform_4, window_bounds = array<i64: 8, 128>}]} {
    %c0_i32 = arith.constant 0 : i32
    %0 = arith.cmpi eq, %arg2, %c0_i32 : i32
    %1 = arith.extui %0 : i1 to i32
    %c0_i32_0 = arith.constant 0 : i32
    %2 = arith.cmpi ne, %1, %c0_i32_0 : i32
    scf.if %2 {
      %cst_9 = arith.constant 0.000000e+00 : f32
      %12 = vector.broadcast %cst_9 : f32 to vector<8x128xf32>
      %c0_10 = arith.constant 0 : index
      %c0_11 = arith.constant 0 : index
      %13 = vector.load %arg8[%c0_10, %c0_11] : memref<8x128xf32, #tpu.memory_space<vmem>>, vector<8x128xf32>
      tpu.vector_store %arg8[%c0_10, %c0_11], %12 {strides = array<i32>} : memref<8x128xf32, #tpu.memory_space<vmem>>, vector<8x128xf32>,
    } else {
    }
    %c0 = arith.constant 0 : index
    %c0_1 = arith.constant 0 : index
    %3 = vector.load %arg8[%c0, %c0_1] : memref<8x128xf32, #tpu.memory_space<vmem>>, vector<8x128xf32>
    %c0_2 = arith.constant 0 : index
    %c0_3 = arith.constant 0 : index
    %4 = vector.load %arg3[%c0_2, %c0_3] : memref<8x512xbf16, #tpu.memory_space<vmem>>, vector<8x512xbf16>
    %c0_4 = arith.constant 0 : index
    %c0_5 = arith.constant 0 : index
    %5 = vector.load %arg4[%c0_4, %c0_5] : memref<512x128xbf16, #tpu.memory_space<vmem>>, vector<512x128xbf16>
    %cst = arith.constant dense<0.000000e+00> : vector<8x128xf32>
    %6 = tpu.matmul %4, %5, %cst {dimension_numbers = #tpu.dot_dimension_numbers<[1], [0], [0], [1], [0, 0, 1, 1], [], []>} : vector<8x512xbf16>, vector<512x128xbf16>, vector<8x128xf32> -> vector<8x128xf32>
    %7 = arith.addf %3, %6 : vector<8x128xf32>
    %c0_6 = arith.constant 0 : index
    %c0_7 = arith.constant 0 : index
    %8 = vector.load %arg8[%c0_6, %c0_7] : memref<8x128xf32, #tpu.memory_space<vmem>>, vector<8x128xf32>
    tpu.vector_store %arg8[%c0_6, %c0_7], %7 {strides = array<i32>} : memref<8x128xf32, #tpu.memory_space<vmem>>, vector<8x128xf32>,
    %c3_i32 = arith.constant 3 : i32
    %9 = arith.cmpi eq, %arg2, %c3_i32 : i32
    %10 = arith.extui %9 : i1 to i32
    %c0_i32_8 = arith.constant 0 : i32
    %11 = arith.cmpi ne, %10, %c0_i32_8 : i32
    scf.if %11 {
      %c0_9 = arith.constant 0 : index
      %c0_10 = arith.constant 0 : index
      %12 = vector.load %arg8[%c0_9, %c0_10] : memref<8x128xf32, #tpu.memory_space<vmem>>, vector<8x128xf32>
      %c0_11 = arith.constant 0 : index
      %c0_12 = arith.constant 0 : index
      %13 = vector.load %arg5[%c0_11, %c0_12] : memref<1x128xf32, #tpu.memory_space<vmem>>, vector<1x128xf32>
      %14 = vector.broadcast %13 : vector<1x128xf32> to vector<8x128xf32>
      %15 = arith.addf %12, %14 : vector<8x128xf32>
      %c0_13 = arith.constant 0 : index
      %c0_14 = arith.constant 0 : index
      %16 = vector.load %arg6[%c0_13, %c0_14] : memref<8x128xf32, #tpu.memory_space<vmem>>, vector<8x128xf32>
      %17 = arith.addf %15, %16 : vector<8x128xf32>
      %c0_15 = arith.constant 0 : index
      %c0_16 = arith.constant 0 : index
      %18 = vector.load %arg7[%c0_15, %c0_16] : memref<8x128xf32, #tpu.memory_space<vmem>>, vector<8x128xf32>
      tpu.vector_store %arg7[%c0_15, %c0_16], %17 {strides = array<i32>} : memref<8x128xf32, #tpu.memory_space<vmem>>, vector<8x128xf32>,
    } else {
    }
    return
  }
  func.func @transform_0(%arg0: i32, %arg1: i32, %arg2: i32) -> (i32, i32) {
    %c0_i32 = arith.constant 0 : i32
    return %arg0, %arg2 : i32, i32
  }
  func.func @transform_1(%arg0: i32, %arg1: i32, %arg2: i32) -> (i32, i32) {
    %c0_i32 = arith.constant 0 : i32
    return %arg2, %arg1 : i32, i32
  }
  func.func @transform_2(%arg0: i32, %arg1: i32, %arg2: i32) -> (i32, i32) {
    %c0_i32 = arith.constant 0 : i32
    %c0_i32_0 = arith.constant 0 : i32
    return %c0_i32, %arg1 : i32, i32
  }
  func.func @transform_3(%arg0: i32, %arg1: i32, %arg2: i32) -> (i32, i32) {
    %c0_i32 = arith.constant 0 : i32
    return %arg0, %arg1 : i32, i32
  }
  func.func @transform_4(%arg0: i32, %arg1: i32, %arg2: i32) -> (i32, i32) {
    %c0_i32 = arith.constant 0 : i32
    return %arg0, %arg1 : i32, i32
  }
}

module attributes {stable_mosaic.version = 11 : i64} {
  func.func @_ln_add_kernel(%arg0: i32, %arg1: memref<16x32xf32, #tpu.memory_space<vmem>>, %arg2: memref<1x32xf32, #tpu.memory_space<vmem>>, %arg3: memref<1x32xf32, #tpu.memory_space<vmem>>, %arg4: memref<16x32xf32, #tpu.memory_space<vmem>>, %arg5: memref<16x32xf32, #tpu.memory_space<vmem>>) attributes {dimension_semantics = [#tpu.dimension_semantics<parallel>], iteration_bounds = array<i64: 1>, scalar_prefetch = 0 : i64, scratch_operands = 0 : i64, tpu.core_type = #tpu.core_type<tc>, window_params = [{transform_indices = @transform_0, window_bounds = array<i64: 16, 32>}, {pipeline_mode = #tpu.pipeline_mode<synchronous>, transform_indices = @transform_1, window_bounds = array<i64: 1, 32>}, {pipeline_mode = #tpu.pipeline_mode<synchronous>, transform_indices = @transform_2, window_bounds = array<i64: 1, 32>}, {transform_indices = @transform_3, window_bounds = array<i64: 16, 32>}, {transform_indices = @transform_4, window_bounds = array<i64: 16, 32>}]} {
    %c0 = arith.constant 0 : index
    %c0_0 = arith.constant 0 : index
    %0 = vector.load %arg1[%c0, %c0_0] : memref<16x32xf32, #tpu.memory_space<vmem>>, vector<16x32xf32>
    %cst = arith.constant dense<0.000000e+00> : vector<16xf32>
    %1 = vector.multi_reduction <add>, %0, %cst [1] : vector<16x32xf32> to vector<16xf32>
    %2 = vector.shape_cast %1 : vector<16xf32> to vector<16x1xf32>
    %cst_1 = arith.constant 3.200000e+01 : f32
    %3 = vector.broadcast %cst_1 : f32 to vector<16x1xf32>
    %4 = arith.divf %2, %3 : vector<16x1xf32>
    %5 = vector.broadcast %4 : vector<16x1xf32> to vector<16x32xf32>
    %6 = arith.subf %0, %5 : vector<16x32xf32>
    %7 = arith.mulf %6, %6 : vector<16x32xf32>
    %cst_2 = arith.constant dense<0.000000e+00> : vector<16xf32>
    %8 = vector.multi_reduction <add>, %7, %cst_2 [1] : vector<16x32xf32> to vector<16xf32>
    %9 = vector.shape_cast %8 : vector<16xf32> to vector<16x1xf32>
    %cst_3 = arith.constant 3.200000e+01 : f32
    %10 = vector.broadcast %cst_3 : f32 to vector<16x1xf32>
    %11 = arith.divf %9, %10 : vector<16x1xf32>
    %cst_4 = arith.constant 9.99999974E-6 : f32
    %12 = vector.broadcast %cst_4 : f32 to vector<16x1xf32>
    %13 = arith.addf %11, %12 : vector<16x1xf32>
    %14 = math.rsqrt %13 : vector<16x1xf32>
    %15 = vector.broadcast %14 : vector<16x1xf32> to vector<16x32xf32>
    %16 = arith.mulf %6, %15 : vector<16x32xf32>
    %c0_5 = arith.constant 0 : index
    %c0_6 = arith.constant 0 : index
    %17 = vector.load %arg2[%c0_5, %c0_6] : memref<1x32xf32, #tpu.memory_space<vmem>>, vector<1x32xf32>
    %18 = vector.broadcast %17 : vector<1x32xf32> to vector<16x32xf32>
    %19 = arith.mulf %16, %18 : vector<16x32xf32>
    %c0_7 = arith.constant 0 : index
    %c0_8 = arith.constant 0 : index
    %20 = vector.load %arg3[%c0_7, %c0_8] : memref<1x32xf32, #tpu.memory_space<vmem>>, vector<1x32xf32>
    %21 = vector.broadcast %20 : vector<1x32xf32> to vector<16x32xf32>
    %22 = arith.addf %19, %21 : vector<16x32xf32>
    %c0_9 = arith.constant 0 : index
    %c0_10 = arith.constant 0 : index
    %23 = vector.load %arg4[%c0_9, %c0_10] : memref<16x32xf32, #tpu.memory_space<vmem>>, vector<16x32xf32>
    %24 = arith.addf %22, %23 : vector<16x32xf32>
    %c0_11 = arith.constant 0 : index
    %c0_12 = arith.constant 0 : index
    %25 = vector.load %arg5[%c0_11, %c0_12] : memref<16x32xf32, #tpu.memory_space<vmem>>, vector<16x32xf32>
    tpu.vector_store %arg5[%c0_11, %c0_12], %24 {strides = array<i32>} : memref<16x32xf32, #tpu.memory_space<vmem>>, vector<16x32xf32>,
    return
  }
  func.func @transform_0(%arg0: i32) -> (i32, i32) {
    %c0_i32 = arith.constant 0 : i32
    %c0_i32_0 = arith.constant 0 : i32
    return %arg0, %c0_i32 : i32, i32
  }
  func.func @transform_1(%arg0: i32) -> (i32, i32) {
    %c0_i32 = arith.constant 0 : i32
    %c0_i32_0 = arith.constant 0 : i32
    %c0_i32_1 = arith.constant 0 : i32
    return %c0_i32, %c0_i32_0 : i32, i32
  }
  func.func @transform_2(%arg0: i32) -> (i32, i32) {
    %c0_i32 = arith.constant 0 : i32
    %c0_i32_0 = arith.constant 0 : i32
    %c0_i32_1 = arith.constant 0 : i32
    return %c0_i32, %c0_i32_0 : i32, i32
  }
  func.func @transform_3(%arg0: i32) -> (i32, i32) {
    %c0_i32 = arith.constant 0 : i32
    %c0_i32_0 = arith.constant 0 : i32
    return %arg0, %c0_i32 : i32, i32
  }
  func.func @transform_4(%arg0: i32) -> (i32, i32) {
    %c0_i32 = arith.constant 0 : i32
    %c0_i32_0 = arith.constant 0 : i32
    return %arg0, %c0_i32 : i32, i32
  }
}

module attributes {stable_mosaic.version = 11 : i64} {
  func.func @_ln_mm_kernel(%arg0: i32, %arg1: i32, %arg2: memref<16x32xf32, #tpu.memory_space<vmem>>, %arg3: memref<1x32xf32, #tpu.memory_space<vmem>>, %arg4: memref<1x32xf32, #tpu.memory_space<vmem>>, %arg5: memref<32x128xbf16, #tpu.memory_space<vmem>>, %arg6: memref<1x128xf32, #tpu.memory_space<vmem>>, %arg7: memref<16x128xf32, #tpu.memory_space<vmem>>) attributes {dimension_semantics = [#tpu.dimension_semantics<parallel>, #tpu.dimension_semantics<parallel>], iteration_bounds = array<i64: 1, 1>, scalar_prefetch = 0 : i64, scratch_operands = 0 : i64, tpu.core_type = #tpu.core_type<tc>, window_params = [{transform_indices = @transform_0, window_bounds = array<i64: 16, 32>}, {pipeline_mode = #tpu.pipeline_mode<synchronous>, transform_indices = @transform_1, window_bounds = array<i64: 1, 32>}, {pipeline_mode = #tpu.pipeline_mode<synchronous>, transform_indices = @transform_2, window_bounds = array<i64: 1, 32>}, {transform_indices = @transform_3, window_bounds = array<i64: 32, 128>}, {transform_indices = @transform_4, window_bounds = array<i64: 1, 128>}, {transform_indices = @transform_5, window_bounds = array<i64: 16, 128>}]} {
    %c0 = arith.constant 0 : index
    %c0_0 = arith.constant 0 : index
    %0 = vector.load %arg2[%c0, %c0_0] : memref<16x32xf32, #tpu.memory_space<vmem>>, vector<16x32xf32>
    %cst = arith.constant dense<0.000000e+00> : vector<16xf32>
    %1 = vector.multi_reduction <add>, %0, %cst [1] : vector<16x32xf32> to vector<16xf32>
    %2 = vector.shape_cast %1 : vector<16xf32> to vector<16x1xf32>
    %cst_1 = arith.constant 3.200000e+01 : f32
    %3 = vector.broadcast %cst_1 : f32 to vector<16x1xf32>
    %4 = arith.divf %2, %3 : vector<16x1xf32>
    %5 = vector.broadcast %4 : vector<16x1xf32> to vector<16x32xf32>
    %6 = arith.subf %0, %5 : vector<16x32xf32>
    %7 = arith.mulf %6, %6 : vector<16x32xf32>
    %cst_2 = arith.constant dense<0.000000e+00> : vector<16xf32>
    %8 = vector.multi_reduction <add>, %7, %cst_2 [1] : vector<16x32xf32> to vector<16xf32>
    %9 = vector.shape_cast %8 : vector<16xf32> to vector<16x1xf32>
    %cst_3 = arith.constant 3.200000e+01 : f32
    %10 = vector.broadcast %cst_3 : f32 to vector<16x1xf32>
    %11 = arith.divf %9, %10 : vector<16x1xf32>
    %cst_4 = arith.constant 9.99999974E-6 : f32
    %12 = vector.broadcast %cst_4 : f32 to vector<16x1xf32>
    %13 = arith.addf %11, %12 : vector<16x1xf32>
    %14 = math.rsqrt %13 : vector<16x1xf32>
    %15 = vector.broadcast %14 : vector<16x1xf32> to vector<16x32xf32>
    %16 = arith.mulf %6, %15 : vector<16x32xf32>
    %c0_5 = arith.constant 0 : index
    %c0_6 = arith.constant 0 : index
    %17 = vector.load %arg3[%c0_5, %c0_6] : memref<1x32xf32, #tpu.memory_space<vmem>>, vector<1x32xf32>
    %18 = vector.broadcast %17 : vector<1x32xf32> to vector<16x32xf32>
    %19 = arith.mulf %16, %18 : vector<16x32xf32>
    %c0_7 = arith.constant 0 : index
    %c0_8 = arith.constant 0 : index
    %20 = vector.load %arg4[%c0_7, %c0_8] : memref<1x32xf32, #tpu.memory_space<vmem>>, vector<1x32xf32>
    %21 = vector.broadcast %20 : vector<1x32xf32> to vector<16x32xf32>
    %22 = arith.addf %19, %21 : vector<16x32xf32>
    %23 = arith.truncf %22 : vector<16x32xf32> to vector<16x32xbf16>
    %c0_9 = arith.constant 0 : index
    %c0_10 = arith.constant 0 : index
    %24 = vector.load %arg5[%c0_9, %c0_10] : memref<32x128xbf16, #tpu.memory_space<vmem>>, vector<32x128xbf16>
    %cst_11 = arith.constant dense<0.000000e+00> : vector<16x128xf32>
    %25 = tpu.matmul %23, %24, %cst_11 {dimension_numbers = #tpu.dot_dimension_numbers<[1], [0], [0], [1], [0, 0, 1, 1], [], []>} : vector<16x32xbf16>, vector<32x128xbf16>, vector<16x128xf32> -> vector<16x128xf32>
    %c0_12 = arith.constant 0 : index
    %c0_13 = arith.constant 0 : index
    %26 = vector.load %arg6[%c0_12, %c0_13] : memref<1x128xf32, #tpu.memory_space<vmem>>, vector<1x128xf32>
    %27 = vector.broadcast %26 : vector<1x128xf32> to vector<16x128xf32>
    %28 = arith.addf %25, %27 : vector<16x128xf32>
    %c0_14 = arith.constant 0 : index
    %c0_15 = arith.constant 0 : index
    %29 = vector.load %arg7[%c0_14, %c0_15] : memref<16x128xf32, #tpu.memory_space<vmem>>, vector<16x128xf32>
    tpu.vector_store %arg7[%c0_14, %c0_15], %28 {strides = array<i32>} : memref<16x128xf32, #tpu.memory_space<vmem>>, vector<16x128xf32>,
    return
  }
  func.func @transform_0(%arg0: i32, %arg1: i32) -> (i32, i32) {
    %c0_i32 = arith.constant 0 : i32
    %c0_i32_0 = arith.constant 0 : i32
    return %arg0, %c0_i32 : i32, i32
  }
  func.func @transform_1(%arg0: i32, %arg1: i32) -> (i32, i32) {
    %c0_i32 = arith.constant 0 : i32
    %c0_i32_0 = arith.constant 0 : i32
    %c0_i32_1 = arith.constant 0 : i32
    return %c0_i32, %c0_i32_0 : i32, i32
  }
  func.func @transform_2(%arg0: i32, %arg1: i32) -> (i32, i32) {
    %c0_i32 = arith.constant 0 : i32
    %c0_i32_0 = arith.constant 0 : i32
    %c0_i32_1 = arith.constant 0 : i32
    return %c0_i32, %c0_i32_0 : i32, i32
  }
  func.func @transform_3(%arg0: i32, %arg1: i32) -> (i32, i32) {
    %c0_i32 = arith.constant 0 : i32
    %c0_i32_0 = arith.constant 0 : i32
    return %c0_i32, %arg1 : i32, i32
  }
  func.func @transform_4(%arg0: i32, %arg1: i32) -> (i32, i32) {
    %c0_i32 = arith.constant 0 : i32
    %c0_i32_0 = arith.constant 0 : i32
    return %c0_i32, %arg1 : i32, i32
  }
  func.func @transform_5(%arg0: i32, %arg1: i32) -> (i32, i32) {
    %c0_i32 = arith.constant 0 : i32
    return %arg0, %arg1 : i32, i32
  }
}

module attributes {stable_mosaic.version = 11 : i64} {
  func.func @_attn_kernel(%arg0: i32, %arg1: memref<2x5x128xbf16, #tpu.memory_space<vmem>>, %arg2: memref<2x5x128xbf16, #tpu.memory_space<vmem>>, %arg3: memref<2x5x128xbf16, #tpu.memory_space<vmem>>, %arg4: memref<5x5xf32, #tpu.memory_space<vmem>>, %arg5: memref<2x5x128xf32, #tpu.memory_space<vmem>>) attributes {dimension_semantics = [#tpu.dimension_semantics<parallel>], iteration_bounds = array<i64: 1>, scalar_prefetch = 0 : i64, scratch_operands = 0 : i64, tpu.core_type = #tpu.core_type<tc>, window_params = [{transform_indices = @transform_0, window_bounds = array<i64: 2, 5, 128>}, {transform_indices = @transform_1, window_bounds = array<i64: 2, 5, 128>}, {transform_indices = @transform_2, window_bounds = array<i64: 2, 5, 128>}, {pipeline_mode = #tpu.pipeline_mode<synchronous>, transform_indices = @transform_3, window_bounds = array<i64: 5, 5>}, {transform_indices = @transform_4, window_bounds = array<i64: 2, 5, 128>}]} {
    %c0 = arith.constant 0 : index
    %c0_0 = arith.constant 0 : index
    %c0_1 = arith.constant 0 : index
    %0 = vector.load %arg1[%c0, %c0_0, %c0_1] : memref<2x5x128xbf16, #tpu.memory_space<vmem>>, vector<2x5x128xbf16>
    %c0_2 = arith.constant 0 : index
    %c0_3 = arith.constant 0 : index
    %c0_4 = arith.constant 0 : index
    %1 = vector.load %arg2[%c0_2, %c0_3, %c0_4] : memref<2x5x128xbf16, #tpu.memory_space<vmem>>, vector<2x5x128xbf16>
    "tpu.trace_start"() <{level = 10 : i32, message = "bqd,bkd->bqk"}> : () -> ()
    %cst = arith.constant dense<0.000000e+00> : vector<2x5x5xf32>
    %2 = tpu.matmul %0, %1, %cst {dimension_numbers = #tpu.dot_dimension_numbers<[2], [2], [1], [1], [0, 0, 0, 1, 1, 1], [0], [0]>} : vector<2x5x128xbf16>, vector<2x5x128xbf16>, vector<2x5x5xf32> -> vector<2x5x5xf32>
    "tpu.trace_stop"() : () -> ()
    %cst_5 = arith.constant 0.176776692 : f32
    %3 = vector.broadcast %cst_5 : f32 to vector<2x5x5xf32>
    %4 = arith.mulf %2, %3 : vector<2x5x5xf32>
    %c0_6 = arith.constant 0 : index
    %c0_7 = arith.constant 0 : index
    %5 = vector.load %arg4[%c0_6, %c0_7] : memref<5x5xf32, #tpu.memory_space<vmem>>, vector<5x5xf32>
    %6 = vector.shape_cast %5 : vector<5x5xf32> to vector<1x5x5xf32>
    %7 = vector.broadcast %6 : vector<1x5x5xf32> to vector<2x5x5xf32>
    %8 = arith.addf %4, %7 : vector<2x5x5xf32>
    %cst_8 = arith.constant dense<0xFF800000> : vector<2x5xf32>
    %9 = vector.multi_reduction <maximumf>, %8, %cst_8 [2] : vector<2x5x5xf32> to vector<2x5xf32>
    %10 = vector.shape_cast %9 : vector<2x5xf32> to vector<2x5x1xf32>
    %11 = vector.broadcast %10 : vector<2x5x1xf32> to vector<2x5x5xf32>
    %12 = arith.subf %8, %11 : vector<2x5x5xf32>
    %13 = math.exp %12 : vector<2x5x5xf32>
    %cst_9 = arith.constant dense<0.000000e+00> : vector<2x5xf32>
    %14 = vector.multi_reduction <add>, %13, %cst_9 [2] : vector<2x5x5xf32> to vector<2x5xf32>
    %15 = vector.shape_cast %14 : vector<2x5xf32> to vector<2x5x1xf32>
    %16 = vector.broadcast %15 : vector<2x5x1xf32> to vector<2x5x5xf32>
    %17 = arith.divf %13, %16 : vector<2x5x5xf32>
    %18 = arith.truncf %17 : vector<2x5x5xf32> to vector<2x5x5xbf16>
    %c0_10 = arith.constant 0 : index
    %c0_11 = arith.constant 0 : index
    %c0_12 = arith.constant 0 : index
    %19 = vector.load %arg3[%c0_10, %c0_11, %c0_12] : memref<2x5x128xbf16, #tpu.memory_space<vmem>>, vector<2x5x128xbf16>
    "tpu.trace_start"() <{level = 10 : i32, message = "bqk,bkd->bqd"}> : () -> ()
    %cst_13 = arith.constant dense<0.000000e+00> : vector<2x5x128xf32>
    %20 = tpu.matmul %18, %19, %cst_13 {dimension_numbers = #tpu.dot_dimension_numbers<[2], [1], [1], [2], [0, 0, 0, 1, 1, 2], [0], [0]>} : vector<2x5x5xbf16>, vector<2x5x128xbf16>, vector<2x5x128xf32> -> vector<2x5x128xf32>
    "tpu.trace_stop"() : () -> ()
    %c0_14 = arith.constant 0 : index
    %c0_15 = arith.constant 0 : index
    %c0_16 = arith.constant 0 : index
    %21 = vector.load %arg5[%c0_14, %c0_15, %c0_16] : memref<2x5x128xf32, #tpu.memory_space<vmem>>, vector<2x5x128xf32>
    tpu.vector_store %arg5[%c0_14, %c0_15, %c0_16], %20 {strides = array<i32>} : memref<2x5x128xf32, #tpu.memory_space<vmem>>, vector<2x5x128xf32>,
    return
  }
  func.func @transform_0(%arg0: i32) -> (i32, i32, i32) {
    %c0_i32 = arith.constant 0 : i32
    %c0_i32_0 = arith.constant 0 : i32
    %c0_i32_1 = arith.constant 0 : i32
    return %arg0, %c0_i32, %c0_i32_0 : i32, i32, i32
  }
  func.func @transform_1(%arg0: i32) -> (i32, i32, i32) {
    %c0_i32 = arith.constant 0 : i32
    %c0_i32_0 = arith.constant 0 : i32
    %c0_i32_1 = arith.constant 0 : i32
    return %arg0, %c0_i32, %c0_i32_0 : i32, i32, i32
  }
  func.func @transform_2(%arg0: i32) -> (i32, i32, i32) {
    %c0_i32 = arith.constant 0 : i32
    %c0_i32_0 = arith.constant 0 : i32
    %c0_i32_1 = arith.constant 0 : i32
    return %arg0, %c0_i32, %c0_i32_0 : i32, i32, i32
  }
  func.func @transform_3(%arg0: i32) -> (i32, i32) {
    %c0_i32 = arith.constant 0 : i32
    %c0_i32_0 = arith.constant 0 : i32
    %c0_i32_1 = arith.constant 0 : i32
    return %c0_i32, %c0_i32_0 : i32, i32
  }
  func.func @transform_4(%arg0: i32) -> (i32, i32, i32) {
    %c0_i32 = arith.constant 0 : i32
    %c0_i32_0 = arith.constant 0 : i32
    %c0_i32_1 = arith.constant 0 : i32
    return %arg0, %c0_i32, %c0_i32_0 : i32, i32, i32
  }
}

module attributes {stable_mosaic.version = 11 : i64} {
  func.func @_mm_kernel(%arg0: i32, %arg1: i32, %arg2: i32, %arg3: memref<16x128xbf16, #tpu.memory_space<vmem>>, %arg4: memref<128x128xbf16, #tpu.memory_space<vmem>>, %arg5: memref<1x128xf32, #tpu.memory_space<vmem>>, %arg6: memref<16x128xf32, #tpu.memory_space<vmem>>, %arg7: memref<16x128xf32, #tpu.memory_space<vmem>>, %arg8: memref<16x128xf32, #tpu.memory_space<vmem>>) attributes {dimension_semantics = [#tpu.dimension_semantics<parallel>, #tpu.dimension_semantics<parallel>, #tpu.dimension_semantics<arbitrary>], iteration_bounds = array<i64: 1, 1, 1>, scalar_prefetch = 0 : i64, scratch_operands = 1 : i64, tpu.core_type = #tpu.core_type<tc>, window_params = [{transform_indices = @transform_0, window_bounds = array<i64: 16, 128>}, {transform_indices = @transform_1, window_bounds = array<i64: 128, 128>}, {transform_indices = @transform_2, window_bounds = array<i64: 1, 128>}, {transform_indices = @transform_3, window_bounds = array<i64: 16, 128>}, {transform_indices = @transform_4, window_bounds = array<i64: 16, 128>}]} {
    %c0_i32 = arith.constant 0 : i32
    %0 = arith.cmpi eq, %arg2, %c0_i32 : i32
    %1 = arith.extui %0 : i1 to i32
    %c0_i32_0 = arith.constant 0 : i32
    %2 = arith.cmpi ne, %1, %c0_i32_0 : i32
    scf.if %2 {
      %cst_10 = arith.constant 0.000000e+00 : f32
      %12 = vector.broadcast %cst_10 : f32 to vector<16x128xf32>
      %c0_11 = arith.constant 0 : index
      %c0_12 = arith.constant 0 : index
      %13 = vector.load %arg8[%c0_11, %c0_12] : memref<16x128xf32, #tpu.memory_space<vmem>>, vector<16x128xf32>
      tpu.vector_store %arg8[%c0_11, %c0_12], %12 {strides = array<i32>} : memref<16x128xf32, #tpu.memory_space<vmem>>, vector<16x128xf32>,
    } else {
    }
    %c0 = arith.constant 0 : index
    %c0_1 = arith.constant 0 : index
    %3 = vector.load %arg8[%c0, %c0_1] : memref<16x128xf32, #tpu.memory_space<vmem>>, vector<16x128xf32>
    %c0_2 = arith.constant 0 : index
    %c0_3 = arith.constant 0 : index
    %4 = vector.load %arg3[%c0_2, %c0_3] : memref<16x128xbf16, #tpu.memory_space<vmem>>, vector<16x128xbf16>
    %c0_4 = arith.constant 0 : index
    %c0_5 = arith.constant 0 : index
    %5 = vector.load %arg4[%c0_4, %c0_5] : memref<128x128xbf16, #tpu.memory_space<vmem>>, vector<128x128xbf16>
    %cst = arith.constant dense<0.000000e+00> : vector<16x128xf32>
    %6 = tpu.matmul %4, %5, %cst {dimension_numbers = #tpu.dot_dimension_numbers<[1], [0], [0], [1], [0, 0, 1, 1], [], []>} : vector<16x128xbf16>, vector<128x128xbf16>, vector<16x128xf32> -> vector<16x128xf32>
    %7 = arith.addf %3, %6 : vector<16x128xf32>
    %c0_6 = arith.constant 0 : index
    %c0_7 = arith.constant 0 : index
    %8 = vector.load %arg8[%c0_6, %c0_7] : memref<16x128xf32, #tpu.memory_space<vmem>>, vector<16x128xf32>
    tpu.vector_store %arg8[%c0_6, %c0_7], %7 {strides = array<i32>} : memref<16x128xf32, #tpu.memory_space<vmem>>, vector<16x128xf32>,
    %c0_i32_8 = arith.constant 0 : i32
    %9 = arith.cmpi eq, %arg2, %c0_i32_8 : i32
    %10 = arith.extui %9 : i1 to i32
    %c0_i32_9 = arith.constant 0 : i32
    %11 = arith.cmpi ne, %10, %c0_i32_9 : i32
    scf.if %11 {
      %c0_10 = arith.constant 0 : index
      %c0_11 = arith.constant 0 : index
      %12 = vector.load %arg8[%c0_10, %c0_11] : memref<16x128xf32, #tpu.memory_space<vmem>>, vector<16x128xf32>
      %c0_12 = arith.constant 0 : index
      %c0_13 = arith.constant 0 : index
      %13 = vector.load %arg5[%c0_12, %c0_13] : memref<1x128xf32, #tpu.memory_space<vmem>>, vector<1x128xf32>
      %14 = vector.broadcast %13 : vector<1x128xf32> to vector<16x128xf32>
      %15 = arith.addf %12, %14 : vector<16x128xf32>
      %c0_14 = arith.constant 0 : index
      %c0_15 = arith.constant 0 : index
      %16 = vector.load %arg6[%c0_14, %c0_15] : memref<16x128xf32, #tpu.memory_space<vmem>>, vector<16x128xf32>
      %17 = arith.addf %15, %16 : vector<16x128xf32>
      %c0_16 = arith.constant 0 : index
      %c0_17 = arith.constant 0 : index
      %18 = vector.load %arg7[%c0_16, %c0_17] : memref<16x128xf32, #tpu.memory_space<vmem>>, vector<16x128xf32>
      tpu.vector_store %arg7[%c0_16, %c0_17], %17 {strides = array<i32>} : memref<16x128xf32, #tpu.memory_space<vmem>>, vector<16x128xf32>,
    } else {
    }
    return
  }
  func.func @transform_0(%arg0: i32, %arg1: i32, %arg2: i32) -> (i32, i32) {
    %c0_i32 = arith.constant 0 : i32
    return %arg0, %arg2 : i32, i32
  }
  func.func @transform_1(%arg0: i32, %arg1: i32, %arg2: i32) -> (i32, i32) {
    %c0_i32 = arith.constant 0 : i32
    return %arg2, %arg1 : i32, i32
  }
  func.func @transform_2(%arg0: i32, %arg1: i32, %arg2: i32) -> (i32, i32) {
    %c0_i32 = arith.constant 0 : i32
    %c0_i32_0 = arith.constant 0 : i32
    return %c0_i32, %arg1 : i32, i32
  }
  func.func @transform_3(%arg0: i32, %arg1: i32, %arg2: i32) -> (i32, i32) {
    %c0_i32 = arith.constant 0 : i32
    return %arg0, %arg1 : i32, i32
  }
  func.func @transform_4(%arg0: i32, %arg1: i32, %arg2: i32) -> (i32, i32) {
    %c0_i32 = arith.constant 0 : i32
    return %arg0, %arg1 : i32, i32
  }
}

module attributes {stable_mosaic.version = 11 : i64} {
  func.func @_attn_kernel(%arg0: i32, %arg1: memref<2x5x128xbf16, #tpu.memory_space<vmem>>, %arg2: memref<2x4x128xbf16, #tpu.memory_space<vmem>>, %arg3: memref<2x4x128xbf16, #tpu.memory_space<vmem>>, %arg4: memref<2x5x128xf32, #tpu.memory_space<vmem>>) attributes {dimension_semantics = [#tpu.dimension_semantics<parallel>], iteration_bounds = array<i64: 1>, scalar_prefetch = 0 : i64, scratch_operands = 0 : i64, tpu.core_type = #tpu.core_type<tc>, window_params = [{transform_indices = @transform_0, window_bounds = array<i64: 2, 5, 128>}, {transform_indices = @transform_1, window_bounds = array<i64: 2, 4, 128>}, {transform_indices = @transform_2, window_bounds = array<i64: 2, 4, 128>}, {transform_indices = @transform_3, window_bounds = array<i64: 2, 5, 128>}]} {
    %c0 = arith.constant 0 : index
    %c0_0 = arith.constant 0 : index
    %c0_1 = arith.constant 0 : index
    %0 = vector.load %arg1[%c0, %c0_0, %c0_1] : memref<2x5x128xbf16, #tpu.memory_space<vmem>>, vector<2x5x128xbf16>
    %c0_2 = arith.constant 0 : index
    %c0_3 = arith.constant 0 : index
    %c0_4 = arith.constant 0 : index
    %1 = vector.load %arg2[%c0_2, %c0_3, %c0_4] : memref<2x4x128xbf16, #tpu.memory_space<vmem>>, vector<2x4x128xbf16>
    "tpu.trace_start"() <{level = 10 : i32, message = "bqd,bkd->bqk"}> : () -> ()
    %cst = arith.constant dense<0.000000e+00> : vector<2x5x4xf32>
    %2 = tpu.matmul %0, %1, %cst {dimension_numbers = #tpu.dot_dimension_numbers<[2], [2], [1], [1], [0, 0, 0, 1, 1, 1], [0], [0]>} : vector<2x5x128xbf16>, vector<2x4x128xbf16>, vector<2x5x4xf32> -> vector<2x5x4xf32>
    "tpu.trace_stop"() : () -> ()
    %cst_5 = arith.constant 0.176776692 : f32
    %3 = vector.broadcast %cst_5 : f32 to vector<2x5x4xf32>
    %4 = arith.mulf %2, %3 : vector<2x5x4xf32>
    %cst_6 = arith.constant dense<0xFF800000> : vector<2x5xf32>
    %5 = vector.multi_reduction <maximumf>, %4, %cst_6 [2] : vector<2x5x4xf32> to vector<2x5xf32>
    %6 = vector.shape_cast %5 : vector<2x5xf32> to vector<2x5x1xf32>
    %7 = vector.broadcast %6 : vector<2x5x1xf32> to vector<2x5x4xf32>
    %8 = arith.subf %4, %7 : vector<2x5x4xf32>
    %9 = math.exp %8 : vector<2x5x4xf32>
    %cst_7 = arith.constant dense<0.000000e+00> : vector<2x5xf32>
    %10 = vector.multi_reduction <add>, %9, %cst_7 [2] : vector<2x5x4xf32> to vector<2x5xf32>
    %11 = vector.shape_cast %10 : vector<2x5xf32> to vector<2x5x1xf32>
    %12 = vector.broadcast %11 : vector<2x5x1xf32> to vector<2x5x4xf32>
    %13 = arith.divf %9, %12 : vector<2x5x4xf32>
    %14 = arith.truncf %13 : vector<2x5x4xf32> to vector<2x5x4xbf16>
    %c0_8 = arith.constant 0 : index
    %c0_9 = arith.constant 0 : index
    %c0_10 = arith.constant 0 : index
    %15 = vector.load %arg3[%c0_8, %c0_9, %c0_10] : memref<2x4x128xbf16, #tpu.memory_space<vmem>>, vector<2x4x128xbf16>
    "tpu.trace_start"() <{level = 10 : i32, message = "bqk,bkd->bqd"}> : () -> ()
    %cst_11 = arith.constant dense<0.000000e+00> : vector<2x5x128xf32>
    %16 = tpu.matmul %14, %15, %cst_11 {dimension_numbers = #tpu.dot_dimension_numbers<[2], [1], [1], [2], [0, 0, 0, 1, 1, 2], [0], [0]>} : vector<2x5x4xbf16>, vector<2x4x128xbf16>, vector<2x5x128xf32> -> vector<2x5x128xf32>
    "tpu.trace_stop"() : () -> ()
    %c0_12 = arith.constant 0 : index
    %c0_13 = arith.constant 0 : index
    %c0_14 = arith.constant 0 : index
    %17 = vector.load %arg4[%c0_12, %c0_13, %c0_14] : memref<2x5x128xf32, #tpu.memory_space<vmem>>, vector<2x5x128xf32>
    tpu.vector_store %arg4[%c0_12, %c0_13, %c0_14], %16 {strides = array<i32>} : memref<2x5x128xf32, #tpu.memory_space<vmem>>, vector<2x5x128xf32>,
    return
  }
  func.func @transform_0(%arg0: i32) -> (i32, i32, i32) {
    %c0_i32 = arith.constant 0 : i32
    %c0_i32_0 = arith.constant 0 : i32
    %c0_i32_1 = arith.constant 0 : i32
    return %arg0, %c0_i32, %c0_i32_0 : i32, i32, i32
  }
  func.func @transform_1(%arg0: i32) -> (i32, i32, i32) {
    %c0_i32 = arith.constant 0 : i32
    %c0_i32_0 = arith.constant 0 : i32
    %c0_i32_1 = arith.constant 0 : i32
    return %arg0, %c0_i32, %c0_i32_0 : i32, i32, i32
  }
  func.func @transform_2(%arg0: i32) -> (i32, i32, i32) {
    %c0_i32 = arith.constant 0 : i32
    %c0_i32_0 = arith.constant 0 : i32
    %c0_i32_1 = arith.constant 0 : i32
    return %arg0, %c0_i32, %c0_i32_0 : i32, i32, i32
  }
  func.func @transform_3(%arg0: i32) -> (i32, i32, i32) {
    %c0_i32 = arith.constant 0 : i32
    %c0_i32_0 = arith.constant 0 : i32
    %c0_i32_1 = arith.constant 0 : i32
    return %arg0, %c0_i32, %c0_i32_0 : i32, i32, i32
  }
}

module attributes {stable_mosaic.version = 11 : i64} {
  func.func @_ln_mm_kernel(%arg0: i32, %arg1: i32, %arg2: memref<16x32xf32, #tpu.memory_space<vmem>>, %arg3: memref<1x32xf32, #tpu.memory_space<vmem>>, %arg4: memref<1x32xf32, #tpu.memory_space<vmem>>, %arg5: memref<32x512xbf16, #tpu.memory_space<vmem>>, %arg6: memref<1x512xf32, #tpu.memory_space<vmem>>, %arg7: memref<16x512xf32, #tpu.memory_space<vmem>>) attributes {dimension_semantics = [#tpu.dimension_semantics<parallel>, #tpu.dimension_semantics<parallel>], iteration_bounds = array<i64: 1, 4>, scalar_prefetch = 0 : i64, scratch_operands = 0 : i64, tpu.core_type = #tpu.core_type<tc>, window_params = [{transform_indices = @transform_0, window_bounds = array<i64: 16, 32>}, {pipeline_mode = #tpu.pipeline_mode<synchronous>, transform_indices = @transform_1, window_bounds = array<i64: 1, 32>}, {pipeline_mode = #tpu.pipeline_mode<synchronous>, transform_indices = @transform_2, window_bounds = array<i64: 1, 32>}, {transform_indices = @transform_3, window_bounds = array<i64: 32, 512>}, {transform_indices = @transform_4, window_bounds = array<i64: 1, 512>}, {transform_indices = @transform_5, window_bounds = array<i64: 16, 512>}]} {
    %c0 = arith.constant 0 : index
    %c0_0 = arith.constant 0 : index
    %0 = vector.load %arg2[%c0, %c0_0] : memref<16x32xf32, #tpu.memory_space<vmem>>, vector<16x32xf32>
    %cst = arith.constant dense<0.000000e+00> : vector<16xf32>
    %1 = vector.multi_reduction <add>, %0, %cst [1] : vector<16x32xf32> to vector<16xf32>
    %2 = vector.shape_cast %1 : vector<16xf32> to vector<16x1xf32>
    %cst_1 = arith.constant 3.200000e+01 : f32
    %3 = vector.broadcast %cst_1 : f32 to vector<16x1xf32>
    %4 = arith.divf %2, %3 : vector<16x1xf32>
    %5 = vector.broadcast %4 : vector<16x1xf32> to vector<16x32xf32>
    %6 = arith.subf %0, %5 : vector<16x32xf32>
    %7 = arith.mulf %6, %6 : vector<16x32xf32>
    %cst_2 = arith.constant dense<0.000000e+00> : vector<16xf32>
    %8 = vector.multi_reduction <add>, %7, %cst_2 [1] : vector<16x32xf32> to vector<16xf32>
    %9 = vector.shape_cast %8 : vector<16xf32> to vector<16x1xf32>
    %cst_3 = arith.constant 3.200000e+01 : f32
    %10 = vector.broadcast %cst_3 : f32 to vector<16x1xf32>
    %11 = arith.divf %9, %10 : vector<16x1xf32>
    %cst_4 = arith.constant 9.99999974E-6 : f32
    %12 = vector.broadcast %cst_4 : f32 to vector<16x1xf32>
    %13 = arith.addf %11, %12 : vector<16x1xf32>
    %14 = math.rsqrt %13 : vector<16x1xf32>
    %15 = vector.broadcast %14 : vector<16x1xf32> to vector<16x32xf32>
    %16 = arith.mulf %6, %15 : vector<16x32xf32>
    %c0_5 = arith.constant 0 : index
    %c0_6 = arith.constant 0 : index
    %17 = vector.load %arg3[%c0_5, %c0_6] : memref<1x32xf32, #tpu.memory_space<vmem>>, vector<1x32xf32>
    %18 = vector.broadcast %17 : vector<1x32xf32> to vector<16x32xf32>
    %19 = arith.mulf %16, %18 : vector<16x32xf32>
    %c0_7 = arith.constant 0 : index
    %c0_8 = arith.constant 0 : index
    %20 = vector.load %arg4[%c0_7, %c0_8] : memref<1x32xf32, #tpu.memory_space<vmem>>, vector<1x32xf32>
    %21 = vector.broadcast %20 : vector<1x32xf32> to vector<16x32xf32>
    %22 = arith.addf %19, %21 : vector<16x32xf32>
    %23 = arith.truncf %22 : vector<16x32xf32> to vector<16x32xbf16>
    %c0_9 = arith.constant 0 : index
    %c0_10 = arith.constant 0 : index
    %24 = vector.load %arg5[%c0_9, %c0_10] : memref<32x512xbf16, #tpu.memory_space<vmem>>, vector<32x512xbf16>
    %cst_11 = arith.constant dense<0.000000e+00> : vector<16x512xf32>
    %25 = tpu.matmul %23, %24, %cst_11 {dimension_numbers = #tpu.dot_dimension_numbers<[1], [0], [0], [1], [0, 0, 1, 1], [], []>} : vector<16x32xbf16>, vector<32x512xbf16>, vector<16x512xf32> -> vector<16x512xf32>
    %c0_12 = arith.constant 0 : index
    %c0_13 = arith.constant 0 : index
    %26 = vector.load %arg6[%c0_12, %c0_13] : memref<1x512xf32, #tpu.memory_space<vmem>>, vector<1x512xf32>
    %27 = vector.broadcast %26 : vector<1x512xf32> to vector<16x512xf32>
    %28 = arith.addf %25, %27 : vector<16x512xf32>
    %cst_14 = arith.constant 0.000000e+00 : f32
    %29 = vector.broadcast %cst_14 : f32 to vector<16x512xf32>
    %30 = arith.maximumf %28, %29 : vector<16x512xf32>
    %c0_15 = arith.constant 0 : index
    %c0_16 = arith.constant 0 : index
    %31 = vector.load %arg7[%c0_15, %c0_16] : memref<16x512xf32, #tpu.memory_space<vmem>>, vector<16x512xf32>
    tpu.vector_store %arg7[%c0_15, %c0_16], %30 {strides = array<i32>} : memref<16x512xf32, #tpu.memory_space<vmem>>, vector<16x512xf32>,
    return
  }
  func.func @transform_0(%arg0: i32, %arg1: i32) -> (i32, i32) {
    %c0_i32 = arith.constant 0 : i32
    %c0_i32_0 = arith.constant 0 : i32
    return %arg0, %c0_i32 : i32, i32
  }
  func.func @transform_1(%arg0: i32, %arg1: i32) -> (i32, i32) {
    %c0_i32 = arith.constant 0 : i32
    %c0_i32_0 = arith.constant 0 : i32
    %c0_i32_1 = arith.constant 0 : i32
    return %c0_i32, %c0_i32_0 : i32, i32
  }
  func.func @transform_2(%arg0: i32, %arg1: i32) -> (i32, i32) {
    %c0_i32 = arith.constant 0 : i32
    %c0_i32_0 = arith.constant 0 : i32
    %c0_i32_1 = arith.constant 0 : i32
    return %c0_i32, %c0_i32_0 : i32, i32
  }
  func.func @transform_3(%arg0: i32, %arg1: i32) -> (i32, i32) {
    %c0_i32 = arith.constant 0 : i32
    %c0_i32_0 = arith.constant 0 : i32
    return %c0_i32, %arg1 : i32, i32
  }
  func.func @transform_4(%arg0: i32, %arg1: i32) -> (i32, i32) {
    %c0_i32 = arith.constant 0 : i32
    %c0_i32_0 = arith.constant 0 : i32
    return %c0_i32, %arg1 : i32, i32
  }
  func.func @transform_5(%arg0: i32, %arg1: i32) -> (i32, i32) {
    %c0_i32 = arith.constant 0 : i32
    return %arg0, %arg1 : i32, i32
  }
}

module attributes {stable_mosaic.version = 11 : i64} {
  func.func @_mm_kernel(%arg0: i32, %arg1: i32, %arg2: i32, %arg3: memref<16x512xbf16, #tpu.memory_space<vmem>>, %arg4: memref<512x128xbf16, #tpu.memory_space<vmem>>, %arg5: memref<1x128xf32, #tpu.memory_space<vmem>>, %arg6: memref<16x128xf32, #tpu.memory_space<vmem>>, %arg7: memref<16x128xf32, #tpu.memory_space<vmem>>, %arg8: memref<16x128xf32, #tpu.memory_space<vmem>>) attributes {dimension_semantics = [#tpu.dimension_semantics<parallel>, #tpu.dimension_semantics<parallel>, #tpu.dimension_semantics<arbitrary>], iteration_bounds = array<i64: 1, 1, 4>, scalar_prefetch = 0 : i64, scratch_operands = 1 : i64, tpu.core_type = #tpu.core_type<tc>, window_params = [{transform_indices = @transform_0, window_bounds = array<i64: 16, 512>}, {transform_indices = @transform_1, window_bounds = array<i64: 512, 128>}, {transform_indices = @transform_2, window_bounds = array<i64: 1, 128>}, {transform_indices = @transform_3, window_bounds = array<i64: 16, 128>}, {transform_indices = @transform_4, window_bounds = array<i64: 16, 128>}]} {
    %c0_i32 = arith.constant 0 : i32
    %0 = arith.cmpi eq, %arg2, %c0_i32 : i32
    %1 = arith.extui %0 : i1 to i32
    %c0_i32_0 = arith.constant 0 : i32
    %2 = arith.cmpi ne, %1, %c0_i32_0 : i32
    scf.if %2 {
      %cst_9 = arith.constant 0.000000e+00 : f32
      %12 = vector.broadcast %cst_9 : f32 to vector<16x128xf32>
      %c0_10 = arith.constant 0 : index
      %c0_11 = arith.constant 0 : index
      %13 = vector.load %arg8[%c0_10, %c0_11] : memref<16x128xf32, #tpu.memory_space<vmem>>, vector<16x128xf32>
      tpu.vector_store %arg8[%c0_10, %c0_11], %12 {strides = array<i32>} : memref<16x128xf32, #tpu.memory_space<vmem>>, vector<16x128xf32>,
    } else {
    }
    %c0 = arith.constant 0 : index
    %c0_1 = arith.constant 0 : index
    %3 = vector.load %arg8[%c0, %c0_1] : memref<16x128xf32, #tpu.memory_space<vmem>>, vector<16x128xf32>
    %c0_2 = arith.constant 0 : index
    %c0_3 = arith.constant 0 : index
    %4 = vector.load %arg3[%c0_2, %c0_3] : memref<16x512xbf16, #tpu.memory_space<vmem>>, vector<16x512xbf16>
    %c0_4 = arith.constant 0 : index
    %c0_5 = arith.constant 0 : index
    %5 = vector.load %arg4[%c0_4, %c0_5] : memref<512x128xbf16, #tpu.memory_space<vmem>>, vector<512x128xbf16>
    %cst = arith.constant dense<0.000000e+00> : vector<16x128xf32>
    %6 = tpu.matmul %4, %5, %cst {dimension_numbers = #tpu.dot_dimension_numbers<[1], [0], [0], [1], [0, 0, 1, 1], [], []>} : vector<16x512xbf16>, vector<512x128xbf16>, vector<16x128xf32> -> vector<16x128xf32>
    %7 = arith.addf %3, %6 : vector<16x128xf32>
    %c0_6 = arith.constant 0 : index
    %c0_7 = arith.constant 0 : index
    %8 = vector.load %arg8[%c0_6, %c0_7] : memref<16x128xf32, #tpu.memory_space<vmem>>, vector<16x128xf32>
    tpu.vector_store %arg8[%c0_6, %c0_7], %7 {strides = array<i32>} : memref<16x128xf32, #tpu.memory_space<vmem>>, vector<16x128xf32>,
    %c3_i32 = arith.constant 3 : i32
    %9 = arith.cmpi eq, %arg2, %c3_i32 : i32
    %10 = arith.extui %9 : i1 to i32
    %c0_i32_8 = arith.constant 0 : i32
    %11 = arith.cmpi ne, %10, %c0_i32_8 : i32
    scf.if %11 {
      %c0_9 = arith.constant 0 : index
      %c0_10 = arith.constant 0 : index
      %12 = vector.load %arg8[%c0_9, %c0_10] : memref<16x128xf32, #tpu.memory_space<vmem>>, vector<16x128xf32>
      %c0_11 = arith.constant 0 : index
      %c0_12 = arith.constant 0 : index
      %13 = vector.load %arg5[%c0_11, %c0_12] : memref<1x128xf32, #tpu.memory_space<vmem>>, vector<1x128xf32>
      %14 = vector.broadcast %13 : vector<1x128xf32> to vector<16x128xf32>
      %15 = arith.addf %12, %14 : vector<16x128xf32>
      %c0_13 = arith.constant 0 : index
      %c0_14 = arith.constant 0 : index
      %16 = vector.load %arg6[%c0_13, %c0_14] : memref<16x128xf32, #tpu.memory_space<vmem>>, vector<16x128xf32>
      %17 = arith.addf %15, %16 : vector<16x128xf32>
      %c0_15 = arith.constant 0 : index
      %c0_16 = arith.constant 0 : index
      %18 = vector.load %arg7[%c0_15, %c0_16] : memref<16x128xf32, #tpu.memory_space<vmem>>, vector<16x128xf32>
      tpu.vector_store %arg7[%c0_15, %c0_16], %17 {strides = array<i32>} : memref<16x128xf32, #tpu.memory_space<vmem>>, vector<16x128xf32>,
    } else {
    }
    return
  }
  func.func @transform_0(%arg0: i32, %arg1: i32, %arg2: i32) -> (i32, i32) {
    %c0_i32 = arith.constant 0 : i32
    return %arg0, %arg2 : i32, i32
  }
  func.func @transform_1(%arg0: i32, %arg1: i32, %arg2: i32) -> (i32, i32) {
    %c0_i32 = arith.constant 0 : i32
    return %arg2, %arg1 : i32, i32
  }
  func.func @transform_2(%arg0: i32, %arg1: i32, %arg2: i32) -> (i32, i32) {
    %c0_i32 = arith.constant 0 : i32
    %c0_i32_0 = arith.constant 0 : i32
    return %c0_i32, %arg1 : i32, i32
  }
  func.func @transform_3(%arg0: i32, %arg1: i32, %arg2: i32) -> (i32, i32) {
    %c0_i32 = arith.constant 0 : i32
    return %arg0, %arg1 : i32, i32
  }
  func.func @transform_4(%arg0: i32, %arg1: i32, %arg2: i32) -> (i32, i32) {
    %c0_i32 = arith.constant 0 : i32
    return %arg0, %arg1 : i32, i32
  }
}

module attributes {stable_mosaic.version = 11 : i64} {
  func.func @_mm_kernel(%arg0: i32, %arg1: i32, %arg2: i32, %arg3: memref<16x128xbf16, #tpu.memory_space<vmem>>, %arg4: memref<128x128xbf16, #tpu.memory_space<vmem>>, %arg5: memref<1x128xf32, #tpu.memory_space<vmem>>, %arg6: memref<16x128xf32, #tpu.memory_space<vmem>>, %arg7: memref<16x128xf32, #tpu.memory_space<vmem>>) attributes {dimension_semantics = [#tpu.dimension_semantics<parallel>, #tpu.dimension_semantics<parallel>, #tpu.dimension_semantics<arbitrary>], iteration_bounds = array<i64: 1, 1, 1>, scalar_prefetch = 0 : i64, scratch_operands = 1 : i64, tpu.core_type = #tpu.core_type<tc>, window_params = [{transform_indices = @transform_0, window_bounds = array<i64: 16, 128>}, {transform_indices = @transform_1, window_bounds = array<i64: 128, 128>}, {transform_indices = @transform_2, window_bounds = array<i64: 1, 128>}, {transform_indices = @transform_3, window_bounds = array<i64: 16, 128>}]} {
    %c0_i32 = arith.constant 0 : i32
    %0 = arith.cmpi eq, %arg2, %c0_i32 : i32
    %1 = arith.extui %0 : i1 to i32
    %c0_i32_0 = arith.constant 0 : i32
    %2 = arith.cmpi ne, %1, %c0_i32_0 : i32
    scf.if %2 {
      %cst_10 = arith.constant 0.000000e+00 : f32
      %12 = vector.broadcast %cst_10 : f32 to vector<16x128xf32>
      %c0_11 = arith.constant 0 : index
      %c0_12 = arith.constant 0 : index
      %13 = vector.load %arg7[%c0_11, %c0_12] : memref<16x128xf32, #tpu.memory_space<vmem>>, vector<16x128xf32>
      tpu.vector_store %arg7[%c0_11, %c0_12], %12 {strides = array<i32>} : memref<16x128xf32, #tpu.memory_space<vmem>>, vector<16x128xf32>,
    } else {
    }
    %c0 = arith.constant 0 : index
    %c0_1 = arith.constant 0 : index
    %3 = vector.load %arg7[%c0, %c0_1] : memref<16x128xf32, #tpu.memory_space<vmem>>, vector<16x128xf32>
    %c0_2 = arith.constant 0 : index
    %c0_3 = arith.constant 0 : index
    %4 = vector.load %arg3[%c0_2, %c0_3] : memref<16x128xbf16, #tpu.memory_space<vmem>>, vector<16x128xbf16>
    %c0_4 = arith.constant 0 : index
    %c0_5 = arith.constant 0 : index
    %5 = vector.load %arg4[%c0_4, %c0_5] : memref<128x128xbf16, #tpu.memory_space<vmem>>, vector<128x128xbf16>
    %cst = arith.constant dense<0.000000e+00> : vector<16x128xf32>
    %6 = tpu.matmul %4, %5, %cst {dimension_numbers = #tpu.dot_dimension_numbers<[1], [0], [0], [1], [0, 0, 1, 1], [], []>} : vector<16x128xbf16>, vector<128x128xbf16>, vector<16x128xf32> -> vector<16x128xf32>
    %7 = arith.addf %3, %6 : vector<16x128xf32>
    %c0_6 = arith.constant 0 : index
    %c0_7 = arith.constant 0 : index
    %8 = vector.load %arg7[%c0_6, %c0_7] : memref<16x128xf32, #tpu.memory_space<vmem>>, vector<16x128xf32>
    tpu.vector_store %arg7[%c0_6, %c0_7], %7 {strides = array<i32>} : memref<16x128xf32, #tpu.memory_space<vmem>>, vector<16x128xf32>,
    %c0_i32_8 = arith.constant 0 : i32
    %9 = arith.cmpi eq, %arg2, %c0_i32_8 : i32
    %10 = arith.extui %9 : i1 to i32
    %c0_i32_9 = arith.constant 0 : i32
    %11 = arith.cmpi ne, %10, %c0_i32_9 : i32
    scf.if %11 {
      %c0_10 = arith.constant 0 : index
      %c0_11 = arith.constant 0 : index
      %12 = vector.load %arg7[%c0_10, %c0_11] : memref<16x128xf32, #tpu.memory_space<vmem>>, vector<16x128xf32>
      %c0_12 = arith.constant 0 : index
      %c0_13 = arith.constant 0 : index
      %13 = vector.load %arg5[%c0_12, %c0_13] : memref<1x128xf32, #tpu.memory_space<vmem>>, vector<1x128xf32>
      %14 = vector.broadcast %13 : vector<1x128xf32> to vector<16x128xf32>
      %15 = arith.addf %12, %14 : vector<16x128xf32>
      %c0_14 = arith.constant 0 : index
      %c0_15 = arith.constant 0 : index
      %16 = vector.load %arg6[%c0_14, %c0_15] : memref<16x128xf32, #tpu.memory_space<vmem>>, vector<16x128xf32>
      tpu.vector_store %arg6[%c0_14, %c0_15], %15 {strides = array<i32>} : memref<16x128xf32, #tpu.memory_space<vmem>>, vector<16x128xf32>,
    } else {
    }
    return
  }
  func.func @transform_0(%arg0: i32, %arg1: i32, %arg2: i32) -> (i32, i32) {
    %c0_i32 = arith.constant 0 : i32
    return %arg0, %arg2 : i32, i32
  }
  func.func @transform_1(%arg0: i32, %arg1: i32, %arg2: i32) -> (i32, i32) {
    %c0_i32 = arith.constant 0 : i32
    return %arg2, %arg1 : i32, i32
  }
  func.func @transform_2(%arg0: i32, %arg1: i32, %arg2: i32) -> (i32, i32) {
    %c0_i32 = arith.constant 0 : i32
    %c0_i32_0 = arith.constant 0 : i32
    return %c0_i32, %arg1 : i32, i32
  }
  func.func @transform_3(%arg0: i32, %arg1: i32, %arg2: i32) -> (i32, i32) {
    %c0_i32 = arith.constant 0 : i32
    return %arg0, %arg1 : i32, i32
  }
}

</mosaic_0001>

<llo_original>
// kernel: forward.28
$region0: #{forward.28}
  #allocation0 [shape = 'u32[]', space=smem, size = 0x4, offset = 0x4, fixed_abs, tag = 'smem constant byte address 0x4 - core index']
  #allocation1 [shape = 'u32[144,128]{1,0:T(1,128)}', space=vmem, size = 0x12000, scoped, tag = 'internal scratch']
  %s0 = inlined_call_operand.vmem [shape: f32[2,10,10,32], index: 0, kind: input, shape index: {}]
  %s1 = inlined_call_operand.vmem [shape: f32[9,32], index: 1, kind: input, shape index: {}]
  %s2 = inlined_call_operand.vmem [shape: f32[1,32], index: 2, kind: input, shape index: {}]
  %s3 = inlined_call_operand.vmem [shape: f32[2,8,8,32], index: 3, kind: output, shape index: {}]
  %s4 = sld [smem:[#allocation0]]
  $region45: #{forward.28} parent=0
    _
  %s6 = ssub.s32 1, %s4
  %s7 = scalar_select 0, %s6, %s4
  loop: start=0, step=1, limit=4
  $region2: #{forward.28} parent=0 // loop_pre_header
    _
  $region3: #{forward.28} parent=0 // loop_header
    %s9 = sphi 0, %s13
    %p10 = scmp.ge.s32.totalorder %s9, 4
    %s19 = sphi 0, %s21
    %s22 = sphi 0, %s19
    %s23 = sphi 0, %s22
    %s39 = sphi 0, %s23
    %s43 = sphi 0, %s43
    %s45 = sphi 0, %s43
    %s46 = sphi 0, %s45
    %s60 = sphi 0, %s46
    %s64 = sphi 0, %s64
    %s66 = sphi 0, %s64
    %s67 = sphi 0, %s66
    %s81 = sphi 0, %s67
    %s87 = sphi 0, %s89
    %s90 = sphi 0, %s87
    %s91 = sphi 0, %s90
    %s107 = sphi 0, %s91
  $region4: #{forward.28} parent=0 // loop_header_branch
    %12 = sbr.rel (%p10) target = $region8
  $region5: #{forward.28} parent=0 // loop_body
    %s14 = ssub.s32 %s9, 1
    %s15 = ssub.s32 %s9, 2
    %s16 = sadd.s32 %s9, 1
    %s17 = ssub.s32 %s9, %s16
    %p18 = scmp.eq.s32.totalorder %s17, 0
    %s20 = sadd.s32 %s19, 1
    %s21 = scalar_select %p18, %s19, %s20
    %p24 = pneg %p18
    %p25 = scmp.eq.s32.totalorder %s9, 1
    %p26 = por %p24, %p25
    %p27 = scmp.ne.s32.totalorder %s19, %s22
    %p28 = scmp.eq.s32.totalorder %s9, 0
    %p29 = por %p27, %p28
    %p30 = scmp.ne.s32.totalorder %s19, %s22
    %p31 = scmp.eq.s32.totalorder %s14, 1
    %p32 = por %p30, %p31
    %p33 = scmp.ne.s32.totalorder %s22, %s23
    %p34 = scmp.eq.s32.totalorder %s14, 0
    %p35 = por %p33, %p34
    %p36 = scmp.ne.s32.totalorder %s22, %s23
    %p37 = scmp.eq.s32.totalorder %s15, 1
    %p38 = por %p36, %p37
    %p40 = scmp.ne.s32.totalorder %s23, %s39
    %p41 = scmp.eq.s32.totalorder %s15, 0
    %p42 = por %p40, %p41
    %s44 = sadd.s32 %s43, 1
    %p47 = scmp.eq.s32.totalorder %s9, 1
    %p48 = scmp.ne.s32.totalorder %s43, %s45
    %p49 = scmp.eq.s32.totalorder %s9, 0
    %p50 = por %p48, %p49
    %p51 = scmp.ne.s32.totalorder %s43, %s45
    %p52 = scmp.eq.s32.totalorder %s14, 1
    %p53 = por %p51, %p52
    %p54 = scmp.ne.s32.totalorder %s45, %s46
    %p55 = scmp.eq.s32.totalorder %s14, 0
    %p56 = por %p54, %p55
    %p57 = scmp.ne.s32.totalorder %s45, %s46
    %p58 = scmp.eq.s32.totalorder %s15, 1
    %p59 = por %p57, %p58
    %p61 = scmp.ne.s32.totalorder %s46, %s60
    %p62 = scmp.eq.s32.totalorder %s15, 0
    %p63 = por %p61, %p62
    %s65 = sadd.s32 %s64, 1
    %p68 = scmp.eq.s32.totalorder %s9, 1
    %p69 = scmp.ne.s32.totalorder %s64, %s66
    %p70 = scmp.eq.s32.totalorder %s9, 0
    %p71 = por %p69, %p70
    %p72 = scmp.ne.s32.totalorder %s64, %s66
    %p73 = scmp.eq.s32.totalorder %s14, 1
    %p74 = por %p72, %p73
    %p75 = scmp.ne.s32.totalorder %s66, %s67
    %p76 = scmp.eq.s32.totalorder %s14, 0
    %p77 = por %p75, %p76
    %p78 = scmp.ne.s32.totalorder %s66, %s67
    %p79 = scmp.eq.s32.totalorder %s15, 1
    %p80 = por %p78, %p79
    %p82 = scmp.ne.s32.totalorder %s67, %s81
    %p83 = scmp.eq.s32.totalorder %s15, 0
    %p84 = por %p82, %p83
    %s85 = ssub.s32 %s9, %s16
    %p86 = scmp.eq.s32.totalorder %s85, 0
    %s88 = sadd.s32 %s87, 1
    %s89 = scalar_select %p86, %s87, %s88
    %p92 = pneg %p86
    %p93 = scmp.eq.s32.totalorder %s9, 1
    %p94 = por %p92, %p93
    %p95 = scmp.ne.s32.totalorder %s87, %s90
    %p96 = scmp.eq.s32.totalorder %s9, 0
    %p97 = por %p95, %p96
    %p98 = scmp.ne.s32.totalorder %s87, %s90
    %p99 = scmp.eq.s32.totalorder %s14, 1
    %p100 = por %p98, %p99
    %p101 = scmp.ne.s32.totalorder %s90, %s91
    %p102 = scmp.eq.s32.totalorder %s14, 0
    %p103 = por %p101, %p102
    %p104 = scmp.ne.s32.totalorder %s90, %s91
    %p105 = scmp.eq.s32.totalorder %s15, 1
    %p106 = por %p104, %p105
    %p108 = scmp.ne.s32.totalorder %s91, %s107
    %p109 = scmp.eq.s32.totalorder %s15, 0
    %p110 = por %p108, %p109
    %p111 = scmp.le.s32.totalorder 1, %s9
    %p112 = scmp.lt.s32.totalorder %s9, 3
    %p113 = pnand %p111, %p112
    %p114 = pneg %p113
    // Predicated region
    $region9: #{forward.28} parent=5 // pred_check
      _
    $region10: #{forward.28} parent=5 // pred_check_branch
      %116 = sbr.rel (%p113) target = $region12
    $region11: #{forward.28} parent=5 // pred_region
      %s117 = ssub.s32 %s9, 1
      // Predicated region
      $region13: #{forward.28} parent=11 // pred_check
        %p118 = pneg %p56
      $region14: #{forward.28} parent=11 // pred_check_branch
        %120 = sbr.rel (%p118) target = $region16
      $region15: #{forward.28} parent=11 // pred_region
        _
      $region16: #{forward.28} parent=11 // pred_fallthru
        _
      // Predicated region
      $region17: #{forward.28} parent=11 // pred_check
        %p121 = pneg %p77
      $region18: #{forward.28} parent=11 // pred_check_branch
        %123 = sbr.rel (%p121) target = $region20
      $region19: #{forward.28} parent=11 // pred_region
        _
      $region20: #{forward.28} parent=11 // pred_fallthru
        _
    $region12: #{forward.28} parent=5 // pred_fallthru
      _
    %p124 = scmp.lt.s32.totalorder %s9, 2
    // Predicated region
    $region21: #{forward.28} parent=5 // pred_check
      %p125 = pneg %p124
    $region22: #{forward.28} parent=5 // pred_check_branch
      %127 = sbr.rel (%p125) target = $region24
    $region23: #{forward.28} parent=5 // pred_region
      // Predicated region
      $region25: #{forward.28} parent=23 // pred_check
        %p128 = pneg %p29
      $region26: #{forward.28} parent=23 // pred_check_branch
        %130 = sbr.rel (%p128) target = $region28
      $region27: #{forward.28} parent=23 // pred_region
        %p131 = scmp.lt.s32.totalorder %s9, 1
        %s132 = scalar_select %p131, %s9, 1
        %s133 = smul.addr %s132, 20
        %s134 = smul.addr %s133, 8
        %s135 = scalar_lea.vmem %s0, %s134
      $region28: #{forward.28} parent=23 // pred_fallthru
        _
    $region24: #{forward.28} parent=5 // pred_fallthru
      _
    %p136 = scmp.le.s32.totalorder 1, %s9
    %p137 = scmp.lt.s32.totalorder %s9, 3
    %p138 = pnand %p136, %p137
    %p139 = pneg %p138
    // Predicated region
    $region29: #{forward.28} parent=5 // pred_check
      _
    $region30: #{forward.28} parent=5 // pred_check_branch
      %141 = sbr.rel (%p138) target = $region32
    $region31: #{forward.28} parent=5 // pred_region
      %s142 = ssub.s32 %s9, 1
      %p143 = scmp.lt.s32.totalorder %s14, 1
      %s144 = scalar_select %p143, %s14, 1
      %s145 = smul.addr %s144, 20
      %s146 = smul.addr %s145, 8
      %s147 = scalar_lea.vmem %s0, %s146
      %p148 = pneg %p35
      %p149 = pneg %p32
      %p150 = pneg %p56
      %p151 = pneg %p53
      %p152 = pneg %p77
      %p153 = pneg %p74
      %p154 = pneg %p103
      %p155 = pneg %p100
      %p156 = scmp.lt.s32.totalorder %s14, 1
      %s157 = scalar_select %p156, %s14, 1
      %s158 = smul.addr %s157, 8
      %s159 = smul.addr %s158, 8
      %s160 = scalar_lea.vmem %s3, %s159
      %p161 = scmp.lt.s32.totalorder %s14, 1
      %s162 = scalar_select %p161, %s14, 1
      %s163 = smul.addr %s162, 20
      %s164 = smul.addr %s163, 8
      %s165 = scalar_lea.vmem %s0, %s164
      %p166 = scmp.lt.s32.totalorder %s14, 1
      %s167 = scalar_select %p166, %s14, 1
      %s168 = smul.addr %s167, 8
      %s169 = smul.addr %s168, 8
      %s170 = scalar_lea.vmem %s3, %s169
      %v171 = vld [vmem:[%s165] sm:$0xff]
      %v172 = vld [vmem:[%s165 + $0x8] sm:$0x3]
      %v173 = vld [vmem:[%s165 + $0x10] sm:$0xff]
      %v174 = vld [vmem:[%s165 + $0x18] sm:$0x3]
      %v175 = vld [vmem:[%s165 + $0x20] sm:$0xff]
      %v176 = vld [vmem:[%s165 + $0x28] sm:$0x3]
      %v177 = vld [vmem:[%s165 + $0x30] sm:$0xff]
      %v178 = vld [vmem:[%s165 + $0x38] sm:$0x3]
      %v179 = vld [vmem:[%s165 + $0x40] sm:$0xff]
      %v180 = vld [vmem:[%s165 + $0x48] sm:$0x3]
      %v181 = vld [vmem:[%s165 + $0x50] sm:$0xff]
      %v182 = vld [vmem:[%s165 + $0x58] sm:$0x3]
      %v183 = vld [vmem:[%s165 + $0x60] sm:$0xff]
      %v184 = vld [vmem:[%s165 + $0x68] sm:$0x3]
      %v185 = vld [vmem:[%s165 + $0x70] sm:$0xff]
      %v186 = vld [vmem:[%s165 + $0x78] sm:$0x3]
      %v187 = vld [vmem:[%s165 + $0x80] sm:$0xff]
      %v188 = vld [vmem:[%s165 + $0x88] sm:$0x3]
      %v189 = vld [vmem:[%s165 + $0x90] sm:$0xff]
      %v190 = vld [vmem:[%s165 + $0x98] sm:$0x3]
      %v191 = vld [vmem:[%s1] sm:$0xff]
      %v192 = vld [vmem:[%s1 + $0x8] sm:$0x1]
      %v193 = vlaneseq
      %v194 = vshrl.u32 %v193, 7
      %v195 = vsub.s32 0, %v194
      %v196 = vrot.slane %v191, %v195
      %v197 = vmul.f32 %v171, %v196
      %v198 = vmul.f32 %v173, %v196
      %v199 = vmul.f32 %v175, %v196
      %v200 = vmul.f32 %v177, %v196
      %v201 = vmul.f32 %v179, %v196
      %v202 = vmul.f32 %v181, %v196
      %v203 = vmul.f32 %v183, %v196
      %v204 = vmul.f32 %v185, %v196
      %v205 = vlaneseq
      %v206 = vshrl.u32 %v205, 7
      %v207 = vsub.s32 1, %v206
      %v208 = vrot.slane %v191, %v207
      %v209 = vmul.f32 %v171, %v208
      %v210 = vmul.f32 %v172, %v208
      %v211 = vmul.f32 %v173, %v208
      %v212 = vmul.f32 %v174, %v208
      %v213 = vmul.f32 %v175, %v208
      %v214 = vmul.f32 %v176, %v208
      %v215 = vmul.f32 %v177, %v208
      %v216 = vmul.f32 %v178, %v208
      %v217 = vmul.f32 %v179, %v208
      %v218 = vmul.f32 %v180, %v208
      %v219 = vmul.f32 %v181, %v208
      %v220 = vmul.f32 %v182, %v208
      %v221 = vmul.f32 %v183, %v208
      %v222 = vmul.f32 %v184, %v208
      %v223 = vmul.f32 %v185, %v208
      %v224 = vmul.f32 %v186, %v208
      %vm241 = vcmask 1046528
      %v242 = vrot.slane %v209, 1
      %v243 = vrot.slane %v210, 1
      %v244 = vsel %vm241, %v242, %v243
      %v245 = vrot.slane %v211, 1
      %v246 = vrot.slane %v212, 1
      %v247 = vsel %vm241, %v245, %v246
      %v248 = vrot.slane %v213, 1
      %v249 = vrot.slane %v214, 1
      %v250 = vsel %vm241, %v248, %v249
      %v251 = vrot.slane %v215, 1
      %v252 = vrot.slane %v216, 1
      %v253 = vsel %vm241, %v251, %v252
      %v254 = vrot.slane %v217, 1
      %v255 = vrot.slane %v218, 1
      %v256 = vsel %vm241, %v254, %v255
      %v257 = vrot.slane %v219, 1
      %v258 = vrot.slane %v220, 1
      %v259 = vsel %vm241, %v257, %v258
      %v260 = vrot.slane %v221, 1
      %v261 = vrot.slane %v222, 1
      %v262 = vsel %vm241, %v260, %v261
      %v263 = vrot.slane %v223, 1
      %v264 = vrot.slane %v224, 1
      %v265 = vsel %vm241, %v263, %v264
      %v274 = vadd.f32 %v197, %v244
      %v275 = vadd.f32 %v198, %v247
      %v276 = vadd.f32 %v199, %v250
      %v277 = vadd.f32 %v200, %v253
      %v278 = vadd.f32 %v201, %v256
      %v279 = vadd.f32 %v202, %v259
      %v280 = vadd.f32 %v203, %v262
      %v281 = vadd.f32 %v204, %v265
      %v282 = vlaneseq
      %v283 = vshrl.u32 %v282, 7
      %v284 = vsub.s32 2, %v283
      %v285 = vrot.slane %v191, %v284
      %v286 = vmul.f32 %v171, %v285
      %v287 = vmul.f32 %v172, %v285
      %v288 = vmul.f32 %v173, %v285
      %v289 = vmul.f32 %v174, %v285
      %v290 = vmul.f32 %v175, %v285
      %v291 = vmul.f32 %v176, %v285
      %v292 = vmul.f32 %v177, %v285
      %v293 = vmul.f32 %v178, %v285
      %v294 = vmul.f32 %v179, %v285
      %v295 = vmul.f32 %v180, %v285
      %v296 = vmul.f32 %v181, %v285
      %v297 = vmul.f32 %v182, %v285
      %v298 = vmul.f32 %v183, %v285
      %v299 = vmul.f32 %v184, %v285
      %v300 = vmul.f32 %v185, %v285
      %v301 = vmul.f32 %v186, %v285
      %vm318 = vcmask 1045504
      %v319 = vrot.slane %v286, 2
      %v320 = vrot.slane %v287, 2
      %v321 = vsel %vm318, %v319, %v320
      %v322 = vrot.slane %v288, 2
      %v323 = vrot.slane %v289, 2
      %v324 = vsel %vm318, %v322, %v323
      %v325 = vrot.slane %v290, 2
      %v326 = vrot.slane %v291, 2
      %v327 = vsel %vm318, %v325, %v326
      %v328 = vrot.slane %v292, 2
      %v329 = vrot.slane %v293, 2
      %v330 = vsel %vm318, %v328, %v329
      %v331 = vrot.slane %v294, 2
      %v332 = vrot.slane %v295, 2
      %v333 = vsel %vm318, %v331, %v332
      %v334 = vrot.slane %v296, 2
      %v335 = vrot.slane %v297, 2
      %v336 = vsel %vm318, %v334, %v335
      %v337 = vrot.slane %v298, 2
      %v338 = vrot.slane %v299, 2
      %v339 = vsel %vm318, %v337, %v338
      %v340 = vrot.slane %v300, 2
      %v341 = vrot.slane %v301, 2
      %v342 = vsel %vm318, %v340, %v341
      %v351 = vadd.f32 %v274, %v321
      %v352 = vadd.f32 %v275, %v324
      %v353 = vadd.f32 %v276, %v327
      %v354 = vadd.f32 %v277, %v330
      %v355 = vadd.f32 %v278, %v333
      %v356 = vadd.f32 %v279, %v336
      %v357 = vadd.f32 %v280, %v339
      %v358 = vadd.f32 %v281, %v342
      %v359 = vlaneseq
      %v360 = vshrl.u32 %v359, 7
      %v361 = vsub.s32 3, %v360
      %v362 = vrot.slane %v191, %v361
      %v363 = vmul.f32 %v173, %v362
      %v364 = vmul.f32 %v175, %v362
      %v365 = vmul.f32 %v177, %v362
      %v366 = vmul.f32 %v179, %v362
      %v367 = vmul.f32 %v181, %v362
      %v368 = vmul.f32 %v183, %v362
      %v369 = vmul.f32 %v185, %v362
      %v370 = vmul.f32 %v187, %v362
      %v371 = vadd.f32 %v351, %v363
      %v372 = vadd.f32 %v352, %v364
      %v373 = vadd.f32 %v353, %v365
      %v374 = vadd.f32 %v354, %v366
      %v375 = vadd.f32 %v355, %v367
      %v376 = vadd.f32 %v356, %v368
      %v377 = vadd.f32 %v357, %v369
      %v378 = vadd.f32 %v358, %v370
      %v379 = vlaneseq
      %v380 = vshrl.u32 %v379, 7
      %v381 = vsub.s32 4, %v380
      %v382 = vrot.slane %v191, %v381
      %v383 = vmul.f32 %v173, %v382
      %v384 = vmul.f32 %v174, %v382
      %v385 = vmul.f32 %v175, %v382
      %v386 = vmul.f32 %v176, %v382
      %v387 = vmul.f32 %v177, %v382
      %v388 = vmul.f32 %v178, %v382
      %v389 = vmul.f32 %v179, %v382
      %v390 = vmul.f32 %v180, %v382
      %v391 = vmul.f32 %v181, %v382
      %v392 = vmul.f32 %v182, %v382
      %v393 = vmul.f32 %v183, %v382
      %v394 = vmul.f32 %v184, %v382
      %v395 = vmul.f32 %v185, %v382
      %v396 = vmul.f32 %v186, %v382
      %v397 = vmul.f32 %v187, %v382
      %v398 = vmul.f32 %v188, %v382
      %v415 = vrot.slane %v383, 1
      %v416 = vrot.slane %v384, 1
      %v417 = vsel %vm241, %v415, %v416
      %v418 = vrot.slane %v385, 1
      %v419 = vrot.slane %v386, 1
      %v420 = vsel %vm241, %v418, %v419
      %v421 = vrot.slane %v387, 1
      %v422 = vrot.slane %v388, 1
      %v423 = vsel %vm241, %v421, %v422
      %v424 = vrot.slane %v389, 1
      %v425 = vrot.slane %v390, 1
      %v426 = vsel %vm241, %v424, %v425
      %v427 = vrot.slane %v391, 1
      %v428 = vrot.slane %v392, 1
      %v429 = vsel %vm241, %v427, %v428
      %v430 = vrot.slane %v393, 1
      %v431 = vrot.slane %v394, 1
      %v432 = vsel %vm241, %v430, %v431
      %v433 = vrot.slane %v395, 1
      %v434 = vrot.slane %v396, 1
      %v435 = vsel %vm241, %v433, %v434
      %v436 = vrot.slane %v397, 1
      %v437 = vrot.slane %v398, 1
      %v438 = vsel %vm241, %v436, %v437
      %v447 = vadd.f32 %v371, %v417
      %v448 = vadd.f32 %v372, %v420
      %v449 = vadd.f32 %v373, %v423
      %v450 = vadd.f32 %v374, %v426
      %v451 = vadd.f32 %v375, %v429
      %v452 = vadd.f32 %v376, %v432
      %v453 = vadd.f32 %v377, %v435
      %v454 = vadd.f32 %v378, %v438
      %v455 = vlaneseq
      %v456 = vshrl.u32 %v455, 7
      %v457 = vsub.s32 5, %v456
      %v458 = vrot.slane %v191, %v457
      %v459 = vmul.f32 %v173, %v458
      %v460 = vmul.f32 %v174, %v458
      %v461 = vmul.f32 %v175, %v458
      %v462 = vmul.f32 %v176, %v458
      %v463 = vmul.f32 %v177, %v458
      %v464 = vmul.f32 %v178, %v458
      %v465 = vmul.f32 %v179, %v458
      %v466 = vmul.f32 %v180, %v458
      %v467 = vmul.f32 %v181, %v458
      %v468 = vmul.f32 %v182, %v458
      %v469 = vmul.f32 %v183, %v458
      %v470 = vmul.f32 %v184, %v458
      %v471 = vmul.f32 %v185, %v458
      %v472 = vmul.f32 %v186, %v458
      %v473 = vmul.f32 %v187, %v458
      %v474 = vmul.f32 %v188, %v458
      %v491 = vrot.slane %v459, 2
      %v492 = vrot.slane %v460, 2
      %v493 = vsel %vm318, %v491, %v492
      %v494 = vrot.slane %v461, 2
      %v495 = vrot.slane %v462, 2
      %v496 = vsel %vm318, %v494, %v495
      %v497 = vrot.slane %v463, 2
      %v498 = vrot.slane %v464, 2
      %v499 = vsel %vm318, %v497, %v498
      %v500 = vrot.slane %v465, 2
      %v501 = vrot.slane %v466, 2
      %v502 = vsel %vm318, %v500, %v501
      %v503 = vrot.slane %v467, 2
      %v504 = vrot.slane %v468, 2
      %v505 = vsel %vm318, %v503, %v504
      %v506 = vrot.slane %v469, 2
      %v507 = vrot.slane %v470, 2
      %v508 = vsel %vm318, %v506, %v507
      %v509 = vrot.slane %v471, 2
      %v510 = vrot.slane %v472, 2
      %v511 = vsel %vm318, %v509, %v510
      %v512 = vrot.slane %v473, 2
      %v513 = vrot.slane %v474, 2
      %v514 = vsel %vm318, %v512, %v513
      %v523 = vadd.f32 %v447, %v493
      %v524 = vadd.f32 %v448, %v496
      %v525 = vadd.f32 %v449, %v499
      %v526 = vadd.f32 %v450, %v502
      %v527 = vadd.f32 %v451, %v505
      %v528 = vadd.f32 %v452, %v508
      %v529 = vadd.f32 %v453, %v511
      %v530 = vadd.f32 %v454, %v514
      %v531 = vlaneseq
      %v532 = vshrl.u32 %v531, 7
      %v533 = vsub.s32 6, %v532
      %v534 = vrot.slane %v191, %v533
      %v535 = vmul.f32 %v175, %v534
      %v536 = vmul.f32 %v177, %v534
      %v537 = vmul.f32 %v179, %v534
      %v538 = vmul.f32 %v181, %v534
      %v539 = vmul.f32 %v183, %v534
      %v540 = vmul.f32 %v185, %v534
      %v541 = vmul.f32 %v187, %v534
      %v542 = vmul.f32 %v189, %v534
      %v543 = vadd.f32 %v523, %v535
      %v544 = vadd.f32 %v524, %v536
      %v545 = vadd.f32 %v525, %v537
      %v546 = vadd.f32 %v526, %v538
      %v547 = vadd.f32 %v527, %v539
      %v548 = vadd.f32 %v528, %v540
      %v549 = vadd.f32 %v529, %v541
      %v550 = vadd.f32 %v530, %v542
      %v551 = vlaneseq
      %v552 = vshrl.u32 %v551, 7
      %v553 = vsub.s32 7, %v552
      %v554 = vrot.slane %v191, %v553
      %v555 = vmul.f32 %v175, %v554
      %v556 = vmul.f32 %v176, %v554
      %v557 = vmul.f32 %v177, %v554
      %v558 = vmul.f32 %v178, %v554
      %v559 = vmul.f32 %v179, %v554
      %v560 = vmul.f32 %v180, %v554
      %v561 = vmul.f32 %v181, %v554
      %v562 = vmul.f32 %v182, %v554
      %v563 = vmul.f32 %v183, %v554
      %v564 = vmul.f32 %v184, %v554
      %v565 = vmul.f32 %v185, %v554
      %v566 = vmul.f32 %v186, %v554
      %v567 = vmul.f32 %v187, %v554
      %v568 = vmul.f32 %v188, %v554
      %v569 = vmul.f32 %v189, %v554
      %v570 = vmul.f32 %v190, %v554
      %v587 = vrot.slane %v555, 1
      %v588 = vrot.slane %v556, 1
      %v589 = vsel %vm241, %v587, %v588
      %v590 = vrot.slane %v557, 1
      %v591 = vrot.slane %v558, 1
      %v592 = vsel %vm241, %v590, %v591
      %v593 = vrot.slane %v559, 1
      %v594 = vrot.slane %v560, 1
      %v595 = vsel %vm241, %v593, %v594
      %v596 = vrot.slane %v561, 1
      %v597 = vrot.slane %v562, 1
      %v598 = vsel %vm241, %v596, %v597
      %v599 = vrot.slane %v563, 1
      %v600 = vrot.slane %v564, 1
      %v601 = vsel %vm241, %v599, %v600
      %v602 = vrot.slane %v565, 1
      %v603 = vrot.slane %v566, 1
      %v604 = vsel %vm241, %v602, %v603
      %v605 = vrot.slane %v567, 1
      %v606 = vrot.slane %v568, 1
      %v607 = vsel %vm241, %v605, %v606
      %v608 = vrot.slane %v569, 1
      %v609 = vrot.slane %v570, 1
      %v610 = vsel %vm241, %v608, %v609
      %v619 = vadd.f32 %v543, %v589
      %v620 = vadd.f32 %v544, %v592
      %v621 = vadd.f32 %v545, %v595
      %v622 = vadd.f32 %v546, %v598
      %v623 = vadd.f32 %v547, %v601
      %v624 = vadd.f32 %v548, %v604
      %v625 = vadd.f32 %v549, %v607
      %v626 = vadd.f32 %v550, %v610
      %v627 = vlaneseq
      %v628 = vshrl.u32 %v627, 7
      %v629 = vsub.s32 0, %v628
      %v630 = vrot.slane %v192, %v629
      %v631 = vmul.f32 %v175, %v630
      %v632 = vmul.f32 %v176, %v630
      %v633 = vmul.f32 %v177, %v630
      %v634 = vmul.f32 %v178, %v630
      %v635 = vmul.f32 %v179, %v630
      %v636 = vmul.f32 %v180, %v630
      %v637 = vmul.f32 %v181, %v630
      %v638 = vmul.f32 %v182, %v630
      %v639 = vmul.f32 %v183, %v630
      %v640 = vmul.f32 %v184, %v630
      %v641 = vmul.f32 %v185, %v630
      %v642 = vmul.f32 %v186, %v630
      %v643 = vmul.f32 %v187, %v630
      %v644 = vmul.f32 %v188, %v630
      %v645 = vmul.f32 %v189, %v630
      %v646 = vmul.f32 %v190, %v630
      %v663 = vrot.slane %v631, 2
      %v664 = vrot.slane %v632, 2
      %v665 = vsel %vm318, %v663, %v664
      %v666 = vrot.slane %v633, 2
      %v667 = vrot.slane %v634, 2
      %v668 = vsel %vm318, %v666, %v667
      %v669 = vrot.slane %v635, 2
      %v670 = vrot.slane %v636, 2
      %v671 = vsel %vm318, %v669, %v670
      %v672 = vrot.slane %v637, 2
      %v673 = vrot.slane %v638, 2
      %v674 = vsel %vm318, %v672, %v673
      %v675 = vrot.slane %v639, 2
      %v676 = vrot.slane %v640, 2
      %v677 = vsel %vm318, %v675, %v676
      %v678 = vrot.slane %v641, 2
      %v679 = vrot.slane %v642, 2
      %v680 = vsel %vm318, %v678, %v679
      %v681 = vrot.slane %v643, 2
      %v682 = vrot.slane %v644, 2
      %v683 = vsel %vm318, %v681, %v682
      %v684 = vrot.slane %v645, 2
      %v685 = vrot.slane %v646, 2
      %v686 = vsel %vm318, %v684, %v685
      %v695 = vadd.f32 %v619, %v665
      %v696 = vadd.f32 %v620, %v668
      %v697 = vadd.f32 %v621, %v671
      %v698 = vadd.f32 %v622, %v674
      %v699 = vadd.f32 %v623, %v677
      %v700 = vadd.f32 %v624, %v680
      %v701 = vadd.f32 %v625, %v683
      %v702 = vadd.f32 %v626, %v686
      %v703 = vld [vmem:[%s2] sm:$0x1]
      %v705 = vlaneseq
      %v706 = vshrl.u32 %v705, 7
      %v707 = vsub.s32 0, %v706
      %v708 = vrot.slane %v703, %v707
      %v710 = vadd.f32 %v695, %v708
      %v711 = vadd.f32 %v696, %v708
      %v712 = vadd.f32 %v697, %v708
      %v713 = vadd.f32 %v698, %v708
      %v714 = vadd.f32 %v699, %v708
      %v715 = vadd.f32 %v700, %v708
      %v716 = vadd.f32 %v701, %v708
      %v717 = vadd.f32 %v702, %v708
      %v718 = vmax.f32 %v710, 0.0
      %v719 = vmax.f32 %v711, 0.0
      %v720 = vmax.f32 %v712, 0.0
      %v721 = vmax.f32 %v713, 0.0
      %v722 = vmax.f32 %v714, 0.0
      %v723 = vmax.f32 %v715, 0.0
      %v724 = vmax.f32 %v716, 0.0
      %v725 = vmax.f32 %v717, 0.0
      %v726 = vmin.f32 %v718, 6.0
      %v727 = vmin.f32 %v719, 6.0
      %v728 = vmin.f32 %v720, 6.0
      %v729 = vmin.f32 %v721, 6.0
      %v730 = vmin.f32 %v722, 6.0
      %v731 = vmin.f32 %v723, 6.0
      %v732 = vmin.f32 %v724, 6.0
      %v733 = vmin.f32 %v725, 6.0
      %vm734 = vcmask 261120
      %735 = vst.msk [vmem:[%s170] sm:$0xff] %vm734, %v726
      %736 = vst.msk [vmem:[%s170 + $0x8] sm:$0xff] %vm734, %v727
      %737 = vst.msk [vmem:[%s170 + $0x10] sm:$0xff] %vm734, %v728
      %738 = vst.msk [vmem:[%s170 + $0x18] sm:$0xff] %vm734, %v729
      %739 = vst.msk [vmem:[%s170 + $0x20] sm:$0xff] %vm734, %v730
      %740 = vst.msk [vmem:[%s170 + $0x28] sm:$0xff] %vm734, %v731
      %741 = vst.msk [vmem:[%s170 + $0x30] sm:$0xff] %vm734, %v732
      %742 = vst.msk [vmem:[%s170 + $0x38] sm:$0xff] %vm734, %v733
      %p743 = scmp.lt.s32.totalorder %s14, 1
      %s744 = scalar_select %p743, %s14, 1
      %s745 = smul.addr %s744, 8
      %s746 = smul.addr %s745, 8
      %s747 = scalar_lea.vmem %s3, %s746
      // Predicated region
      $region33: #{forward.28} parent=31 // pred_check
        %p748 = pneg %p100
      $region34: #{forward.28} parent=31 // pred_check_branch
        %750 = sbr.rel (%p748) target = $region36
      $region35: #{forward.28} parent=31 // pred_region
        _
      $region36: #{forward.28} parent=31 // pred_fallthru
        _
    $region32: #{forward.28} parent=5 // pred_fallthru
      _
    %p751 = scmp.le.s32.totalorder 2, %s9
    // Predicated region
    $region37: #{forward.28} parent=5 // pred_check
      %p752 = pneg %p751
    $region38: #{forward.28} parent=5 // pred_check_branch
      %754 = sbr.rel (%p752) target = $region40
    $region39: #{forward.28} parent=5 // pred_region
      %s755 = ssub.s32 %s9, 2
      // Predicated region
      $region41: #{forward.28} parent=39 // pred_check
        %p756 = pneg %p106
      $region42: #{forward.28} parent=39 // pred_check_branch
        %758 = sbr.rel (%p756) target = $region44
      $region43: #{forward.28} parent=39 // pred_region
        %p759 = scmp.lt.s32.totalorder %s15, 1
        %s760 = scalar_select %p759, %s15, 1
        %s761 = smul.addr %s760, 8
        %s762 = smul.addr %s761, 8
        %s763 = scalar_lea.vmem %s3, %s762
      $region44: #{forward.28} parent=39 // pred_fallthru
        _
    $region40: #{forward.28} parent=5 // pred_fallthru
      _
  $region6: #{forward.28} parent=0 // loop_footer
    %s13 = sadd.s32 1, %s9
  $region7: #{forward.28} parent=0 // loop_footer_branch
    %8 = sbr.rel target = $region3
  $region8: #{forward.28} parent=0 // loop_exit
    _

// kernel: forward.27
$region0: #{forward.27}
  #allocation0 [shape = 'u32[]', space=smem, size = 0x4, offset = 0x4, fixed_abs, tag = 'smem constant byte address 0x4 - core index']
  #allocation1 [shape = 'u32[144,128]{1,0:T(1,128)}', space=vmem, size = 0x12000, scoped, tag = 'internal scratch']
  #allocation2 [shape = 'f32[128,128]{1,0:T(8,128)}', space=vmem, size = 0x10000, scoped, tag = 'scratch operand']
  %s0 = inlined_call_operand.vmem [shape: bf16[128,128], index: 0, kind: input, shape index: {}]
  %s1 = inlined_call_operand.vmem [shape: bf16[128,128], index: 1, kind: input, shape index: {}]
  %s2 = inlined_call_operand.vmem [shape: f32[1,128], index: 2, kind: input, shape index: {}]
  %s3 = inlined_call_operand.vmem [shape: f32[128,128], index: 3, kind: output, shape index: {}]
  %s4 = sld [smem:[#allocation0]]
  $region30: #{forward.27} parent=0
    _
  %s6 = ssub.s32 1, %s4
  %s7 = scalar_select 0, %s6, %s4
  // Predicated region
  $region2: #{forward.27} parent=0 // pred_check
    _
  $region3: #{forward.27} parent=0 // pred_check_branch
    %9 = sbr.rel (0) target = $region5
  $region4: #{forward.27} parent=0 // pred_region
    _
  $region5: #{forward.27} parent=0 // pred_fallthru
    _
  // Predicated region
  $region6: #{forward.27} parent=0 // pred_check
    _
  $region7: #{forward.27} parent=0 // pred_check_branch
    %11 = sbr.rel (0) target = $region9
  $region8: #{forward.27} parent=0 // pred_region
    _
  $region9: #{forward.27} parent=0 // pred_fallthru
    _
  // Predicated region
  $region10: #{forward.27} parent=0 // pred_check
    _
  $region11: #{forward.27} parent=0 // pred_check_branch
    %13 = sbr.rel (0) target = $region13
  $region12: #{forward.27} parent=0 // pred_region
    _
  $region13: #{forward.27} parent=0 // pred_fallthru
    _
  %p15 = scmp.eq.s32.totalorder 0, 0
  // Predicated region
  $region14: #{forward.27} parent=0 // pred_check
    %p16 = pneg %p15
  $region15: #{forward.27} parent=0 // pred_check_branch
    %18 = sbr.rel (%p16) target = $region17
  $region16: #{forward.27} parent=0 // pred_region
    %19 = vst [vmem:[#allocation2] sm:$0xff] 0.0
    %20 = vst [vmem:[#allocation2 + $0x8] sm:$0xff] 0.0
    %21 = vst [vmem:[#allocation2 + $0x10] sm:$0xff] 0.0
    %22 = vst [vmem:[#allocation2 + $0x18] sm:$0xff] 0.0
    %23 = vst [vmem:[#allocation2 + $0x20] sm:$0xff] 0.0
    %24 = vst [vmem:[#allocation2 + $0x28] sm:$0xff] 0.0
    %25 = vst [vmem:[#allocation2 + $0x30] sm:$0xff] 0.0
    %26 = vst [vmem:[#allocation2 + $0x38] sm:$0xff] 0.0
    %27 = vst [vmem:[#allocation2 + $0x40] sm:$0xff] 0.0
    %28 = vst [vmem:[#allocation2 + $0x48] sm:$0xff] 0.0
    %29 = vst [vmem:[#allocation2 + $0x50] sm:$0xff] 0.0
    %30 = vst [vmem:[#allocation2 + $0x58] sm:$0xff] 0.0
    %31 = vst [vmem:[#allocation2 + $0x60] sm:$0xff] 0.0
    %32 = vst [vmem:[#allocation2 + $0x68] sm:$0xff] 0.0
    %33 = vst [vmem:[#allocation2 + $0x70] sm:$0xff] 0.0
    %34 = vst [vmem:[#allocation2 + $0x78] sm:$0xff] 0.0
  $region17: #{forward.27} parent=0 // pred_fallthru
    _
  %v35 = vld [vmem:[#allocation2] sm:$0xff]
  %v36 = vld [vmem:[#allocation2 + $0x8] sm:$0xff]
  %v37 = vld [vmem:[#allocation2 + $0x10] sm:$0xff]
  %v38 = vld [vmem:[#allocation2 + $0x18] sm:$0xff]
  %v39 = vld [vmem:[#allocation2 + $0x20] sm:$0xff]
  %v40 = vld [vmem:[#allocation2 + $0x28] sm:$0xff]
  %v41 = vld [vmem:[#allocation2 + $0x30] sm:$0xff]
  %v42 = vld [vmem:[#allocation2 + $0x38] sm:$0xff]
  %v43 = vld [vmem:[#allocation2 + $0x40] sm:$0xff]
  %v44 = vld [vmem:[#allocation2 + $0x48] sm:$0xff]
  %v45 = vld [vmem:[#allocation2 + $0x50] sm:$0xff]
  %v46 = vld [vmem:[#allocation2 + $0x58] sm:$0xff]
  %v47 = vld [vmem:[#allocation2 + $0x60] sm:$0xff]
  %v48 = vld [vmem:[#allocation2 + $0x68] sm:$0xff]
  %v49 = vld [vmem:[#allocation2 + $0x70] sm:$0xff]
  %v50 = vld [vmem:[#allocation2 + $0x78] sm:$0xff]
  %v51 = vld [vmem:[%s0] sm:$0xf]
  %v52 = vld [vmem:[%s0 + $0x4] sm:$0xf]
  %v53 = vld [vmem:[%s0 + $0x8] sm:$0xf]
  %v54 = vld [vmem:[%s0 + $0xc] sm:$0xf]
  %v55 = vld [vmem:[%s0 + $0x10] sm:$0xf]
  %v56 = vld [vmem:[%s0 + $0x14] sm:$0xf]
  %v57 = vld [vmem:[%s0 + $0x18] sm:$0xf]
  %v58 = vld [vmem:[%s0 + $0x1c] sm:$0xf]
  %v59 = vld [vmem:[%s0 + $0x20] sm:$0xf]
  %v60 = vld [vmem:[%s0 + $0x24] sm:$0xf]
  %v61 = vld [vmem:[%s0 + $0x28] sm:$0xf]
  %v62 = vld [vmem:[%s0 + $0x2c] sm:$0xf]
  %v63 = vld [vmem:[%s0 + $0x30] sm:$0xf]
  %v64 = vld [vmem:[%s0 + $0x34] sm:$0xf]
  %v65 = vld [vmem:[%s0 + $0x38] sm:$0xf]
  %v66 = vld [vmem:[%s0 + $0x3c] sm:$0xf]
  %v67 = vld [vmem:[%s1] sm:$0xf]
  %v68 = vld [vmem:[%s1 + $0x4] sm:$0xf]
  %v69 = vld [vmem:[%s1 + $0x8] sm:$0xf]
  %v70 = vld [vmem:[%s1 + $0xc] sm:$0xf]
  %v71 = vld [vmem:[%s1 + $0x10] sm:$0xf]
  %v72 = vld [vmem:[%s1 + $0x14] sm:$0xf]
  %v73 = vld [vmem:[%s1 + $0x18] sm:$0xf]
  %v74 = vld [vmem:[%s1 + $0x1c] sm:$0xf]
  %v75 = vld [vmem:[%s1 + $0x20] sm:$0xf]
  %v76 = vld [vmem:[%s1 + $0x24] sm:$0xf]
  %v77 = vld [vmem:[%s1 + $0x28] sm:$0xf]
  %v78 = vld [vmem:[%s1 + $0x2c] sm:$0xf]
  %v79 = vld [vmem:[%s1 + $0x30] sm:$0xf]
  %v80 = vld [vmem:[%s1 + $0x34] sm:$0xf]
  %v81 = vld [vmem:[%s1 + $0x38] sm:$0xf]
  %v82 = vld [vmem:[%s1 + $0x3c] sm:$0xf]
  %v99 = vunpack.c.l.b16 %v51
  %v100 = vunpack.c.l.b16 %v52
  %v101 = vunpack.c.l.b16 %v53
  %v102 = vunpack.c.l.b16 %v54
  %v103 = vunpack.c.l.b16 %v55
  %v104 = vunpack.c.l.b16 %v56
  %v105 = vunpack.c.l.b16 %v57
  %v106 = vunpack.c.l.b16 %v58
  %v107 = vunpack.c.l.b16 %v59
  %v108 = vunpack.c.l.b16 %v60
  %v109 = vunpack.c.l.b16 %v61
  %v110 = vunpack.c.l.b16 %v62
  %v111 = vunpack.c.l.b16 %v63
  %v112 = vunpack.c.l.b16 %v64
  %v113 = vunpack.c.l.b16 %v65
  %v114 = vunpack.c.l.b16 %v66
  %v115 = vpack.c.b16 %v100, %v99
  %v116 = vpack.c.b16 %v102, %v101
  %v117 = vpack.c.b16 %v104, %v103
  %v118 = vpack.c.b16 %v106, %v105
  %v119 = vpack.c.b16 %v108, %v107
  %v120 = vpack.c.b16 %v110, %v109
  %v121 = vpack.c.b16 %v112, %v111
  %v122 = vpack.c.b16 %v114, %v113
  %v147 = vunpack.c.l.b16 %v67
  %v148 = vunpack.c.l.b16 %v68
  %v149 = vunpack.c.l.b16 %v69
  %v150 = vunpack.c.l.b16 %v70
  %v151 = vunpack.c.l.b16 %v71
  %v152 = vunpack.c.l.b16 %v72
  %v153 = vunpack.c.l.b16 %v73
  %v154 = vunpack.c.l.b16 %v74
  %v155 = vunpack.c.l.b16 %v75
  %v156 = vunpack.c.l.b16 %v76
  %v157 = vunpack.c.l.b16 %v77
  %v158 = vunpack.c.l.b16 %v78
  %v159 = vunpack.c.l.b16 %v79
  %v160 = vunpack.c.l.b16 %v80
  %v161 = vunpack.c.l.b16 %v81
  %v162 = vunpack.c.l.b16 %v82
  %v163 = vpack.c.b16 %v148, %v147
  %v164 = vpack.c.b16 %v150, %v149
  %v165 = vpack.c.b16 %v152, %v151
  %v166 = vpack.c.b16 %v154, %v153
  %v167 = vpack.c.b16 %v156, %v155
  %v168 = vpack.c.b16 %v158, %v157
  %v169 = vpack.c.b16 %v160, %v159
  %v170 = vpack.c.b16 %v162, %v161
  %179 = vmatprep.subr.bf16.mxu0 0
  %180 = vmatpush1.bf16.msra.mxu0 %v163
  %181 = vmatprep.subr.bf16.mxu0 0
  %182 = vmatpush1.bf16.msra.mxu0 %v164
  %183 = vmatprep.subr.bf16.mxu0 0
  %184 = vmatpush1.bf16.msra.mxu0 %v165
  %185 = vmatprep.subr.bf16.mxu0 0
  %186 = vmatpush1.bf16.msra.mxu0 %v166
  %187 = vmatprep.subr.bf16.mxu0 0
  %188 = vmatpush1.bf16.msra.mxu0 %v167
  %189 = vmatprep.subr.bf16.mxu0 0
  %190 = vmatpush1.bf16.msra.mxu0 %v168
  %191 = vmatprep.subr.bf16.mxu0 0
  %192 = vmatpush1.bf16.msra.mxu0 %v169
  %193 = vmatprep.subr.bf16.mxu0 0
  %194 = vmatpush1.bf16.msra.mxu0 %v170
  %195 = vmatprep.subr.bf16.mxu0 0
  %196 = vmatpush1.bf16.msra.mxu0 0
  %197 = vmatprep.subr.bf16.mxu0 0
  %198 = vmatpush1.bf16.msra.mxu0 0
  %199 = vmatprep.subr.bf16.mxu0 0
  %200 = vmatpush1.bf16.msra.mxu0 0
  %201 = vmatprep.subr.bf16.mxu0 0
  %202 = vmatpush1.bf16.msra.mxu0 0
  %203 = vmatprep.subr.bf16.mxu0 0
  %204 = vmatpush1.bf16.msra.mxu0 0
  %205 = vmatprep.subr.bf16.mxu0 0
  %206 = vmatpush1.bf16.msra.mxu0 0
  %207 = vmatprep.subr.bf16.mxu0 0
  %208 = vmatpush1.bf16.msra.mxu0 0
  %209 = vmatprep.subr.bf16.mxu0 0
  %210 = vmatpush1.bf16.msra.mxu0 0
  %211 = vmatprep.mubr.bf16.mxu0 0
  %212 = vmatmul.mubr.bf16.gmra.mrb[0].mxu0 %v115
  %v213 = vpop.f32.mrb[0].mxu0
  %v214 = vadd.f32 0.0, %v213
  %v215 = vpop.f32.mrb[0].mxu0
  %v216 = vpop.f32.mrb[0].mxu0
  %v217 = vadd.f32 0.0, %v216
  %v218 = vpop.f32.mrb[0].mxu0
  %219 = vmatprep.mubr.bf16.mxu0 0
  %220 = vmatmul.mubr.bf16.gmra.mrb[0].mxu0 %v116
  %v221 = vpop.f32.mrb[0].mxu0
  %v222 = vadd.f32 0.0, %v221
  %v223 = vpop.f32.mrb[0].mxu0
  %v224 = vpop.f32.mrb[0].mxu0
  %v225 = vadd.f32 0.0, %v224
  %v226 = vpop.f32.mrb[0].mxu0
  %227 = vmatprep.mubr.bf16.mxu0 0
  %228 = vmatmul.mubr.bf16.gmra.mrb[0].mxu0 %v117
  %v229 = vpop.f32.mrb[0].mxu0
  %v230 = vadd.f32 0.0, %v229
  %v231 = vpop.f32.mrb[0].mxu0
  %v232 = vpop.f32.mrb[0].mxu0
  %v233 = vadd.f32 0.0, %v232
  %v234 = vpop.f32.mrb[0].mxu0
  %235 = vmatprep.mubr.bf16.mxu0 0
  %236 = vmatmul.mubr.bf16.gmra.mrb[0].mxu0 %v118
  %v237 = vpop.f32.mrb[0].mxu0
  %v238 = vadd.f32 0.0, %v237
  %v239 = vpop.f32.mrb[0].mxu0
  %v240 = vpop.f32.mrb[0].mxu0
  %v241 = vadd.f32 0.0, %v240
  %v242 = vpop.f32.mrb[0].mxu0
  %243 = vmatprep.mubr.bf16.mxu0 0
  %244 = vmatmul.mubr.bf16.gmra.mrb[0].mxu0 %v119
  %v245 = vpop.f32.mrb[0].mxu0
  %v246 = vadd.f32 0.0, %v245
  %v247 = vpop.f32.mrb[0].mxu0
  %v248 = vpop.f32.mrb[0].mxu0
  %v249 = vadd.f32 0.0, %v248
  %v250 = vpop.f32.mrb[0].mxu0
  %251 = vmatprep.mubr.bf16.mxu0 0
  %252 = vmatmul.mubr.bf16.gmra.mrb[0].mxu0 %v120
  %v253 = vpop.f32.mrb[0].mxu0
  %v254 = vadd.f32 0.0, %v253
  %v255 = vpop.f32.mrb[0].mxu0
  %v256 = vpop.f32.mrb[0].mxu0
  %v257 = vadd.f32 0.0, %v256
  %v258 = vpop.f32.mrb[0].mxu0
  %259 = vmatprep.mubr.bf16.mxu0 0
  %260 = vmatmul.mubr.bf16.gmra.mrb[0].mxu0 %v121
  %v261 = vpop.f32.mrb[0].mxu0
  %v262 = vadd.f32 0.0, %v261
  %v263 = vpop.f32.mrb[0].mxu0
  %v264 = vpop.f32.mrb[0].mxu0
  %v265 = vadd.f32 0.0, %v264
  %v266 = vpop.f32.mrb[0].mxu0
  %267 = vmatprep.mubr.bf16.mxu0 0
  %268 = vmatmul.mubr.bf16.gmra.mrb[0].mxu0 %v122
  %v269 = vpop.f32.mrb[0].mxu0
  %v270 = vadd.f32 0.0, %v269
  %v271 = vpop.f32.mrb[0].mxu0
  %v272 = vpop.f32.mrb[0].mxu0
  %v273 = vadd.f32 0.0, %v272
  %v274 = vpop.f32.mrb[0].mxu0
  %275 = vdwg.mxu0
  %v276 = vadd.f32 %v35, %v214
  %v277 = vadd.f32 %v36, %v217
  %v278 = vadd.f32 %v37, %v222
  %v279 = vadd.f32 %v38, %v225
  %v280 = vadd.f32 %v39, %v230
  %v281 = vadd.f32 %v40, %v233
  %v282 = vadd.f32 %v41, %v238
  %v283 = vadd.f32 %v42, %v241
  %v284 = vadd.f32 %v43, %v246
  %v285 = vadd.f32 %v44, %v249
  %v286 = vadd.f32 %v45, %v254
  %v287 = vadd.f32 %v46, %v257
  %v288 = vadd.f32 %v47, %v262
  %v289 = vadd.f32 %v48, %v265
  %v290 = vadd.f32 %v49, %v270
  %v291 = vadd.f32 %v50, %v273
  %292 = vst [vmem:[#allocation2] sm:$0xff] %v276
  %293 = vst [vmem:[#allocation2 + $0x8] sm:$0xff] %v277
  %294 = vst [vmem:[#allocation2 + $0x10] sm:$0xff] %v278
  %295 = vst [vmem:[#allocation2 + $0x18] sm:$0xff] %v279
  %296 = vst [vmem:[#allocation2 + $0x20] sm:$0xff] %v280
  %297 = vst [vmem:[#allocation2 + $0x28] sm:$0xff] %v281
  %298 = vst [vmem:[#allocation2 + $0x30] sm:$0xff] %v282
  %299 = vst [vmem:[#allocation2 + $0x38] sm:$0xff] %v283
  %300 = vst [vmem:[#allocation2 + $0x40] sm:$0xff] %v284
  %301 = vst [vmem:[#allocation2 + $0x48] sm:$0xff] %v285
  %302 = vst [vmem:[#allocation2 + $0x50] sm:$0xff] %v286
  %303 = vst [vmem:[#allocation2 + $0x58] sm:$0xff] %v287
  %304 = vst [vmem:[#allocation2 + $0x60] sm:$0xff] %v288
  %305 = vst [vmem:[#allocation2 + $0x68] sm:$0xff] %v289
  %306 = vst [vmem:[#allocation2 + $0x70] sm:$0xff] %v290
  %307 = vst [vmem:[#allocation2 + $0x78] sm:$0xff] %v291
  // Predicated region
  $region18: #{forward.27} parent=0 // pred_check
    %p308 = pneg %p15
  $region19: #{forward.27} parent=0 // pred_check_branch
    %310 = sbr.rel (%p308) target = $region21
  $region20: #{forward.27} parent=0 // pred_region
    %v311 = vld [vmem:[#allocation2] sm:$0xff]
    %v312 = vld [vmem:[#allocation2 + $0x8] sm:$0xff]
    %v313 = vld [vmem:[#allocation2 + $0x10] sm:$0xff]
    %v314 = vld [vmem:[#allocation2 + $0x18] sm:$0xff]
    %v315 = vld [vmem:[#allocation2 + $0x20] sm:$0xff]
    %v316 = vld [vmem:[#allocation2 + $0x28] sm:$0xff]
    %v317 = vld [vmem:[#allocation2 + $0x30] sm:$0xff]
    %v318 = vld [vmem:[#allocation2 + $0x38] sm:$0xff]
    %v319 = vld [vmem:[#allocation2 + $0x40] sm:$0xff]
    %v320 = vld [vmem:[#allocation2 + $0x48] sm:$0xff]
    %v321 = vld [vmem:[#allocation2 + $0x50] sm:$0xff]
    %v322 = vld [vmem:[#allocation2 + $0x58] sm:$0xff]
    %v323 = vld [vmem:[#allocation2 + $0x60] sm:$0xff]
    %v324 = vld [vmem:[#allocation2 + $0x68] sm:$0xff]
    %v325 = vld [vmem:[#allocation2 + $0x70] sm:$0xff]
    %v326 = vld [vmem:[#allocation2 + $0x78] sm:$0xff]
    %v327 = vld [vmem:[%s2] sm:$0x1]
    %v329 = vlaneseq
    %v330 = vshrl.u32 %v329, 7
    %v331 = vsub.s32 0, %v330
    %v332 = vrot.slane %v327, %v331
    %v334 = vadd.f32 %v311, %v332
    %v335 = vadd.f32 %v312, %v332
    %v336 = vadd.f32 %v313, %v332
    %v337 = vadd.f32 %v314, %v332
    %v338 = vadd.f32 %v315, %v332
    %v339 = vadd.f32 %v316, %v332
    %v340 = vadd.f32 %v317, %v332
    %v341 = vadd.f32 %v318, %v332
    %v342 = vadd.f32 %v319, %v332
    %v343 = vadd.f32 %v320, %v332
    %v344 = vadd.f32 %v321, %v332
    %v345 = vadd.f32 %v322, %v332
    %v346 = vadd.f32 %v323, %v332
    %v347 = vadd.f32 %v324, %v332
    %v348 = vadd.f32 %v325, %v332
    %v349 = vadd.f32 %v326, %v332
    %v350 = vmax.f32 %v334, 0.0
    %v351 = vmax.f32 %v335, 0.0
    %v352 = vmax.f32 %v336, 0.0
    %v353 = vmax.f32 %v337, 0.0
    %v354 = vmax.f32 %v338, 0.0
    %v355 = vmax.f32 %v339, 0.0
    %v356 = vmax.f32 %v340, 0.0
    %v357 = vmax.f32 %v341, 0.0
    %v358 = vmax.f32 %v342, 0.0
    %v359 = vmax.f32 %v343, 0.0
    %v360 = vmax.f32 %v344, 0.0
    %v361 = vmax.f32 %v345, 0.0
    %v362 = vmax.f32 %v346, 0.0
    %v363 = vmax.f32 %v347, 0.0
    %v364 = vmax.f32 %v348, 0.0
    %v365 = vmax.f32 %v349, 0.0
    %v366 = vmin.f32 %v350, 6.0
    %v367 = vmin.f32 %v351, 6.0
    %v368 = vmin.f32 %v352, 6.0
    %v369 = vmin.f32 %v353, 6.0
    %v370 = vmin.f32 %v354, 6.0
    %v371 = vmin.f32 %v355, 6.0
    %v372 = vmin.f32 %v356, 6.0
    %v373 = vmin.f32 %v357, 6.0
    %v374 = vmin.f32 %v358, 6.0
    %v375 = vmin.f32 %v359, 6.0
    %v376 = vmin.f32 %v360, 6.0
    %v377 = vmin.f32 %v361, 6.0
    %v378 = vmin.f32 %v362, 6.0
    %v379 = vmin.f32 %v363, 6.0
    %v380 = vmin.f32 %v364, 6.0
    %v381 = vmin.f32 %v365, 6.0
    %382 = vst [vmem:[%s3] sm:$0xff] %v366
    %383 = vst [vmem:[%s3 + $0x8] sm:$0xff] %v367
    %384 = vst [vmem:[%s3 + $0x10] sm:$0xff] %v368
    %385 = vst [vmem:[%s3 + $0x18] sm:$0xff] %v369
    %386 = vst [vmem:[%s3 + $0x20] sm:$0xff] %v370
    %387 = vst [vmem:[%s3 + $0x28] sm:$0xff] %v371
    %388 = vst [vmem:[%s3 + $0x30] sm:$0xff] %v372
    %389 = vst [vmem:[%s3 + $0x38] sm:$0xff] %v373
    %390 = vst [vmem:[%s3 + $0x40] sm:$0xff] %v374
    %391 = vst [vmem:[%s3 + $0x48] sm:$0xff] %v375
    %392 = vst [vmem:[%s3 + $0x50] sm:$0xff] %v376
    %393 = vst [vmem:[%s3 + $0x58] sm:$0xff] %v377
    %394 = vst [vmem:[%s3 + $0x60] sm:$0xff] %v378
    %395 = vst [vmem:[%s3 + $0x68] sm:$0xff] %v379
    %396 = vst [vmem:[%s3 + $0x70] sm:$0xff] %v380
    %397 = vst [vmem:[%s3 + $0x78] sm:$0xff] %v381
  $region21: #{forward.27} parent=0 // pred_fallthru
    _
  // Predicated region
  $region22: #{forward.27} parent=0 // pred_check
    _
  $region23: #{forward.27} parent=0 // pred_check_branch
    %399 = sbr.rel (0) target = $region25
  $region24: #{forward.27} parent=0 // pred_region
    _
  $region25: #{forward.27} parent=0 // pred_fallthru
    _
  // Predicated region
  $region26: #{forward.27} parent=0 // pred_check
    _
  $region27: #{forward.27} parent=0 // pred_check_branch
    %401 = sbr.rel (0) target = $region29
  $region28: #{forward.27} parent=0 // pred_region
    _
  $region29: #{forward.27} parent=0 // pred_fallthru
    _

// kernel: forward.29
$region0: #{forward.29}
  #allocation0 [shape = 'u32[]', space=smem, size = 0x4, offset = 0x4, fixed_abs, tag = 'smem constant byte address 0x4 - core index']
  #allocation1 [shape = 'u32[144,128]{1,0:T(1,128)}', space=vmem, size = 0x12000, scoped, tag = 'internal scratch']
  #allocation2 [shape = 'f32[128,128]{1,0:T(8,128)}', space=vmem, size = 0x10000, scoped, tag = 'scratch operand']
  %s0 = inlined_call_operand.vmem [shape: bf16[128,128], index: 0, kind: input, shape index: {}]
  %s1 = inlined_call_operand.vmem [shape: bf16[128,128], index: 1, kind: input, shape index: {}]
  %s2 = inlined_call_operand.vmem [shape: f32[1,128], index: 2, kind: input, shape index: {}]
  %s3 = inlined_call_operand.vmem [shape: f32[128,128], index: 3, kind: output, shape index: {}]
  %s4 = sld [smem:[#allocation0]]
  $region30: #{forward.29} parent=0
    _
  %s6 = ssub.s32 1, %s4
  %s7 = scalar_select 0, %s6, %s4
  // Predicated region
  $region2: #{forward.29} parent=0 // pred_check
    _
  $region3: #{forward.29} parent=0 // pred_check_branch
    %9 = sbr.rel (0) target = $region5
  $region4: #{forward.29} parent=0 // pred_region
    _
  $region5: #{forward.29} parent=0 // pred_fallthru
    _
  // Predicated region
  $region6: #{forward.29} parent=0 // pred_check
    _
  $region7: #{forward.29} parent=0 // pred_check_branch
    %11 = sbr.rel (0) target = $region9
  $region8: #{forward.29} parent=0 // pred_region
    _
  $region9: #{forward.29} parent=0 // pred_fallthru
    _
  // Predicated region
  $region10: #{forward.29} parent=0 // pred_check
    _
  $region11: #{forward.29} parent=0 // pred_check_branch
    %13 = sbr.rel (0) target = $region13
  $region12: #{forward.29} parent=0 // pred_region
    _
  $region13: #{forward.29} parent=0 // pred_fallthru
    _
  %p15 = scmp.eq.s32.totalorder 0, 0
  // Predicated region
  $region14: #{forward.29} parent=0 // pred_check
    %p16 = pneg %p15
  $region15: #{forward.29} parent=0 // pred_check_branch
    %18 = sbr.rel (%p16) target = $region17
  $region16: #{forward.29} parent=0 // pred_region
    %19 = vst [vmem:[#allocation2] sm:$0xff] 0.0
    %20 = vst [vmem:[#allocation2 + $0x8] sm:$0xff] 0.0
    %21 = vst [vmem:[#allocation2 + $0x10] sm:$0xff] 0.0
    %22 = vst [vmem:[#allocation2 + $0x18] sm:$0xff] 0.0
    %23 = vst [vmem:[#allocation2 + $0x20] sm:$0xff] 0.0
    %24 = vst [vmem:[#allocation2 + $0x28] sm:$0xff] 0.0
    %25 = vst [vmem:[#allocation2 + $0x30] sm:$0xff] 0.0
    %26 = vst [vmem:[#allocation2 + $0x38] sm:$0xff] 0.0
    %27 = vst [vmem:[#allocation2 + $0x40] sm:$0xff] 0.0
    %28 = vst [vmem:[#allocation2 + $0x48] sm:$0xff] 0.0
    %29 = vst [vmem:[#allocation2 + $0x50] sm:$0xff] 0.0
    %30 = vst [vmem:[#allocation2 + $0x58] sm:$0xff] 0.0
    %31 = vst [vmem:[#allocation2 + $0x60] sm:$0xff] 0.0
    %32 = vst [vmem:[#allocation2 + $0x68] sm:$0xff] 0.0
    %33 = vst [vmem:[#allocation2 + $0x70] sm:$0xff] 0.0
    %34 = vst [vmem:[#allocation2 + $0x78] sm:$0xff] 0.0
  $region17: #{forward.29} parent=0 // pred_fallthru
    _
  %v35 = vld [vmem:[#allocation2] sm:$0xff]
  %v36 = vld [vmem:[#allocation2 + $0x8] sm:$0xff]
  %v37 = vld [vmem:[#allocation2 + $0x10] sm:$0xff]
  %v38 = vld [vmem:[#allocation2 + $0x18] sm:$0xff]
  %v39 = vld [vmem:[#allocation2 + $0x20] sm:$0xff]
  %v40 = vld [vmem:[#allocation2 + $0x28] sm:$0xff]
  %v41 = vld [vmem:[#allocation2 + $0x30] sm:$0xff]
  %v42 = vld [vmem:[#allocation2 + $0x38] sm:$0xff]
  %v43 = vld [vmem:[#allocation2 + $0x40] sm:$0xff]
  %v44 = vld [vmem:[#allocation2 + $0x48] sm:$0xff]
  %v45 = vld [vmem:[#allocation2 + $0x50] sm:$0xff]
  %v46 = vld [vmem:[#allocation2 + $0x58] sm:$0xff]
  %v47 = vld [vmem:[#allocation2 + $0x60] sm:$0xff]
  %v48 = vld [vmem:[#allocation2 + $0x68] sm:$0xff]
  %v49 = vld [vmem:[#allocation2 + $0x70] sm:$0xff]
  %v50 = vld [vmem:[#allocation2 + $0x78] sm:$0xff]
  %v51 = vld [vmem:[%s0] sm:$0xf]
  %v52 = vld [vmem:[%s0 + $0x4] sm:$0xf]
  %v53 = vld [vmem:[%s0 + $0x8] sm:$0xf]
  %v54 = vld [vmem:[%s0 + $0xc] sm:$0xf]
  %v55 = vld [vmem:[%s0 + $0x10] sm:$0xf]
  %v56 = vld [vmem:[%s0 + $0x14] sm:$0xf]
  %v57 = vld [vmem:[%s0 + $0x18] sm:$0xf]
  %v58 = vld [vmem:[%s0 + $0x1c] sm:$0xf]
  %v59 = vld [vmem:[%s0 + $0x20] sm:$0xf]
  %v60 = vld [vmem:[%s0 + $0x24] sm:$0xf]
  %v61 = vld [vmem:[%s0 + $0x28] sm:$0xf]
  %v62 = vld [vmem:[%s0 + $0x2c] sm:$0xf]
  %v63 = vld [vmem:[%s0 + $0x30] sm:$0xf]
  %v64 = vld [vmem:[%s0 + $0x34] sm:$0xf]
  %v65 = vld [vmem:[%s0 + $0x38] sm:$0xf]
  %v66 = vld [vmem:[%s0 + $0x3c] sm:$0xf]
  %v67 = vld [vmem:[%s1] sm:$0xf]
  %v68 = vld [vmem:[%s1 + $0x4] sm:$0xf]
  %v69 = vld [vmem:[%s1 + $0x8] sm:$0xf]
  %v70 = vld [vmem:[%s1 + $0xc] sm:$0xf]
  %v71 = vld [vmem:[%s1 + $0x10] sm:$0xf]
  %v72 = vld [vmem:[%s1 + $0x14] sm:$0xf]
  %v73 = vld [vmem:[%s1 + $0x18] sm:$0xf]
  %v74 = vld [vmem:[%s1 + $0x1c] sm:$0xf]
  %v75 = vld [vmem:[%s1 + $0x20] sm:$0xf]
  %v76 = vld [vmem:[%s1 + $0x24] sm:$0xf]
  %v77 = vld [vmem:[%s1 + $0x28] sm:$0xf]
  %v78 = vld [vmem:[%s1 + $0x2c] sm:$0xf]
  %v79 = vld [vmem:[%s1 + $0x30] sm:$0xf]
  %v80 = vld [vmem:[%s1 + $0x34] sm:$0xf]
  %v81 = vld [vmem:[%s1 + $0x38] sm:$0xf]
  %v82 = vld [vmem:[%s1 + $0x3c] sm:$0xf]
  %v99 = vunpack.c.l.b16 %v51
  %v100 = vunpack.c.l.b16 %v52
  %v101 = vunpack.c.l.b16 %v53
  %v102 = vunpack.c.l.b16 %v54
  %v103 = vunpack.c.l.b16 %v55
  %v104 = vunpack.c.l.b16 %v56
  %v105 = vunpack.c.l.b16 %v57
  %v106 = vunpack.c.l.b16 %v58
  %v107 = vunpack.c.l.b16 %v59
  %v108 = vunpack.c.l.b16 %v60
  %v109 = vunpack.c.l.b16 %v61
  %v110 = vunpack.c.l.b16 %v62
  %v111 = vunpack.c.l.b16 %v63
  %v112 = vunpack.c.l.b16 %v64
  %v113 = vunpack.c.l.b16 %v65
  %v114 = vunpack.c.l.b16 %v66
  %v115 = vpack.c.b16 %v100, %v99
  %v116 = vpack.c.b16 %v102, %v101
  %v117 = vpack.c.b16 %v104, %v103
  %v118 = vpack.c.b16 %v106, %v105
  %v119 = vpack.c.b16 %v108, %v107
  %v120 = vpack.c.b16 %v110, %v109
  %v121 = vpack.c.b16 %v112, %v111
  %v122 = vpack.c.b16 %v114, %v113
  %v147 = vunpack.c.l.b16 %v67
  %v148 = vunpack.c.l.b16 %v68
  %v149 = vunpack.c.l.b16 %v69
  %v150 = vunpack.c.l.b16 %v70
  %v151 = vunpack.c.l.b16 %v71
  %v152 = vunpack.c.l.b16 %v72
  %v153 = vunpack.c.l.b16 %v73
  %v154 = vunpack.c.l.b16 %v74
  %v155 = vunpack.c.l.b16 %v75
  %v156 = vunpack.c.l.b16 %v76
  %v157 = vunpack.c.l.b16 %v77
  %v158 = vunpack.c.l.b16 %v78
  %v159 = vunpack.c.l.b16 %v79
  %v160 = vunpack.c.l.b16 %v80
  %v161 = vunpack.c.l.b16 %v81
  %v162 = vunpack.c.l.b16 %v82
  %v163 = vpack.c.b16 %v148, %v147
  %v164 = vpack.c.b16 %v150, %v149
  %v165 = vpack.c.b16 %v152, %v151
  %v166 = vpack.c.b16 %v154, %v153
  %v167 = vpack.c.b16 %v156, %v155
  %v168 = vpack.c.b16 %v158, %v157
  %v169 = vpack.c.b16 %v160, %v159
  %v170 = vpack.c.b16 %v162, %v161
  %179 = vmatprep.subr.bf16.mxu0 0
  %180 = vmatpush1.bf16.msra.mxu0 %v163
  %181 = vmatprep.subr.bf16.mxu0 0
  %182 = vmatpush1.bf16.msra.mxu0 %v164
  %183 = vmatprep.subr.bf16.mxu0 0
  %184 = vmatpush1.bf16.msra.mxu0 %v165
  %185 = vmatprep.subr.bf16.mxu0 0
  %186 = vmatpush1.bf16.msra.mxu0 %v166
  %187 = vmatprep.subr.bf16.mxu0 0
  %188 = vmatpush1.bf16.msra.mxu0 %v167
  %189 = vmatprep.subr.bf16.mxu0 0
  %190 = vmatpush1.bf16.msra.mxu0 %v168
  %191 = vmatprep.subr.bf16.mxu0 0
  %192 = vmatpush1.bf16.msra.mxu0 %v169
  %193 = vmatprep.subr.bf16.mxu0 0
  %194 = vmatpush1.bf16.msra.mxu0 %v170
  %195 = vmatprep.subr.bf16.mxu0 0
  %196 = vmatpush1.bf16.msra.mxu0 0
  %197 = vmatprep.subr.bf16.mxu0 0
  %198 = vmatpush1.bf16.msra.mxu0 0
  %199 = vmatprep.subr.bf16.mxu0 0
  %200 = vmatpush1.bf16.msra.mxu0 0
  %201 = vmatprep.subr.bf16.mxu0 0
  %202 = vmatpush1.bf16.msra.mxu0 0
  %203 = vmatprep.subr.bf16.mxu0 0
  %204 = vmatpush1.bf16.msra.mxu0 0
  %205 = vmatprep.subr.bf16.mxu0 0
  %206 = vmatpush1.bf16.msra.mxu0 0
  %207 = vmatprep.subr.bf16.mxu0 0
  %208 = vmatpush1.bf16.msra.mxu0 0
  %209 = vmatprep.subr.bf16.mxu0 0
  %210 = vmatpush1.bf16.msra.mxu0 0
  %211 = vmatprep.mubr.bf16.mxu0 0
  %212 = vmatmul.mubr.bf16.gmra.mrb[0].mxu0 %v115
  %v213 = vpop.f32.mrb[0].mxu0
  %v214 = vadd.f32 0.0, %v213
  %v215 = vpop.f32.mrb[0].mxu0
  %v216 = vpop.f32.mrb[0].mxu0
  %v217 = vadd.f32 0.0, %v216
  %v218 = vpop.f32.mrb[0].mxu0
  %219 = vmatprep.mubr.bf16.mxu0 0
  %220 = vmatmul.mubr.bf16.gmra.mrb[0].mxu0 %v116
  %v221 = vpop.f32.mrb[0].mxu0
  %v222 = vadd.f32 0.0, %v221
  %v223 = vpop.f32.mrb[0].mxu0
  %v224 = vpop.f32.mrb[0].mxu0
  %v225 = vadd.f32 0.0, %v224
  %v226 = vpop.f32.mrb[0].mxu0
  %227 = vmatprep.mubr.bf16.mxu0 0
  %228 = vmatmul.mubr.bf16.gmra.mrb[0].mxu0 %v117
  %v229 = vpop.f32.mrb[0].mxu0
  %v230 = vadd.f32 0.0, %v229
  %v231 = vpop.f32.mrb[0].mxu0
  %v232 = vpop.f32.mrb[0].mxu0
  %v233 = vadd.f32 0.0, %v232
  %v234 = vpop.f32.mrb[0].mxu0
  %235 = vmatprep.mubr.bf16.mxu0 0
  %236 = vmatmul.mubr.bf16.gmra.mrb[0].mxu0 %v118
  %v237 = vpop.f32.mrb[0].mxu0
  %v238 = vadd.f32 0.0, %v237
  %v239 = vpop.f32.mrb[0].mxu0
  %v240 = vpop.f32.mrb[0].mxu0
  %v241 = vadd.f32 0.0, %v240
  %v242 = vpop.f32.mrb[0].mxu0
  %243 = vmatprep.mubr.bf16.mxu0 0
  %244 = vmatmul.mubr.bf16.gmra.mrb[0].mxu0 %v119
  %v245 = vpop.f32.mrb[0].mxu0
  %v246 = vadd.f32 0.0, %v245
  %v247 = vpop.f32.mrb[0].mxu0
  %v248 = vpop.f32.mrb[0].mxu0
  %v249 = vadd.f32 0.0, %v248
  %v250 = vpop.f32.mrb[0].mxu0
  %251 = vmatprep.mubr.bf16.mxu0 0
  %252 = vmatmul.mubr.bf16.gmra.mrb[0].mxu0 %v120
  %v253 = vpop.f32.mrb[0].mxu0
  %v254 = vadd.f32 0.0, %v253
  %v255 = vpop.f32.mrb[0].mxu0
  %v256 = vpop.f32.mrb[0].mxu0
  %v257 = vadd.f32 0.0, %v256
  %v258 = vpop.f32.mrb[0].mxu0
  %259 = vmatprep.mubr.bf16.mxu0 0
  %260 = vmatmul.mubr.bf16.gmra.mrb[0].mxu0 %v121
  %v261 = vpop.f32.mrb[0].mxu0
  %v262 = vadd.f32 0.0, %v261
  %v263 = vpop.f32.mrb[0].mxu0
  %v264 = vpop.f32.mrb[0].mxu0
  %v265 = vadd.f32 0.0, %v264
  %v266 = vpop.f32.mrb[0].mxu0
  %267 = vmatprep.mubr.bf16.mxu0 0
  %268 = vmatmul.mubr.bf16.gmra.mrb[0].mxu0 %v122
  %v269 = vpop.f32.mrb[0].mxu0
  %v270 = vadd.f32 0.0, %v269
  %v271 = vpop.f32.mrb[0].mxu0
  %v272 = vpop.f32.mrb[0].mxu0
  %v273 = vadd.f32 0.0, %v272
  %v274 = vpop.f32.mrb[0].mxu0
  %275 = vdwg.mxu0
  %v276 = vadd.f32 %v35, %v214
  %v277 = vadd.f32 %v36, %v217
  %v278 = vadd.f32 %v37, %v222
  %v279 = vadd.f32 %v38, %v225
  %v280 = vadd.f32 %v39, %v230
  %v281 = vadd.f32 %v40, %v233
  %v282 = vadd.f32 %v41, %v238
  %v283 = vadd.f32 %v42, %v241
  %v284 = vadd.f32 %v43, %v246
  %v285 = vadd.f32 %v44, %v249
  %v286 = vadd.f32 %v45, %v254
  %v287 = vadd.f32 %v46, %v257
  %v288 = vadd.f32 %v47, %v262
  %v289 = vadd.f32 %v48, %v265
  %v290 = vadd.f32 %v49, %v270
  %v291 = vadd.f32 %v50, %v273
  %292 = vst [vmem:[#allocation2] sm:$0xff] %v276
  %293 = vst [vmem:[#allocation2 + $0x8] sm:$0xff] %v277
  %294 = vst [vmem:[#allocation2 + $0x10] sm:$0xff] %v278
  %295 = vst [vmem:[#allocation2 + $0x18] sm:$0xff] %v279
  %296 = vst [vmem:[#allocation2 + $0x20] sm:$0xff] %v280
  %297 = vst [vmem:[#allocation2 + $0x28] sm:$0xff] %v281
  %298 = vst [vmem:[#allocation2 + $0x30] sm:$0xff] %v282
  %299 = vst [vmem:[#allocation2 + $0x38] sm:$0xff] %v283
  %300 = vst [vmem:[#allocation2 + $0x40] sm:$0xff] %v284
  %301 = vst [vmem:[#allocation2 + $0x48] sm:$0xff] %v285
  %302 = vst [vmem:[#allocation2 + $0x50] sm:$0xff] %v286
  %303 = vst [vmem:[#allocation2 + $0x58] sm:$0xff] %v287
  %304 = vst [vmem:[#allocation2 + $0x60] sm:$0xff] %v288
  %305 = vst [vmem:[#allocation2 + $0x68] sm:$0xff] %v289
  %306 = vst [vmem:[#allocation2 + $0x70] sm:$0xff] %v290
  %307 = vst [vmem:[#allocation2 + $0x78] sm:$0xff] %v291
  // Predicated region
  $region18: #{forward.29} parent=0 // pred_check
    %p308 = pneg %p15
  $region19: #{forward.29} parent=0 // pred_check_branch
    %310 = sbr.rel (%p308) target = $region21
  $region20: #{forward.29} parent=0 // pred_region
    %v311 = vld [vmem:[#allocation2] sm:$0xff]
    %v312 = vld [vmem:[#allocation2 + $0x8] sm:$0xff]
    %v313 = vld [vmem:[#allocation2 + $0x10] sm:$0xff]
    %v314 = vld [vmem:[#allocation2 + $0x18] sm:$0xff]
    %v315 = vld [vmem:[#allocation2 + $0x20] sm:$0xff]
    %v316 = vld [vmem:[#allocation2 + $0x28] sm:$0xff]
    %v317 = vld [vmem:[#allocation2 + $0x30] sm:$0xff]
    %v318 = vld [vmem:[#allocation2 + $0x38] sm:$0xff]
    %v319 = vld [vmem:[#allocation2 + $0x40] sm:$0xff]
    %v320 = vld [vmem:[#allocation2 + $0x48] sm:$0xff]
    %v321 = vld [vmem:[#allocation2 + $0x50] sm:$0xff]
    %v322 = vld [vmem:[#allocation2 + $0x58] sm:$0xff]
    %v323 = vld [vmem:[#allocation2 + $0x60] sm:$0xff]
    %v324 = vld [vmem:[#allocation2 + $0x68] sm:$0xff]
    %v325 = vld [vmem:[#allocation2 + $0x70] sm:$0xff]
    %v326 = vld [vmem:[#allocation2 + $0x78] sm:$0xff]
    %v327 = vld [vmem:[%s2] sm:$0x1]
    %v329 = vlaneseq
    %v330 = vshrl.u32 %v329, 7
    %v331 = vsub.s32 0, %v330
    %v332 = vrot.slane %v327, %v331
    %v334 = vadd.f32 %v311, %v332
    %v335 = vadd.f32 %v312, %v332
    %v336 = vadd.f32 %v313, %v332
    %v337 = vadd.f32 %v314, %v332
    %v338 = vadd.f32 %v315, %v332
    %v339 = vadd.f32 %v316, %v332
    %v340 = vadd.f32 %v317, %v332
    %v341 = vadd.f32 %v318, %v332
    %v342 = vadd.f32 %v319, %v332
    %v343 = vadd.f32 %v320, %v332
    %v344 = vadd.f32 %v321, %v332
    %v345 = vadd.f32 %v322, %v332
    %v346 = vadd.f32 %v323, %v332
    %v347 = vadd.f32 %v324, %v332
    %v348 = vadd.f32 %v325, %v332
    %v349 = vadd.f32 %v326, %v332
    %350 = vst [vmem:[%s3] sm:$0xff] %v334
    %351 = vst [vmem:[%s3 + $0x8] sm:$0xff] %v335
    %352 = vst [vmem:[%s3 + $0x10] sm:$0xff] %v336
    %353 = vst [vmem:[%s3 + $0x18] sm:$0xff] %v337
    %354 = vst [vmem:[%s3 + $0x20] sm:$0xff] %v338
    %355 = vst [vmem:[%s3 + $0x28] sm:$0xff] %v339
    %356 = vst [vmem:[%s3 + $0x30] sm:$0xff] %v340
    %357 = vst [vmem:[%s3 + $0x38] sm:$0xff] %v341
    %358 = vst [vmem:[%s3 + $0x40] sm:$0xff] %v342
    %359 = vst [vmem:[%s3 + $0x48] sm:$0xff] %v343
    %360 = vst [vmem:[%s3 + $0x50] sm:$0xff] %v344
    %361 = vst [vmem:[%s3 + $0x58] sm:$0xff] %v345
    %362 = vst [vmem:[%s3 + $0x60] sm:$0xff] %v346
    %363 = vst [vmem:[%s3 + $0x68] sm:$0xff] %v347
    %364 = vst [vmem:[%s3 + $0x70] sm:$0xff] %v348
    %365 = vst [vmem:[%s3 + $0x78] sm:$0xff] %v349
  $region21: #{forward.29} parent=0 // pred_fallthru
    _
  // Predicated region
  $region22: #{forward.29} parent=0 // pred_check
    _
  $region23: #{forward.29} parent=0 // pred_check_branch
    %367 = sbr.rel (0) target = $region25
  $region24: #{forward.29} parent=0 // pred_region
    _
  $region25: #{forward.29} parent=0 // pred_fallthru
    _
  // Predicated region
  $region26: #{forward.29} parent=0 // pred_check
    _
  $region27: #{forward.29} parent=0 // pred_check_branch
    %369 = sbr.rel (0) target = $region29
  $region28: #{forward.29} parent=0 // pred_region
    _
  $region29: #{forward.29} parent=0 // pred_fallthru
    _

// kernel: forward.32
$region0: #{forward.32}
  #allocation0 [shape = 'u32[]', space=smem, size = 0x4, offset = 0x4, fixed_abs, tag = 'smem constant byte address 0x4 - core index']
  #allocation1 [shape = 'u32[144,128]{1,0:T(1,128)}', space=vmem, size = 0x12000, scoped, tag = 'internal scratch']
  #allocation2 [shape = 'f32[32,128]{1,0:T(8,128)}', space=vmem, size = 0x4000, scoped, tag = 'scratch operand']
  %s0 = inlined_call_operand.vmem [shape: bf16[32,128], index: 0, kind: input, shape index: {}]
  %s1 = inlined_call_operand.vmem [shape: bf16[128,128], index: 1, kind: input, shape index: {}]
  %s2 = inlined_call_operand.vmem [shape: f32[1,128], index: 2, kind: input, shape index: {}]
  %s3 = inlined_call_operand.vmem [shape: f32[32,128], index: 3, kind: output, shape index: {}]
  %s4 = sld [smem:[#allocation0]]
  $region30: #{forward.32} parent=0
    _
  %s6 = ssub.s32 1, %s4
  %s7 = scalar_select 0, %s6, %s4
  // Predicated region
  $region2: #{forward.32} parent=0 // pred_check
    _
  $region3: #{forward.32} parent=0 // pred_check_branch
    %9 = sbr.rel (0) target = $region5
  $region4: #{forward.32} parent=0 // pred_region
    _
  $region5: #{forward.32} parent=0 // pred_fallthru
    _
  // Predicated region
  $region6: #{forward.32} parent=0 // pred_check
    _
  $region7: #{forward.32} parent=0 // pred_check_branch
    %11 = sbr.rel (0) target = $region9
  $region8: #{forward.32} parent=0 // pred_region
    _
  $region9: #{forward.32} parent=0 // pred_fallthru
    _
  // Predicated region
  $region10: #{forward.32} parent=0 // pred_check
    _
  $region11: #{forward.32} parent=0 // pred_check_branch
    %13 = sbr.rel (0) target = $region13
  $region12: #{forward.32} parent=0 // pred_region
    _
  $region13: #{forward.32} parent=0 // pred_fallthru
    _
  %p15 = scmp.eq.s32.totalorder 0, 0
  // Predicated region
  $region14: #{forward.32} parent=0 // pred_check
    %p16 = pneg %p15
  $region15: #{forward.32} parent=0 // pred_check_branch
    %18 = sbr.rel (%p16) target = $region17
  $region16: #{forward.32} parent=0 // pred_region
    %19 = vst [vmem:[#allocation2] sm:$0xff] 0.0
    %20 = vst [vmem:[#allocation2 + $0x8] sm:$0xff] 0.0
    %21 = vst [vmem:[#allocation2 + $0x10] sm:$0xff] 0.0
    %22 = vst [vmem:[#allocation2 + $0x18] sm:$0xff] 0.0
  $region17: #{forward.32} parent=0 // pred_fallthru
    _
  %v23 = vld [vmem:[#allocation2] sm:$0xff]
  %v24 = vld [vmem:[#allocation2 + $0x8] sm:$0xff]
  %v25 = vld [vmem:[#allocation2 + $0x10] sm:$0xff]
  %v26 = vld [vmem:[#allocation2 + $0x18] sm:$0xff]
  %v27 = vld [vmem:[%s0] sm:$0xf]
  %v28 = vld [vmem:[%s0 + $0x4] sm:$0xf]
  %v29 = vld [vmem:[%s0 + $0x8] sm:$0xf]
  %v30 = vld [vmem:[%s0 + $0xc] sm:$0xf]
  %v31 = vld [vmem:[%s1] sm:$0xf]
  %v32 = vld [vmem:[%s1 + $0x4] sm:$0xf]
  %v33 = vld [vmem:[%s1 + $0x8] sm:$0xf]
  %v34 = vld [vmem:[%s1 + $0xc] sm:$0xf]
  %v35 = vld [vmem:[%s1 + $0x10] sm:$0xf]
  %v36 = vld [vmem:[%s1 + $0x14] sm:$0xf]
  %v37 = vld [vmem:[%s1 + $0x18] sm:$0xf]
  %v38 = vld [vmem:[%s1 + $0x1c] sm:$0xf]
  %v39 = vld [vmem:[%s1 + $0x20] sm:$0xf]
  %v40 = vld [vmem:[%s1 + $0x24] sm:$0xf]
  %v41 = vld [vmem:[%s1 + $0x28] sm:$0xf]
  %v42 = vld [vmem:[%s1 + $0x2c] sm:$0xf]
  %v43 = vld [vmem:[%s1 + $0x30] sm:$0xf]
  %v44 = vld [vmem:[%s1 + $0x34] sm:$0xf]
  %v45 = vld [vmem:[%s1 + $0x38] sm:$0xf]
  %v46 = vld [vmem:[%s1 + $0x3c] sm:$0xf]
  %v51 = vunpack.c.l.b16 %v27
  %v52 = vunpack.c.l.b16 %v28
  %v53 = vunpack.c.l.b16 %v29
  %v54 = vunpack.c.l.b16 %v30
  %v55 = vpack.c.b16 %v52, %v51
  %v56 = vpack.c.b16 %v54, %v53
  %v75 = vunpack.c.l.b16 %v31
  %v76 = vunpack.c.l.b16 %v32
  %v77 = vunpack.c.l.b16 %v33
  %v78 = vunpack.c.l.b16 %v34
  %v79 = vunpack.c.l.b16 %v35
  %v80 = vunpack.c.l.b16 %v36
  %v81 = vunpack.c.l.b16 %v37
  %v82 = vunpack.c.l.b16 %v38
  %v83 = vunpack.c.l.b16 %v39
  %v84 = vunpack.c.l.b16 %v40
  %v85 = vunpack.c.l.b16 %v41
  %v86 = vunpack.c.l.b16 %v42
  %v87 = vunpack.c.l.b16 %v43
  %v88 = vunpack.c.l.b16 %v44
  %v89 = vunpack.c.l.b16 %v45
  %v90 = vunpack.c.l.b16 %v46
  %v91 = vpack.c.b16 %v76, %v75
  %v92 = vpack.c.b16 %v78, %v77
  %v93 = vpack.c.b16 %v80, %v79
  %v94 = vpack.c.b16 %v82, %v81
  %v95 = vpack.c.b16 %v84, %v83
  %v96 = vpack.c.b16 %v86, %v85
  %v97 = vpack.c.b16 %v88, %v87
  %v98 = vpack.c.b16 %v90, %v89
  %107 = vmatprep.subr.bf16.mxu0 0
  %108 = vmatpush1.bf16.msra.mxu0 %v91
  %109 = vmatprep.subr.bf16.mxu0 0
  %110 = vmatpush1.bf16.msra.mxu0 %v92
  %111 = vmatprep.subr.bf16.mxu0 0
  %112 = vmatpush1.bf16.msra.mxu0 %v93
  %113 = vmatprep.subr.bf16.mxu0 0
  %114 = vmatpush1.bf16.msra.mxu0 %v94
  %115 = vmatprep.subr.bf16.mxu0 0
  %116 = vmatpush1.bf16.msra.mxu0 %v95
  %117 = vmatprep.subr.bf16.mxu0 0
  %118 = vmatpush1.bf16.msra.mxu0 %v96
  %119 = vmatprep.subr.bf16.mxu0 0
  %120 = vmatpush1.bf16.msra.mxu0 %v97
  %121 = vmatprep.subr.bf16.mxu0 0
  %122 = vmatpush1.bf16.msra.mxu0 %v98
  %123 = vmatprep.subr.bf16.mxu0 0
  %124 = vmatpush1.bf16.msra.mxu0 0
  %125 = vmatprep.subr.bf16.mxu0 0
  %126 = vmatpush1.bf16.msra.mxu0 0
  %127 = vmatprep.subr.bf16.mxu0 0
  %128 = vmatpush1.bf16.msra.mxu0 0
  %129 = vmatprep.subr.bf16.mxu0 0
  %130 = vmatpush1.bf16.msra.mxu0 0
  %131 = vmatprep.subr.bf16.mxu0 0
  %132 = vmatpush1.bf16.msra.mxu0 0
  %133 = vmatprep.subr.bf16.mxu0 0
  %134 = vmatpush1.bf16.msra.mxu0 0
  %135 = vmatprep.subr.bf16.mxu0 0
  %136 = vmatpush1.bf16.msra.mxu0 0
  %137 = vmatprep.subr.bf16.mxu0 0
  %138 = vmatpush1.bf16.msra.mxu0 0
  %139 = vmatprep.mubr.bf16.mxu0 0
  %140 = vmatmul.mubr.bf16.gmra.mrb[0].mxu0 %v55
  %v141 = vpop.f32.mrb[0].mxu0
  %v142 = vadd.f32 0.0, %v141
  %v143 = vpop.f32.mrb[0].mxu0
  %v144 = vpop.f32.mrb[0].mxu0
  %v145 = vadd.f32 0.0, %v144
  %v146 = vpop.f32.mrb[0].mxu0
  %147 = vmatprep.mubr.bf16.mxu0 0
  %148 = vmatmul.mubr.bf16.gmra.mrb[0].mxu0 %v56
  %v149 = vpop.f32.mrb[0].mxu0
  %v150 = vadd.f32 0.0, %v149
  %v151 = vpop.f32.mrb[0].mxu0
  %v152 = vpop.f32.mrb[0].mxu0
  %v153 = vadd.f32 0.0, %v152
  %v154 = vpop.f32.mrb[0].mxu0
  %155 = vdwg.mxu0
  %v156 = vadd.f32 %v23, %v142
  %v157 = vadd.f32 %v24, %v145
  %v158 = vadd.f32 %v25, %v150
  %v159 = vadd.f32 %v26, %v153
  %160 = vst [vmem:[#allocation2] sm:$0xff] %v156
  %161 = vst [vmem:[#allocation2 + $0x8] sm:$0xff] %v157
  %162 = vst [vmem:[#allocation2 + $0x10] sm:$0xff] %v158
  %163 = vst [vmem:[#allocation2 + $0x18] sm:$0xff] %v159
  // Predicated region
  $region18: #{forward.32} parent=0 // pred_check
    %p164 = pneg %p15
  $region19: #{forward.32} parent=0 // pred_check_branch
    %166 = sbr.rel (%p164) target = $region21
  $region20: #{forward.32} parent=0 // pred_region
    %v167 = vld [vmem:[#allocation2] sm:$0xff]
    %v168 = vld [vmem:[#allocation2 + $0x8] sm:$0xff]
    %v169 = vld [vmem:[#allocation2 + $0x10] sm:$0xff]
    %v170 = vld [vmem:[#allocation2 + $0x18] sm:$0xff]
    %v171 = vld [vmem:[%s2] sm:$0x1]
    %v173 = vlaneseq
    %v174 = vshrl.u32 %v173, 7
    %v175 = vsub.s32 0, %v174
    %v176 = vrot.slane %v171, %v175
    %v178 = vadd.f32 %v167, %v176
    %v179 = vadd.f32 %v168, %v176
    %v180 = vadd.f32 %v169, %v176
    %v181 = vadd.f32 %v170, %v176
    %182 = vst [vmem:[%s3] sm:$0xff] %v178
    %183 = vst [vmem:[%s3 + $0x8] sm:$0xff] %v179
    %184 = vst [vmem:[%s3 + $0x10] sm:$0xff] %v180
    %185 = vst [vmem:[%s3 + $0x18] sm:$0xff] %v181
  $region21: #{forward.32} parent=0 // pred_fallthru
    _
  // Predicated region
  $region22: #{forward.32} parent=0 // pred_check
    _
  $region23: #{forward.32} parent=0 // pred_check_branch
    %187 = sbr.rel (0) target = $region25
  $region24: #{forward.32} parent=0 // pred_region
    _
  $region25: #{forward.32} parent=0 // pred_fallthru
    _
  // Predicated region
  $region26: #{forward.32} parent=0 // pred_check
    _
  $region27: #{forward.32} parent=0 // pred_check_branch
    %189 = sbr.rel (0) target = $region29
  $region28: #{forward.32} parent=0 // pred_region
    _
  $region29: #{forward.32} parent=0 // pred_fallthru
    _

// kernel: forward.31
$region0: #{forward.31}
  #allocation0 [shape = 'u32[]', space=smem, size = 0x4, offset = 0x4, fixed_abs, tag = 'smem constant byte address 0x4 - core index']
  #allocation1 [shape = 'u32[144,128]{1,0:T(1,128)}', space=vmem, size = 0x12000, scoped, tag = 'internal scratch']
  %s0 = inlined_call_operand.vmem [shape: f32[2,5,5,96], index: 0, kind: input, shape index: {}]
  %s1 = inlined_call_operand.vmem [shape: f32[2,5,5,96], index: 1, kind: input, shape index: {}]
  %s2 = inlined_call_operand.vmem [shape: f32[2,5,5,96], index: 2, kind: input, shape index: {}]
  %s3 = inlined_call_operand.vmem [shape: f32[2,5,5,96], index: 3, kind: input, shape index: {}]
  %s4 = inlined_call_operand.vmem [shape: f32[9,96], index: 4, kind: input, shape index: {}]
  %s5 = inlined_call_operand.vmem [shape: f32[1,96], index: 5, kind: input, shape index: {}]
  %s6 = inlined_call_operand.vmem [shape: f32[2,4,4,96], index: 6, kind: output, shape index: {}]
  %s7 = sld [smem:[#allocation0]]
  $region57: #{forward.31} parent=0
    _
  %s9 = ssub.s32 1, %s7
  %s10 = scalar_select 0, %s9, %s7
  loop: start=0, step=1, limit=4
  $region2: #{forward.31} parent=0 // loop_pre_header
    _
  $region3: #{forward.31} parent=0 // loop_header
    %s12 = sphi 0, %s16
    %p13 = scmp.ge.s32.totalorder %s12, 4
    %s22 = sphi 0, %s24
    %s25 = sphi 0, %s22
    %s26 = sphi 0, %s25
    %s42 = sphi 0, %s26
    %s48 = sphi 0, %s50
    %s51 = sphi 0, %s48
    %s52 = sphi 0, %s51
    %s68 = sphi 0, %s52
    %s74 = sphi 0, %s76
    %s77 = sphi 0, %s74
    %s78 = sphi 0, %s77
    %s94 = sphi 0, %s78
    %s100 = sphi 0, %s102
    %s103 = sphi 0, %s100
    %s104 = sphi 0, %s103
    %s120 = sphi 0, %s104
    %s124 = sphi 0, %s124
    %s126 = sphi 0, %s124
    %s127 = sphi 0, %s126
    %s141 = sphi 0, %s127
    %s145 = sphi 0, %s145
    %s147 = sphi 0, %s145
    %s148 = sphi 0, %s147
    %s162 = sphi 0, %s148
    %s168 = sphi 0, %s170
    %s171 = sphi 0, %s168
    %s172 = sphi 0, %s171
    %s188 = sphi 0, %s172
  $region4: #{forward.31} parent=0 // loop_header_branch
    %15 = sbr.rel (%p13) target = $region8
  $region5: #{forward.31} parent=0 // loop_body
    %s17 = ssub.s32 %s12, 1
    %s18 = ssub.s32 %s12, 2
    %s19 = sadd.s32 %s12, 1
    %s20 = ssub.s32 %s12, %s19
    %p21 = scmp.eq.s32.totalorder %s20, 0
    %s23 = sadd.s32 %s22, 1
    %s24 = scalar_select %p21, %s22, %s23
    %p27 = pneg %p21
    %p28 = scmp.eq.s32.totalorder %s12, 1
    %p29 = por %p27, %p28
    %p30 = scmp.ne.s32.totalorder %s22, %s25
    %p31 = scmp.eq.s32.totalorder %s12, 0
    %p32 = por %p30, %p31
    %p33 = scmp.ne.s32.totalorder %s22, %s25
    %p34 = scmp.eq.s32.totalorder %s17, 1
    %p35 = por %p33, %p34
    %p36 = scmp.ne.s32.totalorder %s25, %s26
    %p37 = scmp.eq.s32.totalorder %s17, 0
    %p38 = por %p36, %p37
    %p39 = scmp.ne.s32.totalorder %s25, %s26
    %p40 = scmp.eq.s32.totalorder %s18, 1
    %p41 = por %p39, %p40
    %p43 = scmp.ne.s32.totalorder %s26, %s42
    %p44 = scmp.eq.s32.totalorder %s18, 0
    %p45 = por %p43, %p44
    %s46 = ssub.s32 %s12, %s19
    %p47 = scmp.eq.s32.totalorder %s46, 0
    %s49 = sadd.s32 %s48, 1
    %s50 = scalar_select %p47, %s48, %s49
    %p53 = pneg %p47
    %p54 = scmp.eq.s32.totalorder %s12, 1
    %p55 = por %p53, %p54
    %p56 = scmp.ne.s32.totalorder %s48, %s51
    %p57 = scmp.eq.s32.totalorder %s12, 0
    %p58 = por %p56, %p57
    %p59 = scmp.ne.s32.totalorder %s48, %s51
    %p60 = scmp.eq.s32.totalorder %s17, 1
    %p61 = por %p59, %p60
    %p62 = scmp.ne.s32.totalorder %s51, %s52
    %p63 = scmp.eq.s32.totalorder %s17, 0
    %p64 = por %p62, %p63
    %p65 = scmp.ne.s32.totalorder %s51, %s52
    %p66 = scmp.eq.s32.totalorder %s18, 1
    %p67 = por %p65, %p66
    %p69 = scmp.ne.s32.totalorder %s52, %s68
    %p70 = scmp.eq.s32.totalorder %s18, 0
    %p71 = por %p69, %p70
    %s72 = ssub.s32 %s12, %s19
    %p73 = scmp.eq.s32.totalorder %s72, 0
    %s75 = sadd.s32 %s74, 1
    %s76 = scalar_select %p73, %s74, %s75
    %p79 = pneg %p73
    %p80 = scmp.eq.s32.totalorder %s12, 1
    %p81 = por %p79, %p80
    %p82 = scmp.ne.s32.totalorder %s74, %s77
    %p83 = scmp.eq.s32.totalorder %s12, 0
    %p84 = por %p82, %p83
    %p85 = scmp.ne.s32.totalorder %s74, %s77
    %p86 = scmp.eq.s32.totalorder %s17, 1
    %p87 = por %p85, %p86
    %p88 = scmp.ne.s32.totalorder %s77, %s78
    %p89 = scmp.eq.s32.totalorder %s17, 0
    %p90 = por %p88, %p89
    %p91 = scmp.ne.s32.totalorder %s77, %s78
    %p92 = scmp.eq.s32.totalorder %s18, 1
    %p93 = por %p91, %p92
    %p95 = scmp.ne.s32.totalorder %s78, %s94
    %p96 = scmp.eq.s32.totalorder %s18, 0
    %p97 = por %p95, %p96
    %s98 = ssub.s32 %s12, %s19
    %p99 = scmp.eq.s32.totalorder %s98, 0
    %s101 = sadd.s32 %s100, 1
    %s102 = scalar_select %p99, %s100, %s101
    %p105 = pneg %p99
    %p106 = scmp.eq.s32.totalorder %s12, 1
    %p107 = por %p105, %p106
    %p108 = scmp.ne.s32.totalorder %s100, %s103
    %p109 = scmp.eq.s32.totalorder %s12, 0
    %p110 = por %p108, %p109
    %p111 = scmp.ne.s32.totalorder %s100, %s103
    %p112 = scmp.eq.s32.totalorder %s17, 1
    %p113 = por %p111, %p112
    %p114 = scmp.ne.s32.totalorder %s103, %s104
    %p115 = scmp.eq.s32.totalorder %s17, 0
    %p116 = por %p114, %p115
    %p117 = scmp.ne.s32.totalorder %s103, %s104
    %p118 = scmp.eq.s32.totalorder %s18, 1
    %p119 = por %p117, %p118
    %p121 = scmp.ne.s32.totalorder %s104, %s120
    %p122 = scmp.eq.s32.totalorder %s18, 0
    %p123 = por %p121, %p122
    %s125 = sadd.s32 %s124, 1
    %p128 = scmp.eq.s32.totalorder %s12, 1
    %p129 = scmp.ne.s32.totalorder %s124, %s126
    %p130 = scmp.eq.s32.totalorder %s12, 0
    %p131 = por %p129, %p130
    %p132 = scmp.ne.s32.totalorder %s124, %s126
    %p133 = scmp.eq.s32.totalorder %s17, 1
    %p134 = por %p132, %p133
    %p135 = scmp.ne.s32.totalorder %s126, %s127
    %p136 = scmp.eq.s32.totalorder %s17, 0
    %p137 = por %p135, %p136
    %p138 = scmp.ne.s32.totalorder %s126, %s127
    %p139 = scmp.eq.s32.totalorder %s18, 1
    %p140 = por %p138, %p139
    %p142 = scmp.ne.s32.totalorder %s127, %s141
    %p143 = scmp.eq.s32.totalorder %s18, 0
    %p144 = por %p142, %p143
    %s146 = sadd.s32 %s145, 1
    %p149 = scmp.eq.s32.totalorder %s12, 1
    %p150 = scmp.ne.s32.totalorder %s145, %s147
    %p151 = scmp.eq.s32.totalorder %s12, 0
    %p152 = por %p150, %p151
    %p153 = scmp.ne.s32.totalorder %s145, %s147
    %p154 = scmp.eq.s32.totalorder %s17, 1
    %p155 = por %p153, %p154
    %p156 = scmp.ne.s32.totalorder %s147, %s148
    %p157 = scmp.eq.s32.totalorder %s17, 0
    %p158 = por %p156, %p157
    %p159 = scmp.ne.s32.totalorder %s147, %s148
    %p160 = scmp.eq.s32.totalorder %s18, 1
    %p161 = por %p159, %p160
    %p163 = scmp.ne.s32.totalorder %s148, %s162
    %p164 = scmp.eq.s32.totalorder %s18, 0
    %p165 = por %p163, %p164
    %s166 = ssub.s32 %s12, %s19
    %p167 = scmp.eq.s32.totalorder %s166, 0
    %s169 = sadd.s32 %s168, 1
    %s170 = scalar_select %p167, %s168, %s169
    %p173 = pneg %p167
    %p174 = scmp.eq.s32.totalorder %s12, 1
    %p175 = por %p173, %p174
    %p176 = scmp.ne.s32.totalorder %s168, %s171
    %p177 = scmp.eq.s32.totalorder %s12, 0
    %p178 = por %p176, %p177
    %p179 = scmp.ne.s32.totalorder %s168, %s171
    %p180 = scmp.eq.s32.totalorder %s17, 1
    %p181 = por %p179, %p180
    %p182 = scmp.ne.s32.totalorder %s171, %s172
    %p183 = scmp.eq.s32.totalorder %s17, 0
    %p184 = por %p182, %p183
    %p185 = scmp.ne.s32.totalorder %s171, %s172
    %p186 = scmp.eq.s32.totalorder %s18, 1
    %p187 = por %p185, %p186
    %p189 = scmp.ne.s32.totalorder %s172, %s188
    %p190 = scmp.eq.s32.totalorder %s18, 0
    %p191 = por %p189, %p190
    %p192 = scmp.le.s32.totalorder 1, %s12
    %p193 = scmp.lt.s32.totalorder %s12, 3
    %p194 = pnand %p192, %p193
    %p195 = pneg %p194
    // Predicated region
    $region9: #{forward.31} parent=5 // pred_check
      _
    $region10: #{forward.31} parent=5 // pred_check_branch
      %197 = sbr.rel (%p194) target = $region12
    $region11: #{forward.31} parent=5 // pred_region
      %s198 = ssub.s32 %s12, 1
      // Predicated region
      $region13: #{forward.31} parent=11 // pred_check
        %p199 = pneg %p137
      $region14: #{forward.31} parent=11 // pred_check_branch
        %201 = sbr.rel (%p199) target = $region16
      $region15: #{forward.31} parent=11 // pred_region
        _
      $region16: #{forward.31} parent=11 // pred_fallthru
        _
      // Predicated region
      $region17: #{forward.31} parent=11 // pred_check
        %p202 = pneg %p158
      $region18: #{forward.31} parent=11 // pred_check_branch
        %204 = sbr.rel (%p202) target = $region20
      $region19: #{forward.31} parent=11 // pred_region
        _
      $region20: #{forward.31} parent=11 // pred_fallthru
        _
    $region12: #{forward.31} parent=5 // pred_fallthru
      _
    %p205 = scmp.lt.s32.totalorder %s12, 2
    // Predicated region
    $region21: #{forward.31} parent=5 // pred_check
      %p206 = pneg %p205
    $region22: #{forward.31} parent=5 // pred_check_branch
      %208 = sbr.rel (%p206) target = $region24
    $region23: #{forward.31} parent=5 // pred_region
      // Predicated region
      $region25: #{forward.31} parent=23 // pred_check
        %p209 = pneg %p32
      $region26: #{forward.31} parent=23 // pred_check_branch
        %211 = sbr.rel (%p209) target = $region28
      $region27: #{forward.31} parent=23 // pred_region
        %p212 = scmp.lt.s32.totalorder %s12, 1
        %s213 = scalar_select %p212, %s12, 1
        %s214 = smul.addr %s213, 5
        %s215 = smul.addr %s214, 8
        %s216 = scalar_lea.vmem %s0, %s215
      $region28: #{forward.31} parent=23 // pred_fallthru
        _
      // Predicated region
      $region29: #{forward.31} parent=23 // pred_check
        %p217 = pneg %p58
      $region30: #{forward.31} parent=23 // pred_check_branch
        %219 = sbr.rel (%p217) target = $region32
      $region31: #{forward.31} parent=23 // pred_region
        %p220 = scmp.lt.s32.totalorder %s12, 1
        %s221 = scalar_select %p220, %s12, 1
        %s222 = smul.addr %s221, 5
        %s223 = smul.addr %s222, 8
        %s224 = scalar_lea.vmem %s1, %s223
      $region32: #{forward.31} parent=23 // pred_fallthru
        _
      // Predicated region
      $region33: #{forward.31} parent=23 // pred_check
        %p225 = pneg %p84
      $region34: #{forward.31} parent=23 // pred_check_branch
        %227 = sbr.rel (%p225) target = $region36
      $region35: #{forward.31} parent=23 // pred_region
        %p228 = scmp.lt.s32.totalorder %s12, 1
        %s229 = scalar_select %p228, %s12, 1
        %s230 = smul.addr %s229, 5
        %s231 = smul.addr %s230, 8
        %s232 = scalar_lea.vmem %s2, %s231
      $region36: #{forward.31} parent=23 // pred_fallthru
        _
      // Predicated region
      $region37: #{forward.31} parent=23 // pred_check
        %p233 = pneg %p110
      $region38: #{forward.31} parent=23 // pred_check_branch
        %235 = sbr.rel (%p233) target = $region40
      $region39: #{forward.31} parent=23 // pred_region
        %p236 = scmp.lt.s32.totalorder %s12, 1
        %s237 = scalar_select %p236, %s12, 1
        %s238 = smul.addr %s237, 5
        %s239 = smul.addr %s238, 8
        %s240 = scalar_lea.vmem %s3, %s239
      $region40: #{forward.31} parent=23 // pred_fallthru
        _
    $region24: #{forward.31} parent=5 // pred_fallthru
      _
    %p241 = scmp.le.s32.totalorder 1, %s12
    %p242 = scmp.lt.s32.totalorder %s12, 3
    %p243 = pnand %p241, %p242
    %p244 = pneg %p243
    // Predicated region
    $region41: #{forward.31} parent=5 // pred_check
      _
    $region42: #{forward.31} parent=5 // pred_check_branch
      %246 = sbr.rel (%p243) target = $region44
    $region43: #{forward.31} parent=5 // pred_region
      %s247 = ssub.s32 %s12, 1
      %p248 = scmp.lt.s32.totalorder %s17, 1
      %s249 = scalar_select %p248, %s17, 1
      %s250 = smul.addr %s249, 5
      %s251 = smul.addr %s250, 8
      %s252 = scalar_lea.vmem %s0, %s251
      %p253 = pneg %p38
      %p254 = pneg %p35
      %p255 = scmp.lt.s32.totalorder %s17, 1
      %s256 = scalar_select %p255, %s17, 1
      %s257 = smul.addr %s256, 5
      %s258 = smul.addr %s257, 8
      %s259 = scalar_lea.vmem %s1, %s258
      %p260 = pneg %p64
      %p261 = pneg %p61
      %p262 = scmp.lt.s32.totalorder %s17, 1
      %s263 = scalar_select %p262, %s17, 1
      %s264 = smul.addr %s263, 5
      %s265 = smul.addr %s264, 8
      %s266 = scalar_lea.vmem %s2, %s265
      %p267 = pneg %p90
      %p268 = pneg %p87
      %p269 = scmp.lt.s32.totalorder %s17, 1
      %s270 = scalar_select %p269, %s17, 1
      %s271 = smul.addr %s270, 5
      %s272 = smul.addr %s271, 8
      %s273 = scalar_lea.vmem %s3, %s272
      %p274 = pneg %p116
      %p275 = pneg %p113
      %p276 = pneg %p137
      %p277 = pneg %p134
      %p278 = pneg %p158
      %p279 = pneg %p155
      %p280 = pneg %p184
      %p281 = pneg %p181
      %p282 = scmp.lt.s32.totalorder %s17, 1
      %s283 = scalar_select %p282, %s17, 1
      %s284 = smul.addr %s283, 4
      %s285 = smul.addr %s284, 4
      %s286 = scalar_lea.vmem %s6, %s285
      %p287 = scmp.lt.s32.totalorder %s17, 1
      %s288 = scalar_select %p287, %s17, 1
      %s289 = smul.addr %s288, 5
      %s290 = smul.addr %s289, 8
      %s291 = scalar_lea.vmem %s0, %s290
      %p292 = scmp.lt.s32.totalorder %s17, 1
      %s293 = scalar_select %p292, %s17, 1
      %s294 = smul.addr %s293, 5
      %s295 = smul.addr %s294, 8
      %s296 = scalar_lea.vmem %s1, %s295
      %p297 = scmp.lt.s32.totalorder %s17, 1
      %s298 = scalar_select %p297, %s17, 1
      %s299 = smul.addr %s298, 5
      %s300 = smul.addr %s299, 8
      %s301 = scalar_lea.vmem %s2, %s300
      %p302 = scmp.lt.s32.totalorder %s17, 1
      %s303 = scalar_select %p302, %s17, 1
      %s304 = smul.addr %s303, 5
      %s305 = smul.addr %s304, 8
      %s306 = scalar_lea.vmem %s3, %s305
      %p307 = scmp.lt.s32.totalorder %s17, 1
      %s308 = scalar_select %p307, %s17, 1
      %s309 = smul.addr %s308, 4
      %s310 = smul.addr %s309, 4
      %s311 = scalar_lea.vmem %s6, %s310
      %v312 = vld [vmem:[%s291] sm:$0x1f]
      %v313 = vld [vmem:[%s291 + $0x8] sm:$0x1f]
      %v314 = vld [vmem:[%s291 + $0x10] sm:$0x1f]
      %v315 = vld [vmem:[%s291 + $0x18] sm:$0x1f]
      %v316 = vld [vmem:[%s291 + $0x20] sm:$0x1f]
      %v317 = vld [vmem:[%s296] sm:$0x1f]
      %v318 = vld [vmem:[%s296 + $0x8] sm:$0x1f]
      %v319 = vld [vmem:[%s296 + $0x10] sm:$0x1f]
      %v320 = vld [vmem:[%s296 + $0x18] sm:$0x1f]
      %v321 = vld [vmem:[%s296 + $0x20] sm:$0x1f]
      %v322 = vld [vmem:[%s301] sm:$0x1f]
      %v323 = vld [vmem:[%s301 + $0x8] sm:$0x1f]
      %v324 = vld [vmem:[%s301 + $0x10] sm:$0x1f]
      %v325 = vld [vmem:[%s301 + $0x18] sm:$0x1f]
      %v326 = vld [vmem:[%s306] sm:$0x1f]
      %v327 = vld [vmem:[%s306 + $0x8] sm:$0x1f]
      %v328 = vld [vmem:[%s306 + $0x10] sm:$0x1f]
      %v329 = vld [vmem:[%s306 + $0x18] sm:$0x1f]
      %v330 = vld [vmem:[%s4] sm:$0xff]
      %v331 = vld [vmem:[%s4 + $0x8] sm:$0x1]
      %v332 = vlaneseq
      %v333 = vshrl.u32 %v332, 7
      %v334 = vsub.s32 0, %v333
      %v335 = vrot.slane %v330, %v334
      %v336 = vmul.f32 %v312, %v335
      %v337 = vmul.f32 %v313, %v335
      %v338 = vmul.f32 %v314, %v335
      %v339 = vmul.f32 %v315, %v335
      %v340 = vlaneseq
      %v341 = vshrl.u32 %v340, 7
      %v342 = vsub.s32 1, %v341
      %v343 = vrot.slane %v330, %v342
      %v344 = vmul.f32 %v317, %v343
      %v345 = vmul.f32 %v318, %v343
      %v346 = vmul.f32 %v319, %v343
      %v347 = vmul.f32 %v320, %v343
      %v348 = vadd.f32 %v336, %v344
      %v349 = vadd.f32 %v337, %v345
      %v350 = vadd.f32 %v338, %v346
      %v351 = vadd.f32 %v339, %v347
      %v352 = vlaneseq
      %v353 = vshrl.u32 %v352, 7
      %v354 = vsub.s32 2, %v353
      %v355 = vrot.slane %v330, %v354
      %v356 = vmul.f32 %v312, %v355
      %v357 = vmul.f32 %v313, %v355
      %v358 = vmul.f32 %v314, %v355
      %v359 = vmul.f32 %v315, %v355
      %v364 = vrot.slane %v356, 1
      %v365 = vrot.slane %v357, 1
      %v366 = vrot.slane %v358, 1
      %v367 = vrot.slane %v359, 1
      %v372 = vadd.f32 %v348, %v364
      %v373 = vadd.f32 %v349, %v365
      %v374 = vadd.f32 %v350, %v366
      %v375 = vadd.f32 %v351, %v367
      %v376 = vlaneseq
      %v377 = vshrl.u32 %v376, 7
      %v378 = vsub.s32 3, %v377
      %v379 = vrot.slane %v330, %v378
      %v380 = vmul.f32 %v322, %v379
      %v381 = vmul.f32 %v323, %v379
      %v382 = vmul.f32 %v324, %v379
      %v383 = vmul.f32 %v325, %v379
      %v384 = vadd.f32 %v372, %v380
      %v385 = vadd.f32 %v373, %v381
      %v386 = vadd.f32 %v374, %v382
      %v387 = vadd.f32 %v375, %v383
      %v388 = vlaneseq
      %v389 = vshrl.u32 %v388, 7
      %v390 = vsub.s32 4, %v389
      %v391 = vrot.slane %v330, %v390
      %v392 = vmul.f32 %v326, %v391
      %v393 = vmul.f32 %v327, %v391
      %v394 = vmul.f32 %v328, %v391
      %v395 = vmul.f32 %v329, %v391
      %v396 = vadd.f32 %v384, %v392
      %v397 = vadd.f32 %v385, %v393
      %v398 = vadd.f32 %v386, %v394
      %v399 = vadd.f32 %v387, %v395
      %v400 = vlaneseq
      %v401 = vshrl.u32 %v400, 7
      %v402 = vsub.s32 5, %v401
      %v403 = vrot.slane %v330, %v402
      %v404 = vmul.f32 %v322, %v403
      %v405 = vmul.f32 %v323, %v403
      %v406 = vmul.f32 %v324, %v403
      %v407 = vmul.f32 %v325, %v403
      %v412 = vrot.slane %v404, 1
      %v413 = vrot.slane %v405, 1
      %v414 = vrot.slane %v406, 1
      %v415 = vrot.slane %v407, 1
      %v420 = vadd.f32 %v396, %v412
      %v421 = vadd.f32 %v397, %v413
      %v422 = vadd.f32 %v398, %v414
      %v423 = vadd.f32 %v399, %v415
      %v424 = vlaneseq
      %v425 = vshrl.u32 %v424, 7
      %v426 = vsub.s32 6, %v425
      %v427 = vrot.slane %v330, %v426
      %v428 = vmul.f32 %v313, %v427
      %v429 = vmul.f32 %v314, %v427
      %v430 = vmul.f32 %v315, %v427
      %v431 = vmul.f32 %v316, %v427
      %v432 = vadd.f32 %v420, %v428
      %v433 = vadd.f32 %v421, %v429
      %v434 = vadd.f32 %v422, %v430
      %v435 = vadd.f32 %v423, %v431
      %v436 = vlaneseq
      %v437 = vshrl.u32 %v436, 7
      %v438 = vsub.s32 7, %v437
      %v439 = vrot.slane %v330, %v438
      %v440 = vmul.f32 %v318, %v439
      %v441 = vmul.f32 %v319, %v439
      %v442 = vmul.f32 %v320, %v439
      %v443 = vmul.f32 %v321, %v439
      %v444 = vadd.f32 %v432, %v440
      %v445 = vadd.f32 %v433, %v441
      %v446 = vadd.f32 %v434, %v442
      %v447 = vadd.f32 %v435, %v443
      %v448 = vlaneseq
      %v449 = vshrl.u32 %v448, 7
      %v450 = vsub.s32 0, %v449
      %v451 = vrot.slane %v331, %v450
      %v452 = vmul.f32 %v313, %v451
      %v453 = vmul.f32 %v314, %v451
      %v454 = vmul.f32 %v315, %v451
      %v455 = vmul.f32 %v316, %v451
      %v460 = vrot.slane %v452, 1
      %v461 = vrot.slane %v453, 1
      %v462 = vrot.slane %v454, 1
      %v463 = vrot.slane %v455, 1
      %v468 = vadd.f32 %v444, %v460
      %v469 = vadd.f32 %v445, %v461
      %v470 = vadd.f32 %v446, %v462
      %v471 = vadd.f32 %v447, %v463
      %v472 = vld [vmem:[%s5] sm:$0x1]
      %v474 = vlaneseq
      %v475 = vshrl.u32 %v474, 7
      %v476 = vsub.s32 0, %v475
      %v477 = vrot.slane %v472, %v476
      %v479 = vadd.f32 %v468, %v477
      %v480 = vadd.f32 %v469, %v477
      %v481 = vadd.f32 %v470, %v477
      %v482 = vadd.f32 %v471, %v477
      %v483 = vmax.f32 %v479, 0.0
      %v484 = vmax.f32 %v480, 0.0
      %v485 = vmax.f32 %v481, 0.0
      %v486 = vmax.f32 %v482, 0.0
      %v487 = vmin.f32 %v483, 6.0
      %v488 = vmin.f32 %v484, 6.0
      %v489 = vmin.f32 %v485, 6.0
      %v490 = vmin.f32 %v486, 6.0
      %vm491 = vcmask 781312
      %492 = vst.msk [vmem:[%s311] sm:$0xf] %vm491, %v487
      %493 = vst.msk [vmem:[%s311 + $0x4] sm:$0xf] %vm491, %v488
      %494 = vst.msk [vmem:[%s311 + $0x8] sm:$0xf] %vm491, %v489
      %495 = vst.msk [vmem:[%s311 + $0xc] sm:$0xf] %vm491, %v490
      %p496 = scmp.lt.s32.totalorder %s17, 1
      %s497 = scalar_select %p496, %s17, 1
      %s498 = smul.addr %s497, 4
      %s499 = smul.addr %s498, 4
      %s500 = scalar_lea.vmem %s6, %s499
      // Predicated region
      $region45: #{forward.31} parent=43 // pred_check
        %p501 = pneg %p181
      $region46: #{forward.31} parent=43 // pred_check_branch
        %503 = sbr.rel (%p501) target = $region48
      $region47: #{forward.31} parent=43 // pred_region
        _
      $region48: #{forward.31} parent=43 // pred_fallthru
        _
    $region44: #{forward.31} parent=5 // pred_fallthru
      _
    %p504 = scmp.le.s32.totalorder 2, %s12
    // Predicated region
    $region49: #{forward.31} parent=5 // pred_check
      %p505 = pneg %p504
    $region50: #{forward.31} parent=5 // pred_check_branch
      %507 = sbr.rel (%p505) target = $region52
    $region51: #{forward.31} parent=5 // pred_region
      %s508 = ssub.s32 %s12, 2
      // Predicated region
      $region53: #{forward.31} parent=51 // pred_check
        %p509 = pneg %p187
      $region54: #{forward.31} parent=51 // pred_check_branch
        %511 = sbr.rel (%p509) target = $region56
      $region55: #{forward.31} parent=51 // pred_region
        %p512 = scmp.lt.s32.totalorder %s18, 1
        %s513 = scalar_select %p512, %s18, 1
        %s514 = smul.addr %s513, 4
        %s515 = smul.addr %s514, 4
        %s516 = scalar_lea.vmem %s6, %s515
      $region56: #{forward.31} parent=51 // pred_fallthru
        _
    $region52: #{forward.31} parent=5 // pred_fallthru
      _
  $region6: #{forward.31} parent=0 // loop_footer
    %s16 = sadd.s32 1, %s12
  $region7: #{forward.31} parent=0 // loop_footer_branch
    %11 = sbr.rel target = $region3
  $region8: #{forward.31} parent=0 // loop_exit
    _

// kernel: forward.33
$region0: #{forward.33}
  #allocation0 [shape = 'u32[]', space=smem, size = 0x4, offset = 0x4, fixed_abs, tag = 'smem constant byte address 0x4 - core index']
  #allocation1 [shape = 'u32[144,128]{1,0:T(1,128)}', space=vmem, size = 0x12000, scoped, tag = 'internal scratch']
  #allocation2 [shape = 'f32[32,256]{1,0:T(8,128)}', space=vmem, size = 0x8000, scoped, tag = 'scratch operand']
  %s0 = inlined_call_operand.vmem [shape: bf16[32,128], index: 0, kind: input, shape index: {}]
  %s1 = inlined_call_operand.vmem [shape: bf16[128,256], index: 1, kind: input, shape index: {}]
  %s2 = inlined_call_operand.vmem [shape: f32[1,256], index: 2, kind: input, shape index: {}]
  %s3 = inlined_call_operand.vmem [shape: f32[32,256], index: 3, kind: output, shape index: {}]
  %s4 = sld [smem:[#allocation0]]
  $region30: #{forward.33} parent=0
    _
  %s6 = ssub.s32 1, %s4
  %s7 = scalar_select 0, %s6, %s4
  // Predicated region
  $region2: #{forward.33} parent=0 // pred_check
    _
  $region3: #{forward.33} parent=0 // pred_check_branch
    %9 = sbr.rel (0) target = $region5
  $region4: #{forward.33} parent=0 // pred_region
    _
  $region5: #{forward.33} parent=0 // pred_fallthru
    _
  // Predicated region
  $region6: #{forward.33} parent=0 // pred_check
    _
  $region7: #{forward.33} parent=0 // pred_check_branch
    %11 = sbr.rel (0) target = $region9
  $region8: #{forward.33} parent=0 // pred_region
    _
  $region9: #{forward.33} parent=0 // pred_fallthru
    _
  // Predicated region
  $region10: #{forward.33} parent=0 // pred_check
    _
  $region11: #{forward.33} parent=0 // pred_check_branch
    %13 = sbr.rel (0) target = $region13
  $region12: #{forward.33} parent=0 // pred_region
    _
  $region13: #{forward.33} parent=0 // pred_fallthru
    _
  %p15 = scmp.eq.s32.totalorder 0, 0
  // Predicated region
  $region14: #{forward.33} parent=0 // pred_check
    %p16 = pneg %p15
  $region15: #{forward.33} parent=0 // pred_check_branch
    %18 = sbr.rel (%p16) target = $region17
  $region16: #{forward.33} parent=0 // pred_region
    %19 = vst [vmem:[#allocation2] sm:$0xff] 0.0
    %20 = vst [vmem:[#allocation2 + $0x8] sm:$0xff] 0.0
    %21 = vst [vmem:[#allocation2 + $0x10] sm:$0xff] 0.0
    %22 = vst [vmem:[#allocation2 + $0x18] sm:$0xff] 0.0
    %23 = vst [vmem:[#allocation2 + $0x20] sm:$0xff] 0.0
    %24 = vst [vmem:[#allocation2 + $0x28] sm:$0xff] 0.0
    %25 = vst [vmem:[#allocation2 + $0x30] sm:$0xff] 0.0
    %26 = vst [vmem:[#allocation2 + $0x38] sm:$0xff] 0.0
  $region17: #{forward.33} parent=0 // pred_fallthru
    _
  %v27 = vld [vmem:[#allocation2] sm:$0xff]
  %v28 = vld [vmem:[#allocation2 + $0x8] sm:$0xff]
  %v29 = vld [vmem:[#allocation2 + $0x10] sm:$0xff]
  %v30 = vld [vmem:[#allocation2 + $0x18] sm:$0xff]
  %v31 = vld [vmem:[#allocation2 + $0x20] sm:$0xff]
  %v32 = vld [vmem:[#allocation2 + $0x28] sm:$0xff]
  %v33 = vld [vmem:[#allocation2 + $0x30] sm:$0xff]
  %v34 = vld [vmem:[#allocation2 + $0x38] sm:$0xff]
  %v35 = vld [vmem:[%s0] sm:$0xf]
  %v36 = vld [vmem:[%s0 + $0x4] sm:$0xf]
  %v37 = vld [vmem:[%s0 + $0x8] sm:$0xf]
  %v38 = vld [vmem:[%s0 + $0xc] sm:$0xf]
  %v39 = vld [vmem:[%s1] sm:$0xff]
  %v40 = vld [vmem:[%s1 + $0x8] sm:$0xff]
  %v41 = vld [vmem:[%s1 + $0x10] sm:$0xff]
  %v42 = vld [vmem:[%s1 + $0x18] sm:$0xff]
  %v43 = vld [vmem:[%s1 + $0x20] sm:$0xff]
  %v44 = vld [vmem:[%s1 + $0x28] sm:$0xff]
  %v45 = vld [vmem:[%s1 + $0x30] sm:$0xff]
  %v46 = vld [vmem:[%s1 + $0x38] sm:$0xff]
  %v47 = vld [vmem:[%s1 + $0x40] sm:$0xff]
  %v48 = vld [vmem:[%s1 + $0x48] sm:$0xff]
  %v49 = vld [vmem:[%s1 + $0x50] sm:$0xff]
  %v50 = vld [vmem:[%s1 + $0x58] sm:$0xff]
  %v51 = vld [vmem:[%s1 + $0x60] sm:$0xff]
  %v52 = vld [vmem:[%s1 + $0x68] sm:$0xff]
  %v53 = vld [vmem:[%s1 + $0x70] sm:$0xff]
  %v54 = vld [vmem:[%s1 + $0x78] sm:$0xff]
  %v59 = vunpack.c.l.b16 %v35
  %v60 = vunpack.c.l.b16 %v36
  %v61 = vunpack.c.l.b16 %v37
  %v62 = vunpack.c.l.b16 %v38
  %v63 = vpack.c.b16 %v60, %v59
  %v64 = vpack.c.b16 %v62, %v61
  %v83 = vunpack.c.l.b16 %v39
  %v84 = vunpack.c.h.b16 %v39
  %v85 = vunpack.c.l.b16 %v40
  %v86 = vunpack.c.h.b16 %v40
  %v87 = vunpack.c.l.b16 %v41
  %v88 = vunpack.c.h.b16 %v41
  %v89 = vunpack.c.l.b16 %v42
  %v90 = vunpack.c.h.b16 %v42
  %v91 = vunpack.c.l.b16 %v43
  %v92 = vunpack.c.h.b16 %v43
  %v93 = vunpack.c.l.b16 %v44
  %v94 = vunpack.c.h.b16 %v44
  %v95 = vunpack.c.l.b16 %v45
  %v96 = vunpack.c.h.b16 %v45
  %v97 = vunpack.c.l.b16 %v46
  %v98 = vunpack.c.h.b16 %v46
  %v99 = vunpack.c.l.b16 %v47
  %v100 = vunpack.c.h.b16 %v47
  %v101 = vunpack.c.l.b16 %v48
  %v102 = vunpack.c.h.b16 %v48
  %v103 = vunpack.c.l.b16 %v49
  %v104 = vunpack.c.h.b16 %v49
  %v105 = vunpack.c.l.b16 %v50
  %v106 = vunpack.c.h.b16 %v50
  %v107 = vunpack.c.l.b16 %v51
  %v108 = vunpack.c.h.b16 %v51
  %v109 = vunpack.c.l.b16 %v52
  %v110 = vunpack.c.h.b16 %v52
  %v111 = vunpack.c.l.b16 %v53
  %v112 = vunpack.c.h.b16 %v53
  %v113 = vunpack.c.l.b16 %v54
  %v114 = vunpack.c.h.b16 %v54
  %v115 = vpack.c.b16 %v85, %v83
  %v116 = vpack.c.b16 %v86, %v84
  %v117 = vpack.c.b16 %v89, %v87
  %v118 = vpack.c.b16 %v90, %v88
  %v119 = vpack.c.b16 %v93, %v91
  %v120 = vpack.c.b16 %v94, %v92
  %v121 = vpack.c.b16 %v97, %v95
  %v122 = vpack.c.b16 %v98, %v96
  %v123 = vpack.c.b16 %v101, %v99
  %v124 = vpack.c.b16 %v102, %v100
  %v125 = vpack.c.b16 %v105, %v103
  %v126 = vpack.c.b16 %v106, %v104
  %v127 = vpack.c.b16 %v109, %v107
  %v128 = vpack.c.b16 %v110, %v108
  %v129 = vpack.c.b16 %v113, %v111
  %v130 = vpack.c.b16 %v114, %v112
  %147 = vmatprep.subr.bf16.mxu0 %v116
  %148 = vmatpush1.bf16.msra.mxu0 %v115
  %149 = vmatprep.subr.bf16.mxu0 %v118
  %150 = vmatpush1.bf16.msra.mxu0 %v117
  %151 = vmatprep.subr.bf16.mxu0 %v120
  %152 = vmatpush1.bf16.msra.mxu0 %v119
  %153 = vmatprep.subr.bf16.mxu0 %v122
  %154 = vmatpush1.bf16.msra.mxu0 %v121
  %155 = vmatprep.subr.bf16.mxu0 %v124
  %156 = vmatpush1.bf16.msra.mxu0 %v123
  %157 = vmatprep.subr.bf16.mxu0 %v126
  %158 = vmatpush1.bf16.msra.mxu0 %v125
  %159 = vmatprep.subr.bf16.mxu0 %v128
  %160 = vmatpush1.bf16.msra.mxu0 %v127
  %161 = vmatprep.subr.bf16.mxu0 %v130
  %162 = vmatpush1.bf16.msra.mxu0 %v129
  %163 = vmatprep.subr.bf16.mxu0 0
  %164 = vmatpush1.bf16.msra.mxu0 0
  %165 = vmatprep.subr.bf16.mxu0 0
  %166 = vmatpush1.bf16.msra.mxu0 0
  %167 = vmatprep.subr.bf16.mxu0 0
  %168 = vmatpush1.bf16.msra.mxu0 0
  %169 = vmatprep.subr.bf16.mxu0 0
  %170 = vmatpush1.bf16.msra.mxu0 0
  %171 = vmatprep.subr.bf16.mxu0 0
  %172 = vmatpush1.bf16.msra.mxu0 0
  %173 = vmatprep.subr.bf16.mxu0 0
  %174 = vmatpush1.bf16.msra.mxu0 0
  %175 = vmatprep.subr.bf16.mxu0 0
  %176 = vmatpush1.bf16.msra.mxu0 0
  %177 = vmatprep.subr.bf16.mxu0 0
  %178 = vmatpush1.bf16.msra.mxu0 0
  %179 = vmatprep.mubr.bf16.mxu0 0
  %180 = vmatmul.mubr.bf16.gmra.mrb[0].mxu0 %v63
  %v181 = vpop.f32.mrb[0].mxu0
  %v182 = vadd.f32 0.0, %v181
  %v183 = vpop.f32.mrb[0].mxu0
  %v184 = vadd.f32 0.0, %v183
  %v185 = vpop.f32.mrb[0].mxu0
  %v186 = vadd.f32 0.0, %v185
  %v187 = vpop.f32.mrb[0].mxu0
  %v188 = vadd.f32 0.0, %v187
  %189 = vmatprep.mubr.bf16.mxu0 0
  %190 = vmatmul.mubr.bf16.gmra.mrb[0].mxu0 %v64
  %v191 = vpop.f32.mrb[0].mxu0
  %v192 = vadd.f32 0.0, %v191
  %v193 = vpop.f32.mrb[0].mxu0
  %v194 = vadd.f32 0.0, %v193
  %v195 = vpop.f32.mrb[0].mxu0
  %v196 = vadd.f32 0.0, %v195
  %v197 = vpop.f32.mrb[0].mxu0
  %v198 = vadd.f32 0.0, %v197
  %199 = vdwg.mxu0
  %v200 = vadd.f32 %v27, %v182
  %v201 = vadd.f32 %v28, %v184
  %v202 = vadd.f32 %v29, %v186
  %v203 = vadd.f32 %v30, %v188
  %v204 = vadd.f32 %v31, %v192
  %v205 = vadd.f32 %v32, %v194
  %v206 = vadd.f32 %v33, %v196
  %v207 = vadd.f32 %v34, %v198
  %208 = vst [vmem:[#allocation2] sm:$0xff] %v200
  %209 = vst [vmem:[#allocation2 + $0x8] sm:$0xff] %v201
  %210 = vst [vmem:[#allocation2 + $0x10] sm:$0xff] %v202
  %211 = vst [vmem:[#allocation2 + $0x18] sm:$0xff] %v203
  %212 = vst [vmem:[#allocation2 + $0x20] sm:$0xff] %v204
  %213 = vst [vmem:[#allocation2 + $0x28] sm:$0xff] %v205
  %214 = vst [vmem:[#allocation2 + $0x30] sm:$0xff] %v206
  %215 = vst [vmem:[#allocation2 + $0x38] sm:$0xff] %v207
  // Predicated region
  $region18: #{forward.33} parent=0 // pred_check
    %p216 = pneg %p15
  $region19: #{forward.33} parent=0 // pred_check_branch
    %218 = sbr.rel (%p216) target = $region21
  $region20: #{forward.33} parent=0 // pred_region
    %v219 = vld [vmem:[#allocation2] sm:$0xff]
    %v220 = vld [vmem:[#allocation2 + $0x8] sm:$0xff]
    %v221 = vld [vmem:[#allocation2 + $0x10] sm:$0xff]
    %v222 = vld [vmem:[#allocation2 + $0x18] sm:$0xff]
    %v223 = vld [vmem:[#allocation2 + $0x20] sm:$0xff]
    %v224 = vld [vmem:[#allocation2 + $0x28] sm:$0xff]
    %v225 = vld [vmem:[#allocation2 + $0x30] sm:$0xff]
    %v226 = vld [vmem:[#allocation2 + $0x38] sm:$0xff]
    %v227 = vld [vmem:[%s2] sm:$0x3]
    %v229 = vlaneseq
    %v230 = vshrl.u32 %v229, 7
    %v231 = vsub.s32 0, %v230
    %v232 = vrot.slane %v227, %v231
    %v233 = vlaneseq
    %v234 = vshrl.u32 %v233, 7
    %v235 = vsub.s32 1, %v234
    %v236 = vrot.slane %v227, %v235
    %v239 = vadd.f32 %v219, %v232
    %v240 = vadd.f32 %v220, %v236
    %v241 = vadd.f32 %v221, %v232
    %v242 = vadd.f32 %v222, %v236
    %v243 = vadd.f32 %v223, %v232
    %v244 = vadd.f32 %v224, %v236
    %v245 = vadd.f32 %v225, %v232
    %v246 = vadd.f32 %v226, %v236
    %v247 = vmax.f32 %v239, 0.0
    %v248 = vmax.f32 %v240, 0.0
    %v249 = vmax.f32 %v241, 0.0
    %v250 = vmax.f32 %v242, 0.0
    %v251 = vmax.f32 %v243, 0.0
    %v252 = vmax.f32 %v244, 0.0
    %v253 = vmax.f32 %v245, 0.0
    %v254 = vmax.f32 %v246, 0.0
    %v255 = vmin.f32 %v247, 6.0
    %v256 = vmin.f32 %v248, 6.0
    %v257 = vmin.f32 %v249, 6.0
    %v258 = vmin.f32 %v250, 6.0
    %v259 = vmin.f32 %v251, 6.0
    %v260 = vmin.f32 %v252, 6.0
    %v261 = vmin.f32 %v253, 6.0
    %v262 = vmin.f32 %v254, 6.0
    %263 = vst [vmem:[%s3] sm:$0xff] %v255
    %264 = vst [vmem:[%s3 + $0x8] sm:$0xff] %v256
    %265 = vst [vmem:[%s3 + $0x10] sm:$0xff] %v257
    %266 = vst [vmem:[%s3 + $0x18] sm:$0xff] %v258
    %267 = vst [vmem:[%s3 + $0x20] sm:$0xff] %v259
    %268 = vst [vmem:[%s3 + $0x28] sm:$0xff] %v260
    %269 = vst [vmem:[%s3 + $0x30] sm:$0xff] %v261
    %270 = vst [vmem:[%s3 + $0x38] sm:$0xff] %v262
  $region21: #{forward.33} parent=0 // pred_fallthru
    _
  // Predicated region
  $region22: #{forward.33} parent=0 // pred_check
    _
  $region23: #{forward.33} parent=0 // pred_check_branch
    %272 = sbr.rel (0) target = $region25
  $region24: #{forward.33} parent=0 // pred_region
    _
  $region25: #{forward.33} parent=0 // pred_fallthru
    _
  // Predicated region
  $region26: #{forward.33} parent=0 // pred_check
    _
  $region27: #{forward.33} parent=0 // pred_check_branch
    %274 = sbr.rel (0) target = $region29
  $region28: #{forward.33} parent=0 // pred_region
    _
  $region29: #{forward.33} parent=0 // pred_fallthru
    _

// kernel: forward.34
$region0: #{forward.34}
  #allocation0 [shape = 'u32[]', space=smem, size = 0x4, offset = 0x4, fixed_abs, tag = 'smem constant byte address 0x4 - core index']
  #allocation1 [shape = 'u32[144,128]{1,0:T(1,128)}', space=vmem, size = 0x12000, scoped, tag = 'internal scratch']
  %s0 = inlined_call_operand.vmem [shape: f32[2,6,6,144], index: 0, kind: input, shape index: {}]
  %s1 = inlined_call_operand.vmem [shape: f32[9,144], index: 1, kind: input, shape index: {}]
  %s2 = inlined_call_operand.vmem [shape: f32[1,144], index: 2, kind: input, shape index: {}]
  %s3 = inlined_call_operand.vmem [shape: f32[2,4,4,144], index: 3, kind: output, shape index: {}]
  %s4 = sld [smem:[#allocation0]]
  $region45: #{forward.34} parent=0
    _
  %s6 = ssub.s32 1, %s4
  %s7 = scalar_select 0, %s6, %s4
  loop: start=0, step=1, limit=4
  $region2: #{forward.34} parent=0 // loop_pre_header
    _
  $region3: #{forward.34} parent=0 // loop_header
    %s9 = sphi 0, %s13
    %p10 = scmp.ge.s32.totalorder %s9, 4
    %s19 = sphi 0, %s21
    %s22 = sphi 0, %s19
    %s23 = sphi 0, %s22
    %s39 = sphi 0, %s23
    %s43 = sphi 0, %s43
    %s45 = sphi 0, %s43
    %s46 = sphi 0, %s45
    %s60 = sphi 0, %s46
    %s64 = sphi 0, %s64
    %s66 = sphi 0, %s64
    %s67 = sphi 0, %s66
    %s81 = sphi 0, %s67
    %s87 = sphi 0, %s89
    %s90 = sphi 0, %s87
    %s91 = sphi 0, %s90
    %s107 = sphi 0, %s91
  $region4: #{forward.34} parent=0 // loop_header_branch
    %12 = sbr.rel (%p10) target = $region8
  $region5: #{forward.34} parent=0 // loop_body
    %s14 = ssub.s32 %s9, 1
    %s15 = ssub.s32 %s9, 2
    %s16 = sadd.s32 %s9, 1
    %s17 = ssub.s32 %s9, %s16
    %p18 = scmp.eq.s32.totalorder %s17, 0
    %s20 = sadd.s32 %s19, 1
    %s21 = scalar_select %p18, %s19, %s20
    %p24 = pneg %p18
    %p25 = scmp.eq.s32.totalorder %s9, 1
    %p26 = por %p24, %p25
    %p27 = scmp.ne.s32.totalorder %s19, %s22
    %p28 = scmp.eq.s32.totalorder %s9, 0
    %p29 = por %p27, %p28
    %p30 = scmp.ne.s32.totalorder %s19, %s22
    %p31 = scmp.eq.s32.totalorder %s14, 1
    %p32 = por %p30, %p31
    %p33 = scmp.ne.s32.totalorder %s22, %s23
    %p34 = scmp.eq.s32.totalorder %s14, 0
    %p35 = por %p33, %p34
    %p36 = scmp.ne.s32.totalorder %s22, %s23
    %p37 = scmp.eq.s32.totalorder %s15, 1
    %p38 = por %p36, %p37
    %p40 = scmp.ne.s32.totalorder %s23, %s39
    %p41 = scmp.eq.s32.totalorder %s15, 0
    %p42 = por %p40, %p41
    %s44 = sadd.s32 %s43, 1
    %p47 = scmp.eq.s32.totalorder %s9, 1
    %p48 = scmp.ne.s32.totalorder %s43, %s45
    %p49 = scmp.eq.s32.totalorder %s9, 0
    %p50 = por %p48, %p49
    %p51 = scmp.ne.s32.totalorder %s43, %s45
    %p52 = scmp.eq.s32.totalorder %s14, 1
    %p53 = por %p51, %p52
    %p54 = scmp.ne.s32.totalorder %s45, %s46
    %p55 = scmp.eq.s32.totalorder %s14, 0
    %p56 = por %p54, %p55
    %p57 = scmp.ne.s32.totalorder %s45, %s46
    %p58 = scmp.eq.s32.totalorder %s15, 1
    %p59 = por %p57, %p58
    %p61 = scmp.ne.s32.totalorder %s46, %s60
    %p62 = scmp.eq.s32.totalorder %s15, 0
    %p63 = por %p61, %p62
    %s65 = sadd.s32 %s64, 1
    %p68 = scmp.eq.s32.totalorder %s9, 1
    %p69 = scmp.ne.s32.totalorder %s64, %s66
    %p70 = scmp.eq.s32.totalorder %s9, 0
    %p71 = por %p69, %p70
    %p72 = scmp.ne.s32.totalorder %s64, %s66
    %p73 = scmp.eq.s32.totalorder %s14, 1
    %p74 = por %p72, %p73
    %p75 = scmp.ne.s32.totalorder %s66, %s67
    %p76 = scmp.eq.s32.totalorder %s14, 0
    %p77 = por %p75, %p76
    %p78 = scmp.ne.s32.totalorder %s66, %s67
    %p79 = scmp.eq.s32.totalorder %s15, 1
    %p80 = por %p78, %p79
    %p82 = scmp.ne.s32.totalorder %s67, %s81
    %p83 = scmp.eq.s32.totalorder %s15, 0
    %p84 = por %p82, %p83
    %s85 = ssub.s32 %s9, %s16
    %p86 = scmp.eq.s32.totalorder %s85, 0
    %s88 = sadd.s32 %s87, 1
    %s89 = scalar_select %p86, %s87, %s88
    %p92 = pneg %p86
    %p93 = scmp.eq.s32.totalorder %s9, 1
    %p94 = por %p92, %p93
    %p95 = scmp.ne.s32.totalorder %s87, %s90
    %p96 = scmp.eq.s32.totalorder %s9, 0
    %p97 = por %p95, %p96
    %p98 = scmp.ne.s32.totalorder %s87, %s90
    %p99 = scmp.eq.s32.totalorder %s14, 1
    %p100 = por %p98, %p99
    %p101 = scmp.ne.s32.totalorder %s90, %s91
    %p102 = scmp.eq.s32.totalorder %s14, 0
    %p103 = por %p101, %p102
    %p104 = scmp.ne.s32.totalorder %s90, %s91
    %p105 = scmp.eq.s32.totalorder %s15, 1
    %p106 = por %p104, %p105
    %p108 = scmp.ne.s32.totalorder %s91, %s107
    %p109 = scmp.eq.s32.totalorder %s15, 0
    %p110 = por %p108, %p109
    %p111 = scmp.le.s32.totalorder 1, %s9
    %p112 = scmp.lt.s32.totalorder %s9, 3
    %p113 = pnand %p111, %p112
    %p114 = pneg %p113
    // Predicated region
    $region9: #{forward.34} parent=5 // pred_check
      _
    $region10: #{forward.34} parent=5 // pred_check_branch
      %116 = sbr.rel (%p113) target = $region12
    $region11: #{forward.34} parent=5 // pred_region
      %s117 = ssub.s32 %s9, 1
      // Predicated region
      $region13: #{forward.34} parent=11 // pred_check
        %p118 = pneg %p56
      $region14: #{forward.34} parent=11 // pred_check_branch
        %120 = sbr.rel (%p118) target = $region16
      $region15: #{forward.34} parent=11 // pred_region
        _
      $region16: #{forward.34} parent=11 // pred_fallthru
        _
      // Predicated region
      $region17: #{forward.34} parent=11 // pred_check
        %p121 = pneg %p77
      $region18: #{forward.34} parent=11 // pred_check_branch
        %123 = sbr.rel (%p121) target = $region20
      $region19: #{forward.34} parent=11 // pred_region
        _
      $region20: #{forward.34} parent=11 // pred_fallthru
        _
    $region12: #{forward.34} parent=5 // pred_fallthru
      _
    %p124 = scmp.lt.s32.totalorder %s9, 2
    // Predicated region
    $region21: #{forward.34} parent=5 // pred_check
      %p125 = pneg %p124
    $region22: #{forward.34} parent=5 // pred_check_branch
      %127 = sbr.rel (%p125) target = $region24
    $region23: #{forward.34} parent=5 // pred_region
      // Predicated region
      $region25: #{forward.34} parent=23 // pred_check
        %p128 = pneg %p29
      $region26: #{forward.34} parent=23 // pred_check_branch
        %130 = sbr.rel (%p128) target = $region28
      $region27: #{forward.34} parent=23 // pred_region
        %p131 = scmp.lt.s32.totalorder %s9, 1
        %s132 = scalar_select %p131, %s9, 1
        %s133 = smul.addr %s132, 12
        %s134 = smul.addr %s133, 8
        %s135 = scalar_lea.vmem %s0, %s134
      $region28: #{forward.34} parent=23 // pred_fallthru
        _
    $region24: #{forward.34} parent=5 // pred_fallthru
      _
    %p136 = scmp.le.s32.totalorder 1, %s9
    %p137 = scmp.lt.s32.totalorder %s9, 3
    %p138 = pnand %p136, %p137
    %p139 = pneg %p138
    // Predicated region
    $region29: #{forward.34} parent=5 // pred_check
      _
    $region30: #{forward.34} parent=5 // pred_check_branch
      %141 = sbr.rel (%p138) target = $region32
    $region31: #{forward.34} parent=5 // pred_region
      %s142 = ssub.s32 %s9, 1
      %p143 = scmp.lt.s32.totalorder %s14, 1
      %s144 = scalar_select %p143, %s14, 1
      %s145 = smul.addr %s144, 12
      %s146 = smul.addr %s145, 8
      %s147 = scalar_lea.vmem %s0, %s146
      %p148 = pneg %p35
      %p149 = pneg %p32
      %p150 = pneg %p56
      %p151 = pneg %p53
      %p152 = pneg %p77
      %p153 = pneg %p74
      %p154 = pneg %p103
      %p155 = pneg %p100
      %p156 = scmp.lt.s32.totalorder %s14, 1
      %s157 = scalar_select %p156, %s14, 1
      %s158 = smul.addr %s157, 8
      %s159 = smul.addr %s158, 4
      %s160 = scalar_lea.vmem %s3, %s159
      %p161 = scmp.lt.s32.totalorder %s14, 1
      %s162 = scalar_select %p161, %s14, 1
      %s163 = smul.addr %s162, 12
      %s164 = smul.addr %s163, 8
      %s165 = scalar_lea.vmem %s0, %s164
      %p166 = scmp.lt.s32.totalorder %s14, 1
      %s167 = scalar_select %p166, %s14, 1
      %s168 = smul.addr %s167, 8
      %s169 = smul.addr %s168, 4
      %s170 = scalar_lea.vmem %s3, %s169
      %v171 = vld [vmem:[%s165] sm:$0x3f]
      %v172 = vld [vmem:[%s165 + $0x8] sm:$0x3f]
      %v173 = vld [vmem:[%s165 + $0x10] sm:$0x3f]
      %v174 = vld [vmem:[%s165 + $0x18] sm:$0x3f]
      %v175 = vld [vmem:[%s165 + $0x20] sm:$0x3f]
      %v176 = vld [vmem:[%s165 + $0x28] sm:$0x3f]
      %v177 = vld [vmem:[%s165 + $0x30] sm:$0x3f]
      %v178 = vld [vmem:[%s165 + $0x38] sm:$0x3f]
      %v179 = vld [vmem:[%s165 + $0x40] sm:$0x3f]
      %v180 = vld [vmem:[%s165 + $0x48] sm:$0x3f]
      %v181 = vld [vmem:[%s165 + $0x50] sm:$0x3f]
      %v182 = vld [vmem:[%s165 + $0x58] sm:$0x3f]
      %v183 = vld [vmem:[%s1] sm:$0xff]
      %v184 = vld [vmem:[%s1 + $0x8] sm:$0xff]
      %v185 = vld [vmem:[%s1 + $0x10] sm:$0x1]
      %v186 = vld [vmem:[%s1 + $0x18] sm:$0x1]
      %v187 = vlaneseq
      %v188 = vshrl.u32 %v187, 7
      %v189 = vsub.s32 0, %v188
      %v190 = vrot.slane %v183, %v189
      %v191 = vlaneseq
      %v192 = vshrl.u32 %v191, 7
      %v193 = vsub.s32 0, %v192
      %v194 = vrot.slane %v184, %v193
      %v195 = vmul.f32 %v171, %v190
      %v196 = vmul.f32 %v172, %v194
      %v197 = vmul.f32 %v173, %v190
      %v198 = vmul.f32 %v174, %v194
      %v199 = vmul.f32 %v175, %v190
      %v200 = vmul.f32 %v176, %v194
      %v201 = vmul.f32 %v177, %v190
      %v202 = vmul.f32 %v178, %v194
      %v203 = vlaneseq
      %v204 = vshrl.u32 %v203, 7
      %v205 = vsub.s32 1, %v204
      %v206 = vrot.slane %v183, %v205
      %v207 = vlaneseq
      %v208 = vshrl.u32 %v207, 7
      %v209 = vsub.s32 1, %v208
      %v210 = vrot.slane %v184, %v209
      %v211 = vmul.f32 %v171, %v206
      %v212 = vmul.f32 %v172, %v210
      %v213 = vmul.f32 %v173, %v206
      %v214 = vmul.f32 %v174, %v210
      %v215 = vmul.f32 %v175, %v206
      %v216 = vmul.f32 %v176, %v210
      %v217 = vmul.f32 %v177, %v206
      %v218 = vmul.f32 %v178, %v210
      %v227 = vrot.slane %v211, 1
      %v228 = vrot.slane %v212, 1
      %v229 = vrot.slane %v213, 1
      %v230 = vrot.slane %v214, 1
      %v231 = vrot.slane %v215, 1
      %v232 = vrot.slane %v216, 1
      %v233 = vrot.slane %v217, 1
      %v234 = vrot.slane %v218, 1
      %v243 = vadd.f32 %v195, %v227
      %v244 = vadd.f32 %v196, %v228
      %v245 = vadd.f32 %v197, %v229
      %v246 = vadd.f32 %v198, %v230
      %v247 = vadd.f32 %v199, %v231
      %v248 = vadd.f32 %v200, %v232
      %v249 = vadd.f32 %v201, %v233
      %v250 = vadd.f32 %v202, %v234
      %v251 = vlaneseq
      %v252 = vshrl.u32 %v251, 7
      %v253 = vsub.s32 2, %v252
      %v254 = vrot.slane %v183, %v253
      %v255 = vlaneseq
      %v256 = vshrl.u32 %v255, 7
      %v257 = vsub.s32 2, %v256
      %v258 = vrot.slane %v184, %v257
      %v259 = vmul.f32 %v171, %v254
      %v260 = vmul.f32 %v172, %v258
      %v261 = vmul.f32 %v173, %v254
      %v262 = vmul.f32 %v174, %v258
      %v263 = vmul.f32 %v175, %v254
      %v264 = vmul.f32 %v176, %v258
      %v265 = vmul.f32 %v177, %v254
      %v266 = vmul.f32 %v178, %v258
      %v275 = vrot.slane %v259, 2
      %v276 = vrot.slane %v260, 2
      %v277 = vrot.slane %v261, 2
      %v278 = vrot.slane %v262, 2
      %v279 = vrot.slane %v263, 2
      %v280 = vrot.slane %v264, 2
      %v281 = vrot.slane %v265, 2
      %v282 = vrot.slane %v266, 2
      %v291 = vadd.f32 %v243, %v275
      %v292 = vadd.f32 %v244, %v276
      %v293 = vadd.f32 %v245, %v277
      %v294 = vadd.f32 %v246, %v278
      %v295 = vadd.f32 %v247, %v279
      %v296 = vadd.f32 %v248, %v280
      %v297 = vadd.f32 %v249, %v281
      %v298 = vadd.f32 %v250, %v282
      %v299 = vlaneseq
      %v300 = vshrl.u32 %v299, 7
      %v301 = vsub.s32 3, %v300
      %v302 = vrot.slane %v183, %v301
      %v303 = vlaneseq
      %v304 = vshrl.u32 %v303, 7
      %v305 = vsub.s32 3, %v304
      %v306 = vrot.slane %v184, %v305
      %v307 = vmul.f32 %v173, %v302
      %v308 = vmul.f32 %v174, %v306
      %v309 = vmul.f32 %v175, %v302
      %v310 = vmul.f32 %v176, %v306
      %v311 = vmul.f32 %v177, %v302
      %v312 = vmul.f32 %v178, %v306
      %v313 = vmul.f32 %v179, %v302
      %v314 = vmul.f32 %v180, %v306
      %v315 = vadd.f32 %v291, %v307
      %v316 = vadd.f32 %v292, %v308
      %v317 = vadd.f32 %v293, %v309
      %v318 = vadd.f32 %v294, %v310
      %v319 = vadd.f32 %v295, %v311
      %v320 = vadd.f32 %v296, %v312
      %v321 = vadd.f32 %v297, %v313
      %v322 = vadd.f32 %v298, %v314
      %v323 = vlaneseq
      %v324 = vshrl.u32 %v323, 7
      %v325 = vsub.s32 4, %v324
      %v326 = vrot.slane %v183, %v325
      %v327 = vlaneseq
      %v328 = vshrl.u32 %v327, 7
      %v329 = vsub.s32 4, %v328
      %v330 = vrot.slane %v184, %v329
      %v331 = vmul.f32 %v173, %v326
      %v332 = vmul.f32 %v174, %v330
      %v333 = vmul.f32 %v175, %v326
      %v334 = vmul.f32 %v176, %v330
      %v335 = vmul.f32 %v177, %v326
      %v336 = vmul.f32 %v178, %v330
      %v337 = vmul.f32 %v179, %v326
      %v338 = vmul.f32 %v180, %v330
      %v347 = vrot.slane %v331, 1
      %v348 = vrot.slane %v332, 1
      %v349 = vrot.slane %v333, 1
      %v350 = vrot.slane %v334, 1
      %v351 = vrot.slane %v335, 1
      %v352 = vrot.slane %v336, 1
      %v353 = vrot.slane %v337, 1
      %v354 = vrot.slane %v338, 1
      %v363 = vadd.f32 %v315, %v347
      %v364 = vadd.f32 %v316, %v348
      %v365 = vadd.f32 %v317, %v349
      %v366 = vadd.f32 %v318, %v350
      %v367 = vadd.f32 %v319, %v351
      %v368 = vadd.f32 %v320, %v352
      %v369 = vadd.f32 %v321, %v353
      %v370 = vadd.f32 %v322, %v354
      %v371 = vlaneseq
      %v372 = vshrl.u32 %v371, 7
      %v373 = vsub.s32 5, %v372
      %v374 = vrot.slane %v183, %v373
      %v375 = vlaneseq
      %v376 = vshrl.u32 %v375, 7
      %v377 = vsub.s32 5, %v376
      %v378 = vrot.slane %v184, %v377
      %v379 = vmul.f32 %v173, %v374
      %v380 = vmul.f32 %v174, %v378
      %v381 = vmul.f32 %v175, %v374
      %v382 = vmul.f32 %v176, %v378
      %v383 = vmul.f32 %v177, %v374
      %v384 = vmul.f32 %v178, %v378
      %v385 = vmul.f32 %v179, %v374
      %v386 = vmul.f32 %v180, %v378
      %v395 = vrot.slane %v379, 2
      %v396 = vrot.slane %v380, 2
      %v397 = vrot.slane %v381, 2
      %v398 = vrot.slane %v382, 2
      %v399 = vrot.slane %v383, 2
      %v400 = vrot.slane %v384, 2
      %v401 = vrot.slane %v385, 2
      %v402 = vrot.slane %v386, 2
      %v411 = vadd.f32 %v363, %v395
      %v412 = vadd.f32 %v364, %v396
      %v413 = vadd.f32 %v365, %v397
      %v414 = vadd.f32 %v366, %v398
      %v415 = vadd.f32 %v367, %v399
      %v416 = vadd.f32 %v368, %v400
      %v417 = vadd.f32 %v369, %v401
      %v418 = vadd.f32 %v370, %v402
      %v419 = vlaneseq
      %v420 = vshrl.u32 %v419, 7
      %v421 = vsub.s32 6, %v420
      %v422 = vrot.slane %v183, %v421
      %v423 = vlaneseq
      %v424 = vshrl.u32 %v423, 7
      %v425 = vsub.s32 6, %v424
      %v426 = vrot.slane %v184, %v425
      %v427 = vmul.f32 %v175, %v422
      %v428 = vmul.f32 %v176, %v426
      %v429 = vmul.f32 %v177, %v422
      %v430 = vmul.f32 %v178, %v426
      %v431 = vmul.f32 %v179, %v422
      %v432 = vmul.f32 %v180, %v426
      %v433 = vmul.f32 %v181, %v422
      %v434 = vmul.f32 %v182, %v426
      %v435 = vadd.f32 %v411, %v427
      %v436 = vadd.f32 %v412, %v428
      %v437 = vadd.f32 %v413, %v429
      %v438 = vadd.f32 %v414, %v430
      %v439 = vadd.f32 %v415, %v431
      %v440 = vadd.f32 %v416, %v432
      %v441 = vadd.f32 %v417, %v433
      %v442 = vadd.f32 %v418, %v434
      %v443 = vlaneseq
      %v444 = vshrl.u32 %v443, 7
      %v445 = vsub.s32 7, %v444
      %v446 = vrot.slane %v183, %v445
      %v447 = vlaneseq
      %v448 = vshrl.u32 %v447, 7
      %v449 = vsub.s32 7, %v448
      %v450 = vrot.slane %v184, %v449
      %v451 = vmul.f32 %v175, %v446
      %v452 = vmul.f32 %v176, %v450
      %v453 = vmul.f32 %v177, %v446
      %v454 = vmul.f32 %v178, %v450
      %v455 = vmul.f32 %v179, %v446
      %v456 = vmul.f32 %v180, %v450
      %v457 = vmul.f32 %v181, %v446
      %v458 = vmul.f32 %v182, %v450
      %v467 = vrot.slane %v451, 1
      %v468 = vrot.slane %v452, 1
      %v469 = vrot.slane %v453, 1
      %v470 = vrot.slane %v454, 1
      %v471 = vrot.slane %v455, 1
      %v472 = vrot.slane %v456, 1
      %v473 = vrot.slane %v457, 1
      %v474 = vrot.slane %v458, 1
      %v483 = vadd.f32 %v435, %v467
      %v484 = vadd.f32 %v436, %v468
      %v485 = vadd.f32 %v437, %v469
      %v486 = vadd.f32 %v438, %v470
      %v487 = vadd.f32 %v439, %v471
      %v488 = vadd.f32 %v440, %v472
      %v489 = vadd.f32 %v441, %v473
      %v490 = vadd.f32 %v442, %v474
      %v491 = vlaneseq
      %v492 = vshrl.u32 %v491, 7
      %v493 = vsub.s32 0, %v492
      %v494 = vrot.slane %v185, %v493
      %v495 = vlaneseq
      %v496 = vshrl.u32 %v495, 7
      %v497 = vsub.s32 0, %v496
      %v498 = vrot.slane %v186, %v497
      %v499 = vmul.f32 %v175, %v494
      %v500 = vmul.f32 %v176, %v498
      %v501 = vmul.f32 %v177, %v494
      %v502 = vmul.f32 %v178, %v498
      %v503 = vmul.f32 %v179, %v494
      %v504 = vmul.f32 %v180, %v498
      %v505 = vmul.f32 %v181, %v494
      %v506 = vmul.f32 %v182, %v498
      %v515 = vrot.slane %v499, 2
      %v516 = vrot.slane %v500, 2
      %v517 = vrot.slane %v501, 2
      %v518 = vrot.slane %v502, 2
      %v519 = vrot.slane %v503, 2
      %v520 = vrot.slane %v504, 2
      %v521 = vrot.slane %v505, 2
      %v522 = vrot.slane %v506, 2
      %v531 = vadd.f32 %v483, %v515
      %v532 = vadd.f32 %v484, %v516
      %v533 = vadd.f32 %v485, %v517
      %v534 = vadd.f32 %v486, %v518
      %v535 = vadd.f32 %v487, %v519
      %v536 = vadd.f32 %v488, %v520
      %v537 = vadd.f32 %v489, %v521
      %v538 = vadd.f32 %v490, %v522
      %v539 = vld [vmem:[%s2] sm:$0x3]
      %v541 = vlaneseq
      %v542 = vshrl.u32 %v541, 7
      %v543 = vsub.s32 0, %v542
      %v544 = vrot.slane %v539, %v543
      %v545 = vlaneseq
      %v546 = vshrl.u32 %v545, 7
      %v547 = vsub.s32 1, %v546
      %v548 = vrot.slane %v539, %v547
      %v551 = vadd.f32 %v531, %v544
      %v552 = vadd.f32 %v532, %v548
      %v553 = vadd.f32 %v533, %v544
      %v554 = vadd.f32 %v534, %v548
      %v555 = vadd.f32 %v535, %v544
      %v556 = vadd.f32 %v536, %v548
      %v557 = vadd.f32 %v537, %v544
      %v558 = vadd.f32 %v538, %v548
      %v559 = vmax.f32 %v551, 0.0
      %v560 = vmax.f32 %v552, 0.0
      %v561 = vmax.f32 %v553, 0.0
      %v562 = vmax.f32 %v554, 0.0
      %v563 = vmax.f32 %v555, 0.0
      %v564 = vmax.f32 %v556, 0.0
      %v565 = vmax.f32 %v557, 0.0
      %v566 = vmax.f32 %v558, 0.0
      %v567 = vmin.f32 %v559, 6.0
      %v568 = vmin.f32 %v560, 6.0
      %v569 = vmin.f32 %v561, 6.0
      %v570 = vmin.f32 %v562, 6.0
      %v571 = vmin.f32 %v563, 6.0
      %v572 = vmin.f32 %v564, 6.0
      %v573 = vmin.f32 %v565, 6.0
      %v574 = vmin.f32 %v566, 6.0
      %v583 = vcombine.low %v567, %v568
      %v584 = vcombine.low %v569, %v570
      %v585 = vcombine.low %v571, %v572
      %v586 = vcombine.low %v573, %v574
      %vm591 = vcmask 1043456
      %vm592 = vcmask 130052
      %vm593 = vmor %vm592, %vm591
      %594 = vst.msk [vmem:[%s170] sm:$0xff] %vm593, %v583
      %595 = vst.msk [vmem:[%s170 + $0x8] sm:$0xff] %vm593, %v584
      %596 = vst.msk [vmem:[%s170 + $0x10] sm:$0xff] %vm593, %v585
      %597 = vst.msk [vmem:[%s170 + $0x18] sm:$0xff] %vm593, %v586
      %p598 = scmp.lt.s32.totalorder %s14, 1
      %s599 = scalar_select %p598, %s14, 1
      %s600 = smul.addr %s599, 8
      %s601 = smul.addr %s600, 4
      %s602 = scalar_lea.vmem %s3, %s601
      // Predicated region
      $region33: #{forward.34} parent=31 // pred_check
        %p603 = pneg %p100
      $region34: #{forward.34} parent=31 // pred_check_branch
        %605 = sbr.rel (%p603) target = $region36
      $region35: #{forward.34} parent=31 // pred_region
        _
      $region36: #{forward.34} parent=31 // pred_fallthru
        _
    $region32: #{forward.34} parent=5 // pred_fallthru
      _
    %p606 = scmp.le.s32.totalorder 2, %s9
    // Predicated region
    $region37: #{forward.34} parent=5 // pred_check
      %p607 = pneg %p606
    $region38: #{forward.34} parent=5 // pred_check_branch
      %609 = sbr.rel (%p607) target = $region40
    $region39: #{forward.34} parent=5 // pred_region
      %s610 = ssub.s32 %s9, 2
      // Predicated region
      $region41: #{forward.34} parent=39 // pred_check
        %p611 = pneg %p106
      $region42: #{forward.34} parent=39 // pred_check_branch
        %613 = sbr.rel (%p611) target = $region44
      $region43: #{forward.34} parent=39 // pred_region
        %p614 = scmp.lt.s32.totalorder %s15, 1
        %s615 = scalar_select %p614, %s15, 1
        %s616 = smul.addr %s615, 8
        %s617 = smul.addr %s616, 4
        %s618 = scalar_lea.vmem %s3, %s617
      $region44: #{forward.34} parent=39 // pred_fallthru
        _
    $region40: #{forward.34} parent=5 // pred_fallthru
      _
  $region6: #{forward.34} parent=0 // loop_footer
    %s13 = sadd.s32 1, %s9
  $region7: #{forward.34} parent=0 // loop_footer_branch
    %8 = sbr.rel target = $region3
  $region8: #{forward.34} parent=0 // loop_exit
    _

// kernel: forward.35
$region0: #{forward.35}
  #allocation0 [shape = 'u32[]', space=smem, size = 0x4, offset = 0x4, fixed_abs, tag = 'smem constant byte address 0x4 - core index']
  #allocation1 [shape = 'u32[144,128]{1,0:T(1,128)}', space=vmem, size = 0x12000, scoped, tag = 'internal scratch']
  #allocation2 [shape = 'f32[32,128]{1,0:T(8,128)}', space=vmem, size = 0x4000, scoped, tag = 'scratch operand']
  %s0 = inlined_call_operand.vmem [shape: bf16[32,256], index: 0, kind: input, shape index: {}]
  %s1 = inlined_call_operand.vmem [shape: bf16[256,128], index: 1, kind: input, shape index: {}]
  %s2 = inlined_call_operand.vmem [shape: f32[1,128], index: 2, kind: input, shape index: {}]
  %s3 = inlined_call_operand.vmem [shape: f32[32,128], index: 3, kind: input, shape index: {}]
  %s4 = inlined_call_operand.vmem [shape: f32[32,128], index: 4, kind: output, shape index: {}]
  %s5 = sld [smem:[#allocation0]]
  $region34: #{forward.35} parent=0
    _
  %s7 = ssub.s32 1, %s5
  %s8 = scalar_select 0, %s7, %s5
  // Predicated region
  $region2: #{forward.35} parent=0 // pred_check
    _
  $region3: #{forward.35} parent=0 // pred_check_branch
    %10 = sbr.rel (0) target = $region5
  $region4: #{forward.35} parent=0 // pred_region
    _
  $region5: #{forward.35} parent=0 // pred_fallthru
    _
  // Predicated region
  $region6: #{forward.35} parent=0 // pred_check
    _
  $region7: #{forward.35} parent=0 // pred_check_branch
    %12 = sbr.rel (0) target = $region9
  $region8: #{forward.35} parent=0 // pred_region
    _
  $region9: #{forward.35} parent=0 // pred_fallthru
    _
  // Predicated region
  $region10: #{forward.35} parent=0 // pred_check
    _
  $region11: #{forward.35} parent=0 // pred_check_branch
    %14 = sbr.rel (0) target = $region13
  $region12: #{forward.35} parent=0 // pred_region
    _
  $region13: #{forward.35} parent=0 // pred_fallthru
    _
  // Predicated region
  $region14: #{forward.35} parent=0 // pred_check
    _
  $region15: #{forward.35} parent=0 // pred_check_branch
    %16 = sbr.rel (0) target = $region17
  $region16: #{forward.35} parent=0 // pred_region
    _
  $region17: #{forward.35} parent=0 // pred_fallthru
    _
  %p18 = scmp.eq.s32.totalorder 0, 0
  // Predicated region
  $region18: #{forward.35} parent=0 // pred_check
    %p19 = pneg %p18
  $region19: #{forward.35} parent=0 // pred_check_branch
    %21 = sbr.rel (%p19) target = $region21
  $region20: #{forward.35} parent=0 // pred_region
    %22 = vst [vmem:[#allocation2] sm:$0xff] 0.0
    %23 = vst [vmem:[#allocation2 + $0x8] sm:$0xff] 0.0
    %24 = vst [vmem:[#allocation2 + $0x10] sm:$0xff] 0.0
    %25 = vst [vmem:[#allocation2 + $0x18] sm:$0xff] 0.0
  $region21: #{forward.35} parent=0 // pred_fallthru
    _
  %v26 = vld [vmem:[#allocation2] sm:$0xff]
  %v27 = vld [vmem:[#allocation2 + $0x8] sm:$0xff]
  %v28 = vld [vmem:[#allocation2 + $0x10] sm:$0xff]
  %v29 = vld [vmem:[#allocation2 + $0x18] sm:$0xff]
  %v30 = vld [vmem:[%s0] sm:$0xff]
  %v31 = vld [vmem:[%s0 + $0x8] sm:$0xff]
  %v32 = vld [vmem:[%s0 + $0x10] sm:$0xff]
  %v33 = vld [vmem:[%s0 + $0x18] sm:$0xff]
  %v34 = vld [vmem:[%s1] sm:$0xf]
  %v35 = vld [vmem:[%s1 + $0x4] sm:$0xf]
  %v36 = vld [vmem:[%s1 + $0x8] sm:$0xf]
  %v37 = vld [vmem:[%s1 + $0xc] sm:$0xf]
  %v38 = vld [vmem:[%s1 + $0x10] sm:$0xf]
  %v39 = vld [vmem:[%s1 + $0x14] sm:$0xf]
  %v40 = vld [vmem:[%s1 + $0x18] sm:$0xf]
  %v41 = vld [vmem:[%s1 + $0x1c] sm:$0xf]
  %v42 = vld [vmem:[%s1 + $0x20] sm:$0xf]
  %v43 = vld [vmem:[%s1 + $0x24] sm:$0xf]
  %v44 = vld [vmem:[%s1 + $0x28] sm:$0xf]
  %v45 = vld [vmem:[%s1 + $0x2c] sm:$0xf]
  %v46 = vld [vmem:[%s1 + $0x30] sm:$0xf]
  %v47 = vld [vmem:[%s1 + $0x34] sm:$0xf]
  %v48 = vld [vmem:[%s1 + $0x38] sm:$0xf]
  %v49 = vld [vmem:[%s1 + $0x3c] sm:$0xf]
  %v50 = vld [vmem:[%s1 + $0x40] sm:$0xf]
  %v51 = vld [vmem:[%s1 + $0x44] sm:$0xf]
  %v52 = vld [vmem:[%s1 + $0x48] sm:$0xf]
  %v53 = vld [vmem:[%s1 + $0x4c] sm:$0xf]
  %v54 = vld [vmem:[%s1 + $0x50] sm:$0xf]
  %v55 = vld [vmem:[%s1 + $0x54] sm:$0xf]
  %v56 = vld [vmem:[%s1 + $0x58] sm:$0xf]
  %v57 = vld [vmem:[%s1 + $0x5c] sm:$0xf]
  %v58 = vld [vmem:[%s1 + $0x60] sm:$0xf]
  %v59 = vld [vmem:[%s1 + $0x64] sm:$0xf]
  %v60 = vld [vmem:[%s1 + $0x68] sm:$0xf]
  %v61 = vld [vmem:[%s1 + $0x6c] sm:$0xf]
  %v62 = vld [vmem:[%s1 + $0x70] sm:$0xf]
  %v63 = vld [vmem:[%s1 + $0x74] sm:$0xf]
  %v64 = vld [vmem:[%s1 + $0x78] sm:$0xf]
  %v65 = vld [vmem:[%s1 + $0x7c] sm:$0xf]
  %v70 = vunpack.c.l.b16 %v30
  %v71 = vunpack.c.h.b16 %v30
  %v72 = vunpack.c.l.b16 %v31
  %v73 = vunpack.c.h.b16 %v31
  %v74 = vunpack.c.l.b16 %v32
  %v75 = vunpack.c.h.b16 %v32
  %v76 = vunpack.c.l.b16 %v33
  %v77 = vunpack.c.h.b16 %v33
  %v78 = vpack.c.b16 %v72, %v70
  %v79 = vpack.c.b16 %v73, %v71
  %v80 = vpack.c.b16 %v76, %v74
  %v81 = vpack.c.b16 %v77, %v75
  %v118 = vunpack.c.l.b16 %v34
  %v119 = vunpack.c.l.b16 %v35
  %v120 = vunpack.c.l.b16 %v36
  %v121 = vunpack.c.l.b16 %v37
  %v122 = vunpack.c.l.b16 %v38
  %v123 = vunpack.c.l.b16 %v39
  %v124 = vunpack.c.l.b16 %v40
  %v125 = vunpack.c.l.b16 %v41
  %v126 = vunpack.c.l.b16 %v42
  %v127 = vunpack.c.l.b16 %v43
  %v128 = vunpack.c.l.b16 %v44
  %v129 = vunpack.c.l.b16 %v45
  %v130 = vunpack.c.l.b16 %v46
  %v131 = vunpack.c.l.b16 %v47
  %v132 = vunpack.c.l.b16 %v48
  %v133 = vunpack.c.l.b16 %v49
  %v134 = vunpack.c.l.b16 %v50
  %v135 = vunpack.c.l.b16 %v51
  %v136 = vunpack.c.l.b16 %v52
  %v137 = vunpack.c.l.b16 %v53
  %v138 = vunpack.c.l.b16 %v54
  %v139 = vunpack.c.l.b16 %v55
  %v140 = vunpack.c.l.b16 %v56
  %v141 = vunpack.c.l.b16 %v57
  %v142 = vunpack.c.l.b16 %v58
  %v143 = vunpack.c.l.b16 %v59
  %v144 = vunpack.c.l.b16 %v60
  %v145 = vunpack.c.l.b16 %v61
  %v146 = vunpack.c.l.b16 %v62
  %v147 = vunpack.c.l.b16 %v63
  %v148 = vunpack.c.l.b16 %v64
  %v149 = vunpack.c.l.b16 %v65
  %v150 = vpack.c.b16 %v119, %v118
  %v151 = vpack.c.b16 %v121, %v120
  %v152 = vpack.c.b16 %v123, %v122
  %v153 = vpack.c.b16 %v125, %v124
  %v154 = vpack.c.b16 %v127, %v126
  %v155 = vpack.c.b16 %v129, %v128
  %v156 = vpack.c.b16 %v131, %v130
  %v157 = vpack.c.b16 %v133, %v132
  %v158 = vpack.c.b16 %v135, %v134
  %v159 = vpack.c.b16 %v137, %v136
  %v160 = vpack.c.b16 %v139, %v138
  %v161 = vpack.c.b16 %v141, %v140
  %v162 = vpack.c.b16 %v143, %v142
  %v163 = vpack.c.b16 %v145, %v144
  %v164 = vpack.c.b16 %v147, %v146
  %v165 = vpack.c.b16 %v149, %v148
  %182 = vmatprep.subr.bf16.mxu0 0
  %183 = vmatpush1.bf16.msra.mxu0 %v150
  %184 = vmatprep.subr.bf16.mxu0 0
  %185 = vmatpush1.bf16.msra.mxu0 %v151
  %186 = vmatprep.subr.bf16.mxu0 0
  %187 = vmatpush1.bf16.msra.mxu0 %v152
  %188 = vmatprep.subr.bf16.mxu0 0
  %189 = vmatpush1.bf16.msra.mxu0 %v153
  %190 = vmatprep.subr.bf16.mxu0 0
  %191 = vmatpush1.bf16.msra.mxu0 %v154
  %192 = vmatprep.subr.bf16.mxu0 0
  %193 = vmatpush1.bf16.msra.mxu0 %v155
  %194 = vmatprep.subr.bf16.mxu0 0
  %195 = vmatpush1.bf16.msra.mxu0 %v156
  %196 = vmatprep.subr.bf16.mxu0 0
  %197 = vmatpush1.bf16.msra.mxu0 %v157
  %198 = vmatprep.subr.bf16.mxu0 0
  %199 = vmatpush1.bf16.msra.mxu0 %v158
  %200 = vmatprep.subr.bf16.mxu0 0
  %201 = vmatpush1.bf16.msra.mxu0 %v159
  %202 = vmatprep.subr.bf16.mxu0 0
  %203 = vmatpush1.bf16.msra.mxu0 %v160
  %204 = vmatprep.subr.bf16.mxu0 0
  %205 = vmatpush1.bf16.msra.mxu0 %v161
  %206 = vmatprep.subr.bf16.mxu0 0
  %207 = vmatpush1.bf16.msra.mxu0 %v162
  %208 = vmatprep.subr.bf16.mxu0 0
  %209 = vmatpush1.bf16.msra.mxu0 %v163
  %210 = vmatprep.subr.bf16.mxu0 0
  %211 = vmatpush1.bf16.msra.mxu0 %v164
  %212 = vmatprep.subr.bf16.mxu0 0
  %213 = vmatpush1.bf16.msra.mxu0 %v165
  %214 = vmatprep.mubr.bf16.mxu0 %v79
  %215 = vmatmul.mubr.bf16.gmra.mrb[0].mxu0 %v78
  %v216 = vpop.f32.mrb[0].mxu0
  %v217 = vadd.f32 0.0, %v216
  %v218 = vpop.f32.mrb[0].mxu0
  %v219 = vpop.f32.mrb[0].mxu0
  %v220 = vadd.f32 0.0, %v219
  %v221 = vpop.f32.mrb[0].mxu0
  %222 = vmatprep.mubr.bf16.mxu0 %v81
  %223 = vmatmul.mubr.bf16.gmra.mrb[0].mxu0 %v80
  %v224 = vpop.f32.mrb[0].mxu0
  %v225 = vadd.f32 0.0, %v224
  %v226 = vpop.f32.mrb[0].mxu0
  %v227 = vpop.f32.mrb[0].mxu0
  %v228 = vadd.f32 0.0, %v227
  %v229 = vpop.f32.mrb[0].mxu0
  %230 = vdwg.mxu0
  %v231 = vadd.f32 %v26, %v217
  %v232 = vadd.f32 %v27, %v220
  %v233 = vadd.f32 %v28, %v225
  %v234 = vadd.f32 %v29, %v228
  %235 = vst [vmem:[#allocation2] sm:$0xff] %v231
  %236 = vst [vmem:[#allocation2 + $0x8] sm:$0xff] %v232
  %237 = vst [vmem:[#allocation2 + $0x10] sm:$0xff] %v233
  %238 = vst [vmem:[#allocation2 + $0x18] sm:$0xff] %v234
  // Predicated region
  $region22: #{forward.35} parent=0 // pred_check
    %p239 = pneg %p18
  $region23: #{forward.35} parent=0 // pred_check_branch
    %241 = sbr.rel (%p239) target = $region25
  $region24: #{forward.35} parent=0 // pred_region
    %v242 = vld [vmem:[#allocation2] sm:$0xff]
    %v243 = vld [vmem:[#allocation2 + $0x8] sm:$0xff]
    %v244 = vld [vmem:[#allocation2 + $0x10] sm:$0xff]
    %v245 = vld [vmem:[#allocation2 + $0x18] sm:$0xff]
    %v246 = vld [vmem:[%s2] sm:$0x1]
    %v248 = vlaneseq
    %v249 = vshrl.u32 %v248, 7
    %v250 = vsub.s32 0, %v249
    %v251 = vrot.slane %v246, %v250
    %v253 = vadd.f32 %v242, %v251
    %v254 = vadd.f32 %v243, %v251
    %v255 = vadd.f32 %v244, %v251
    %v256 = vadd.f32 %v245, %v251
    %v257 = vld [vmem:[%s3] sm:$0xff]
    %v258 = vld [vmem:[%s3 + $0x8] sm:$0xff]
    %v259 = vld [vmem:[%s3 + $0x10] sm:$0xff]
    %v260 = vld [vmem:[%s3 + $0x18] sm:$0xff]
    %v261 = vadd.f32 %v253, %v257
    %v262 = vadd.f32 %v254, %v258
    %v263 = vadd.f32 %v255, %v259
    %v264 = vadd.f32 %v256, %v260
    %265 = vst [vmem:[%s4] sm:$0xff] %v261
    %266 = vst [vmem:[%s4 + $0x8] sm:$0xff] %v262
    %267 = vst [vmem:[%s4 + $0x10] sm:$0xff] %v263
    %268 = vst [vmem:[%s4 + $0x18] sm:$0xff] %v264
  $region25: #{forward.35} parent=0 // pred_fallthru
    _
  // Predicated region
  $region26: #{forward.35} parent=0 // pred_check
    _
  $region27: #{forward.35} parent=0 // pred_check_branch
    %270 = sbr.rel (0) target = $region29
  $region28: #{forward.35} parent=0 // pred_region
    _
  $region29: #{forward.35} parent=0 // pred_fallthru
    _
  // Predicated region
  $region30: #{forward.35} parent=0 // pred_check
    _
  $region31: #{forward.35} parent=0 // pred_check_branch
    %272 = sbr.rel (0) target = $region33
  $region32: #{forward.35} parent=0 // pred_region
    _
  $region33: #{forward.35} parent=0 // pred_fallthru
    _

// kernel: forward.36
$region0: #{forward.36}
  #allocation0 [shape = 'u32[]', space=smem, size = 0x4, offset = 0x4, fixed_abs, tag = 'smem constant byte address 0x4 - core index']
  #allocation1 [shape = 'u32[144,128]{1,0:T(1,128)}', space=vmem, size = 0x12000, scoped, tag = 'internal scratch']
  #allocation2 [shape = 'f32[8,128]{1,0:T(8,128)}', space=vmem, size = 0x1000, scoped, tag = 'scratch operand']
  %s0 = inlined_call_operand.vmem [shape: bf16[8,128], index: 0, kind: input, shape index: {}]
  %s1 = inlined_call_operand.vmem [shape: bf16[128,128], index: 1, kind: input, shape index: {}]
  %s2 = inlined_call_operand.vmem [shape: f32[1,128], index: 2, kind: input, shape index: {}]
  %s3 = inlined_call_operand.vmem [shape: f32[8,128], index: 3, kind: output, shape index: {}]
  %s4 = sld [smem:[#allocation0]]
  $region30: #{forward.36} parent=0
    _
  %s6 = ssub.s32 1, %s4
  %s7 = scalar_select 0, %s6, %s4
  // Predicated region
  $region2: #{forward.36} parent=0 // pred_check
    _
  $region3: #{forward.36} parent=0 // pred_check_branch
    %9 = sbr.rel (0) target = $region5
  $region4: #{forward.36} parent=0 // pred_region
    _
  $region5: #{forward.36} parent=0 // pred_fallthru
    _
  // Predicated region
  $region6: #{forward.36} parent=0 // pred_check
    _
  $region7: #{forward.36} parent=0 // pred_check_branch
    %11 = sbr.rel (0) target = $region9
  $region8: #{forward.36} parent=0 // pred_region
    _
  $region9: #{forward.36} parent=0 // pred_fallthru
    _
  // Predicated region
  $region10: #{forward.36} parent=0 // pred_check
    _
  $region11: #{forward.36} parent=0 // pred_check_branch
    %13 = sbr.rel (0) target = $region13
  $region12: #{forward.36} parent=0 // pred_region
    _
  $region13: #{forward.36} parent=0 // pred_fallthru
    _
  %p15 = scmp.eq.s32.totalorder 0, 0
  // Predicated region
  $region14: #{forward.36} parent=0 // pred_check
    %p16 = pneg %p15
  $region15: #{forward.36} parent=0 // pred_check_branch
    %18 = sbr.rel (%p16) target = $region17
  $region16: #{forward.36} parent=0 // pred_region
    %19 = vst [vmem:[#allocation2] sm:$0xff] 0.0
  $region17: #{forward.36} parent=0 // pred_fallthru
    _
  %v20 = vld [vmem:[#allocation2] sm:$0xff]
  %v21 = vld [vmem:[%s0] sm:$0xf]
  %v22 = vld [vmem:[%s1] sm:$0xf]
  %v23 = vld [vmem:[%s1 + $0x4] sm:$0xf]
  %v24 = vld [vmem:[%s1 + $0x8] sm:$0xf]
  %v25 = vld [vmem:[%s1 + $0xc] sm:$0xf]
  %v26 = vld [vmem:[%s1 + $0x10] sm:$0xf]
  %v27 = vld [vmem:[%s1 + $0x14] sm:$0xf]
  %v28 = vld [vmem:[%s1 + $0x18] sm:$0xf]
  %v29 = vld [vmem:[%s1 + $0x1c] sm:$0xf]
  %v30 = vld [vmem:[%s1 + $0x20] sm:$0xf]
  %v31 = vld [vmem:[%s1 + $0x24] sm:$0xf]
  %v32 = vld [vmem:[%s1 + $0x28] sm:$0xf]
  %v33 = vld [vmem:[%s1 + $0x2c] sm:$0xf]
  %v34 = vld [vmem:[%s1 + $0x30] sm:$0xf]
  %v35 = vld [vmem:[%s1 + $0x34] sm:$0xf]
  %v36 = vld [vmem:[%s1 + $0x38] sm:$0xf]
  %v37 = vld [vmem:[%s1 + $0x3c] sm:$0xf]
  %v54 = vunpack.c.l.b16 %v22
  %v55 = vunpack.c.l.b16 %v23
  %v56 = vunpack.c.l.b16 %v24
  %v57 = vunpack.c.l.b16 %v25
  %v58 = vunpack.c.l.b16 %v26
  %v59 = vunpack.c.l.b16 %v27
  %v60 = vunpack.c.l.b16 %v28
  %v61 = vunpack.c.l.b16 %v29
  %v62 = vunpack.c.l.b16 %v30
  %v63 = vunpack.c.l.b16 %v31
  %v64 = vunpack.c.l.b16 %v32
  %v65 = vunpack.c.l.b16 %v33
  %v66 = vunpack.c.l.b16 %v34
  %v67 = vunpack.c.l.b16 %v35
  %v68 = vunpack.c.l.b16 %v36
  %v69 = vunpack.c.l.b16 %v37
  %v70 = vpack.c.b16 %v55, %v54
  %v71 = vpack.c.b16 %v57, %v56
  %v72 = vpack.c.b16 %v59, %v58
  %v73 = vpack.c.b16 %v61, %v60
  %v74 = vpack.c.b16 %v63, %v62
  %v75 = vpack.c.b16 %v65, %v64
  %v76 = vpack.c.b16 %v67, %v66
  %v77 = vpack.c.b16 %v69, %v68
  %86 = vmatprep.subr.bf16.mxu0 0
  %87 = vmatpush1.bf16.msra.mxu0 %v70
  %88 = vmatprep.subr.bf16.mxu0 0
  %89 = vmatpush1.bf16.msra.mxu0 %v71
  %90 = vmatprep.subr.bf16.mxu0 0
  %91 = vmatpush1.bf16.msra.mxu0 %v72
  %92 = vmatprep.subr.bf16.mxu0 0
  %93 = vmatpush1.bf16.msra.mxu0 %v73
  %94 = vmatprep.subr.bf16.mxu0 0
  %95 = vmatpush1.bf16.msra.mxu0 %v74
  %96 = vmatprep.subr.bf16.mxu0 0
  %97 = vmatpush1.bf16.msra.mxu0 %v75
  %98 = vmatprep.subr.bf16.mxu0 0
  %99 = vmatpush1.bf16.msra.mxu0 %v76
  %100 = vmatprep.subr.bf16.mxu0 0
  %101 = vmatpush1.bf16.msra.mxu0 %v77
  %102 = vmatprep.subr.bf16.mxu0 0
  %103 = vmatpush1.bf16.msra.mxu0 0
  %104 = vmatprep.subr.bf16.mxu0 0
  %105 = vmatpush1.bf16.msra.mxu0 0
  %106 = vmatprep.subr.bf16.mxu0 0
  %107 = vmatpush1.bf16.msra.mxu0 0
  %108 = vmatprep.subr.bf16.mxu0 0
  %109 = vmatpush1.bf16.msra.mxu0 0
  %110 = vmatprep.subr.bf16.mxu0 0
  %111 = vmatpush1.bf16.msra.mxu0 0
  %112 = vmatprep.subr.bf16.mxu0 0
  %113 = vmatpush1.bf16.msra.mxu0 0
  %114 = vmatprep.subr.bf16.mxu0 0
  %115 = vmatpush1.bf16.msra.mxu0 0
  %116 = vmatprep.subr.bf16.mxu0 0
  %117 = vmatpush1.bf16.msra.mxu0 0
  %118 = vmatprep.mubr.bf16.mxu0 0
  %119 = vmatmul.mubr.bf16.gmra.mrb[0].mxu0 %v21
  %v120 = vpop.f32.mrb[0].mxu0
  %v121 = vadd.f32 0.0, %v120
  %v122 = vpop.f32.mrb[0].mxu0
  %v123 = vpop.f32.mrb[0].mxu0
  %v124 = vpop.f32.mrb[0].mxu0
  %125 = vdwg.mxu0
  %v126 = vadd.f32 %v20, %v121
  %127 = vst [vmem:[#allocation2] sm:$0xff] %v126
  // Predicated region
  $region18: #{forward.36} parent=0 // pred_check
    %p128 = pneg %p15
  $region19: #{forward.36} parent=0 // pred_check_branch
    %130 = sbr.rel (%p128) target = $region21
  $region20: #{forward.36} parent=0 // pred_region
    %v131 = vld [vmem:[#allocation2] sm:$0xff]
    %v132 = vld [vmem:[%s2] sm:$0x1]
    %v134 = vlaneseq
    %v135 = vshrl.u32 %v134, 7
    %v136 = vsub.s32 0, %v135
    %v137 = vrot.slane %v132, %v136
    %v139 = vadd.f32 %v131, %v137
    %140 = vst [vmem:[%s3] sm:$0xff] %v139
  $region21: #{forward.36} parent=0 // pred_fallthru
    _
  // Predicated region
  $region22: #{forward.36} parent=0 // pred_check
    _
  $region23: #{forward.36} parent=0 // pred_check_branch
    %142 = sbr.rel (0) target = $region25
  $region24: #{forward.36} parent=0 // pred_region
    _
  $region25: #{forward.36} parent=0 // pred_fallthru
    _
  // Predicated region
  $region26: #{forward.36} parent=0 // pred_check
    _
  $region27: #{forward.36} parent=0 // pred_check_branch
    %144 = sbr.rel (0) target = $region29
  $region28: #{forward.36} parent=0 // pred_region
    _
  $region29: #{forward.36} parent=0 // pred_fallthru
    _

// kernel: forward.37
$region0: #{forward.37}
  #allocation0 [shape = 'u32[]', space=smem, size = 0x4, offset = 0x4, fixed_abs, tag = 'smem constant byte address 0x4 - core index']
  #allocation1 [shape = 'u32[144,128]{1,0:T(1,128)}', space=vmem, size = 0x12000, scoped, tag = 'internal scratch']
  %s0 = inlined_call_operand.vmem [shape: f32[8,32], index: 0, kind: input, shape index: {}]
  %s1 = inlined_call_operand.vmem [shape: f32[1,32], index: 1, kind: input, shape index: {}]
  %s2 = inlined_call_operand.vmem [shape: f32[1,32], index: 2, kind: input, shape index: {}]
  %s3 = inlined_call_operand.vmem [shape: f32[8,32], index: 3, kind: input, shape index: {}]
  %s4 = inlined_call_operand.vmem [shape: f32[8,32], index: 4, kind: output, shape index: {}]
  %s5 = sld [smem:[#allocation0]]
  $region26: #{forward.37} parent=0
    _
  %s7 = ssub.s32 1, %s5
  %s8 = scalar_select 0, %s7, %s5
  // Predicated region
  $region2: #{forward.37} parent=0 // pred_check
    _
  $region3: #{forward.37} parent=0 // pred_check_branch
    %10 = sbr.rel (0) target = $region5
  $region4: #{forward.37} parent=0 // pred_region
    _
  $region5: #{forward.37} parent=0 // pred_fallthru
    _
  // Predicated region
  $region6: #{forward.37} parent=0 // pred_check
    _
  $region7: #{forward.37} parent=0 // pred_check_branch
    %12 = sbr.rel (0) target = $region9
  $region8: #{forward.37} parent=0 // pred_region
    _
  $region9: #{forward.37} parent=0 // pred_fallthru
    _
  // Predicated region
  $region10: #{forward.37} parent=0 // pred_check
    _
  $region11: #{forward.37} parent=0 // pred_check_branch
    %14 = sbr.rel (0) target = $region13
  $region12: #{forward.37} parent=0 // pred_region
    _
  $region13: #{forward.37} parent=0 // pred_fallthru
    _
  // Predicated region
  $region14: #{forward.37} parent=0 // pred_check
    _
  $region15: #{forward.37} parent=0 // pred_check_branch
    %16 = sbr.rel (0) target = $region17
  $region16: #{forward.37} parent=0 // pred_region
    _
  $region17: #{forward.37} parent=0 // pred_fallthru
    _
  %v17 = vld [vmem:[%s0] sm:$0xff]
  %vm18 = vcmask 261120
  %v19 = vsel %vm18, %v17, 0.0
  %20 = vadd.xlane.f32.xlu0 %v19
  %v21 = vpop.xlane.xlu0 %20
  %v22 = vrcp.pop 32.0
  %v23 = vmul.f32 %v21, %v22
  %v24 = vsub.f32 %v17, %v23
  %v25 = vmul.f32 %v24, %v24
  %v26 = vsel %vm18, %v25, 0.0
  %27 = vadd.xlane.f32.xlu0 %v26
  %v28 = vpop.xlane.xlu0 %27
  %v29 = vmul.f32 %v28, %v22
  %v30 = vadd.f32 %v29, 1e-05
  %v31 = vrsqrt.pop %v30
  %v32 = vmul.f32 %v24, %v31
  %v33 = vld [vmem:[%s1] sm:$0x1]
  %v35 = vlaneseq
  %v36 = vshrl.u32 %v35, 7
  %v37 = vsub.s32 0, %v36
  %v38 = vrot.slane %v33, %v37
  %v40 = vmul.f32 %v32, %v38
  %v41 = vld [vmem:[%s2] sm:$0x1]
  %v43 = vlaneseq
  %v44 = vshrl.u32 %v43, 7
  %v45 = vsub.s32 0, %v44
  %v46 = vrot.slane %v41, %v45
  %v48 = vadd.f32 %v40, %v46
  %v49 = vld [vmem:[%s3] sm:$0xff]
  %v50 = vadd.f32 %v48, %v49
  %51 = vst.msk [vmem:[%s4] sm:$0xff] %vm18, %v50
  // Predicated region
  $region18: #{forward.37} parent=0 // pred_check
    _
  $region19: #{forward.37} parent=0 // pred_check_branch
    %53 = sbr.rel (0) target = $region21
  $region20: #{forward.37} parent=0 // pred_region
    _
  $region21: #{forward.37} parent=0 // pred_fallthru
    _
  // Predicated region
  $region22: #{forward.37} parent=0 // pred_check
    _
  $region23: #{forward.37} parent=0 // pred_check_branch
    %55 = sbr.rel (0) target = $region25
  $region24: #{forward.37} parent=0 // pred_region
    _
  $region25: #{forward.37} parent=0 // pred_fallthru
    _

// kernel: forward.38
$region0: #{forward.38}
  #allocation0 [shape = 'u32[]', space=smem, size = 0x4, offset = 0x4, fixed_abs, tag = 'smem constant byte address 0x4 - core index']
  #allocation1 [shape = 'u32[144,128]{1,0:T(1,128)}', space=vmem, size = 0x12000, scoped, tag = 'internal scratch']
  %s0 = inlined_call_operand.vmem [shape: f32[8,32], index: 0, kind: input, shape index: {}]
  %s1 = inlined_call_operand.vmem [shape: f32[1,32], index: 1, kind: input, shape index: {}]
  %s2 = inlined_call_operand.vmem [shape: f32[1,32], index: 2, kind: input, shape index: {}]
  %s3 = inlined_call_operand.vmem [shape: bf16[32,128], index: 3, kind: input, shape index: {}]
  %s4 = inlined_call_operand.vmem [shape: f32[1,128], index: 4, kind: input, shape index: {}]
  %s5 = inlined_call_operand.vmem [shape: f32[8,128], index: 5, kind: output, shape index: {}]
  %s6 = sld [smem:[#allocation0]]
  $region30: #{forward.38} parent=0
    _
  %s8 = ssub.s32 1, %s6
  %s9 = scalar_select 0, %s8, %s6
  // Predicated region
  $region2: #{forward.38} parent=0 // pred_check
    _
  $region3: #{forward.38} parent=0 // pred_check_branch
    %11 = sbr.rel (0) target = $region5
  $region4: #{forward.38} parent=0 // pred_region
    _
  $region5: #{forward.38} parent=0 // pred_fallthru
    _
  // Predicated region
  $region6: #{forward.38} parent=0 // pred_check
    _
  $region7: #{forward.38} parent=0 // pred_check_branch
    %13 = sbr.rel (0) target = $region9
  $region8: #{forward.38} parent=0 // pred_region
    _
  $region9: #{forward.38} parent=0 // pred_fallthru
    _
  // Predicated region
  $region10: #{forward.38} parent=0 // pred_check
    _
  $region11: #{forward.38} parent=0 // pred_check_branch
    %15 = sbr.rel (0) target = $region13
  $region12: #{forward.38} parent=0 // pred_region
    _
  $region13: #{forward.38} parent=0 // pred_fallthru
    _
  // Predicated region
  $region14: #{forward.38} parent=0 // pred_check
    _
  $region15: #{forward.38} parent=0 // pred_check_branch
    %17 = sbr.rel (0) target = $region17
  $region16: #{forward.38} parent=0 // pred_region
    _
  $region17: #{forward.38} parent=0 // pred_fallthru
    _
  // Predicated region
  $region18: #{forward.38} parent=0 // pred_check
    _
  $region19: #{forward.38} parent=0 // pred_check_branch
    %19 = sbr.rel (0) target = $region21
  $region20: #{forward.38} parent=0 // pred_region
    _
  $region21: #{forward.38} parent=0 // pred_fallthru
    _
  %v21 = vld [vmem:[%s0] sm:$0xff]
  %vm22 = vcmask 261120
  %v23 = vsel %vm22, %v21, 0.0
  %24 = vadd.xlane.f32.xlu0 %v23
  %v25 = vpop.xlane.xlu0 %24
  %v26 = vrcp.pop 32.0
  %v27 = vmul.f32 %v25, %v26
  %v28 = vsub.f32 %v21, %v27
  %v29 = vmul.f32 %v28, %v28
  %v30 = vsel %vm22, %v29, 0.0
  %31 = vadd.xlane.f32.xlu0 %v30
  %v32 = vpop.xlane.xlu0 %31
  %v33 = vmul.f32 %v32, %v26
  %v34 = vadd.f32 %v33, 1e-05
  %v35 = vrsqrt.pop %v34
  %v36 = vmul.f32 %v28, %v35
  %v37 = vld [vmem:[%s1] sm:$0x1]
  %v39 = vlaneseq
  %v40 = vshrl.u32 %v39, 7
  %v41 = vsub.s32 0, %v40
  %v42 = vrot.slane %v37, %v41
  %v44 = vmul.f32 %v36, %v42
  %v45 = vld [vmem:[%s2] sm:$0x1]
  %v47 = vlaneseq
  %v48 = vshrl.u32 %v47, 7
  %v49 = vsub.s32 0, %v48
  %v50 = vrot.slane %v45, %v49
  %v52 = vadd.f32 %v44, %v50
  %v53 = vpack.c.bf16 %v52, %v52
  %v54 = vld [vmem:[%s3] sm:$0xf]
  %v55 = vld [vmem:[%s3 + $0x4] sm:$0xf]
  %v56 = vld [vmem:[%s3 + $0x8] sm:$0xf]
  %v57 = vld [vmem:[%s3 + $0xc] sm:$0xf]
  %v58 = vld [vmem:[%s4] sm:$0x1]
  %v60 = vlaneseq
  %v61 = vshrl.u32 %v60, 7
  %v62 = vsub.s32 0, %v61
  %v63 = vrot.slane %v58, %v62
  %v69 = vunpack.c.l.b16 %v54
  %v70 = vunpack.c.l.b16 %v55
  %v71 = vunpack.c.l.b16 %v56
  %v72 = vunpack.c.l.b16 %v57
  %v73 = vpack.c.b16 %v70, %v69
  %v74 = vpack.c.b16 %v72, %v71
  %v78 = vsel %vm22, %v53, 0
  %80 = vmatprep.subr.bf16.mxu0 0
  %81 = vmatpush1.bf16.msra.mxu0 %v73
  %82 = vmatprep.subr.bf16.mxu0 0
  %83 = vmatpush1.bf16.msra.mxu0 %v74
  %84 = vmatprep.subr.bf16.mxu0 0
  %85 = vmatpush1.bf16.msra.mxu0 0
  %86 = vmatprep.subr.bf16.mxu0 0
  %87 = vmatpush1.bf16.msra.mxu0 0
  %88 = vmatprep.subr.bf16.mxu0 0
  %89 = vmatpush1.bf16.msra.mxu0 0
  %90 = vmatprep.subr.bf16.mxu0 0
  %91 = vmatpush1.bf16.msra.mxu0 0
  %92 = vmatprep.subr.bf16.mxu0 0
  %93 = vmatpush1.bf16.msra.mxu0 0
  %94 = vmatprep.subr.bf16.mxu0 0
  %95 = vmatpush1.bf16.msra.mxu0 0
  %96 = vmatprep.subr.bf16.mxu0 0
  %97 = vmatpush1.bf16.msra.mxu0 0
  %98 = vmatprep.subr.bf16.mxu0 0
  %99 = vmatpush1.bf16.msra.mxu0 0
  %100 = vmatprep.subr.bf16.mxu0 0
  %101 = vmatpush1.bf16.msra.mxu0 0
  %102 = vmatprep.subr.bf16.mxu0 0
  %103 = vmatpush1.bf16.msra.mxu0 0
  %104 = vmatprep.subr.bf16.mxu0 0
  %105 = vmatpush1.bf16.msra.mxu0 0
  %106 = vmatprep.subr.bf16.mxu0 0
  %107 = vmatpush1.bf16.msra.mxu0 0
  %108 = vmatprep.subr.bf16.mxu0 0
  %109 = vmatpush1.bf16.msra.mxu0 0
  %110 = vmatprep.subr.bf16.mxu0 0
  %111 = vmatpush1.bf16.msra.mxu0 0
  %112 = vmatprep.mubr.bf16.mxu0 0
  %113 = vmatmul.mubr.bf16.gmra.mrb[0].mxu0 %v78
  %v114 = vpop.f32.mrb[0].mxu0
  %v115 = vadd.f32 %v63, %v114
  %v116 = vpop.f32.mrb[0].mxu0
  %v117 = vpop.f32.mrb[0].mxu0
  %v118 = vpop.f32.mrb[0].mxu0
  %119 = vdwg.mxu0
  %120 = vst [vmem:[%s5] sm:$0xff] %v115
  // Predicated region
  $region22: #{forward.38} parent=0 // pred_check
    _
  $region23: #{forward.38} parent=0 // pred_check_branch
    %122 = sbr.rel (0) target = $region25
  $region24: #{forward.38} parent=0 // pred_region
    _
  $region25: #{forward.38} parent=0 // pred_fallthru
    _
  // Predicated region
  $region26: #{forward.38} parent=0 // pred_check
    _
  $region27: #{forward.38} parent=0 // pred_check_branch
    %124 = sbr.rel (0) target = $region29
  $region28: #{forward.38} parent=0 // pred_region
    _
  $region29: #{forward.38} parent=0 // pred_fallthru
    _

// kernel: forward.39
$region0: #{forward.39}
  #allocation0 [shape = 'u32[]', space=smem, size = 0x4, offset = 0x4, fixed_abs, tag = 'smem constant byte address 0x4 - core index']
  #allocation1 [shape = 'u32[144,128]{1,0:T(1,128)}', space=vmem, size = 0x12000, scoped, tag = 'internal scratch']
  %s0 = inlined_call_operand.vmem [shape: bf16[2,4,128], index: 0, kind: input, shape index: {}]
  %s1 = inlined_call_operand.vmem [shape: bf16[2,4,128], index: 1, kind: input, shape index: {}]
  %s2 = inlined_call_operand.vmem [shape: bf16[2,4,128], index: 2, kind: input, shape index: {}]
  %s3 = inlined_call_operand.vmem [shape: f32[2,4,128], index: 3, kind: output, shape index: {}]
  %s4 = sld [smem:[#allocation0]]
  $region22: #{forward.39} parent=0
    _
  %s6 = ssub.s32 1, %s4
  %s7 = scalar_select 0, %s6, %s4
  // Predicated region
  $region2: #{forward.39} parent=0 // pred_check
    _
  $region3: #{forward.39} parent=0 // pred_check_branch
    %9 = sbr.rel (0) target = $region5
  $region4: #{forward.39} parent=0 // pred_region
    _
  $region5: #{forward.39} parent=0 // pred_fallthru
    _
  // Predicated region
  $region6: #{forward.39} parent=0 // pred_check
    _
  $region7: #{forward.39} parent=0 // pred_check_branch
    %11 = sbr.rel (0) target = $region9
  $region8: #{forward.39} parent=0 // pred_region
    _
  $region9: #{forward.39} parent=0 // pred_fallthru
    _
  // Predicated region
  $region10: #{forward.39} parent=0 // pred_check
    _
  $region11: #{forward.39} parent=0 // pred_check_branch
    %13 = sbr.rel (0) target = $region13
  $region12: #{forward.39} parent=0 // pred_region
    _
  $region13: #{forward.39} parent=0 // pred_fallthru
    _
  %v15 = vld [vmem:[%s0] sm:$0x3]
  %v16 = vld [vmem:[%s0 + $0x2] sm:$0x3]
  %v17 = vld [vmem:[%s1] sm:$0x3]
  %v18 = vld [vmem:[%s1 + $0x2] sm:$0x3]
  %19 = vmatprep.subr.bf16.mxu0 0
  %20 = vmatpush1.bf16.xpose.msra.mxu0 %v17
  %21 = vmatprep.subr.bf16.mxu0 0
  %22 = vmatpush1.bf16.xpose.msra.mxu0 0
  %23 = vmatprep.subr.bf16.mxu0 0
  %24 = vmatpush1.bf16.xpose.msra.mxu0 0
  %25 = vmatprep.subr.bf16.mxu0 0
  %26 = vmatpush1.bf16.xpose.msra.mxu0 0
  %27 = vmatprep.subr.bf16.mxu0 0
  %28 = vmatpush1.bf16.xpose.msra.mxu0 0
  %29 = vmatprep.subr.bf16.mxu0 0
  %30 = vmatpush1.bf16.xpose.msra.mxu0 0
  %31 = vmatprep.subr.bf16.mxu0 0
  %32 = vmatpush1.bf16.xpose.msra.mxu0 0
  %33 = vmatprep.subr.bf16.mxu0 0
  %34 = vmatpush1.bf16.xpose.msra.mxu0 0
  %35 = vmatprep.subr.bf16.mxu0 0
  %36 = vmatpush1.bf16.xpose.msra.mxu0 0
  %37 = vmatprep.subr.bf16.mxu0 0
  %38 = vmatpush1.bf16.xpose.msra.mxu0 0
  %39 = vmatprep.subr.bf16.mxu0 0
  %40 = vmatpush1.bf16.xpose.msra.mxu0 0
  %41 = vmatprep.subr.bf16.mxu0 0
  %42 = vmatpush1.bf16.xpose.msra.mxu0 0
  %43 = vmatprep.subr.bf16.mxu0 0
  %44 = vmatpush1.bf16.xpose.msra.mxu0 0
  %45 = vmatprep.subr.bf16.mxu0 0
  %46 = vmatpush1.bf16.xpose.msra.mxu0 0
  %47 = vmatprep.subr.bf16.mxu0 0
  %48 = vmatpush1.bf16.xpose.msra.mxu0 0
  %49 = vmatprep.subr.bf16.mxu0 0
  %50 = vmatpush1.bf16.xpose.msra.mxu0 0
  %51 = vmatprep.mubr.bf16.mxu0 0
  %52 = vmatmul.mubr.bf16.gmra.mrb[0].mxu0 %v15
  %v53 = vpop.f32.mrb[0].mxu0
  %v54 = vadd.f32 0.0, %v53
  %v55 = vpop.f32.mrb[0].mxu0
  %v56 = vpop.f32.mrb[0].mxu0
  %v57 = vpop.f32.mrb[0].mxu0
  %58 = vdwg.mxu0
  %59 = vmatprep.subr.bf16.mxu0 0
  %60 = vmatpush1.bf16.xpose.msra.mxu0 %v18
  %61 = vmatprep.subr.bf16.mxu0 0
  %62 = vmatpush1.bf16.xpose.msra.mxu0 0
  %63 = vmatprep.subr.bf16.mxu0 0
  %64 = vmatpush1.bf16.xpose.msra.mxu0 0
  %65 = vmatprep.subr.bf16.mxu0 0
  %66 = vmatpush1.bf16.xpose.msra.mxu0 0
  %67 = vmatprep.subr.bf16.mxu0 0
  %68 = vmatpush1.bf16.xpose.msra.mxu0 0
  %69 = vmatprep.subr.bf16.mxu0 0
  %70 = vmatpush1.bf16.xpose.msra.mxu0 0
  %71 = vmatprep.subr.bf16.mxu0 0
  %72 = vmatpush1.bf16.xpose.msra.mxu0 0
  %73 = vmatprep.subr.bf16.mxu0 0
  %74 = vmatpush1.bf16.xpose.msra.mxu0 0
  %75 = vmatprep.subr.bf16.mxu0 0
  %76 = vmatpush1.bf16.xpose.msra.mxu0 0
  %77 = vmatprep.subr.bf16.mxu0 0
  %78 = vmatpush1.bf16.xpose.msra.mxu0 0
  %79 = vmatprep.subr.bf16.mxu0 0
  %80 = vmatpush1.bf16.xpose.msra.mxu0 0
  %81 = vmatprep.subr.bf16.mxu0 0
  %82 = vmatpush1.bf16.xpose.msra.mxu0 0
  %83 = vmatprep.subr.bf16.mxu0 0
  %84 = vmatpush1.bf16.xpose.msra.mxu0 0
  %85 = vmatprep.subr.bf16.mxu0 0
  %86 = vmatpush1.bf16.xpose.msra.mxu0 0
  %87 = vmatprep.subr.bf16.mxu0 0
  %88 = vmatpush1.bf16.xpose.msra.mxu0 0
  %89 = vmatprep.subr.bf16.mxu0 0
  %90 = vmatpush1.bf16.xpose.msra.mxu0 0
  %91 = vmatprep.mubr.bf16.mxu0 0
  %92 = vmatmul.mubr.bf16.gmra.mrb[0].mxu0 %v16
  %v93 = vpop.f32.mrb[0].mxu0
  %v94 = vadd.f32 0.0, %v93
  %v95 = vpop.f32.mrb[0].mxu0
  %v96 = vpop.f32.mrb[0].mxu0
  %v97 = vpop.f32.mrb[0].mxu0
  %98 = vdwg.mxu0
  %v99 = vmul.f32 %v54, 0.17677669
  %v100 = vmul.f32 %v94, 0.17677669
  %vm101 = vcmask 27648
  %v102 = vsel %vm101, %v99, -inf
  %103 = vmax.xlane.f32.xlu0 %v102
  %v104 = vpop.xlane.xlu0 %103
  %v105 = vsel %vm101, %v100, -inf
  %106 = vmax.xlane.f32.xlu0 %v105
  %v107 = vpop.xlane.xlu0 %106
  %v108 = vsub.f32 %v99, %v104
  %v109 = vsub.f32 %v100, %v107
  %v110 = vmul.f32 %v108, 1.442695
  %v111 = vpow.pop %v110
  %v112 = vmul.f32 %v109, 1.442695
  %v113 = vpow.pop %v112
  %v114 = vsel %vm101, %v111, 0.0
  %115 = vadd.xlane.f32.xlu0 %v114
  %v116 = vpop.xlane.xlu0 %115
  %v117 = vsel %vm101, %v113, 0.0
  %118 = vadd.xlane.f32.xlu0 %v117
  %v119 = vpop.xlane.xlu0 %118
  %v120 = vrcp.pop %v116
  %v121 = vmul.f32 %v111, %v120
  %v122 = vrcp.pop %v119
  %v123 = vmul.f32 %v113, %v122
  %v124 = vpack.c.bf16 %v121, %v121
  %v125 = vpack.c.bf16 %v123, %v123
  %v126 = vld [vmem:[%s2] sm:$0x3]
  %v127 = vld [vmem:[%s2 + $0x2] sm:$0x3]
  %vm128 = vcmask 31744
  %v130 = vsel %vm128, %v124, 0
  %vm132 = vcmask 1041408
  %v134 = vsel %vm132, %v126, 0
  %136 = vmatprep.subr.bf16.mxu0 0
  %137 = vmatpush1.bf16.msra.mxu0 %v134
  %138 = vmatprep.subr.bf16.mxu0 0
  %139 = vmatpush1.bf16.msra.mxu0 0
  %140 = vmatprep.subr.bf16.mxu0 0
  %141 = vmatpush1.bf16.msra.mxu0 0
  %142 = vmatprep.subr.bf16.mxu0 0
  %143 = vmatpush1.bf16.msra.mxu0 0
  %144 = vmatprep.subr.bf16.mxu0 0
  %145 = vmatpush1.bf16.msra.mxu0 0
  %146 = vmatprep.subr.bf16.mxu0 0
  %147 = vmatpush1.bf16.msra.mxu0 0
  %148 = vmatprep.subr.bf16.mxu0 0
  %149 = vmatpush1.bf16.msra.mxu0 0
  %150 = vmatprep.subr.bf16.mxu0 0
  %151 = vmatpush1.bf16.msra.mxu0 0
  %152 = vmatprep.subr.bf16.mxu0 0
  %153 = vmatpush1.bf16.msra.mxu0 0
  %154 = vmatprep.subr.bf16.mxu0 0
  %155 = vmatpush1.bf16.msra.mxu0 0
  %156 = vmatprep.subr.bf16.mxu0 0
  %157 = vmatpush1.bf16.msra.mxu0 0
  %158 = vmatprep.subr.bf16.mxu0 0
  %159 = vmatpush1.bf16.msra.mxu0 0
  %160 = vmatprep.subr.bf16.mxu0 0
  %161 = vmatpush1.bf16.msra.mxu0 0
  %162 = vmatprep.subr.bf16.mxu0 0
  %163 = vmatpush1.bf16.msra.mxu0 0
  %164 = vmatprep.subr.bf16.mxu0 0
  %165 = vmatpush1.bf16.msra.mxu0 0
  %166 = vmatprep.subr.bf16.mxu0 0
  %167 = vmatpush1.bf16.msra.mxu0 0
  %168 = vmatprep.mubr.bf16.mxu0 0
  %169 = vmatmul.mubr.bf16.gmra.mrb[0].mxu0 %v130
  %v170 = vpop.f32.mrb[0].mxu0
  %v171 = vadd.f32 0.0, %v170
  %v172 = vpop.f32.mrb[0].mxu0
  %v173 = vpop.f32.mrb[0].mxu0
  %v174 = vpop.f32.mrb[0].mxu0
  %175 = vdwg.mxu0
  %v177 = vsel %vm128, %v125, 0
  %v180 = vsel %vm132, %v127, 0
  %182 = vmatprep.subr.bf16.mxu0 0
  %183 = vmatpush1.bf16.msra.mxu0 %v180
  %184 = vmatprep.subr.bf16.mxu0 0
  %185 = vmatpush1.bf16.msra.mxu0 0
  %186 = vmatprep.subr.bf16.mxu0 0
  %187 = vmatpush1.bf16.msra.mxu0 0
  %188 = vmatprep.subr.bf16.mxu0 0
  %189 = vmatpush1.bf16.msra.mxu0 0
  %190 = vmatprep.subr.bf16.mxu0 0
  %191 = vmatpush1.bf16.msra.mxu0 0
  %192 = vmatprep.subr.bf16.mxu0 0
  %193 = vmatpush1.bf16.msra.mxu0 0
  %194 = vmatprep.subr.bf16.mxu0 0
  %195 = vmatpush1.bf16.msra.mxu0 0
  %196 = vmatprep.subr.bf16.mxu0 0
  %197 = vmatpush1.bf16.msra.mxu0 0
  %198 = vmatprep.subr.bf16.mxu0 0
  %199 = vmatpush1.bf16.msra.mxu0 0
  %200 = vmatprep.subr.bf16.mxu0 0
  %201 = vmatpush1.bf16.msra.mxu0 0
  %202 = vmatprep.subr.bf16.mxu0 0
  %203 = vmatpush1.bf16.msra.mxu0 0
  %204 = vmatprep.subr.bf16.mxu0 0
  %205 = vmatpush1.bf16.msra.mxu0 0
  %206 = vmatprep.subr.bf16.mxu0 0
  %207 = vmatpush1.bf16.msra.mxu0 0
  %208 = vmatprep.subr.bf16.mxu0 0
  %209 = vmatpush1.bf16.msra.mxu0 0
  %210 = vmatprep.subr.bf16.mxu0 0
  %211 = vmatpush1.bf16.msra.mxu0 0
  %212 = vmatprep.subr.bf16.mxu0 0
  %213 = vmatpush1.bf16.msra.mxu0 0
  %214 = vmatprep.mubr.bf16.mxu0 0
  %215 = vmatmul.mubr.bf16.gmra.mrb[0].mxu0 %v177
  %v216 = vpop.f32.mrb[0].mxu0
  %v217 = vadd.f32 0.0, %v216
  %v218 = vpop.f32.mrb[0].mxu0
  %v219 = vpop.f32.mrb[0].mxu0
  %v220 = vpop.f32.mrb[0].mxu0
  %221 = vdwg.mxu0
  %222 = vst [vmem:[%s3] sm:$0xf] %v171
  %223 = vst [vmem:[%s3 + $0x4] sm:$0xf] %v217
  // Predicated region
  $region14: #{forward.39} parent=0 // pred_check
    _
  $region15: #{forward.39} parent=0 // pred_check_branch
    %225 = sbr.rel (0) target = $region17
  $region16: #{forward.39} parent=0 // pred_region
    _
  $region17: #{forward.39} parent=0 // pred_fallthru
    _
  // Predicated region
  $region18: #{forward.39} parent=0 // pred_check
    _
  $region19: #{forward.39} parent=0 // pred_check_branch
    %227 = sbr.rel (0) target = $region21
  $region20: #{forward.39} parent=0 // pred_region
    _
  $region21: #{forward.39} parent=0 // pred_fallthru
    _

// kernel: forward.40
$region0: #{forward.40}
  #allocation0 [shape = 'u32[]', space=smem, size = 0x4, offset = 0x4, fixed_abs, tag = 'smem constant byte address 0x4 - core index']
  #allocation1 [shape = 'u32[144,128]{1,0:T(1,128)}', space=vmem, size = 0x12000, scoped, tag = 'internal scratch']
  #allocation2 [shape = 'f32[8,128]{1,0:T(8,128)}', space=vmem, size = 0x1000, scoped, tag = 'scratch operand']
  %s0 = inlined_call_operand.vmem [shape: bf16[8,128], index: 0, kind: input, shape index: {}]
  %s1 = inlined_call_operand.vmem [shape: bf16[128,128], index: 1, kind: input, shape index: {}]
  %s2 = inlined_call_operand.vmem [shape: f32[1,128], index: 2, kind: input, shape index: {}]
  %s3 = inlined_call_operand.vmem [shape: f32[8,128], index: 3, kind: input, shape index: {}]
  %s4 = inlined_call_operand.vmem [shape: f32[8,128], index: 4, kind: output, shape index: {}]
  %s5 = sld [smem:[#allocation0]]
  $region34: #{forward.40} parent=0
    _
  %s7 = ssub.s32 1, %s5
  %s8 = scalar_select 0, %s7, %s5
  // Predicated region
  $region2: #{forward.40} parent=0 // pred_check
    _
  $region3: #{forward.40} parent=0 // pred_check_branch
    %10 = sbr.rel (0) target = $region5
  $region4: #{forward.40} parent=0 // pred_region
    _
  $region5: #{forward.40} parent=0 // pred_fallthru
    _
  // Predicated region
  $region6: #{forward.40} parent=0 // pred_check
    _
  $region7: #{forward.40} parent=0 // pred_check_branch
    %12 = sbr.rel (0) target = $region9
  $region8: #{forward.40} parent=0 // pred_region
    _
  $region9: #{forward.40} parent=0 // pred_fallthru
    _
  // Predicated region
  $region10: #{forward.40} parent=0 // pred_check
    _
  $region11: #{forward.40} parent=0 // pred_check_branch
    %14 = sbr.rel (0) target = $region13
  $region12: #{forward.40} parent=0 // pred_region
    _
  $region13: #{forward.40} parent=0 // pred_fallthru
    _
  // Predicated region
  $region14: #{forward.40} parent=0 // pred_check
    _
  $region15: #{forward.40} parent=0 // pred_check_branch
    %16 = sbr.rel (0) target = $region17
  $region16: #{forward.40} parent=0 // pred_region
    _
  $region17: #{forward.40} parent=0 // pred_fallthru
    _
  %p18 = scmp.eq.s32.totalorder 0, 0
  // Predicated region
  $region18: #{forward.40} parent=0 // pred_check
    %p19 = pneg %p18
  $region19: #{forward.40} parent=0 // pred_check_branch
    %21 = sbr.rel (%p19) target = $region21
  $region20: #{forward.40} parent=0 // pred_region
    %22 = vst [vmem:[#allocation2] sm:$0xff] 0.0
  $region21: #{forward.40} parent=0 // pred_fallthru
    _
  %v23 = vld [vmem:[#allocation2] sm:$0xff]
  %v24 = vld [vmem:[%s0] sm:$0xf]
  %v25 = vld [vmem:[%s1] sm:$0xf]
  %v26 = vld [vmem:[%s1 + $0x4] sm:$0xf]
  %v27 = vld [vmem:[%s1 + $0x8] sm:$0xf]
  %v28 = vld [vmem:[%s1 + $0xc] sm:$0xf]
  %v29 = vld [vmem:[%s1 + $0x10] sm:$0xf]
  %v30 = vld [vmem:[%s1 + $0x14] sm:$0xf]
  %v31 = vld [vmem:[%s1 + $0x18] sm:$0xf]
  %v32 = vld [vmem:[%s1 + $0x1c] sm:$0xf]
  %v33 = vld [vmem:[%s1 + $0x20] sm:$0xf]
  %v34 = vld [vmem:[%s1 + $0x24] sm:$0xf]
  %v35 = vld [vmem:[%s1 + $0x28] sm:$0xf]
  %v36 = vld [vmem:[%s1 + $0x2c] sm:$0xf]
  %v37 = vld [vmem:[%s1 + $0x30] sm:$0xf]
  %v38 = vld [vmem:[%s1 + $0x34] sm:$0xf]
  %v39 = vld [vmem:[%s1 + $0x38] sm:$0xf]
  %v40 = vld [vmem:[%s1 + $0x3c] sm:$0xf]
  %v57 = vunpack.c.l.b16 %v25
  %v58 = vunpack.c.l.b16 %v26
  %v59 = vunpack.c.l.b16 %v27
  %v60 = vunpack.c.l.b16 %v28
  %v61 = vunpack.c.l.b16 %v29
  %v62 = vunpack.c.l.b16 %v30
  %v63 = vunpack.c.l.b16 %v31
  %v64 = vunpack.c.l.b16 %v32
  %v65 = vunpack.c.l.b16 %v33
  %v66 = vunpack.c.l.b16 %v34
  %v67 = vunpack.c.l.b16 %v35
  %v68 = vunpack.c.l.b16 %v36
  %v69 = vunpack.c.l.b16 %v37
  %v70 = vunpack.c.l.b16 %v38
  %v71 = vunpack.c.l.b16 %v39
  %v72 = vunpack.c.l.b16 %v40
  %v73 = vpack.c.b16 %v58, %v57
  %v74 = vpack.c.b16 %v60, %v59
  %v75 = vpack.c.b16 %v62, %v61
  %v76 = vpack.c.b16 %v64, %v63
  %v77 = vpack.c.b16 %v66, %v65
  %v78 = vpack.c.b16 %v68, %v67
  %v79 = vpack.c.b16 %v70, %v69
  %v80 = vpack.c.b16 %v72, %v71
  %89 = vmatprep.subr.bf16.mxu0 0
  %90 = vmatpush1.bf16.msra.mxu0 %v73
  %91 = vmatprep.subr.bf16.mxu0 0
  %92 = vmatpush1.bf16.msra.mxu0 %v74
  %93 = vmatprep.subr.bf16.mxu0 0
  %94 = vmatpush1.bf16.msra.mxu0 %v75
  %95 = vmatprep.subr.bf16.mxu0 0
  %96 = vmatpush1.bf16.msra.mxu0 %v76
  %97 = vmatprep.subr.bf16.mxu0 0
  %98 = vmatpush1.bf16.msra.mxu0 %v77
  %99 = vmatprep.subr.bf16.mxu0 0
  %100 = vmatpush1.bf16.msra.mxu0 %v78
  %101 = vmatprep.subr.bf16.mxu0 0
  %102 = vmatpush1.bf16.msra.mxu0 %v79
  %103 = vmatprep.subr.bf16.mxu0 0
  %104 = vmatpush1.bf16.msra.mxu0 %v80
  %105 = vmatprep.subr.bf16.mxu0 0
  %106 = vmatpush1.bf16.msra.mxu0 0
  %107 = vmatprep.subr.bf16.mxu0 0
  %108 = vmatpush1.bf16.msra.mxu0 0
  %109 = vmatprep.subr.bf16.mxu0 0
  %110 = vmatpush1.bf16.msra.mxu0 0
  %111 = vmatprep.subr.bf16.mxu0 0
  %112 = vmatpush1.bf16.msra.mxu0 0
  %113 = vmatprep.subr.bf16.mxu0 0
  %114 = vmatpush1.bf16.msra.mxu0 0
  %115 = vmatprep.subr.bf16.mxu0 0
  %116 = vmatpush1.bf16.msra.mxu0 0
  %117 = vmatprep.subr.bf16.mxu0 0
  %118 = vmatpush1.bf16.msra.mxu0 0
  %119 = vmatprep.subr.bf16.mxu0 0
  %120 = vmatpush1.bf16.msra.mxu0 0
  %121 = vmatprep.mubr.bf16.mxu0 0
  %122 = vmatmul.mubr.bf16.gmra.mrb[0].mxu0 %v24
  %v123 = vpop.f32.mrb[0].mxu0
  %v124 = vadd.f32 0.0, %v123
  %v125 = vpop.f32.mrb[0].mxu0
  %v126 = vpop.f32.mrb[0].mxu0
  %v127 = vpop.f32.mrb[0].mxu0
  %128 = vdwg.mxu0
  %v129 = vadd.f32 %v23, %v124
  %130 = vst [vmem:[#allocation2] sm:$0xff] %v129
  // Predicated region
  $region22: #{forward.40} parent=0 // pred_check
    %p131 = pneg %p18
  $region23: #{forward.40} parent=0 // pred_check_branch
    %133 = sbr.rel (%p131) target = $region25
  $region24: #{forward.40} parent=0 // pred_region
    %v134 = vld [vmem:[#allocation2] sm:$0xff]
    %v135 = vld [vmem:[%s2] sm:$0x1]
    %v137 = vlaneseq
    %v138 = vshrl.u32 %v137, 7
    %v139 = vsub.s32 0, %v138
    %v140 = vrot.slane %v135, %v139
    %v142 = vadd.f32 %v134, %v140
    %v143 = vld [vmem:[%s3] sm:$0xff]
    %v144 = vadd.f32 %v142, %v143
    %145 = vst [vmem:[%s4] sm:$0xff] %v144
  $region25: #{forward.40} parent=0 // pred_fallthru
    _
  // Predicated region
  $region26: #{forward.40} parent=0 // pred_check
    _
  $region27: #{forward.40} parent=0 // pred_check_branch
    %147 = sbr.rel (0) target = $region29
  $region28: #{forward.40} parent=0 // pred_region
    _
  $region29: #{forward.40} parent=0 // pred_fallthru
    _
  // Predicated region
  $region30: #{forward.40} parent=0 // pred_check
    _
  $region31: #{forward.40} parent=0 // pred_check_branch
    %149 = sbr.rel (0) target = $region33
  $region32: #{forward.40} parent=0 // pred_region
    _
  $region33: #{forward.40} parent=0 // pred_fallthru
    _

// kernel: forward.41
$region0: #{forward.41}
  #allocation0 [shape = 'u32[]', space=smem, size = 0x4, offset = 0x4, fixed_abs, tag = 'smem constant byte address 0x4 - core index']
  #allocation1 [shape = 'u32[144,128]{1,0:T(1,128)}', space=vmem, size = 0x12000, scoped, tag = 'internal scratch']
  %s0 = inlined_call_operand.vmem [shape: f32[8,32], index: 0, kind: input, shape index: {}]
  %s1 = inlined_call_operand.vmem [shape: f32[1,32], index: 1, kind: input, shape index: {}]
  %s2 = inlined_call_operand.vmem [shape: f32[1,32], index: 2, kind: input, shape index: {}]
  %s3 = inlined_call_operand.vmem [shape: bf16[32,2048], index: 3, kind: input, shape index: {}]
  %s4 = inlined_call_operand.vmem [shape: f32[1,2048], index: 4, kind: input, shape index: {}]
  %s5 = inlined_call_operand.vmem [shape: f32[8,2048], index: 5, kind: output, shape index: {}]
  %s6 = sld [smem:[#allocation0]]
  $region76: #{forward.41} parent=0
    _
  %s8 = ssub.s32 1, %s6
  %s9 = scalar_select 0, %s8, %s6
  $region1: #{forward.41} parent=0
    #allocation2 [shape = 'u8[65536]{0}', space=vmem, size = 0x10000, scoped, tag = 'input window, operand 3']
    loop: start=0, step=1, limit=6
    $region2: #{forward.41} parent=1 // loop_pre_header
      _
    $region3: #{forward.41} parent=1 // loop_header
      %s11 = sphi 0, %s15
      %p12 = scmp.ge.s32.totalorder %s11, 6
      %s18 = sphi 0, %s30
      %s19 = sphi 0, %s26
      %s20 = sphi 0, %s18
      %s21 = sphi 0, %s19
      %s22 = sphi 0, %s20
      %s23 = sphi 0, %s21
      %s33 = sphi 0, %s35
      %s36 = sphi 0, %s33
      %s37 = sphi 0, %s36
      %s53 = sphi 0, %s37
      %s57 = sphi 0, %s57
      %s59 = sphi 0, %s57
      %s60 = sphi 0, %s59
      %s74 = sphi 0, %s60
      %s78 = sphi 0, %s78
      %s80 = sphi 0, %s78
      %s81 = sphi 0, %s80
      %s95 = sphi 0, %s81
      %s101 = sphi 0, %s103
      %s104 = sphi 0, %s101
      %s105 = sphi 0, %s104
      %s121 = sphi 0, %s105
      %s127 = sphi 0, %s129
      %s130 = sphi 0, %s127
      %s131 = sphi 0, %s130
      %s147 = sphi 0, %s131
      %s155 = sphi 0, %s157
      %s158 = sphi 0, %s155
      %s159 = sphi 0, %s158
      %s175 = sphi 0, %s159
    $region4: #{forward.41} parent=1 // loop_header_branch
      %14 = sbr.rel (%p12) target = $region8
    $region5: #{forward.41} parent=1 // loop_body
      %s16 = ssub.s32 %s11, 1
      %s17 = ssub.s32 %s11, 2
      %s24 = sadd.s32 1, %s19
      %p25 = scmp.ge.s32.totalorder %s24, 4
      %s26 = scalar_select %p25, 0, %s24
      %s27 = sadd.s32 1, %s18
      %s28 = scalar_select %p25, %s27, %s18
      %p29 = scmp.ge.s32.totalorder %s28, 1
      %s30 = scalar_select %p29, 0, %s28
      %s31 = ssub.s32 %s18, %s30
      %p32 = scmp.eq.s32.totalorder %s31, 0
      %s34 = sadd.s32 %s33, 1
      %s35 = scalar_select %p32, %s33, %s34
      %p38 = pneg %p32
      %p39 = scmp.eq.s32.totalorder %s11, 3
      %p40 = por %p38, %p39
      %p41 = scmp.ne.s32.totalorder %s33, %s36
      %p42 = scmp.eq.s32.totalorder %s11, 0
      %p43 = por %p41, %p42
      %p44 = scmp.ne.s32.totalorder %s33, %s36
      %p45 = scmp.eq.s32.totalorder %s16, 3
      %p46 = por %p44, %p45
      %p47 = scmp.ne.s32.totalorder %s36, %s37
      %p48 = scmp.eq.s32.totalorder %s16, 0
      %p49 = por %p47, %p48
      %p50 = scmp.ne.s32.totalorder %s36, %s37
      %p51 = scmp.eq.s32.totalorder %s17, 3
      %p52 = por %p50, %p51
      %p54 = scmp.ne.s32.totalorder %s37, %s53
      %p55 = scmp.eq.s32.totalorder %s17, 0
      %p56 = por %p54, %p55
      %s58 = sadd.s32 %s57, 1
      %p61 = scmp.eq.s32.totalorder %s11, 3
      %p62 = scmp.ne.s32.totalorder %s57, %s59
      %p63 = scmp.eq.s32.totalorder %s11, 0
      %p64 = por %p62, %p63
      %p65 = scmp.ne.s32.totalorder %s57, %s59
      %p66 = scmp.eq.s32.totalorder %s16, 3
      %p67 = por %p65, %p66
      %p68 = scmp.ne.s32.totalorder %s59, %s60
      %p69 = scmp.eq.s32.totalorder %s16, 0
      %p70 = por %p68, %p69
      %p71 = scmp.ne.s32.totalorder %s59, %s60
      %p72 = scmp.eq.s32.totalorder %s17, 3
      %p73 = por %p71, %p72
      %p75 = scmp.ne.s32.totalorder %s60, %s74
      %p76 = scmp.eq.s32.totalorder %s17, 0
      %p77 = por %p75, %p76
      %s79 = sadd.s32 %s78, 1
      %p82 = scmp.eq.s32.totalorder %s11, 3
      %p83 = scmp.ne.s32.totalorder %s78, %s80
      %p84 = scmp.eq.s32.totalorder %s11, 0
      %p85 = por %p83, %p84
      %p86 = scmp.ne.s32.totalorder %s78, %s80
      %p87 = scmp.eq.s32.totalorder %s16, 3
      %p88 = por %p86, %p87
      %p89 = scmp.ne.s32.totalorder %s80, %s81
      %p90 = scmp.eq.s32.totalorder %s16, 0
      %p91 = por %p89, %p90
      %p92 = scmp.ne.s32.totalorder %s80, %s81
      %p93 = scmp.eq.s32.totalorder %s17, 3
      %p94 = por %p92, %p93
      %p96 = scmp.ne.s32.totalorder %s81, %s95
      %p97 = scmp.eq.s32.totalorder %s17, 0
      %p98 = por %p96, %p97
      %s99 = ssub.s32 %s19, %s26
      %p100 = scmp.eq.s32.totalorder %s99, 0
      %s102 = sadd.s32 %s101, 1
      %s103 = scalar_select %p100, %s101, %s102
      %p106 = pneg %p100
      %p107 = scmp.eq.s32.totalorder %s11, 3
      %p108 = por %p106, %p107
      %p109 = scmp.ne.s32.totalorder %s101, %s104
      %p110 = scmp.eq.s32.totalorder %s11, 0
      %p111 = por %p109, %p110
      %p112 = scmp.ne.s32.totalorder %s101, %s104
      %p113 = scmp.eq.s32.totalorder %s16, 3
      %p114 = por %p112, %p113
      %p115 = scmp.ne.s32.totalorder %s104, %s105
      %p116 = scmp.eq.s32.totalorder %s16, 0
      %p117 = por %p115, %p116
      %p118 = scmp.ne.s32.totalorder %s104, %s105
      %p119 = scmp.eq.s32.totalorder %s17, 3
      %p120 = por %p118, %p119
      %p122 = scmp.ne.s32.totalorder %s105, %s121
      %p123 = scmp.eq.s32.totalorder %s17, 0
      %p124 = por %p122, %p123
      %s125 = ssub.s32 %s19, %s26
      %p126 = scmp.eq.s32.totalorder %s125, 0
      %s128 = sadd.s32 %s127, 1
      %s129 = scalar_select %p126, %s127, %s128
      %p132 = pneg %p126
      %p133 = scmp.eq.s32.totalorder %s11, 3
      %p134 = por %p132, %p133
      %p135 = scmp.ne.s32.totalorder %s127, %s130
      %p136 = scmp.eq.s32.totalorder %s11, 0
      %p137 = por %p135, %p136
      %p138 = scmp.ne.s32.totalorder %s127, %s130
      %p139 = scmp.eq.s32.totalorder %s16, 3
      %p140 = por %p138, %p139
      %p141 = scmp.ne.s32.totalorder %s130, %s131
      %p142 = scmp.eq.s32.totalorder %s16, 0
      %p143 = por %p141, %p142
      %p144 = scmp.ne.s32.totalorder %s130, %s131
      %p145 = scmp.eq.s32.totalorder %s17, 3
      %p146 = por %p144, %p145
      %p148 = scmp.ne.s32.totalorder %s131, %s147
      %p149 = scmp.eq.s32.totalorder %s17, 0
      %p150 = por %p148, %p149
      %s151 = ssub.s32 %s18, %s30
      %s152 = ssub.s32 %s19, %s26
      %s153 = sor.u32 %s151, %s152
      %p154 = scmp.eq.s32.totalorder %s153, 0
      %s156 = sadd.s32 %s155, 1
      %s157 = scalar_select %p154, %s155, %s156
      %p160 = pneg %p154
      %p161 = scmp.eq.s32.totalorder %s11, 3
      %p162 = por %p160, %p161
      %p163 = scmp.ne.s32.totalorder %s155, %s158
      %p164 = scmp.eq.s32.totalorder %s11, 0
      %p165 = por %p163, %p164
      %p166 = scmp.ne.s32.totalorder %s155, %s158
      %p167 = scmp.eq.s32.totalorder %s16, 3
      %p168 = por %p166, %p167
      %p169 = scmp.ne.s32.totalorder %s158, %s159
      %p170 = scmp.eq.s32.totalorder %s16, 0
      %p171 = por %p169, %p170
      %p172 = scmp.ne.s32.totalorder %s158, %s159
      %p173 = scmp.eq.s32.totalorder %s17, 3
      %p174 = por %p172, %p173
      %p176 = scmp.ne.s32.totalorder %s159, %s175
      %p177 = scmp.eq.s32.totalorder %s17, 0
      %p178 = por %p176, %p177
      %p179 = scmp.le.s32.totalorder 1, %s11
      %p180 = scmp.lt.s32.totalorder %s11, 5
      %p181 = pnand %p179, %p180
      %p182 = pneg %p181
      // Predicated region
      $region9: #{forward.41} parent=5 // pred_check
        _
      $region10: #{forward.41} parent=5 // pred_check_branch
        %184 = sbr.rel (%p181) target = $region12
      $region11: #{forward.41} parent=5 // pred_region
        %s185 = ssub.s32 %s11, 1
        // Predicated region
        $region13: #{forward.41} parent=11 // pred_check
          %p186 = pneg %p49
        $region14: #{forward.41} parent=11 // pred_check_branch
          %188 = sbr.rel (%p186) target = $region16
        $region15: #{forward.41} parent=11 // pred_region
          %p189 = scmp.lt.s32.totalorder %s20, 0
          %s190 = scalar_select %p189, %s20, 0
          %s191 = smul.addr %s190, 8
          %s192 = scalar_lea.vmem %s0, %s191
        $region16: #{forward.41} parent=11 // pred_fallthru
          _
        // Predicated region
        $region17: #{forward.41} parent=11 // pred_check
          %p193 = pneg %p70
        $region18: #{forward.41} parent=11 // pred_check_branch
          %195 = sbr.rel (%p193) target = $region20
        $region19: #{forward.41} parent=11 // pred_region
          _
        $region20: #{forward.41} parent=11 // pred_fallthru
          _
        // Predicated region
        $region21: #{forward.41} parent=11 // pred_check
          %p196 = pneg %p91
        $region22: #{forward.41} parent=11 // pred_check_branch
          %198 = sbr.rel (%p196) target = $region24
        $region23: #{forward.41} parent=11 // pred_region
          _
        $region24: #{forward.41} parent=11 // pred_fallthru
          _
      $region12: #{forward.41} parent=5 // pred_fallthru
        _
      %p199 = scmp.lt.s32.totalorder %s11, 4
      // Predicated region
      $region25: #{forward.41} parent=5 // pred_check
        %p200 = pneg %p199
      $region26: #{forward.41} parent=5 // pred_check_branch
        %202 = sbr.rel (%p200) target = $region28
      $region27: #{forward.41} parent=5 // pred_region
        // Predicated region
        $region29: #{forward.41} parent=27 // pred_check
          %p203 = pneg %p111
        $region30: #{forward.41} parent=27 // pred_check_branch
          %205 = sbr.rel (%p203) target = $region32
        $region31: #{forward.41} parent=27 // pred_region
          %s206 = sand.u32 %s101, 1
          %s207 = sand.u32 %s101, 1
          %s208 = smul.addr %s207, 64
          %s209 = scalar_lea.vmem [#allocation2], %s208
          %s210 = smul.u32 4, %s19
          %s211 = smul.addr %s210, 4
          %s212 = scalar_lea.vmem %s3, %s211
          // Predicated region
          $region33: #{forward.41} parent=31 // pred_check
            _
          $region34: #{forward.41} parent=31 // pred_check_branch
            %214 = sbr.rel (0) target = $region36
          $region35: #{forward.41} parent=31 // pred_region
            // Predicated region
            $region37: #{forward.41} parent=35 // pred_check
              _
            $region38: #{forward.41} parent=35 // pred_check_branch
              %216 = sbr.rel (0) target = $region40
            $region39: #{forward.41} parent=35 // pred_region
              loop: start=0, step=1, limit=1
              $region41: #{forward.41} parent=39 // loop_pre_header
                _
              $region42: #{forward.41} parent=39 // loop_header
                %s218 = sphi 0, %s222
                %p219 = scmp.ge.s32.totalorder %s218, 1
                %s223 = sphi %s212, %s212
                %s224 = sphi %s209, %s209
              $region43: #{forward.41} parent=39 // loop_header_branch
                %221 = sbr.rel (%p219) target = $region47
              $region44: #{forward.41} parent=39 // loop_body
                %v225 = vld [vmem:[%s223] sm:$0xff]
                %226 = vst [vmem:[%s224] sm:$0xff] %v225
                %v227 = vld [vmem:[%s223 + $0x8] sm:$0xff]
                %228 = vst [vmem:[%s224 + $0x8] sm:$0xff] %v227
                %v229 = vld [vmem:[%s223 + $0x40] sm:$0xff]
                %230 = vst [vmem:[%s224 + $0x10] sm:$0xff] %v229
                %v231 = vld [vmem:[%s223 + $0x48] sm:$0xff]
                %232 = vst [vmem:[%s224 + $0x18] sm:$0xff] %v231
                %v233 = vld [vmem:[%s223 + $0x80] sm:$0xff]
                %234 = vst [vmem:[%s224 + $0x20] sm:$0xff] %v233
                %v235 = vld [vmem:[%s223 + $0x88] sm:$0xff]
                %236 = vst [vmem:[%s224 + $0x28] sm:$0xff] %v235
                %v237 = vld [vmem:[%s223 + $0xc0] sm:$0xff]
                %238 = vst [vmem:[%s224 + $0x30] sm:$0xff] %v237
                %v239 = vld [vmem:[%s223 + $0xc8] sm:$0xff]
                %240 = vst [vmem:[%s224 + $0x38] sm:$0xff] %v239
              $region45: #{forward.41} parent=39 // loop_footer
                %s222 = sadd.s32 1, %s218
              $region46: #{forward.41} parent=39 // loop_footer_branch
                %217 = sbr.rel target = $region42
              $region47: #{forward.41} parent=39 // loop_exit
                _
            $region40: #{forward.41} parent=35 // pred_fallthru
              _
            // Predicated region
            $region48: #{forward.41} parent=35 // pred_check
              _
            $region49: #{forward.41} parent=35 // pred_check_branch
              %242 = sbr.rel target = $region51
            $region50: #{forward.41} parent=35 // pred_region
              _
            $region51: #{forward.41} parent=35 // pred_fallthru
              _
          $region36: #{forward.41} parent=31 // pred_fallthru
            _
          %243 = vnop
        $region32: #{forward.41} parent=27 // pred_fallthru
          _
        // Predicated region
        $region52: #{forward.41} parent=27 // pred_check
          %p244 = pneg %p137
        $region53: #{forward.41} parent=27 // pred_check_branch
          %246 = sbr.rel (%p244) target = $region55
        $region54: #{forward.41} parent=27 // pred_region
          %s247 = smul.u32 4, %s19
          %p248 = scmp.lt.s32.totalorder %s247, 15
          %s249 = scalar_select %p248, %s247, 15
          %s250 = scalar_lea.vmem %s4, %s249
          %s251 = smul.u32 4, %s19
        $region55: #{forward.41} parent=27 // pred_fallthru
          _
      $region28: #{forward.41} parent=5 // pred_fallthru
        _
      %p252 = scmp.le.s32.totalorder 1, %s11
      %p253 = scmp.lt.s32.totalorder %s11, 5
      %p254 = pnand %p252, %p253
      %p255 = pneg %p254
      // Predicated region
      $region56: #{forward.41} parent=5 // pred_check
        _
      $region57: #{forward.41} parent=5 // pred_check_branch
        %257 = sbr.rel (%p254) target = $region59
      $region58: #{forward.41} parent=5 // pred_region
        %s258 = ssub.s32 %s11, 1
        %s259 = sand.u32 %s104, 1
        %s260 = sand.u32 %s104, 1
        %s261 = smul.addr %s260, 64
        %s262 = scalar_lea.vmem [#allocation2], %s261
        // Predicated region
        $region60: #{forward.41} parent=58 // pred_check
          %p263 = pneg %p117
        $region61: #{forward.41} parent=58 // pred_check_branch
          %265 = sbr.rel (%p263) target = $region63
        $region62: #{forward.41} parent=58 // pred_region
          _
        $region63: #{forward.41} parent=58 // pred_fallthru
          _
        %p266 = scmp.lt.s32.totalorder %s20, 0
        %s267 = scalar_select %p266, %s20, 0
        %s268 = smul.addr %s267, 8
        %s269 = scalar_lea.vmem %s0, %s268
        %p270 = pneg %p49
        %p271 = pneg %p46
        %p272 = pneg %p70
        %p273 = pneg %p67
        %p274 = pneg %p91
        %p275 = pneg %p88
        %s276 = sand.u32 %s104, 1
        %s277 = sand.u32 %s104, 1
        %s278 = smul.addr %s277, 64
        %s279 = scalar_lea.vmem [#allocation2], %s278
        %p280 = pneg %p117
        %p281 = pneg %p114
        %s282 = smul.u32 4, %s21
        %p283 = scmp.lt.s32.totalorder %s282, 15
        %s284 = scalar_select %p283, %s282, 15
        %s285 = scalar_lea.vmem %s4, %s284
        %p286 = pneg %p143
        %p287 = pneg %p140
        %p288 = pneg %p171
        %p289 = pneg %p168
        %s290 = smul.u32 4, %s21
        %p291 = scmp.lt.s32.totalorder %s20, 0
        %s292 = scalar_select %p291, %s20, 0
        %p293 = scmp.lt.s32.totalorder %s290, 15
        %s294 = scalar_select %p293, %s290, 15
        %s295 = smul.addr %s292, 16
        %s296 = sadd.s32 %s294, %s295
        %s297 = smul.addr %s296, 8
        %s298 = scalar_lea.vmem %s5, %s297
        %p299 = scmp.lt.s32.totalorder %s20, 0
        %s300 = scalar_select %p299, %s20, 0
        %s301 = smul.addr %s300, 8
        %s302 = scalar_lea.vmem %s0, %s301
        %s303 = smul.u32 4, %s21
        %s304 = smul.u32 4, %s21
        %p305 = scmp.lt.s32.totalorder %s304, 15
        %s306 = scalar_select %p305, %s304, 15
        %s307 = scalar_lea.vmem %s4, %s306
        %s308 = smul.u32 4, %s21
        %s309 = smul.u32 4, %s21
        %p310 = scmp.lt.s32.totalorder %s20, 0
        %s311 = scalar_select %p310, %s20, 0
        %p312 = scmp.lt.s32.totalorder %s309, 15
        %s313 = scalar_select %p312, %s309, 15
        %s314 = smul.addr %s311, 16
        %s315 = sadd.s32 %s313, %s314
        %s316 = smul.addr %s315, 8
        %s317 = scalar_lea.vmem %s5, %s316
        %s318 = smul.u32 4, %s21
        %v320 = vld [vmem:[%s302] sm:$0xff]
        %vm321 = vcmask 261120
        %v322 = vsel %vm321, %v320, 0.0
        %323 = vadd.xlane.f32.xlu0 %v322
        %v324 = vpop.xlane.xlu0 %323
        %v325 = vrcp.pop 32.0
        %v326 = vmul.f32 %v324, %v325
        %v327 = vsub.f32 %v320, %v326
        %v328 = vmul.f32 %v327, %v327
        %v329 = vsel %vm321, %v328, 0.0
        %330 = vadd.xlane.f32.xlu0 %v329
        %v331 = vpop.xlane.xlu0 %330
        %v332 = vmul.f32 %v331, %v325
        %v333 = vadd.f32 %v332, 1e-05
        %v334 = vrsqrt.pop %v333
        %v335 = vmul.f32 %v327, %v334
        %v336 = vld [vmem:[%s1] sm:$0x1]
        %v338 = vlaneseq
        %v339 = vshrl.u32 %v338, 7
        %v340 = vsub.s32 0, %v339
        %v341 = vrot.slane %v336, %v340
        %v343 = vmul.f32 %v335, %v341
        %v344 = vld [vmem:[%s2] sm:$0x1]
        %v346 = vlaneseq
        %v347 = vshrl.u32 %v346, 7
        %v348 = vsub.s32 0, %v347
        %v349 = vrot.slane %v344, %v348
        %v351 = vadd.f32 %v343, %v349
        %v352 = vpack.c.bf16 %v351, %v351
        %v353 = vld [vmem:[%s262] sm:$0xff]
        %v354 = vld [vmem:[%s262 + $0x8] sm:$0xff]
        %v355 = vld [vmem:[%s262 + $0x10] sm:$0xff]
        %v356 = vld [vmem:[%s262 + $0x18] sm:$0xff]
        %v357 = vld [vmem:[%s262 + $0x20] sm:$0xff]
        %v358 = vld [vmem:[%s262 + $0x28] sm:$0xff]
        %v359 = vld [vmem:[%s262 + $0x30] sm:$0xff]
        %v360 = vld [vmem:[%s262 + $0x38] sm:$0xff]
        %v361 = vld [vmem:[%s307] sm:$0xf]
        %v363 = vlaneseq
        %v364 = vshrl.u32 %v363, 7
        %v365 = vsub.s32 0, %v364
        %v366 = vrot.slane %v361, %v365
        %v367 = vlaneseq
        %v368 = vshrl.u32 %v367, 7
        %v369 = vsub.s32 1, %v368
        %v370 = vrot.slane %v361, %v369
        %v371 = vlaneseq
        %v372 = vshrl.u32 %v371, 7
        %v373 = vsub.s32 2, %v372
        %v374 = vrot.slane %v361, %v373
        %v375 = vlaneseq
        %v376 = vshrl.u32 %v375, 7
        %v377 = vsub.s32 3, %v376
        %v378 = vrot.slane %v361, %v377
        %v391 = vunpack.c.l.b16 %v353
        %v392 = vunpack.c.h.b16 %v353
        %v393 = vunpack.c.l.b16 %v354
        %v394 = vunpack.c.h.b16 %v354
        %v395 = vunpack.c.l.b16 %v355
        %v396 = vunpack.c.h.b16 %v355
        %v397 = vunpack.c.l.b16 %v356
        %v398 = vunpack.c.h.b16 %v356
        %v399 = vunpack.c.l.b16 %v357
        %v400 = vunpack.c.h.b16 %v357
        %v401 = vunpack.c.l.b16 %v358
        %v402 = vunpack.c.h.b16 %v358
        %v403 = vunpack.c.l.b16 %v359
        %v404 = vunpack.c.h.b16 %v359
        %v405 = vunpack.c.l.b16 %v360
        %v406 = vunpack.c.h.b16 %v360
        %v407 = vpack.c.b16 %v395, %v391
        %v408 = vpack.c.b16 %v396, %v392
        %v409 = vpack.c.b16 %v397, %v393
        %v410 = vpack.c.b16 %v398, %v394
        %v411 = vpack.c.b16 %v403, %v399
        %v412 = vpack.c.b16 %v404, %v400
        %v413 = vpack.c.b16 %v405, %v401
        %v414 = vpack.c.b16 %v406, %v402
        %v424 = vsel %vm321, %v352, 0
        %426 = vmatprep.subr.bf16.mxu0 %v408
        %427 = vmatpush1.bf16.msra.mxu0 %v407
        %428 = vmatprep.subr.bf16.mxu0 %v412
        %429 = vmatpush1.bf16.msra.mxu0 %v411
        %430 = vmatprep.subr.bf16.mxu0 0
        %431 = vmatpush1.bf16.msra.mxu0 0
        %432 = vmatprep.subr.bf16.mxu0 0
        %433 = vmatpush1.bf16.msra.mxu0 0
        %434 = vmatprep.subr.bf16.mxu0 0
        %435 = vmatpush1.bf16.msra.mxu0 0
        %436 = vmatprep.subr.bf16.mxu0 0
        %437 = vmatpush1.bf16.msra.mxu0 0
        %438 = vmatprep.subr.bf16.mxu0 0
        %439 = vmatpush1.bf16.msra.mxu0 0
        %440 = vmatprep.subr.bf16.mxu0 0
        %441 = vmatpush1.bf16.msra.mxu0 0
        %442 = vmatprep.subr.bf16.mxu0 0
        %443 = vmatpush1.bf16.msra.mxu0 0
        %444 = vmatprep.subr.bf16.mxu0 0
        %445 = vmatpush1.bf16.msra.mxu0 0
        %446 = vmatprep.subr.bf16.mxu0 0
        %447 = vmatpush1.bf16.msra.mxu0 0
        %448 = vmatprep.subr.bf16.mxu0 0
        %449 = vmatpush1.bf16.msra.mxu0 0
        %450 = vmatprep.subr.bf16.mxu0 0
        %451 = vmatpush1.bf16.msra.mxu0 0
        %452 = vmatprep.subr.bf16.mxu0 0
        %453 = vmatpush1.bf16.msra.mxu0 0
        %454 = vmatprep.subr.bf16.mxu0 0
        %455 = vmatpush1.bf16.msra.mxu0 0
        %456 = vmatprep.subr.bf16.mxu0 0
        %457 = vmatpush1.bf16.msra.mxu0 0
        %458 = vmatprep.mubr.bf16.mxu0 0
        %459 = vmatmul.mubr.bf16.gmra.mrb[0].mxu0 %v424
        %v460 = vpop.f32.mrb[0].mxu0
        %v461 = vadd.f32 %v366, %v460
        %v462 = vpop.f32.mrb[0].mxu0
        %v463 = vadd.f32 %v370, %v462
        %v464 = vpop.f32.mrb[0].mxu0
        %v465 = vpop.f32.mrb[0].mxu0
        %466 = vdwg.mxu0
        %467 = vmatprep.subr.bf16.mxu0 %v410
        %468 = vmatpush1.bf16.msra.mxu0 %v409
        %469 = vmatprep.subr.bf16.mxu0 %v414
        %470 = vmatpush1.bf16.msra.mxu0 %v413
        %471 = vmatprep.subr.bf16.mxu0 0
        %472 = vmatpush1.bf16.msra.mxu0 0
        %473 = vmatprep.subr.bf16.mxu0 0
        %474 = vmatpush1.bf16.msra.mxu0 0
        %475 = vmatprep.subr.bf16.mxu0 0
        %476 = vmatpush1.bf16.msra.mxu0 0
        %477 = vmatprep.subr.bf16.mxu0 0
        %478 = vmatpush1.bf16.msra.mxu0 0
        %479 = vmatprep.subr.bf16.mxu0 0
        %480 = vmatpush1.bf16.msra.mxu0 0
        %481 = vmatprep.subr.bf16.mxu0 0
        %482 = vmatpush1.bf16.msra.mxu0 0
        %483 = vmatprep.subr.bf16.mxu0 0
        %484 = vmatpush1.bf16.msra.mxu0 0
        %485 = vmatprep.subr.bf16.mxu0 0
        %486 = vmatpush1.bf16.msra.mxu0 0
        %487 = vmatprep.subr.bf16.mxu0 0
        %488 = vmatpush1.bf16.msra.mxu0 0
        %489 = vmatprep.subr.bf16.mxu0 0
        %490 = vmatpush1.bf16.msra.mxu0 0
        %491 = vmatprep.subr.bf16.mxu0 0
        %492 = vmatpush1.bf16.msra.mxu0 0
        %493 = vmatprep.subr.bf16.mxu0 0
        %494 = vmatpush1.bf16.msra.mxu0 0
        %495 = vmatprep.subr.bf16.mxu0 0
        %496 = vmatpush1.bf16.msra.mxu0 0
        %497 = vmatprep.subr.bf16.mxu0 0
        %498 = vmatpush1.bf16.msra.mxu0 0
        %499 = vmatprep.mubr.bf16.mxu0 0
        %500 = vmatmul.mubr.bf16.gmra.mrb[0].mxu0 %v424
        %v501 = vpop.f32.mrb[0].mxu0
        %v502 = vadd.f32 %v374, %v501
        %v503 = vpop.f32.mrb[0].mxu0
        %v504 = vadd.f32 %v378, %v503
        %v505 = vpop.f32.mrb[0].mxu0
        %v506 = vpop.f32.mrb[0].mxu0
        %507 = vdwg.mxu0
        %v508 = vmax.f32 %v461, 0.0
        %v509 = vmax.f32 %v463, 0.0
        %v510 = vmax.f32 %v502, 0.0
        %v511 = vmax.f32 %v504, 0.0
        %512 = vst [vmem:[%s317] sm:$0xff] %v508
        %513 = vst [vmem:[%s317 + $0x8] sm:$0xff] %v509
        %514 = vst [vmem:[%s317 + $0x10] sm:$0xff] %v510
        %515 = vst [vmem:[%s317 + $0x18] sm:$0xff] %v511
        %s516 = smul.u32 4, %s21
        %p517 = scmp.lt.s32.totalorder %s20, 0
        %s518 = scalar_select %p517, %s20, 0
        %p519 = scmp.lt.s32.totalorder %s516, 15
        %s520 = scalar_select %p519, %s516, 15
        %s521 = smul.addr %s518, 16
        %s522 = sadd.s32 %s520, %s521
        %s523 = smul.addr %s522, 8
        %s524 = scalar_lea.vmem %s5, %s523
        // Predicated region
        $region64: #{forward.41} parent=58 // pred_check
          %p525 = pneg %p168
        $region65: #{forward.41} parent=58 // pred_check_branch
          %527 = sbr.rel (%p525) target = $region67
        $region66: #{forward.41} parent=58 // pred_region
          %s528 = smul.u32 4, %s21
        $region67: #{forward.41} parent=58 // pred_fallthru
          _
      $region59: #{forward.41} parent=5 // pred_fallthru
        _
      %p529 = scmp.le.s32.totalorder 2, %s11
      // Predicated region
      $region68: #{forward.41} parent=5 // pred_check
        %p530 = pneg %p529
      $region69: #{forward.41} parent=5 // pred_check_branch
        %532 = sbr.rel (%p530) target = $region71
      $region70: #{forward.41} parent=5 // pred_region
        %s533 = ssub.s32 %s11, 2
        // Predicated region
        $region72: #{forward.41} parent=70 // pred_check
          %p534 = pneg %p174
        $region73: #{forward.41} parent=70 // pred_check_branch
          %536 = sbr.rel (%p534) target = $region75
        $region74: #{forward.41} parent=70 // pred_region
          %s537 = smul.u32 4, %s23
          %p538 = scmp.lt.s32.totalorder %s22, 0
          %s539 = scalar_select %p538, %s22, 0
          %p540 = scmp.lt.s32.totalorder %s537, 15
          %s541 = scalar_select %p540, %s537, 15
          %s542 = smul.addr %s539, 16
          %s543 = sadd.s32 %s541, %s542
          %s544 = smul.addr %s543, 8
          %s545 = scalar_lea.vmem %s5, %s544
        $region75: #{forward.41} parent=70 // pred_fallthru
          _
      $region71: #{forward.41} parent=5 // pred_fallthru
        _
    $region6: #{forward.41} parent=1 // loop_footer
      %s15 = sadd.s32 1, %s11
    $region7: #{forward.41} parent=1 // loop_footer_branch
      %10 = sbr.rel target = $region3
    $region8: #{forward.41} parent=1 // loop_exit
      _

// kernel: forward.42
$region0: #{forward.42}
  #allocation0 [shape = 'u32[]', space=smem, size = 0x4, offset = 0x4, fixed_abs, tag = 'smem constant byte address 0x4 - core index']
  #allocation1 [shape = 'u32[144,128]{1,0:T(1,128)}', space=vmem, size = 0x12000, scoped, tag = 'internal scratch']
  #allocation2 [shape = 'f32[8,128]{1,0:T(8,128)}', space=vmem, size = 0x1000, scoped, tag = 'scratch operand']
  %s0 = inlined_call_operand.vmem [shape: bf16[8,2048], index: 0, kind: input, shape index: {}]
  %s1 = inlined_call_operand.vmem [shape: bf16[2048,128], index: 1, kind: input, shape index: {}]
  %s2 = inlined_call_operand.vmem [shape: f32[1,128], index: 2, kind: input, shape index: {}]
  %s3 = inlined_call_operand.vmem [shape: f32[8,128], index: 3, kind: input, shape index: {}]
  %s4 = inlined_call_operand.vmem [shape: f32[8,128], index: 4, kind: output, shape index: {}]
  %s5 = sld [smem:[#allocation0]]
  $region57: #{forward.42} parent=0
    _
  %s7 = ssub.s32 1, %s5
  %s8 = scalar_select 0, %s7, %s5
  loop: start=0, step=1, limit=6
  $region2: #{forward.42} parent=0 // loop_pre_header
    _
  $region3: #{forward.42} parent=0 // loop_header
    %s10 = sphi 0, %s14
    %p11 = scmp.ge.s32.totalorder %s10, 6
    %s17 = sphi 0, %s36
    %s18 = sphi 0, %s32
    %s19 = sphi 0, %s28
    %s20 = sphi 0, %s17
    %s21 = sphi 0, %s18
    %s22 = sphi 0, %s19
    %s23 = sphi 0, %s20
    %s24 = sphi 0, %s21
    %s25 = sphi 0, %s22
    %s41 = sphi 0, %s43
    %s44 = sphi 0, %s41
    %s45 = sphi 0, %s44
    %s61 = sphi 0, %s45
    %s69 = sphi 0, %s71
    %s72 = sphi 0, %s69
    %s73 = sphi 0, %s72
    %s89 = sphi 0, %s73
    %s95 = sphi 0, %s97
    %s98 = sphi 0, %s95
    %s99 = sphi 0, %s98
    %s115 = sphi 0, %s99
    %s123 = sphi 0, %s125
    %s126 = sphi 0, %s123
    %s127 = sphi 0, %s126
    %s143 = sphi 0, %s127
    %s151 = sphi 0, %s153
    %s154 = sphi 0, %s151
    %s155 = sphi 0, %s154
    %s171 = sphi 0, %s155
  $region4: #{forward.42} parent=0 // loop_header_branch
    %13 = sbr.rel (%p11) target = $region8
  $region5: #{forward.42} parent=0 // loop_body
    %s15 = ssub.s32 %s10, 1
    %s16 = ssub.s32 %s10, 2
    %s26 = sadd.s32 1, %s19
    %p27 = scmp.ge.s32.totalorder %s26, 4
    %s28 = scalar_select %p27, 0, %s26
    %s29 = sadd.s32 1, %s18
    %s30 = scalar_select %p27, %s29, %s18
    %p31 = scmp.ge.s32.totalorder %s30, 1
    %s32 = scalar_select %p31, 0, %s30
    %s33 = sadd.s32 1, %s17
    %s34 = scalar_select %p31, %s33, %s17
    %p35 = scmp.ge.s32.totalorder %s34, 1
    %s36 = scalar_select %p35, 0, %s34
    %s37 = ssub.s32 %s17, %s36
    %s38 = ssub.s32 %s19, %s28
    %s39 = sor.u32 %s37, %s38
    %p40 = scmp.eq.s32.totalorder %s39, 0
    %s42 = sadd.s32 %s41, 1
    %s43 = scalar_select %p40, %s41, %s42
    %p46 = pneg %p40
    %p47 = scmp.eq.s32.totalorder %s10, 3
    %p48 = por %p46, %p47
    %p49 = scmp.ne.s32.totalorder %s41, %s44
    %p50 = scmp.eq.s32.totalorder %s10, 0
    %p51 = por %p49, %p50
    %p52 = scmp.ne.s32.totalorder %s41, %s44
    %p53 = scmp.eq.s32.totalorder %s15, 3
    %p54 = por %p52, %p53
    %p55 = scmp.ne.s32.totalorder %s44, %s45
    %p56 = scmp.eq.s32.totalorder %s15, 0
    %p57 = por %p55, %p56
    %p58 = scmp.ne.s32.totalorder %s44, %s45
    %p59 = scmp.eq.s32.totalorder %s16, 3
    %p60 = por %p58, %p59
    %p62 = scmp.ne.s32.totalorder %s45, %s61
    %p63 = scmp.eq.s32.totalorder %s16, 0
    %p64 = por %p62, %p63
    %s65 = ssub.s32 %s19, %s28
    %s66 = ssub.s32 %s18, %s32
    %s67 = sor.u32 %s65, %s66
    %p68 = scmp.eq.s32.totalorder %s67, 0
    %s70 = sadd.s32 %s69, 1
    %s71 = scalar_select %p68, %s69, %s70
    %p74 = pneg %p68
    %p75 = scmp.eq.s32.totalorder %s10, 3
    %p76 = por %p74, %p75
    %p77 = scmp.ne.s32.totalorder %s69, %s72
    %p78 = scmp.eq.s32.totalorder %s10, 0
    %p79 = por %p77, %p78
    %p80 = scmp.ne.s32.totalorder %s69, %s72
    %p81 = scmp.eq.s32.totalorder %s15, 3
    %p82 = por %p80, %p81
    %p83 = scmp.ne.s32.totalorder %s72, %s73
    %p84 = scmp.eq.s32.totalorder %s15, 0
    %p85 = por %p83, %p84
    %p86 = scmp.ne.s32.totalorder %s72, %s73
    %p87 = scmp.eq.s32.totalorder %s16, 3
    %p88 = por %p86, %p87
    %p90 = scmp.ne.s32.totalorder %s73, %s89
    %p91 = scmp.eq.s32.totalorder %s16, 0
    %p92 = por %p90, %p91
    %s93 = ssub.s32 %s18, %s32
    %p94 = scmp.eq.s32.totalorder %s93, 0
    %s96 = sadd.s32 %s95, 1
    %s97 = scalar_select %p94, %s95, %s96
    %p100 = pneg %p94
    %p101 = scmp.eq.s32.totalorder %s10, 3
    %p102 = por %p100, %p101
    %p103 = scmp.ne.s32.totalorder %s95, %s98
    %p104 = scmp.eq.s32.totalorder %s10, 0
    %p105 = por %p103, %p104
    %p106 = scmp.ne.s32.totalorder %s95, %s98
    %p107 = scmp.eq.s32.totalorder %s15, 3
    %p108 = por %p106, %p107
    %p109 = scmp.ne.s32.totalorder %s98, %s99
    %p110 = scmp.eq.s32.totalorder %s15, 0
    %p111 = por %p109, %p110
    %p112 = scmp.ne.s32.totalorder %s98, %s99
    %p113 = scmp.eq.s32.totalorder %s16, 3
    %p114 = por %p112, %p113
    %p116 = scmp.ne.s32.totalorder %s99, %s115
    %p117 = scmp.eq.s32.totalorder %s16, 0
    %p118 = por %p116, %p117
    %s119 = ssub.s32 %s17, %s36
    %s120 = ssub.s32 %s18, %s32
    %s121 = sor.u32 %s119, %s120
    %p122 = scmp.eq.s32.totalorder %s121, 0
    %s124 = sadd.s32 %s123, 1
    %s125 = scalar_select %p122, %s123, %s124
    %p128 = pneg %p122
    %p129 = scmp.eq.s32.totalorder %s10, 3
    %p130 = por %p128, %p129
    %p131 = scmp.ne.s32.totalorder %s123, %s126
    %p132 = scmp.eq.s32.totalorder %s10, 0
    %p133 = por %p131, %p132
    %p134 = scmp.ne.s32.totalorder %s123, %s126
    %p135 = scmp.eq.s32.totalorder %s15, 3
    %p136 = por %p134, %p135
    %p137 = scmp.ne.s32.totalorder %s126, %s127
    %p138 = scmp.eq.s32.totalorder %s15, 0
    %p139 = por %p137, %p138
    %p140 = scmp.ne.s32.totalorder %s126, %s127
    %p141 = scmp.eq.s32.totalorder %s16, 3
    %p142 = por %p140, %p141
    %p144 = scmp.ne.s32.totalorder %s127, %s143
    %p145 = scmp.eq.s32.totalorder %s16, 0
    %p146 = por %p144, %p145
    %s147 = ssub.s32 %s17, %s36
    %s148 = ssub.s32 %s18, %s32
    %s149 = sor.u32 %s147, %s148
    %p150 = scmp.eq.s32.totalorder %s149, 0
    %s152 = sadd.s32 %s151, 1
    %s153 = scalar_select %p150, %s151, %s152
    %p156 = pneg %p150
    %p157 = scmp.eq.s32.totalorder %s10, 3
    %p158 = por %p156, %p157
    %p159 = scmp.ne.s32.totalorder %s151, %s154
    %p160 = scmp.eq.s32.totalorder %s10, 0
    %p161 = por %p159, %p160
    %p162 = scmp.ne.s32.totalorder %s151, %s154
    %p163 = scmp.eq.s32.totalorder %s15, 3
    %p164 = por %p162, %p163
    %p165 = scmp.ne.s32.totalorder %s154, %s155
    %p166 = scmp.eq.s32.totalorder %s15, 0
    %p167 = por %p165, %p166
    %p168 = scmp.ne.s32.totalorder %s154, %s155
    %p169 = scmp.eq.s32.totalorder %s16, 3
    %p170 = por %p168, %p169
    %p172 = scmp.ne.s32.totalorder %s155, %s171
    %p173 = scmp.eq.s32.totalorder %s16, 0
    %p174 = por %p172, %p173
    %p175 = scmp.le.s32.totalorder 1, %s10
    %p176 = scmp.lt.s32.totalorder %s10, 5
    %p177 = pnand %p175, %p176
    %p178 = pneg %p177
    // Predicated region
    $region9: #{forward.42} parent=5 // pred_check
      _
    $region10: #{forward.42} parent=5 // pred_check_branch
      %180 = sbr.rel (%p177) target = $region12
    $region11: #{forward.42} parent=5 // pred_region
      %s181 = ssub.s32 %s10, 1
      // Predicated region
      $region13: #{forward.42} parent=11 // pred_check
        %p182 = pneg %p111
      $region14: #{forward.42} parent=11 // pred_check_branch
        %184 = sbr.rel (%p182) target = $region16
      $region15: #{forward.42} parent=11 // pred_region
        %p185 = scmp.lt.s32.totalorder %s21, 0
        %s186 = scalar_select %p185, %s21, 0
        %s187 = scalar_lea.vmem %s2, %s186
      $region16: #{forward.42} parent=11 // pred_fallthru
        _
      // Predicated region
      $region17: #{forward.42} parent=11 // pred_check
        %p188 = pneg %p139
      $region18: #{forward.42} parent=11 // pred_check_branch
        %190 = sbr.rel (%p188) target = $region20
      $region19: #{forward.42} parent=11 // pred_region
        %p191 = scmp.lt.s32.totalorder %s20, 0
        %s192 = scalar_select %p191, %s20, 0
        %p193 = scmp.lt.s32.totalorder %s21, 0
        %s194 = scalar_select %p193, %s21, 0
        %s195 = sadd.s32 %s194, %s192
        %s196 = smul.addr %s195, 8
        %s197 = scalar_lea.vmem %s3, %s196
      $region20: #{forward.42} parent=11 // pred_fallthru
        _
    $region12: #{forward.42} parent=5 // pred_fallthru
      _
    %p198 = scmp.lt.s32.totalorder %s10, 4
    // Predicated region
    $region21: #{forward.42} parent=5 // pred_check
      %p199 = pneg %p198
    $region22: #{forward.42} parent=5 // pred_check_branch
      %201 = sbr.rel (%p199) target = $region24
    $region23: #{forward.42} parent=5 // pred_region
      // Predicated region
      $region25: #{forward.42} parent=23 // pred_check
        %p202 = pneg %p51
      $region26: #{forward.42} parent=23 // pred_check_branch
        %204 = sbr.rel (%p202) target = $region28
      $region27: #{forward.42} parent=23 // pred_region
        %s205 = smul.u32 4, %s19
        %p206 = scmp.lt.s32.totalorder %s17, 0
        %s207 = scalar_select %p206, %s17, 0
        %p208 = scmp.lt.s32.totalorder %s205, 15
        %s209 = scalar_select %p208, %s205, 15
        %s210 = smul.addr %s207, 16
        %s211 = sadd.s32 %s209, %s210
        %s212 = smul.addr %s211, 4
        %s213 = scalar_lea.vmem %s0, %s212
        %s214 = smul.u32 4, %s19
      $region28: #{forward.42} parent=23 // pred_fallthru
        _
      // Predicated region
      $region29: #{forward.42} parent=23 // pred_check
        %p215 = pneg %p79
      $region30: #{forward.42} parent=23 // pred_check_branch
        %217 = sbr.rel (%p215) target = $region32
      $region31: #{forward.42} parent=23 // pred_region
        %s218 = smul.u32 64, %s19
        %p219 = scmp.lt.s32.totalorder %s218, 255
        %s220 = scalar_select %p219, %s218, 255
        %p221 = scmp.lt.s32.totalorder %s18, 0
        %s222 = scalar_select %p221, %s18, 0
        %s223 = sadd.s32 %s222, %s220
        %s224 = smul.addr %s223, 4
        %s225 = scalar_lea.vmem %s1, %s224
        %s226 = smul.u32 64, %s19
      $region32: #{forward.42} parent=23 // pred_fallthru
        _
    $region24: #{forward.42} parent=5 // pred_fallthru
      _
    %p227 = scmp.le.s32.totalorder 1, %s10
    %p228 = scmp.lt.s32.totalorder %s10, 5
    %p229 = pnand %p227, %p228
    %p230 = pneg %p229
    // Predicated region
    $region33: #{forward.42} parent=5 // pred_check
      _
    $region34: #{forward.42} parent=5 // pred_check_branch
      %232 = sbr.rel (%p229) target = $region36
    $region35: #{forward.42} parent=5 // pred_region
      %s233 = ssub.s32 %s10, 1
      %s234 = smul.u32 4, %s22
      %p235 = scmp.lt.s32.totalorder %s20, 0
      %s236 = scalar_select %p235, %s20, 0
      %p237 = scmp.lt.s32.totalorder %s234, 15
      %s238 = scalar_select %p237, %s234, 15
      %s239 = smul.addr %s236, 16
      %s240 = sadd.s32 %s238, %s239
      %s241 = smul.addr %s240, 4
      %s242 = scalar_lea.vmem %s0, %s241
      %p243 = pneg %p57
      %p244 = pneg %p54
      %s245 = smul.u32 64, %s22
      %p246 = scmp.lt.s32.totalorder %s245, 255
      %s247 = scalar_select %p246, %s245, 255
      %p248 = scmp.lt.s32.totalorder %s21, 0
      %s249 = scalar_select %p248, %s21, 0
      %s250 = sadd.s32 %s249, %s247
      %s251 = smul.addr %s250, 4
      %s252 = scalar_lea.vmem %s1, %s251
      %p253 = pneg %p85
      %p254 = pneg %p82
      %p255 = scmp.lt.s32.totalorder %s21, 0
      %s256 = scalar_select %p255, %s21, 0
      %s257 = scalar_lea.vmem %s2, %s256
      %p258 = pneg %p111
      %p259 = pneg %p108
      %p260 = scmp.lt.s32.totalorder %s20, 0
      %s261 = scalar_select %p260, %s20, 0
      %p262 = scmp.lt.s32.totalorder %s21, 0
      %s263 = scalar_select %p262, %s21, 0
      %s264 = sadd.s32 %s263, %s261
      %s265 = smul.addr %s264, 8
      %s266 = scalar_lea.vmem %s3, %s265
      %p267 = pneg %p139
      %p268 = pneg %p136
      %p269 = pneg %p167
      %p270 = pneg %p164
      %p271 = scmp.lt.s32.totalorder %s20, 0
      %s272 = scalar_select %p271, %s20, 0
      %p273 = scmp.lt.s32.totalorder %s21, 0
      %s274 = scalar_select %p273, %s21, 0
      %s275 = sadd.s32 %s274, %s272
      %s276 = smul.addr %s275, 8
      %s277 = scalar_lea.vmem %s4, %s276
      %s278 = smul.u32 4, %s22
      %p279 = scmp.lt.s32.totalorder %s20, 0
      %s280 = scalar_select %p279, %s20, 0
      %p281 = scmp.lt.s32.totalorder %s278, 15
      %s282 = scalar_select %p281, %s278, 15
      %s283 = smul.addr %s280, 16
      %s284 = sadd.s32 %s282, %s283
      %s285 = smul.addr %s284, 4
      %s286 = scalar_lea.vmem %s0, %s285
      %s287 = smul.u32 4, %s22
      %s288 = smul.u32 64, %s22
      %p289 = scmp.lt.s32.totalorder %s288, 255
      %s290 = scalar_select %p289, %s288, 255
      %p291 = scmp.lt.s32.totalorder %s21, 0
      %s292 = scalar_select %p291, %s21, 0
      %s293 = sadd.s32 %s292, %s290
      %s294 = smul.addr %s293, 4
      %s295 = scalar_lea.vmem %s1, %s294
      %s296 = smul.u32 64, %s22
      %p297 = scmp.lt.s32.totalorder %s21, 0
      %s298 = scalar_select %p297, %s21, 0
      %s299 = scalar_lea.vmem %s2, %s298
      %p300 = scmp.lt.s32.totalorder %s20, 0
      %s301 = scalar_select %p300, %s20, 0
      %p302 = scmp.lt.s32.totalorder %s21, 0
      %s303 = scalar_select %p302, %s21, 0
      %s304 = sadd.s32 %s303, %s301
      %s305 = smul.addr %s304, 8
      %s306 = scalar_lea.vmem %s3, %s305
      %p307 = scmp.lt.s32.totalorder %s20, 0
      %s308 = scalar_select %p307, %s20, 0
      %p309 = scmp.lt.s32.totalorder %s21, 0
      %s310 = scalar_select %p309, %s21, 0
      %s311 = sadd.s32 %s310, %s308
      %s312 = smul.addr %s311, 8
      %s313 = scalar_lea.vmem %s4, %s312
      %p315 = scmp.eq.s32.totalorder %s22, 0
      // Predicated region
      $region37: #{forward.42} parent=35 // pred_check
        %p316 = pneg %p315
      $region38: #{forward.42} parent=35 // pred_check_branch
        %318 = sbr.rel (%p316) target = $region40
      $region39: #{forward.42} parent=35 // pred_region
        %319 = vst [vmem:[#allocation2] sm:$0xff] 0.0
      $region40: #{forward.42} parent=35 // pred_fallthru
        _
      %v320 = vld [vmem:[#allocation2] sm:$0xff]
      %v321 = vld [vmem:[%s286] sm:$0xff]
      %v322 = vld [vmem:[%s286 + $0x8] sm:$0xff]
      %v323 = vld [vmem:[%s295] sm:$0xf]
      %v324 = vld [vmem:[%s295 + $0x4] sm:$0xf]
      %v325 = vld [vmem:[%s295 + $0x8] sm:$0xf]
      %v326 = vld [vmem:[%s295 + $0xc] sm:$0xf]
      %v327 = vld [vmem:[%s295 + $0x10] sm:$0xf]
      %v328 = vld [vmem:[%s295 + $0x14] sm:$0xf]
      %v329 = vld [vmem:[%s295 + $0x18] sm:$0xf]
      %v330 = vld [vmem:[%s295 + $0x1c] sm:$0xf]
      %v331 = vld [vmem:[%s295 + $0x20] sm:$0xf]
      %v332 = vld [vmem:[%s295 + $0x24] sm:$0xf]
      %v333 = vld [vmem:[%s295 + $0x28] sm:$0xf]
      %v334 = vld [vmem:[%s295 + $0x2c] sm:$0xf]
      %v335 = vld [vmem:[%s295 + $0x30] sm:$0xf]
      %v336 = vld [vmem:[%s295 + $0x34] sm:$0xf]
      %v337 = vld [vmem:[%s295 + $0x38] sm:$0xf]
      %v338 = vld [vmem:[%s295 + $0x3c] sm:$0xf]
      %v339 = vld [vmem:[%s295 + $0x40] sm:$0xf]
      %v340 = vld [vmem:[%s295 + $0x44] sm:$0xf]
      %v341 = vld [vmem:[%s295 + $0x48] sm:$0xf]
      %v342 = vld [vmem:[%s295 + $0x4c] sm:$0xf]
      %v343 = vld [vmem:[%s295 + $0x50] sm:$0xf]
      %v344 = vld [vmem:[%s295 + $0x54] sm:$0xf]
      %v345 = vld [vmem:[%s295 + $0x58] sm:$0xf]
      %v346 = vld [vmem:[%s295 + $0x5c] sm:$0xf]
      %v347 = vld [vmem:[%s295 + $0x60] sm:$0xf]
      %v348 = vld [vmem:[%s295 + $0x64] sm:$0xf]
      %v349 = vld [vmem:[%s295 + $0x68] sm:$0xf]
      %v350 = vld [vmem:[%s295 + $0x6c] sm:$0xf]
      %v351 = vld [vmem:[%s295 + $0x70] sm:$0xf]
      %v352 = vld [vmem:[%s295 + $0x74] sm:$0xf]
      %v353 = vld [vmem:[%s295 + $0x78] sm:$0xf]
      %v354 = vld [vmem:[%s295 + $0x7c] sm:$0xf]
      %v355 = vld [vmem:[%s295 + $0x80] sm:$0xf]
      %v356 = vld [vmem:[%s295 + $0x84] sm:$0xf]
      %v357 = vld [vmem:[%s295 + $0x88] sm:$0xf]
      %v358 = vld [vmem:[%s295 + $0x8c] sm:$0xf]
      %v359 = vld [vmem:[%s295 + $0x90] sm:$0xf]
      %v360 = vld [vmem:[%s295 + $0x94] sm:$0xf]
      %v361 = vld [vmem:[%s295 + $0x98] sm:$0xf]
      %v362 = vld [vmem:[%s295 + $0x9c] sm:$0xf]
      %v363 = vld [vmem:[%s295 + $0xa0] sm:$0xf]
      %v364 = vld [vmem:[%s295 + $0xa4] sm:$0xf]
      %v365 = vld [vmem:[%s295 + $0xa8] sm:$0xf]
      %v366 = vld [vmem:[%s295 + $0xac] sm:$0xf]
      %v367 = vld [vmem:[%s295 + $0xb0] sm:$0xf]
      %v368 = vld [vmem:[%s295 + $0xb4] sm:$0xf]
      %v369 = vld [vmem:[%s295 + $0xb8] sm:$0xf]
      %v370 = vld [vmem:[%s295 + $0xbc] sm:$0xf]
      %v371 = vld [vmem:[%s295 + $0xc0] sm:$0xf]
      %v372 = vld [vmem:[%s295 + $0xc4] sm:$0xf]
      %v373 = vld [vmem:[%s295 + $0xc8] sm:$0xf]
      %v374 = vld [vmem:[%s295 + $0xcc] sm:$0xf]
      %v375 = vld [vmem:[%s295 + $0xd0] sm:$0xf]
      %v376 = vld [vmem:[%s295 + $0xd4] sm:$0xf]
      %v377 = vld [vmem:[%s295 + $0xd8] sm:$0xf]
      %v378 = vld [vmem:[%s295 + $0xdc] sm:$0xf]
      %v379 = vld [vmem:[%s295 + $0xe0] sm:$0xf]
      %v380 = vld [vmem:[%s295 + $0xe4] sm:$0xf]
      %v381 = vld [vmem:[%s295 + $0xe8] sm:$0xf]
      %v382 = vld [vmem:[%s295 + $0xec] sm:$0xf]
      %v383 = vld [vmem:[%s295 + $0xf0] sm:$0xf]
      %v384 = vld [vmem:[%s295 + $0xf4] sm:$0xf]
      %v385 = vld [vmem:[%s295 + $0xf8] sm:$0xf]
      %v386 = vld [vmem:[%s295 + $0xfc] sm:$0xf]
      %v389 = vunpack.c.l.b16 %v321
      %v390 = vunpack.c.h.b16 %v321
      %v391 = vunpack.c.l.b16 %v322
      %v392 = vunpack.c.h.b16 %v322
      %v393 = vpack.c.b16 %v389, %v389
      %v394 = vpack.c.b16 %v390, %v390
      %v395 = vpack.c.b16 %v391, %v391
      %v396 = vpack.c.b16 %v392, %v392
      %v465 = vunpack.c.l.b16 %v323
      %v466 = vunpack.c.l.b16 %v324
      %v467 = vunpack.c.l.b16 %v325
      %v468 = vunpack.c.l.b16 %v326
      %v469 = vunpack.c.l.b16 %v327
      %v470 = vunpack.c.l.b16 %v328
      %v471 = vunpack.c.l.b16 %v329
      %v472 = vunpack.c.l.b16 %v330
      %v473 = vunpack.c.l.b16 %v331
      %v474 = vunpack.c.l.b16 %v332
      %v475 = vunpack.c.l.b16 %v333
      %v476 = vunpack.c.l.b16 %v334
      %v477 = vunpack.c.l.b16 %v335
      %v478 = vunpack.c.l.b16 %v336
      %v479 = vunpack.c.l.b16 %v337
      %v480 = vunpack.c.l.b16 %v338
      %v481 = vunpack.c.l.b16 %v339
      %v482 = vunpack.c.l.b16 %v340
      %v483 = vunpack.c.l.b16 %v341
      %v484 = vunpack.c.l.b16 %v342
      %v485 = vunpack.c.l.b16 %v343
      %v486 = vunpack.c.l.b16 %v344
      %v487 = vunpack.c.l.b16 %v345
      %v488 = vunpack.c.l.b16 %v346
      %v489 = vunpack.c.l.b16 %v347
      %v490 = vunpack.c.l.b16 %v348
      %v491 = vunpack.c.l.b16 %v349
      %v492 = vunpack.c.l.b16 %v350
      %v493 = vunpack.c.l.b16 %v351
      %v494 = vunpack.c.l.b16 %v352
      %v495 = vunpack.c.l.b16 %v353
      %v496 = vunpack.c.l.b16 %v354
      %v497 = vunpack.c.l.b16 %v355
      %v498 = vunpack.c.l.b16 %v356
      %v499 = vunpack.c.l.b16 %v357
      %v500 = vunpack.c.l.b16 %v358
      %v501 = vunpack.c.l.b16 %v359
      %v502 = vunpack.c.l.b16 %v360
      %v503 = vunpack.c.l.b16 %v361
      %v504 = vunpack.c.l.b16 %v362
      %v505 = vunpack.c.l.b16 %v363
      %v506 = vunpack.c.l.b16 %v364
      %v507 = vunpack.c.l.b16 %v365
      %v508 = vunpack.c.l.b16 %v366
      %v509 = vunpack.c.l.b16 %v367
      %v510 = vunpack.c.l.b16 %v368
      %v511 = vunpack.c.l.b16 %v369
      %v512 = vunpack.c.l.b16 %v370
      %v513 = vunpack.c.l.b16 %v371
      %v514 = vunpack.c.l.b16 %v372
      %v515 = vunpack.c.l.b16 %v373
      %v516 = vunpack.c.l.b16 %v374
      %v517 = vunpack.c.l.b16 %v375
      %v518 = vunpack.c.l.b16 %v376
      %v519 = vunpack.c.l.b16 %v377
      %v520 = vunpack.c.l.b16 %v378
      %v521 = vunpack.c.l.b16 %v379
      %v522 = vunpack.c.l.b16 %v380
      %v523 = vunpack.c.l.b16 %v381
      %v524 = vunpack.c.l.b16 %v382
      %v525 = vunpack.c.l.b16 %v383
      %v526 = vunpack.c.l.b16 %v384
      %v527 = vunpack.c.l.b16 %v385
      %v528 = vunpack.c.l.b16 %v386
      %v529 = vpack.c.b16 %v466, %v465
      %v530 = vpack.c.b16 %v468, %v467
      %v531 = vpack.c.b16 %v470, %v469
      %v532 = vpack.c.b16 %v472, %v471
      %v533 = vpack.c.b16 %v474, %v473
      %v534 = vpack.c.b16 %v476, %v475
      %v535 = vpack.c.b16 %v478, %v477
      %v536 = vpack.c.b16 %v480, %v479
      %v537 = vpack.c.b16 %v482, %v481
      %v538 = vpack.c.b16 %v484, %v483
      %v539 = vpack.c.b16 %v486, %v485
      %v540 = vpack.c.b16 %v488, %v487
      %v541 = vpack.c.b16 %v490, %v489
      %v542 = vpack.c.b16 %v492, %v491
      %v543 = vpack.c.b16 %v494, %v493
      %v544 = vpack.c.b16 %v496, %v495
      %v545 = vpack.c.b16 %v498, %v497
      %v546 = vpack.c.b16 %v500, %v499
      %v547 = vpack.c.b16 %v502, %v501
      %v548 = vpack.c.b16 %v504, %v503
      %v549 = vpack.c.b16 %v506, %v505
      %v550 = vpack.c.b16 %v508, %v507
      %v551 = vpack.c.b16 %v510, %v509
      %v552 = vpack.c.b16 %v512, %v511
      %v553 = vpack.c.b16 %v514, %v513
      %v554 = vpack.c.b16 %v516, %v515
      %v555 = vpack.c.b16 %v518, %v517
      %v556 = vpack.c.b16 %v520, %v519
      %v557 = vpack.c.b16 %v522, %v521
      %v558 = vpack.c.b16 %v524, %v523
      %v559 = vpack.c.b16 %v526, %v525
      %v560 = vpack.c.b16 %v528, %v527
      %593 = vmatprep.subr.bf16.mxu0 0
      %594 = vmatpush1.bf16.msra.mxu0 %v529
      %595 = vmatprep.subr.bf16.mxu0 0
      %596 = vmatpush1.bf16.msra.mxu0 %v530
      %597 = vmatprep.subr.bf16.mxu0 0
      %598 = vmatpush1.bf16.msra.mxu0 %v531
      %599 = vmatprep.subr.bf16.mxu0 0
      %600 = vmatpush1.bf16.msra.mxu0 %v532
      %601 = vmatprep.subr.bf16.mxu0 0
      %602 = vmatpush1.bf16.msra.mxu0 %v533
      %603 = vmatprep.subr.bf16.mxu0 0
      %604 = vmatpush1.bf16.msra.mxu0 %v534
      %605 = vmatprep.subr.bf16.mxu0 0
      %606 = vmatpush1.bf16.msra.mxu0 %v535
      %607 = vmatprep.subr.bf16.mxu0 0
      %608 = vmatpush1.bf16.msra.mxu0 %v536
      %609 = vmatprep.subr.bf16.mxu0 0
      %610 = vmatpush1.bf16.msra.mxu0 %v537
      %611 = vmatprep.subr.bf16.mxu0 0
      %612 = vmatpush1.bf16.msra.mxu0 %v538
      %613 = vmatprep.subr.bf16.mxu0 0
      %614 = vmatpush1.bf16.msra.mxu0 %v539
      %615 = vmatprep.subr.bf16.mxu0 0
      %616 = vmatpush1.bf16.msra.mxu0 %v540
      %617 = vmatprep.subr.bf16.mxu0 0
      %618 = vmatpush1.bf16.msra.mxu0 %v541
      %619 = vmatprep.subr.bf16.mxu0 0
      %620 = vmatpush1.bf16.msra.mxu0 %v542
      %621 = vmatprep.subr.bf16.mxu0 0
      %622 = vmatpush1.bf16.msra.mxu0 %v543
      %623 = vmatprep.subr.bf16.mxu0 0
      %624 = vmatpush1.bf16.msra.mxu0 %v544
      %625 = vmatprep.mubr.bf16.mxu0 %v394
      %626 = vmatmul.mubr.bf16.gmra.mrb[0].mxu0 %v393
      %v627 = vpop.f32.mrb[0].mxu0
      %v628 = vadd.f32 0.0, %v627
      %v629 = vpop.f32.mrb[0].mxu0
      %v630 = vpop.f32.mrb[0].mxu0
      %v631 = vpop.f32.mrb[0].mxu0
      %632 = vdwg.mxu0
      %633 = vmatprep.subr.bf16.mxu0 0
      %634 = vmatpush1.bf16.msra.mxu0 %v545
      %635 = vmatprep.subr.bf16.mxu0 0
      %636 = vmatpush1.bf16.msra.mxu0 %v546
      %637 = vmatprep.subr.bf16.mxu0 0
      %638 = vmatpush1.bf16.msra.mxu0 %v547
      %639 = vmatprep.subr.bf16.mxu0 0
      %640 = vmatpush1.bf16.msra.mxu0 %v548
      %641 = vmatprep.subr.bf16.mxu0 0
      %642 = vmatpush1.bf16.msra.mxu0 %v549
      %643 = vmatprep.subr.bf16.mxu0 0
      %644 = vmatpush1.bf16.msra.mxu0 %v550
      %645 = vmatprep.subr.bf16.mxu0 0
      %646 = vmatpush1.bf16.msra.mxu0 %v551
      %647 = vmatprep.subr.bf16.mxu0 0
      %648 = vmatpush1.bf16.msra.mxu0 %v552
      %649 = vmatprep.subr.bf16.mxu0 0
      %650 = vmatpush1.bf16.msra.mxu0 %v553
      %651 = vmatprep.subr.bf16.mxu0 0
      %652 = vmatpush1.bf16.msra.mxu0 %v554
      %653 = vmatprep.subr.bf16.mxu0 0
      %654 = vmatpush1.bf16.msra.mxu0 %v555
      %655 = vmatprep.subr.bf16.mxu0 0
      %656 = vmatpush1.bf16.msra.mxu0 %v556
      %657 = vmatprep.subr.bf16.mxu0 0
      %658 = vmatpush1.bf16.msra.mxu0 %v557
      %659 = vmatprep.subr.bf16.mxu0 0
      %660 = vmatpush1.bf16.msra.mxu0 %v558
      %661 = vmatprep.subr.bf16.mxu0 0
      %662 = vmatpush1.bf16.msra.mxu0 %v559
      %663 = vmatprep.subr.bf16.mxu0 0
      %664 = vmatpush1.bf16.msra.mxu0 %v560
      %665 = vmatprep.mubr.bf16.mxu0 %v396
      %666 = vmatmul.mubr.bf16.gmra.mrb[0].mxu0 %v395
      %v667 = vpop.f32.mrb[0].mxu0
      %v668 = vadd.f32 %v628, %v667
      %v669 = vpop.f32.mrb[0].mxu0
      %v670 = vpop.f32.mrb[0].mxu0
      %v671 = vpop.f32.mrb[0].mxu0
      %672 = vdwg.mxu0
      %v673 = vadd.f32 %v320, %v668
      %674 = vst [vmem:[#allocation2] sm:$0xff] %v673
      %p675 = scmp.eq.s32.totalorder %s22, 3
      // Predicated region
      $region41: #{forward.42} parent=35 // pred_check
        %p676 = pneg %p675
      $region42: #{forward.42} parent=35 // pred_check_branch
        %678 = sbr.rel (%p676) target = $region44
      $region43: #{forward.42} parent=35 // pred_region
        %v679 = vld [vmem:[#allocation2] sm:$0xff]
        %v680 = vld [vmem:[%s299] sm:$0x1]
        %v682 = vlaneseq
        %v683 = vshrl.u32 %v682, 7
        %v684 = vsub.s32 0, %v683
        %v685 = vrot.slane %v680, %v684
        %v687 = vadd.f32 %v679, %v685
        %v688 = vld [vmem:[%s306] sm:$0xff]
        %v689 = vadd.f32 %v687, %v688
        %690 = vst [vmem:[%s313] sm:$0xff] %v689
      $region44: #{forward.42} parent=35 // pred_fallthru
        _
      %p691 = scmp.lt.s32.totalorder %s20, 0
      %s692 = scalar_select %p691, %s20, 0
      %p693 = scmp.lt.s32.totalorder %s21, 0
      %s694 = scalar_select %p693, %s21, 0
      %s695 = sadd.s32 %s694, %s692
      %s696 = smul.addr %s695, 8
      %s697 = scalar_lea.vmem %s4, %s696
      // Predicated region
      $region45: #{forward.42} parent=35 // pred_check
        %p698 = pneg %p164
      $region46: #{forward.42} parent=35 // pred_check_branch
        %700 = sbr.rel (%p698) target = $region48
      $region47: #{forward.42} parent=35 // pred_region
        _
      $region48: #{forward.42} parent=35 // pred_fallthru
        _
      // Predicated region
      $region49: #{forward.42} parent=35 // pred_check
        %p701 = pneg %p164
      $region50: #{forward.42} parent=35 // pred_check_branch
        %703 = sbr.rel (%p701) target = $region52
      $region51: #{forward.42} parent=35 // pred_region
        %p704 = scmp.lt.s32.totalorder %s20, 0
        %s705 = scalar_select %p704, %s20, 0
        %p706 = scmp.lt.s32.totalorder %s21, 0
        %s707 = scalar_select %p706, %s21, 0
        %s708 = sadd.s32 %s707, %s705
        %s709 = smul.addr %s708, 8
        %s710 = scalar_lea.vmem %s4, %s709
      $region52: #{forward.42} parent=35 // pred_fallthru
        _
    $region36: #{forward.42} parent=5 // pred_fallthru
      _
    %p711 = scmp.le.s32.totalorder 2, %s10
    // Predicated region
    $region53: #{forward.42} parent=5 // pred_check
      %p712 = pneg %p711
    $region54: #{forward.42} parent=5 // pred_check_branch
      %714 = sbr.rel (%p712) target = $region56
    $region55: #{forward.42} parent=5 // pred_region
      %s715 = ssub.s32 %s10, 2
    $region56: #{forward.42} parent=5 // pred_fallthru
      _
  $region6: #{forward.42} parent=0 // loop_footer
    %s14 = sadd.s32 1, %s10
  $region7: #{forward.42} parent=0 // loop_footer_branch
    %9 = sbr.rel target = $region3
  $region8: #{forward.42} parent=0 // loop_exit
    _

// kernel: forward.43
$region0: #{forward.43}
  #allocation0 [shape = 'u32[]', space=smem, size = 0x4, offset = 0x4, fixed_abs, tag = 'smem constant byte address 0x4 - core index']
  #allocation1 [shape = 'u32[144,128]{1,0:T(1,128)}', space=vmem, size = 0x12000, scoped, tag = 'internal scratch']
  %s0 = inlined_call_operand.vmem [shape: f32[16,32], index: 0, kind: input, shape index: {}]
  %s1 = inlined_call_operand.vmem [shape: f32[1,32], index: 1, kind: input, shape index: {}]
  %s2 = inlined_call_operand.vmem [shape: f32[1,32], index: 2, kind: input, shape index: {}]
  %s3 = inlined_call_operand.vmem [shape: f32[16,32], index: 3, kind: input, shape index: {}]
  %s4 = inlined_call_operand.vmem [shape: f32[16,32], index: 4, kind: output, shape index: {}]
  %s5 = sld [smem:[#allocation0]]
  $region26: #{forward.43} parent=0
    _
  %s7 = ssub.s32 1, %s5
  %s8 = scalar_select 0, %s7, %s5
  // Predicated region
  $region2: #{forward.43} parent=0 // pred_check
    _
  $region3: #{forward.43} parent=0 // pred_check_branch
    %10 = sbr.rel (0) target = $region5
  $region4: #{forward.43} parent=0 // pred_region
    _
  $region5: #{forward.43} parent=0 // pred_fallthru
    _
  // Predicated region
  $region6: #{forward.43} parent=0 // pred_check
    _
  $region7: #{forward.43} parent=0 // pred_check_branch
    %12 = sbr.rel (0) target = $region9
  $region8: #{forward.43} parent=0 // pred_region
    _
  $region9: #{forward.43} parent=0 // pred_fallthru
    _
  // Predicated region
  $region10: #{forward.43} parent=0 // pred_check
    _
  $region11: #{forward.43} parent=0 // pred_check_branch
    %14 = sbr.rel (0) target = $region13
  $region12: #{forward.43} parent=0 // pred_region
    _
  $region13: #{forward.43} parent=0 // pred_fallthru
    _
  // Predicated region
  $region14: #{forward.43} parent=0 // pred_check
    _
  $region15: #{forward.43} parent=0 // pred_check_branch
    %16 = sbr.rel (0) target = $region17
  $region16: #{forward.43} parent=0 // pred_region
    _
  $region17: #{forward.43} parent=0 // pred_fallthru
    _
  %v17 = vld [vmem:[%s0] sm:$0xff]
  %v18 = vld [vmem:[%s0 + $0x8] sm:$0xff]
  %vm19 = vcmask 261120
  %v20 = vsel %vm19, %v17, 0.0
  %21 = vadd.xlane.f32.xlu0 %v20
  %v22 = vpop.xlane.xlu0 %21
  %v23 = vsel %vm19, %v18, 0.0
  %24 = vadd.xlane.f32.xlu0 %v23
  %v25 = vpop.xlane.xlu0 %24
  %v26 = vrcp.pop 32.0
  %v27 = vmul.f32 %v22, %v26
  %v28 = vmul.f32 %v25, %v26
  %v29 = vsub.f32 %v17, %v27
  %v30 = vsub.f32 %v18, %v28
  %v31 = vmul.f32 %v29, %v29
  %v32 = vmul.f32 %v30, %v30
  %v33 = vsel %vm19, %v31, 0.0
  %34 = vadd.xlane.f32.xlu0 %v33
  %v35 = vpop.xlane.xlu0 %34
  %v36 = vsel %vm19, %v32, 0.0
  %37 = vadd.xlane.f32.xlu0 %v36
  %v38 = vpop.xlane.xlu0 %37
  %v39 = vmul.f32 %v35, %v26
  %v40 = vmul.f32 %v38, %v26
  %v41 = vadd.f32 %v39, 1e-05
  %v42 = vadd.f32 %v40, 1e-05
  %v43 = vrsqrt.pop %v41
  %v44 = vrsqrt.pop %v42
  %v45 = vmul.f32 %v29, %v43
  %v46 = vmul.f32 %v30, %v44
  %v47 = vld [vmem:[%s1] sm:$0x1]
  %v49 = vlaneseq
  %v50 = vshrl.u32 %v49, 7
  %v51 = vsub.s32 0, %v50
  %v52 = vrot.slane %v47, %v51
  %v54 = vmul.f32 %v45, %v52
  %v55 = vmul.f32 %v46, %v52
  %v56 = vld [vmem:[%s2] sm:$0x1]
  %v58 = vlaneseq
  %v59 = vshrl.u32 %v58, 7
  %v60 = vsub.s32 0, %v59
  %v61 = vrot.slane %v56, %v60
  %v63 = vadd.f32 %v54, %v61
  %v64 = vadd.f32 %v55, %v61
  %v65 = vld [vmem:[%s3] sm:$0xff]
  %v66 = vld [vmem:[%s3 + $0x8] sm:$0xff]
  %v67 = vadd.f32 %v63, %v65
  %v68 = vadd.f32 %v64, %v66
  %69 = vst.msk [vmem:[%s4] sm:$0xff] %vm19, %v67
  %70 = vst.msk [vmem:[%s4 + $0x8] sm:$0xff] %vm19, %v68
  // Predicated region
  $region18: #{forward.43} parent=0 // pred_check
    _
  $region19: #{forward.43} parent=0 // pred_check_branch
    %72 = sbr.rel (0) target = $region21
  $region20: #{forward.43} parent=0 // pred_region
    _
  $region21: #{forward.43} parent=0 // pred_fallthru
    _
  // Predicated region
  $region22: #{forward.43} parent=0 // pred_check
    _
  $region23: #{forward.43} parent=0 // pred_check_branch
    %74 = sbr.rel (0) target = $region25
  $region24: #{forward.43} parent=0 // pred_region
    _
  $region25: #{forward.43} parent=0 // pred_fallthru
    _

// kernel: forward.44
$region0: #{forward.44}
  #allocation0 [shape = 'u32[]', space=smem, size = 0x4, offset = 0x4, fixed_abs, tag = 'smem constant byte address 0x4 - core index']
  #allocation1 [shape = 'u32[144,128]{1,0:T(1,128)}', space=vmem, size = 0x12000, scoped, tag = 'internal scratch']
  %s0 = inlined_call_operand.vmem [shape: f32[16,32], index: 0, kind: input, shape index: {}]
  %s1 = inlined_call_operand.vmem [shape: f32[1,32], index: 1, kind: input, shape index: {}]
  %s2 = inlined_call_operand.vmem [shape: f32[1,32], index: 2, kind: input, shape index: {}]
  %s3 = inlined_call_operand.vmem [shape: bf16[32,128], index: 3, kind: input, shape index: {}]
  %s4 = inlined_call_operand.vmem [shape: f32[1,128], index: 4, kind: input, shape index: {}]
  %s5 = inlined_call_operand.vmem [shape: f32[16,128], index: 5, kind: output, shape index: {}]
  %s6 = sld [smem:[#allocation0]]
  $region30: #{forward.44} parent=0
    _
  %s8 = ssub.s32 1, %s6
  %s9 = scalar_select 0, %s8, %s6
  // Predicated region
  $region2: #{forward.44} parent=0 // pred_check
    _
  $region3: #{forward.44} parent=0 // pred_check_branch
    %11 = sbr.rel (0) target = $region5
  $region4: #{forward.44} parent=0 // pred_region
    _
  $region5: #{forward.44} parent=0 // pred_fallthru
    _
  // Predicated region
  $region6: #{forward.44} parent=0 // pred_check
    _
  $region7: #{forward.44} parent=0 // pred_check_branch
    %13 = sbr.rel (0) target = $region9
  $region8: #{forward.44} parent=0 // pred_region
    _
  $region9: #{forward.44} parent=0 // pred_fallthru
    _
  // Predicated region
  $region10: #{forward.44} parent=0 // pred_check
    _
  $region11: #{forward.44} parent=0 // pred_check_branch
    %15 = sbr.rel (0) target = $region13
  $region12: #{forward.44} parent=0 // pred_region
    _
  $region13: #{forward.44} parent=0 // pred_fallthru
    _
  // Predicated region
  $region14: #{forward.44} parent=0 // pred_check
    _
  $region15: #{forward.44} parent=0 // pred_check_branch
    %17 = sbr.rel (0) target = $region17
  $region16: #{forward.44} parent=0 // pred_region
    _
  $region17: #{forward.44} parent=0 // pred_fallthru
    _
  // Predicated region
  $region18: #{forward.44} parent=0 // pred_check
    _
  $region19: #{forward.44} parent=0 // pred_check_branch
    %19 = sbr.rel (0) target = $region21
  $region20: #{forward.44} parent=0 // pred_region
    _
  $region21: #{forward.44} parent=0 // pred_fallthru
    _
  %v21 = vld [vmem:[%s0] sm:$0xff]
  %v22 = vld [vmem:[%s0 + $0x8] sm:$0xff]
  %vm23 = vcmask 261120
  %v24 = vsel %vm23, %v21, 0.0
  %25 = vadd.xlane.f32.xlu0 %v24
  %v26 = vpop.xlane.xlu0 %25
  %v27 = vsel %vm23, %v22, 0.0
  %28 = vadd.xlane.f32.xlu0 %v27
  %v29 = vpop.xlane.xlu0 %28
  %v30 = vrcp.pop 32.0
  %v31 = vmul.f32 %v26, %v30
  %v32 = vmul.f32 %v29, %v30
  %v33 = vsub.f32 %v21, %v31
  %v34 = vsub.f32 %v22, %v32
  %v35 = vmul.f32 %v33, %v33
  %v36 = vmul.f32 %v34, %v34
  %v37 = vsel %vm23, %v35, 0.0
  %38 = vadd.xlane.f32.xlu0 %v37
  %v39 = vpop.xlane.xlu0 %38
  %v40 = vsel %vm23, %v36, 0.0
  %41 = vadd.xlane.f32.xlu0 %v40
  %v42 = vpop.xlane.xlu0 %41
  %v43 = vmul.f32 %v39, %v30
  %v44 = vmul.f32 %v42, %v30
  %v45 = vadd.f32 %v43, 1e-05
  %v46 = vadd.f32 %v44, 1e-05
  %v47 = vrsqrt.pop %v45
  %v48 = vrsqrt.pop %v46
  %v49 = vmul.f32 %v33, %v47
  %v50 = vmul.f32 %v34, %v48
  %v51 = vld [vmem:[%s1] sm:$0x1]
  %v53 = vlaneseq
  %v54 = vshrl.u32 %v53, 7
  %v55 = vsub.s32 0, %v54
  %v56 = vrot.slane %v51, %v55
  %v58 = vmul.f32 %v49, %v56
  %v59 = vmul.f32 %v50, %v56
  %v60 = vld [vmem:[%s2] sm:$0x1]
  %v62 = vlaneseq
  %v63 = vshrl.u32 %v62, 7
  %v64 = vsub.s32 0, %v63
  %v65 = vrot.slane %v60, %v64
  %v67 = vadd.f32 %v58, %v65
  %v68 = vadd.f32 %v59, %v65
  %v69 = vpack.c.bf16 %v68, %v67
  %v70 = vld [vmem:[%s3] sm:$0xf]
  %v71 = vld [vmem:[%s3 + $0x4] sm:$0xf]
  %v72 = vld [vmem:[%s3 + $0x8] sm:$0xf]
  %v73 = vld [vmem:[%s3 + $0xc] sm:$0xf]
  %v74 = vld [vmem:[%s4] sm:$0x1]
  %v76 = vlaneseq
  %v77 = vshrl.u32 %v76, 7
  %v78 = vsub.s32 0, %v77
  %v79 = vrot.slane %v74, %v78
  %v85 = vunpack.c.l.b16 %v70
  %v86 = vunpack.c.l.b16 %v71
  %v87 = vunpack.c.l.b16 %v72
  %v88 = vunpack.c.l.b16 %v73
  %v89 = vpack.c.b16 %v86, %v85
  %v90 = vpack.c.b16 %v88, %v87
  %v94 = vsel %vm23, %v69, 0
  %96 = vmatprep.subr.bf16.mxu0 0
  %97 = vmatpush1.bf16.msra.mxu0 %v89
  %98 = vmatprep.subr.bf16.mxu0 0
  %99 = vmatpush1.bf16.msra.mxu0 %v90
  %100 = vmatprep.subr.bf16.mxu0 0
  %101 = vmatpush1.bf16.msra.mxu0 0
  %102 = vmatprep.subr.bf16.mxu0 0
  %103 = vmatpush1.bf16.msra.mxu0 0
  %104 = vmatprep.subr.bf16.mxu0 0
  %105 = vmatpush1.bf16.msra.mxu0 0
  %106 = vmatprep.subr.bf16.mxu0 0
  %107 = vmatpush1.bf16.msra.mxu0 0
  %108 = vmatprep.subr.bf16.mxu0 0
  %109 = vmatpush1.bf16.msra.mxu0 0
  %110 = vmatprep.subr.bf16.mxu0 0
  %111 = vmatpush1.bf16.msra.mxu0 0
  %112 = vmatprep.subr.bf16.mxu0 0
  %113 = vmatpush1.bf16.msra.mxu0 0
  %114 = vmatprep.subr.bf16.mxu0 0
  %115 = vmatpush1.bf16.msra.mxu0 0
  %116 = vmatprep.subr.bf16.mxu0 0
  %117 = vmatpush1.bf16.msra.mxu0 0
  %118 = vmatprep.subr.bf16.mxu0 0
  %119 = vmatpush1.bf16.msra.mxu0 0
  %120 = vmatprep.subr.bf16.mxu0 0
  %121 = vmatpush1.bf16.msra.mxu0 0
  %122 = vmatprep.subr.bf16.mxu0 0
  %123 = vmatpush1.bf16.msra.mxu0 0
  %124 = vmatprep.subr.bf16.mxu0 0
  %125 = vmatpush1.bf16.msra.mxu0 0
  %126 = vmatprep.subr.bf16.mxu0 0
  %127 = vmatpush1.bf16.msra.mxu0 0
  %128 = vmatprep.mubr.bf16.mxu0 0
  %129 = vmatmul.mubr.bf16.gmra.mrb[0].mxu0 %v94
  %v130 = vpop.f32.mrb[0].mxu0
  %v131 = vadd.f32 %v79, %v130
  %v132 = vpop.f32.mrb[0].mxu0
  %v133 = vpop.f32.mrb[0].mxu0
  %v134 = vadd.f32 %v79, %v133
  %v135 = vpop.f32.mrb[0].mxu0
  %136 = vdwg.mxu0
  %137 = vst [vmem:[%s5] sm:$0xff] %v131
  %138 = vst [vmem:[%s5 + $0x8] sm:$0xff] %v134
  // Predicated region
  $region22: #{forward.44} parent=0 // pred_check
    _
  $region23: #{forward.44} parent=0 // pred_check_branch
    %140 = sbr.rel (0) target = $region25
  $region24: #{forward.44} parent=0 // pred_region
    _
  $region25: #{forward.44} parent=0 // pred_fallthru
    _
  // Predicated region
  $region26: #{forward.44} parent=0 // pred_check
    _
  $region27: #{forward.44} parent=0 // pred_check_branch
    %142 = sbr.rel (0) target = $region29
  $region28: #{forward.44} parent=0 // pred_region
    _
  $region29: #{forward.44} parent=0 // pred_fallthru
    _

// kernel: forward.45
$region0: #{forward.45}
  #allocation0 [shape = 'u32[]', space=smem, size = 0x4, offset = 0x4, fixed_abs, tag = 'smem constant byte address 0x4 - core index']
  #allocation1 [shape = 'u32[144,128]{1,0:T(1,128)}', space=vmem, size = 0x12000, scoped, tag = 'internal scratch']
  %s0 = inlined_call_operand.vmem [shape: bf16[2,5,128], index: 0, kind: input, shape index: {}]
  %s1 = inlined_call_operand.vmem [shape: bf16[2,5,128], index: 1, kind: input, shape index: {}]
  %s2 = inlined_call_operand.vmem [shape: bf16[2,5,128], index: 2, kind: input, shape index: {}]
  %s3 = inlined_call_operand.vmem [shape: f32[5,5], index: 3, kind: input, shape index: {}]
  %s4 = inlined_call_operand.vmem [shape: f32[2,5,128], index: 4, kind: output, shape index: {}]
  %s5 = sld [smem:[#allocation0]]
  $region26: #{forward.45} parent=0
    _
  %s7 = ssub.s32 1, %s5
  %s8 = scalar_select 0, %s7, %s5
  // Predicated region
  $region2: #{forward.45} parent=0 // pred_check
    _
  $region3: #{forward.45} parent=0 // pred_check_branch
    %10 = sbr.rel (0) target = $region5
  $region4: #{forward.45} parent=0 // pred_region
    _
  $region5: #{forward.45} parent=0 // pred_fallthru
    _
  // Predicated region
  $region6: #{forward.45} parent=0 // pred_check
    _
  $region7: #{forward.45} parent=0 // pred_check_branch
    %12 = sbr.rel (0) target = $region9
  $region8: #{forward.45} parent=0 // pred_region
    _
  $region9: #{forward.45} parent=0 // pred_fallthru
    _
  // Predicated region
  $region10: #{forward.45} parent=0 // pred_check
    _
  $region11: #{forward.45} parent=0 // pred_check_branch
    %14 = sbr.rel (0) target = $region13
  $region12: #{forward.45} parent=0 // pred_region
    _
  $region13: #{forward.45} parent=0 // pred_fallthru
    _
  // Predicated region
  $region14: #{forward.45} parent=0 // pred_check
    _
  $region15: #{forward.45} parent=0 // pred_check_branch
    %16 = sbr.rel (0) target = $region17
  $region16: #{forward.45} parent=0 // pred_region
    _
  $region17: #{forward.45} parent=0 // pred_fallthru
    _
  %v18 = vld [vmem:[%s0] sm:$0x7]
  %v19 = vld [vmem:[%s0 + $0x4] sm:$0x7]
  %v20 = vld [vmem:[%s1] sm:$0x7]
  %v21 = vld [vmem:[%s1 + $0x4] sm:$0x7]
  %22 = vmatprep.subr.bf16.mxu0 0
  %23 = vmatpush1.bf16.xpose.msra.mxu0 %v20
  %24 = vmatprep.subr.bf16.mxu0 0
  %25 = vmatpush1.bf16.xpose.msra.mxu0 0
  %26 = vmatprep.subr.bf16.mxu0 0
  %27 = vmatpush1.bf16.xpose.msra.mxu0 0
  %28 = vmatprep.subr.bf16.mxu0 0
  %29 = vmatpush1.bf16.xpose.msra.mxu0 0
  %30 = vmatprep.subr.bf16.mxu0 0
  %31 = vmatpush1.bf16.xpose.msra.mxu0 0
  %32 = vmatprep.subr.bf16.mxu0 0
  %33 = vmatpush1.bf16.xpose.msra.mxu0 0
  %34 = vmatprep.subr.bf16.mxu0 0
  %35 = vmatpush1.bf16.xpose.msra.mxu0 0
  %36 = vmatprep.subr.bf16.mxu0 0
  %37 = vmatpush1.bf16.xpose.msra.mxu0 0
  %38 = vmatprep.subr.bf16.mxu0 0
  %39 = vmatpush1.bf16.xpose.msra.mxu0 0
  %40 = vmatprep.subr.bf16.mxu0 0
  %41 = vmatpush1.bf16.xpose.msra.mxu0 0
  %42 = vmatprep.subr.bf16.mxu0 0
  %43 = vmatpush1.bf16.xpose.msra.mxu0 0
  %44 = vmatprep.subr.bf16.mxu0 0
  %45 = vmatpush1.bf16.xpose.msra.mxu0 0
  %46 = vmatprep.subr.bf16.mxu0 0
  %47 = vmatpush1.bf16.xpose.msra.mxu0 0
  %48 = vmatprep.subr.bf16.mxu0 0
  %49 = vmatpush1.bf16.xpose.msra.mxu0 0
  %50 = vmatprep.subr.bf16.mxu0 0
  %51 = vmatpush1.bf16.xpose.msra.mxu0 0
  %52 = vmatprep.subr.bf16.mxu0 0
  %53 = vmatpush1.bf16.xpose.msra.mxu0 0
  %54 = vmatprep.mubr.bf16.mxu0 0
  %55 = vmatmul.mubr.bf16.gmra.mrb[0].mxu0 %v18
  %v56 = vpop.f32.mrb[0].mxu0
  %v57 = vadd.f32 0.0, %v56
  %v58 = vpop.f32.mrb[0].mxu0
  %v59 = vpop.f32.mrb[0].mxu0
  %v60 = vpop.f32.mrb[0].mxu0
  %61 = vdwg.mxu0
  %62 = vmatprep.subr.bf16.mxu0 0
  %63 = vmatpush1.bf16.xpose.msra.mxu0 %v21
  %64 = vmatprep.subr.bf16.mxu0 0
  %65 = vmatpush1.bf16.xpose.msra.mxu0 0
  %66 = vmatprep.subr.bf16.mxu0 0
  %67 = vmatpush1.bf16.xpose.msra.mxu0 0
  %68 = vmatprep.subr.bf16.mxu0 0
  %69 = vmatpush1.bf16.xpose.msra.mxu0 0
  %70 = vmatprep.subr.bf16.mxu0 0
  %71 = vmatpush1.bf16.xpose.msra.mxu0 0
  %72 = vmatprep.subr.bf16.mxu0 0
  %73 = vmatpush1.bf16.xpose.msra.mxu0 0
  %74 = vmatprep.subr.bf16.mxu0 0
  %75 = vmatpush1.bf16.xpose.msra.mxu0 0
  %76 = vmatprep.subr.bf16.mxu0 0
  %77 = vmatpush1.bf16.xpose.msra.mxu0 0
  %78 = vmatprep.subr.bf16.mxu0 0
  %79 = vmatpush1.bf16.xpose.msra.mxu0 0
  %80 = vmatprep.subr.bf16.mxu0 0
  %81 = vmatpush1.bf16.xpose.msra.mxu0 0
  %82 = vmatprep.subr.bf16.mxu0 0
  %83 = vmatpush1.bf16.xpose.msra.mxu0 0
  %84 = vmatprep.subr.bf16.mxu0 0
  %85 = vmatpush1.bf16.xpose.msra.mxu0 0
  %86 = vmatprep.subr.bf16.mxu0 0
  %87 = vmatpush1.bf16.xpose.msra.mxu0 0
  %88 = vmatprep.subr.bf16.mxu0 0
  %89 = vmatpush1.bf16.xpose.msra.mxu0 0
  %90 = vmatprep.subr.bf16.mxu0 0
  %91 = vmatpush1.bf16.xpose.msra.mxu0 0
  %92 = vmatprep.subr.bf16.mxu0 0
  %93 = vmatpush1.bf16.xpose.msra.mxu0 0
  %94 = vmatprep.mubr.bf16.mxu0 0
  %95 = vmatmul.mubr.bf16.gmra.mrb[0].mxu0 %v19
  %v96 = vpop.f32.mrb[0].mxu0
  %v97 = vadd.f32 0.0, %v96
  %v98 = vpop.f32.mrb[0].mxu0
  %v99 = vpop.f32.mrb[0].mxu0
  %v100 = vpop.f32.mrb[0].mxu0
  %101 = vdwg.mxu0
  %v102 = vmul.f32 %v57, 0.17677669
  %v103 = vmul.f32 %v97, 0.17677669
  %v104 = vld [vmem:[%s3] sm:$0x1f]
  %v105 = vadd.f32 %v102, %v104
  %v106 = vadd.f32 %v103, %v104
  %vm107 = vcmask 36864
  %v108 = vsel %vm107, %v105, -inf
  %109 = vmax.xlane.f32.xlu0 %v108
  %v110 = vpop.xlane.xlu0 %109
  %v111 = vsel %vm107, %v106, -inf
  %112 = vmax.xlane.f32.xlu0 %v111
  %v113 = vpop.xlane.xlu0 %112
  %v114 = vsub.f32 %v105, %v110
  %v115 = vsub.f32 %v106, %v113
  %v116 = vmul.f32 %v114, 1.442695
  %v117 = vpow.pop %v116
  %v118 = vmul.f32 %v115, 1.442695
  %v119 = vpow.pop %v118
  %v120 = vsel %vm107, %v117, 0.0
  %121 = vadd.xlane.f32.xlu0 %v120
  %v122 = vpop.xlane.xlu0 %121
  %v123 = vsel %vm107, %v119, 0.0
  %124 = vadd.xlane.f32.xlu0 %v123
  %v125 = vpop.xlane.xlu0 %124
  %v126 = vrcp.pop %v122
  %v127 = vmul.f32 %v117, %v126
  %v128 = vrcp.pop %v125
  %v129 = vmul.f32 %v119, %v128
  %v130 = vpack.c.bf16 %v127, %v127
  %v131 = vpack.c.bf16 %v129, %v129
  %v132 = vld [vmem:[%s2] sm:$0x7]
  %v133 = vld [vmem:[%s2 + $0x4] sm:$0x7]
  %vm134 = vcmask 39936
  %v136 = vsel %vm134, %v130, 0
  %vm138 = vcmask 1041408
  %vm139 = vcmask 1042432
  %v140 = vsel %vm138, 4294967295, 65535
  %v141 = vsel %vm139, %v140, 0
  %v143 = vand.u32 %v132, %v141
  %145 = vmatprep.subr.bf16.mxu0 0
  %146 = vmatpush1.bf16.msra.mxu0 %v143
  %147 = vmatprep.subr.bf16.mxu0 0
  %148 = vmatpush1.bf16.msra.mxu0 0
  %149 = vmatprep.subr.bf16.mxu0 0
  %150 = vmatpush1.bf16.msra.mxu0 0
  %151 = vmatprep.subr.bf16.mxu0 0
  %152 = vmatpush1.bf16.msra.mxu0 0
  %153 = vmatprep.subr.bf16.mxu0 0
  %154 = vmatpush1.bf16.msra.mxu0 0
  %155 = vmatprep.subr.bf16.mxu0 0
  %156 = vmatpush1.bf16.msra.mxu0 0
  %157 = vmatprep.subr.bf16.mxu0 0
  %158 = vmatpush1.bf16.msra.mxu0 0
  %159 = vmatprep.subr.bf16.mxu0 0
  %160 = vmatpush1.bf16.msra.mxu0 0
  %161 = vmatprep.subr.bf16.mxu0 0
  %162 = vmatpush1.bf16.msra.mxu0 0
  %163 = vmatprep.subr.bf16.mxu0 0
  %164 = vmatpush1.bf16.msra.mxu0 0
  %165 = vmatprep.subr.bf16.mxu0 0
  %166 = vmatpush1.bf16.msra.mxu0 0
  %167 = vmatprep.subr.bf16.mxu0 0
  %168 = vmatpush1.bf16.msra.mxu0 0
  %169 = vmatprep.subr.bf16.mxu0 0
  %170 = vmatpush1.bf16.msra.mxu0 0
  %171 = vmatprep.subr.bf16.mxu0 0
  %172 = vmatpush1.bf16.msra.mxu0 0
  %173 = vmatprep.subr.bf16.mxu0 0
  %174 = vmatpush1.bf16.msra.mxu0 0
  %175 = vmatprep.subr.bf16.mxu0 0
  %176 = vmatpush1.bf16.msra.mxu0 0
  %177 = vmatprep.mubr.bf16.mxu0 0
  %178 = vmatmul.mubr.bf16.gmra.mrb[0].mxu0 %v136
  %v179 = vpop.f32.mrb[0].mxu0
  %v180 = vadd.f32 0.0, %v179
  %v181 = vpop.f32.mrb[0].mxu0
  %v182 = vpop.f32.mrb[0].mxu0
  %v183 = vpop.f32.mrb[0].mxu0
  %184 = vdwg.mxu0
  %v186 = vsel %vm134, %v131, 0
  %v189 = vand.u32 %v133, %v141
  %191 = vmatprep.subr.bf16.mxu0 0
  %192 = vmatpush1.bf16.msra.mxu0 %v189
  %193 = vmatprep.subr.bf16.mxu0 0
  %194 = vmatpush1.bf16.msra.mxu0 0
  %195 = vmatprep.subr.bf16.mxu0 0
  %196 = vmatpush1.bf16.msra.mxu0 0
  %197 = vmatprep.subr.bf16.mxu0 0
  %198 = vmatpush1.bf16.msra.mxu0 0
  %199 = vmatprep.subr.bf16.mxu0 0
  %200 = vmatpush1.bf16.msra.mxu0 0
  %201 = vmatprep.subr.bf16.mxu0 0
  %202 = vmatpush1.bf16.msra.mxu0 0
  %203 = vmatprep.subr.bf16.mxu0 0
  %204 = vmatpush1.bf16.msra.mxu0 0
  %205 = vmatprep.subr.bf16.mxu0 0
  %206 = vmatpush1.bf16.msra.mxu0 0
  %207 = vmatprep.subr.bf16.mxu0 0
  %208 = vmatpush1.bf16.msra.mxu0 0
  %209 = vmatprep.subr.bf16.mxu0 0
  %210 = vmatpush1.bf16.msra.mxu0 0
  %211 = vmatprep.subr.bf16.mxu0 0
  %212 = vmatpush1.bf16.msra.mxu0 0
  %213 = vmatprep.subr.bf16.mxu0 0
  %214 = vmatpush1.bf16.msra.mxu0 0
  %215 = vmatprep.subr.bf16.mxu0 0
  %216 = vmatpush1.bf16.msra.mxu0 0
  %217 = vmatprep.subr.bf16.mxu0 0
  %218 = vmatpush1.bf16.msra.mxu0 0
  %219 = vmatprep.subr.bf16.mxu0 0
  %220 = vmatpush1.bf16.msra.mxu0 0
  %221 = vmatprep.subr.bf16.mxu0 0
  %222 = vmatpush1.bf16.msra.mxu0 0
  %223 = vmatprep.mubr.bf16.mxu0 0
  %224 = vmatmul.mubr.bf16.gmra.mrb[0].mxu0 %v186
  %v225 = vpop.f32.mrb[0].mxu0
  %v226 = vadd.f32 0.0, %v225
  %v227 = vpop.f32.mrb[0].mxu0
  %v228 = vpop.f32.mrb[0].mxu0
  %v229 = vpop.f32.mrb[0].mxu0
  %230 = vdwg.mxu0
  %231 = vst [vmem:[%s4] sm:$0x1f] %v180
  %232 = vst [vmem:[%s4 + $0x8] sm:$0x1f] %v226
  // Predicated region
  $region18: #{forward.45} parent=0 // pred_check
    _
  $region19: #{forward.45} parent=0 // pred_check_branch
    %234 = sbr.rel (0) target = $region21
  $region20: #{forward.45} parent=0 // pred_region
    _
  $region21: #{forward.45} parent=0 // pred_fallthru
    _
  // Predicated region
  $region22: #{forward.45} parent=0 // pred_check
    _
  $region23: #{forward.45} parent=0 // pred_check_branch
    %236 = sbr.rel (0) target = $region25
  $region24: #{forward.45} parent=0 // pred_region
    _
  $region25: #{forward.45} parent=0 // pred_fallthru
    _

// kernel: forward.46
$region0: #{forward.46}
  #allocation0 [shape = 'u32[]', space=smem, size = 0x4, offset = 0x4, fixed_abs, tag = 'smem constant byte address 0x4 - core index']
  #allocation1 [shape = 'u32[144,128]{1,0:T(1,128)}', space=vmem, size = 0x12000, scoped, tag = 'internal scratch']
  #allocation2 [shape = 'f32[16,128]{1,0:T(8,128)}', space=vmem, size = 0x2000, scoped, tag = 'scratch operand']
  %s0 = inlined_call_operand.vmem [shape: bf16[16,128], index: 0, kind: input, shape index: {}]
  %s1 = inlined_call_operand.vmem [shape: bf16[128,128], index: 1, kind: input, shape index: {}]
  %s2 = inlined_call_operand.vmem [shape: f32[1,128], index: 2, kind: input, shape index: {}]
  %s3 = inlined_call_operand.vmem [shape: f32[16,128], index: 3, kind: input, shape index: {}]
  %s4 = inlined_call_operand.vmem [shape: f32[16,128], index: 4, kind: output, shape index: {}]
  %s5 = sld [smem:[#allocation0]]
  $region34: #{forward.46} parent=0
    _
  %s7 = ssub.s32 1, %s5
  %s8 = scalar_select 0, %s7, %s5
  // Predicated region
  $region2: #{forward.46} parent=0 // pred_check
    _
  $region3: #{forward.46} parent=0 // pred_check_branch
    %10 = sbr.rel (0) target = $region5
  $region4: #{forward.46} parent=0 // pred_region
    _
  $region5: #{forward.46} parent=0 // pred_fallthru
    _
  // Predicated region
  $region6: #{forward.46} parent=0 // pred_check
    _
  $region7: #{forward.46} parent=0 // pred_check_branch
    %12 = sbr.rel (0) target = $region9
  $region8: #{forward.46} parent=0 // pred_region
    _
  $region9: #{forward.46} parent=0 // pred_fallthru
    _
  // Predicated region
  $region10: #{forward.46} parent=0 // pred_check
    _
  $region11: #{forward.46} parent=0 // pred_check_branch
    %14 = sbr.rel (0) target = $region13
  $region12: #{forward.46} parent=0 // pred_region
    _
  $region13: #{forward.46} parent=0 // pred_fallthru
    _
  // Predicated region
  $region14: #{forward.46} parent=0 // pred_check
    _
  $region15: #{forward.46} parent=0 // pred_check_branch
    %16 = sbr.rel (0) target = $region17
  $region16: #{forward.46} parent=0 // pred_region
    _
  $region17: #{forward.46} parent=0 // pred_fallthru
    _
  %p18 = scmp.eq.s32.totalorder 0, 0
  // Predicated region
  $region18: #{forward.46} parent=0 // pred_check
    %p19 = pneg %p18
  $region19: #{forward.46} parent=0 // pred_check_branch
    %21 = sbr.rel (%p19) target = $region21
  $region20: #{forward.46} parent=0 // pred_region
    %22 = vst [vmem:[#allocation2] sm:$0xff] 0.0
    %23 = vst [vmem:[#allocation2 + $0x8] sm:$0xff] 0.0
  $region21: #{forward.46} parent=0 // pred_fallthru
    _
  %v24 = vld [vmem:[#allocation2] sm:$0xff]
  %v25 = vld [vmem:[#allocation2 + $0x8] sm:$0xff]
  %v26 = vld [vmem:[%s0] sm:$0xf]
  %v27 = vld [vmem:[%s0 + $0x4] sm:$0xf]
  %v28 = vld [vmem:[%s1] sm:$0xf]
  %v29 = vld [vmem:[%s1 + $0x4] sm:$0xf]
  %v30 = vld [vmem:[%s1 + $0x8] sm:$0xf]
  %v31 = vld [vmem:[%s1 + $0xc] sm:$0xf]
  %v32 = vld [vmem:[%s1 + $0x10] sm:$0xf]
  %v33 = vld [vmem:[%s1 + $0x14] sm:$0xf]
  %v34 = vld [vmem:[%s1 + $0x18] sm:$0xf]
  %v35 = vld [vmem:[%s1 + $0x1c] sm:$0xf]
  %v36 = vld [vmem:[%s1 + $0x20] sm:$0xf]
  %v37 = vld [vmem:[%s1 + $0x24] sm:$0xf]
  %v38 = vld [vmem:[%s1 + $0x28] sm:$0xf]
  %v39 = vld [vmem:[%s1 + $0x2c] sm:$0xf]
  %v40 = vld [vmem:[%s1 + $0x30] sm:$0xf]
  %v41 = vld [vmem:[%s1 + $0x34] sm:$0xf]
  %v42 = vld [vmem:[%s1 + $0x38] sm:$0xf]
  %v43 = vld [vmem:[%s1 + $0x3c] sm:$0xf]
  %v46 = vunpack.c.l.b16 %v26
  %v47 = vunpack.c.l.b16 %v27
  %v48 = vpack.c.b16 %v47, %v46
  %v66 = vunpack.c.l.b16 %v28
  %v67 = vunpack.c.l.b16 %v29
  %v68 = vunpack.c.l.b16 %v30
  %v69 = vunpack.c.l.b16 %v31
  %v70 = vunpack.c.l.b16 %v32
  %v71 = vunpack.c.l.b16 %v33
  %v72 = vunpack.c.l.b16 %v34
  %v73 = vunpack.c.l.b16 %v35
  %v74 = vunpack.c.l.b16 %v36
  %v75 = vunpack.c.l.b16 %v37
  %v76 = vunpack.c.l.b16 %v38
  %v77 = vunpack.c.l.b16 %v39
  %v78 = vunpack.c.l.b16 %v40
  %v79 = vunpack.c.l.b16 %v41
  %v80 = vunpack.c.l.b16 %v42
  %v81 = vunpack.c.l.b16 %v43
  %v82 = vpack.c.b16 %v67, %v66
  %v83 = vpack.c.b16 %v69, %v68
  %v84 = vpack.c.b16 %v71, %v70
  %v85 = vpack.c.b16 %v73, %v72
  %v86 = vpack.c.b16 %v75, %v74
  %v87 = vpack.c.b16 %v77, %v76
  %v88 = vpack.c.b16 %v79, %v78
  %v89 = vpack.c.b16 %v81, %v80
  %98 = vmatprep.subr.bf16.mxu0 0
  %99 = vmatpush1.bf16.msra.mxu0 %v82
  %100 = vmatprep.subr.bf16.mxu0 0
  %101 = vmatpush1.bf16.msra.mxu0 %v83
  %102 = vmatprep.subr.bf16.mxu0 0
  %103 = vmatpush1.bf16.msra.mxu0 %v84
  %104 = vmatprep.subr.bf16.mxu0 0
  %105 = vmatpush1.bf16.msra.mxu0 %v85
  %106 = vmatprep.subr.bf16.mxu0 0
  %107 = vmatpush1.bf16.msra.mxu0 %v86
  %108 = vmatprep.subr.bf16.mxu0 0
  %109 = vmatpush1.bf16.msra.mxu0 %v87
  %110 = vmatprep.subr.bf16.mxu0 0
  %111 = vmatpush1.bf16.msra.mxu0 %v88
  %112 = vmatprep.subr.bf16.mxu0 0
  %113 = vmatpush1.bf16.msra.mxu0 %v89
  %114 = vmatprep.subr.bf16.mxu0 0
  %115 = vmatpush1.bf16.msra.mxu0 0
  %116 = vmatprep.subr.bf16.mxu0 0
  %117 = vmatpush1.bf16.msra.mxu0 0
  %118 = vmatprep.subr.bf16.mxu0 0
  %119 = vmatpush1.bf16.msra.mxu0 0
  %120 = vmatprep.subr.bf16.mxu0 0
  %121 = vmatpush1.bf16.msra.mxu0 0
  %122 = vmatprep.subr.bf16.mxu0 0
  %123 = vmatpush1.bf16.msra.mxu0 0
  %124 = vmatprep.subr.bf16.mxu0 0
  %125 = vmatpush1.bf16.msra.mxu0 0
  %126 = vmatprep.subr.bf16.mxu0 0
  %127 = vmatpush1.bf16.msra.mxu0 0
  %128 = vmatprep.subr.bf16.mxu0 0
  %129 = vmatpush1.bf16.msra.mxu0 0
  %130 = vmatprep.mubr.bf16.mxu0 0
  %131 = vmatmul.mubr.bf16.gmra.mrb[0].mxu0 %v48
  %v132 = vpop.f32.mrb[0].mxu0
  %v133 = vadd.f32 0.0, %v132
  %v134 = vpop.f32.mrb[0].mxu0
  %v135 = vpop.f32.mrb[0].mxu0
  %v136 = vadd.f32 0.0, %v135
  %v137 = vpop.f32.mrb[0].mxu0
  %138 = vdwg.mxu0
  %v139 = vadd.f32 %v24, %v133
  %v140 = vadd.f32 %v25, %v136
  %141 = vst [vmem:[#allocation2] sm:$0xff] %v139
  %142 = vst [vmem:[#allocation2 + $0x8] sm:$0xff] %v140
  // Predicated region
  $region22: #{forward.46} parent=0 // pred_check
    %p143 = pneg %p18
  $region23: #{forward.46} parent=0 // pred_check_branch
    %145 = sbr.rel (%p143) target = $region25
  $region24: #{forward.46} parent=0 // pred_region
    %v146 = vld [vmem:[#allocation2] sm:$0xff]
    %v147 = vld [vmem:[#allocation2 + $0x8] sm:$0xff]
    %v148 = vld [vmem:[%s2] sm:$0x1]
    %v150 = vlaneseq
    %v151 = vshrl.u32 %v150, 7
    %v152 = vsub.s32 0, %v151
    %v153 = vrot.slane %v148, %v152
    %v155 = vadd.f32 %v146, %v153
    %v156 = vadd.f32 %v147, %v153
    %v157 = vld [vmem:[%s3] sm:$0xff]
    %v158 = vld [vmem:[%s3 + $0x8] sm:$0xff]
    %v159 = vadd.f32 %v155, %v157
    %v160 = vadd.f32 %v156, %v158
    %161 = vst [vmem:[%s4] sm:$0xff] %v159
    %162 = vst [vmem:[%s4 + $0x8] sm:$0xff] %v160
  $region25: #{forward.46} parent=0 // pred_fallthru
    _
  // Predicated region
  $region26: #{forward.46} parent=0 // pred_check
    _
  $region27: #{forward.46} parent=0 // pred_check_branch
    %164 = sbr.rel (0) target = $region29
  $region28: #{forward.46} parent=0 // pred_region
    _
  $region29: #{forward.46} parent=0 // pred_fallthru
    _
  // Predicated region
  $region30: #{forward.46} parent=0 // pred_check
    _
  $region31: #{forward.46} parent=0 // pred_check_branch
    %166 = sbr.rel (0) target = $region33
  $region32: #{forward.46} parent=0 // pred_region
    _
  $region33: #{forward.46} parent=0 // pred_fallthru
    _

// kernel: forward.49
$region0: #{forward.49}
  #allocation0 [shape = 'u32[]', space=smem, size = 0x4, offset = 0x4, fixed_abs, tag = 'smem constant byte address 0x4 - core index']
  #allocation1 [shape = 'u32[144,128]{1,0:T(1,128)}', space=vmem, size = 0x12000, scoped, tag = 'internal scratch']
  %s0 = inlined_call_operand.vmem [shape: bf16[2,5,128], index: 0, kind: input, shape index: {}]
  %s1 = inlined_call_operand.vmem [shape: bf16[2,4,128], index: 1, kind: input, shape index: {}]
  %s2 = inlined_call_operand.vmem [shape: bf16[2,4,128], index: 2, kind: input, shape index: {}]
  %s3 = inlined_call_operand.vmem [shape: f32[2,5,128], index: 3, kind: output, shape index: {}]
  %s4 = sld [smem:[#allocation0]]
  $region22: #{forward.49} parent=0
    _
  %s6 = ssub.s32 1, %s4
  %s7 = scalar_select 0, %s6, %s4
  // Predicated region
  $region2: #{forward.49} parent=0 // pred_check
    _
  $region3: #{forward.49} parent=0 // pred_check_branch
    %9 = sbr.rel (0) target = $region5
  $region4: #{forward.49} parent=0 // pred_region
    _
  $region5: #{forward.49} parent=0 // pred_fallthru
    _
  // Predicated region
  $region6: #{forward.49} parent=0 // pred_check
    _
  $region7: #{forward.49} parent=0 // pred_check_branch
    %11 = sbr.rel (0) target = $region9
  $region8: #{forward.49} parent=0 // pred_region
    _
  $region9: #{forward.49} parent=0 // pred_fallthru
    _
  // Predicated region
  $region10: #{forward.49} parent=0 // pred_check
    _
  $region11: #{forward.49} parent=0 // pred_check_branch
    %13 = sbr.rel (0) target = $region13
  $region12: #{forward.49} parent=0 // pred_region
    _
  $region13: #{forward.49} parent=0 // pred_fallthru
    _
  %v15 = vld [vmem:[%s0] sm:$0x7]
  %v16 = vld [vmem:[%s0 + $0x4] sm:$0x7]
  %v17 = vld [vmem:[%s1] sm:$0x3]
  %v18 = vld [vmem:[%s1 + $0x2] sm:$0x3]
  %19 = vmatprep.subr.bf16.mxu0 0
  %20 = vmatpush1.bf16.xpose.msra.mxu0 %v17
  %21 = vmatprep.subr.bf16.mxu0 0
  %22 = vmatpush1.bf16.xpose.msra.mxu0 0
  %23 = vmatprep.subr.bf16.mxu0 0
  %24 = vmatpush1.bf16.xpose.msra.mxu0 0
  %25 = vmatprep.subr.bf16.mxu0 0
  %26 = vmatpush1.bf16.xpose.msra.mxu0 0
  %27 = vmatprep.subr.bf16.mxu0 0
  %28 = vmatpush1.bf16.xpose.msra.mxu0 0
  %29 = vmatprep.subr.bf16.mxu0 0
  %30 = vmatpush1.bf16.xpose.msra.mxu0 0
  %31 = vmatprep.subr.bf16.mxu0 0
  %32 = vmatpush1.bf16.xpose.msra.mxu0 0
  %33 = vmatprep.subr.bf16.mxu0 0
  %34 = vmatpush1.bf16.xpose.msra.mxu0 0
  %35 = vmatprep.subr.bf16.mxu0 0
  %36 = vmatpush1.bf16.xpose.msra.mxu0 0
  %37 = vmatprep.subr.bf16.mxu0 0
  %38 = vmatpush1.bf16.xpose.msra.mxu0 0
  %39 = vmatprep.subr.bf16.mxu0 0
  %40 = vmatpush1.bf16.xpose.msra.mxu0 0
  %41 = vmatprep.subr.bf16.mxu0 0
  %42 = vmatpush1.bf16.xpose.msra.mxu0 0
  %43 = vmatprep.subr.bf16.mxu0 0
  %44 = vmatpush1.bf16.xpose.msra.mxu0 0
  %45 = vmatprep.subr.bf16.mxu0 0
  %46 = vmatpush1.bf16.xpose.msra.mxu0 0
  %47 = vmatprep.subr.bf16.mxu0 0
  %48 = vmatpush1.bf16.xpose.msra.mxu0 0
  %49 = vmatprep.subr.bf16.mxu0 0
  %50 = vmatpush1.bf16.xpose.msra.mxu0 0
  %51 = vmatprep.mubr.bf16.mxu0 0
  %52 = vmatmul.mubr.bf16.gmra.mrb[0].mxu0 %v15
  %v53 = vpop.f32.mrb[0].mxu0
  %v54 = vadd.f32 0.0, %v53
  %v55 = vpop.f32.mrb[0].mxu0
  %v56 = vpop.f32.mrb[0].mxu0
  %v57 = vpop.f32.mrb[0].mxu0
  %58 = vdwg.mxu0
  %59 = vmatprep.subr.bf16.mxu0 0
  %60 = vmatpush1.bf16.xpose.msra.mxu0 %v18
  %61 = vmatprep.subr.bf16.mxu0 0
  %62 = vmatpush1.bf16.xpose.msra.mxu0 0
  %63 = vmatprep.subr.bf16.mxu0 0
  %64 = vmatpush1.bf16.xpose.msra.mxu0 0
  %65 = vmatprep.subr.bf16.mxu0 0
  %66 = vmatpush1.bf16.xpose.msra.mxu0 0
  %67 = vmatprep.subr.bf16.mxu0 0
  %68 = vmatpush1.bf16.xpose.msra.mxu0 0
  %69 = vmatprep.subr.bf16.mxu0 0
  %70 = vmatpush1.bf16.xpose.msra.mxu0 0
  %71 = vmatprep.subr.bf16.mxu0 0
  %72 = vmatpush1.bf16.xpose.msra.mxu0 0
  %73 = vmatprep.subr.bf16.mxu0 0
  %74 = vmatpush1.bf16.xpose.msra.mxu0 0
  %75 = vmatprep.subr.bf16.mxu0 0
  %76 = vmatpush1.bf16.xpose.msra.mxu0 0
  %77 = vmatprep.subr.bf16.mxu0 0
  %78 = vmatpush1.bf16.xpose.msra.mxu0 0
  %79 = vmatprep.subr.bf16.mxu0 0
  %80 = vmatpush1.bf16.xpose.msra.mxu0 0
  %81 = vmatprep.subr.bf16.mxu0 0
  %82 = vmatpush1.bf16.xpose.msra.mxu0 0
  %83 = vmatprep.subr.bf16.mxu0 0
  %84 = vmatpush1.bf16.xpose.msra.mxu0 0
  %85 = vmatprep.subr.bf16.mxu0 0
  %86 = vmatpush1.bf16.xpose.msra.mxu0 0
  %87 = vmatprep.subr.bf16.mxu0 0
  %88 = vmatpush1.bf16.xpose.msra.mxu0 0
  %89 = vmatprep.subr.bf16.mxu0 0
  %90 = vmatpush1.bf16.xpose.msra.mxu0 0
  %91 = vmatprep.mubr.bf16.mxu0 0
  %92 = vmatmul.mubr.bf16.gmra.mrb[0].mxu0 %v16
  %v93 = vpop.f32.mrb[0].mxu0
  %v94 = vadd.f32 0.0, %v93
  %v95 = vpop.f32.mrb[0].mxu0
  %v96 = vpop.f32.mrb[0].mxu0
  %v97 = vpop.f32.mrb[0].mxu0
  %98 = vdwg.mxu0
  %v99 = vmul.f32 %v54, 0.17677669
  %v100 = vmul.f32 %v94, 0.17677669
  %vm101 = vcmask 28672
  %v102 = vsel %vm101, %v99, -inf
  %103 = vmax.xlane.f32.xlu0 %v102
  %v104 = vpop.xlane.xlu0 %103
  %v105 = vsel %vm101, %v100, -inf
  %106 = vmax.xlane.f32.xlu0 %v105
  %v107 = vpop.xlane.xlu0 %106
  %v108 = vsub.f32 %v99, %v104
  %v109 = vsub.f32 %v100, %v107
  %v110 = vmul.f32 %v108, 1.442695
  %v111 = vpow.pop %v110
  %v112 = vmul.f32 %v109, 1.442695
  %v113 = vpow.pop %v112
  %v114 = vsel %vm101, %v111, 0.0
  %115 = vadd.xlane.f32.xlu0 %v114
  %v116 = vpop.xlane.xlu0 %115
  %v117 = vsel %vm101, %v113, 0.0
  %118 = vadd.xlane.f32.xlu0 %v117
  %v119 = vpop.xlane.xlu0 %118
  %v120 = vrcp.pop %v116
  %v121 = vmul.f32 %v111, %v120
  %v122 = vrcp.pop %v119
  %v123 = vmul.f32 %v113, %v122
  %v124 = vpack.c.bf16 %v121, %v121
  %v125 = vpack.c.bf16 %v123, %v123
  %v126 = vld [vmem:[%s2] sm:$0x3]
  %v127 = vld [vmem:[%s2 + $0x2] sm:$0x3]
  %vm128 = vcmask 31744
  %v130 = vsel %vm128, %v124, 0
  %vm132 = vcmask 1041408
  %v134 = vsel %vm132, %v126, 0
  %136 = vmatprep.subr.bf16.mxu0 0
  %137 = vmatpush1.bf16.msra.mxu0 %v134
  %138 = vmatprep.subr.bf16.mxu0 0
  %139 = vmatpush1.bf16.msra.mxu0 0
  %140 = vmatprep.subr.bf16.mxu0 0
  %141 = vmatpush1.bf16.msra.mxu0 0
  %142 = vmatprep.subr.bf16.mxu0 0
  %143 = vmatpush1.bf16.msra.mxu0 0
  %144 = vmatprep.subr.bf16.mxu0 0
  %145 = vmatpush1.bf16.msra.mxu0 0
  %146 = vmatprep.subr.bf16.mxu0 0
  %147 = vmatpush1.bf16.msra.mxu0 0
  %148 = vmatprep.subr.bf16.mxu0 0
  %149 = vmatpush1.bf16.msra.mxu0 0
  %150 = vmatprep.subr.bf16.mxu0 0
  %151 = vmatpush1.bf16.msra.mxu0 0
  %152 = vmatprep.subr.bf16.mxu0 0
  %153 = vmatpush1.bf16.msra.mxu0 0
  %154 = vmatprep.subr.bf16.mxu0 0
  %155 = vmatpush1.bf16.msra.mxu0 0
  %156 = vmatprep.subr.bf16.mxu0 0
  %157 = vmatpush1.bf16.msra.mxu0 0
  %158 = vmatprep.subr.bf16.mxu0 0
  %159 = vmatpush1.bf16.msra.mxu0 0
  %160 = vmatprep.subr.bf16.mxu0 0
  %161 = vmatpush1.bf16.msra.mxu0 0
  %162 = vmatprep.subr.bf16.mxu0 0
  %163 = vmatpush1.bf16.msra.mxu0 0
  %164 = vmatprep.subr.bf16.mxu0 0
  %165 = vmatpush1.bf16.msra.mxu0 0
  %166 = vmatprep.subr.bf16.mxu0 0
  %167 = vmatpush1.bf16.msra.mxu0 0
  %168 = vmatprep.mubr.bf16.mxu0 0
  %169 = vmatmul.mubr.bf16.gmra.mrb[0].mxu0 %v130
  %v170 = vpop.f32.mrb[0].mxu0
  %v171 = vadd.f32 0.0, %v170
  %v172 = vpop.f32.mrb[0].mxu0
  %v173 = vpop.f32.mrb[0].mxu0
  %v174 = vpop.f32.mrb[0].mxu0
  %175 = vdwg.mxu0
  %v177 = vsel %vm128, %v125, 0
  %v180 = vsel %vm132, %v127, 0
  %182 = vmatprep.subr.bf16.mxu0 0
  %183 = vmatpush1.bf16.msra.mxu0 %v180
  %184 = vmatprep.subr.bf16.mxu0 0
  %185 = vmatpush1.bf16.msra.mxu0 0
  %186 = vmatprep.subr.bf16.mxu0 0
  %187 = vmatpush1.bf16.msra.mxu0 0
  %188 = vmatprep.subr.bf16.mxu0 0
  %189 = vmatpush1.bf16.msra.mxu0 0
  %190 = vmatprep.subr.bf16.mxu0 0
  %191 = vmatpush1.bf16.msra.mxu0 0
  %192 = vmatprep.subr.bf16.mxu0 0
  %193 = vmatpush1.bf16.msra.mxu0 0
  %194 = vmatprep.subr.bf16.mxu0 0
  %195 = vmatpush1.bf16.msra.mxu0 0
  %196 = vmatprep.subr.bf16.mxu0 0
  %197 = vmatpush1.bf16.msra.mxu0 0
  %198 = vmatprep.subr.bf16.mxu0 0
  %199 = vmatpush1.bf16.msra.mxu0 0
  %200 = vmatprep.subr.bf16.mxu0 0
  %201 = vmatpush1.bf16.msra.mxu0 0
  %202 = vmatprep.subr.bf16.mxu0 0
  %203 = vmatpush1.bf16.msra.mxu0 0
  %204 = vmatprep.subr.bf16.mxu0 0
  %205 = vmatpush1.bf16.msra.mxu0 0
  %206 = vmatprep.subr.bf16.mxu0 0
  %207 = vmatpush1.bf16.msra.mxu0 0
  %208 = vmatprep.subr.bf16.mxu0 0
  %209 = vmatpush1.bf16.msra.mxu0 0
  %210 = vmatprep.subr.bf16.mxu0 0
  %211 = vmatpush1.bf16.msra.mxu0 0
  %212 = vmatprep.subr.bf16.mxu0 0
  %213 = vmatpush1.bf16.msra.mxu0 0
  %214 = vmatprep.mubr.bf16.mxu0 0
  %215 = vmatmul.mubr.bf16.gmra.mrb[0].mxu0 %v177
  %v216 = vpop.f32.mrb[0].mxu0
  %v217 = vadd.f32 0.0, %v216
  %v218 = vpop.f32.mrb[0].mxu0
  %v219 = vpop.f32.mrb[0].mxu0
  %v220 = vpop.f32.mrb[0].mxu0
  %221 = vdwg.mxu0
  %222 = vst [vmem:[%s3] sm:$0x1f] %v171
  %223 = vst [vmem:[%s3 + $0x8] sm:$0x1f] %v217
  // Predicated region
  $region14: #{forward.49} parent=0 // pred_check
    _
  $region15: #{forward.49} parent=0 // pred_check_branch
    %225 = sbr.rel (0) target = $region17
  $region16: #{forward.49} parent=0 // pred_region
    _
  $region17: #{forward.49} parent=0 // pred_fallthru
    _
  // Predicated region
  $region18: #{forward.49} parent=0 // pred_check
    _
  $region19: #{forward.49} parent=0 // pred_check_branch
    %227 = sbr.rel (0) target = $region21
  $region20: #{forward.49} parent=0 // pred_region
    _
  $region21: #{forward.49} parent=0 // pred_fallthru
    _

// kernel: forward.51
$region0: #{forward.51}
  #allocation0 [shape = 'u32[]', space=smem, size = 0x4, offset = 0x4, fixed_abs, tag = 'smem constant byte address 0x4 - core index']
  #allocation1 [shape = 'u32[144,128]{1,0:T(1,128)}', space=vmem, size = 0x12000, scoped, tag = 'internal scratch']
  %s0 = inlined_call_operand.vmem [shape: f32[16,32], index: 0, kind: input, shape index: {}]
  %s1 = inlined_call_operand.vmem [shape: f32[1,32], index: 1, kind: input, shape index: {}]
  %s2 = inlined_call_operand.vmem [shape: f32[1,32], index: 2, kind: input, shape index: {}]
  %s3 = inlined_call_operand.vmem [shape: bf16[32,2048], index: 3, kind: input, shape index: {}]
  %s4 = inlined_call_operand.vmem [shape: f32[1,2048], index: 4, kind: input, shape index: {}]
  %s5 = inlined_call_operand.vmem [shape: f32[16,2048], index: 5, kind: output, shape index: {}]
  %s6 = sld [smem:[#allocation0]]
  $region95: #{forward.51} parent=0
    _
  %s8 = ssub.s32 1, %s6
  %s9 = scalar_select 0, %s8, %s6
  $region1: #{forward.51} parent=0
    #allocation2 [shape = 'u8[65536]{0}', space=vmem, size = 0x10000, scoped, tag = 'input window, operand 3']
    #allocation3 [shape = 'u8[65536]{0}', space=vmem, size = 0x10000, scoped, tag = 'output window, operand 0']
    loop: start=0, step=1, limit=6
    $region2: #{forward.51} parent=1 // loop_pre_header
      _
    $region3: #{forward.51} parent=1 // loop_header
      %s11 = sphi 0, %s15
      %p12 = scmp.ge.s32.totalorder %s11, 6
      %s18 = sphi 0, %s30
      %s19 = sphi 0, %s26
      %s20 = sphi 0, %s18
      %s21 = sphi 0, %s19
      %s22 = sphi 0, %s20
      %s23 = sphi 0, %s21
      %s33 = sphi 0, %s35
      %s36 = sphi 0, %s33
      %s37 = sphi 0, %s36
      %s53 = sphi 0, %s37
      %s57 = sphi 0, %s57
      %s59 = sphi 0, %s57
      %s60 = sphi 0, %s59
      %s74 = sphi 0, %s60
      %s78 = sphi 0, %s78
      %s80 = sphi 0, %s78
      %s81 = sphi 0, %s80
      %s95 = sphi 0, %s81
      %s101 = sphi 0, %s103
      %s104 = sphi 0, %s101
      %s105 = sphi 0, %s104
      %s121 = sphi 0, %s105
      %s127 = sphi 0, %s129
      %s130 = sphi 0, %s127
      %s131 = sphi 0, %s130
      %s147 = sphi 0, %s131
      %s155 = sphi 0, %s157
      %s158 = sphi 0, %s155
      %s159 = sphi 0, %s158
      %s175 = sphi 0, %s159
    $region4: #{forward.51} parent=1 // loop_header_branch
      %14 = sbr.rel (%p12) target = $region8
    $region5: #{forward.51} parent=1 // loop_body
      %s16 = ssub.s32 %s11, 1
      %s17 = ssub.s32 %s11, 2
      %s24 = sadd.s32 1, %s19
      %p25 = scmp.ge.s32.totalorder %s24, 4
      %s26 = scalar_select %p25, 0, %s24
      %s27 = sadd.s32 1, %s18
      %s28 = scalar_select %p25, %s27, %s18
      %p29 = scmp.ge.s32.totalorder %s28, 1
      %s30 = scalar_select %p29, 0, %s28
      %s31 = ssub.s32 %s18, %s30
      %p32 = scmp.eq.s32.totalorder %s31, 0
      %s34 = sadd.s32 %s33, 1
      %s35 = scalar_select %p32, %s33, %s34
      %p38 = pneg %p32
      %p39 = scmp.eq.s32.totalorder %s11, 3
      %p40 = por %p38, %p39
      %p41 = scmp.ne.s32.totalorder %s33, %s36
      %p42 = scmp.eq.s32.totalorder %s11, 0
      %p43 = por %p41, %p42
      %p44 = scmp.ne.s32.totalorder %s33, %s36
      %p45 = scmp.eq.s32.totalorder %s16, 3
      %p46 = por %p44, %p45
      %p47 = scmp.ne.s32.totalorder %s36, %s37
      %p48 = scmp.eq.s32.totalorder %s16, 0
      %p49 = por %p47, %p48
      %p50 = scmp.ne.s32.totalorder %s36, %s37
      %p51 = scmp.eq.s32.totalorder %s17, 3
      %p52 = por %p50, %p51
      %p54 = scmp.ne.s32.totalorder %s37, %s53
      %p55 = scmp.eq.s32.totalorder %s17, 0
      %p56 = por %p54, %p55
      %s58 = sadd.s32 %s57, 1
      %p61 = scmp.eq.s32.totalorder %s11, 3
      %p62 = scmp.ne.s32.totalorder %s57, %s59
      %p63 = scmp.eq.s32.totalorder %s11, 0
      %p64 = por %p62, %p63
      %p65 = scmp.ne.s32.totalorder %s57, %s59
      %p66 = scmp.eq.s32.totalorder %s16, 3
      %p67 = por %p65, %p66
      %p68 = scmp.ne.s32.totalorder %s59, %s60
      %p69 = scmp.eq.s32.totalorder %s16, 0
      %p70 = por %p68, %p69
      %p71 = scmp.ne.s32.totalorder %s59, %s60
      %p72 = scmp.eq.s32.totalorder %s17, 3
      %p73 = por %p71, %p72
      %p75 = scmp.ne.s32.totalorder %s60, %s74
      %p76 = scmp.eq.s32.totalorder %s17, 0
      %p77 = por %p75, %p76
      %s79 = sadd.s32 %s78, 1
      %p82 = scmp.eq.s32.totalorder %s11, 3
      %p83 = scmp.ne.s32.totalorder %s78, %s80
      %p84 = scmp.eq.s32.totalorder %s11, 0
      %p85 = por %p83, %p84
      %p86 = scmp.ne.s32.totalorder %s78, %s80
      %p87 = scmp.eq.s32.totalorder %s16, 3
      %p88 = por %p86, %p87
      %p89 = scmp.ne.s32.totalorder %s80, %s81
      %p90 = scmp.eq.s32.totalorder %s16, 0
      %p91 = por %p89, %p90
      %p92 = scmp.ne.s32.totalorder %s80, %s81
      %p93 = scmp.eq.s32.totalorder %s17, 3
      %p94 = por %p92, %p93
      %p96 = scmp.ne.s32.totalorder %s81, %s95
      %p97 = scmp.eq.s32.totalorder %s17, 0
      %p98 = por %p96, %p97
      %s99 = ssub.s32 %s19, %s26
      %p100 = scmp.eq.s32.totalorder %s99, 0
      %s102 = sadd.s32 %s101, 1
      %s103 = scalar_select %p100, %s101, %s102
      %p106 = pneg %p100
      %p107 = scmp.eq.s32.totalorder %s11, 3
      %p108 = por %p106, %p107
      %p109 = scmp.ne.s32.totalorder %s101, %s104
      %p110 = scmp.eq.s32.totalorder %s11, 0
      %p111 = por %p109, %p110
      %p112 = scmp.ne.s32.totalorder %s101, %s104
      %p113 = scmp.eq.s32.totalorder %s16, 3
      %p114 = por %p112, %p113
      %p115 = scmp.ne.s32.totalorder %s104, %s105
      %p116 = scmp.eq.s32.totalorder %s16, 0
      %p117 = por %p115, %p116
      %p118 = scmp.ne.s32.totalorder %s104, %s105
      %p119 = scmp.eq.s32.totalorder %s17, 3
      %p120 = por %p118, %p119
      %p122 = scmp.ne.s32.totalorder %s105, %s121
      %p123 = scmp.eq.s32.totalorder %s17, 0
      %p124 = por %p122, %p123
      %s125 = ssub.s32 %s19, %s26
      %p126 = scmp.eq.s32.totalorder %s125, 0
      %s128 = sadd.s32 %s127, 1
      %s129 = scalar_select %p126, %s127, %s128
      %p132 = pneg %p126
      %p133 = scmp.eq.s32.totalorder %s11, 3
      %p134 = por %p132, %p133
      %p135 = scmp.ne.s32.totalorder %s127, %s130
      %p136 = scmp.eq.s32.totalorder %s11, 0
      %p137 = por %p135, %p136
      %p138 = scmp.ne.s32.totalorder %s127, %s130
      %p139 = scmp.eq.s32.totalorder %s16, 3
      %p140 = por %p138, %p139
      %p141 = scmp.ne.s32.totalorder %s130, %s131
      %p142 = scmp.eq.s32.totalorder %s16, 0
      %p143 = por %p141, %p142
      %p144 = scmp.ne.s32.totalorder %s130, %s131
      %p145 = scmp.eq.s32.totalorder %s17, 3
      %p146 = por %p144, %p145
      %p148 = scmp.ne.s32.totalorder %s131, %s147
      %p149 = scmp.eq.s32.totalorder %s17, 0
      %p150 = por %p148, %p149
      %s151 = ssub.s32 %s18, %s30
      %s152 = ssub.s32 %s19, %s26
      %s153 = sor.u32 %s151, %s152
      %p154 = scmp.eq.s32.totalorder %s153, 0
      %s156 = sadd.s32 %s155, 1
      %s157 = scalar_select %p154, %s155, %s156
      %p160 = pneg %p154
      %p161 = scmp.eq.s32.totalorder %s11, 3
      %p162 = por %p160, %p161
      %p163 = scmp.ne.s32.totalorder %s155, %s158
      %p164 = scmp.eq.s32.totalorder %s11, 0
      %p165 = por %p163, %p164
      %p166 = scmp.ne.s32.totalorder %s155, %s158
      %p167 = scmp.eq.s32.totalorder %s16, 3
      %p168 = por %p166, %p167
      %p169 = scmp.ne.s32.totalorder %s158, %s159
      %p170 = scmp.eq.s32.totalorder %s16, 0
      %p171 = por %p169, %p170
      %p172 = scmp.ne.s32.totalorder %s158, %s159
      %p173 = scmp.eq.s32.totalorder %s17, 3
      %p174 = por %p172, %p173
      %p176 = scmp.ne.s32.totalorder %s159, %s175
      %p177 = scmp.eq.s32.totalorder %s17, 0
      %p178 = por %p176, %p177
      %p179 = scmp.le.s32.totalorder 1, %s11
      %p180 = scmp.lt.s32.totalorder %s11, 5
      %p181 = pnand %p179, %p180
      %p182 = pneg %p181
      // Predicated region
      $region9: #{forward.51} parent=5 // pred_check
        _
      $region10: #{forward.51} parent=5 // pred_check_branch
        %184 = sbr.rel (%p181) target = $region12
      $region11: #{forward.51} parent=5 // pred_region
        %s185 = ssub.s32 %s11, 1
        // Predicated region
        $region13: #{forward.51} parent=11 // pred_check
          %p186 = pneg %p49
        $region14: #{forward.51} parent=11 // pred_check_branch
          %188 = sbr.rel (%p186) target = $region16
        $region15: #{forward.51} parent=11 // pred_region
          %s189 = smul.u32 2, %s20
          %p190 = scmp.lt.s32.totalorder %s189, 1
          %s191 = scalar_select %p190, %s189, 1
          %s192 = smul.addr %s191, 8
          %s193 = scalar_lea.vmem %s0, %s192
          %s194 = smul.u32 2, %s20
        $region16: #{forward.51} parent=11 // pred_fallthru
          _
        // Predicated region
        $region17: #{forward.51} parent=11 // pred_check
          %p195 = pneg %p70
        $region18: #{forward.51} parent=11 // pred_check_branch
          %197 = sbr.rel (%p195) target = $region20
        $region19: #{forward.51} parent=11 // pred_region
          _
        $region20: #{forward.51} parent=11 // pred_fallthru
          _
        // Predicated region
        $region21: #{forward.51} parent=11 // pred_check
          %p198 = pneg %p91
        $region22: #{forward.51} parent=11 // pred_check_branch
          %200 = sbr.rel (%p198) target = $region24
        $region23: #{forward.51} parent=11 // pred_region
          _
        $region24: #{forward.51} parent=11 // pred_fallthru
          _
      $region12: #{forward.51} parent=5 // pred_fallthru
        _
      %p201 = scmp.lt.s32.totalorder %s11, 4
      // Predicated region
      $region25: #{forward.51} parent=5 // pred_check
        %p202 = pneg %p201
      $region26: #{forward.51} parent=5 // pred_check_branch
        %204 = sbr.rel (%p202) target = $region28
      $region27: #{forward.51} parent=5 // pred_region
        // Predicated region
        $region29: #{forward.51} parent=27 // pred_check
          %p205 = pneg %p111
        $region30: #{forward.51} parent=27 // pred_check_branch
          %207 = sbr.rel (%p205) target = $region32
        $region31: #{forward.51} parent=27 // pred_region
          %s208 = sand.u32 %s101, 1
          %s209 = sand.u32 %s101, 1
          %s210 = smul.addr %s209, 64
          %s211 = scalar_lea.vmem [#allocation2], %s210
          %s212 = smul.u32 4, %s19
          %s213 = smul.addr %s212, 4
          %s214 = scalar_lea.vmem %s3, %s213
          // Predicated region
          $region33: #{forward.51} parent=31 // pred_check
            _
          $region34: #{forward.51} parent=31 // pred_check_branch
            %216 = sbr.rel (0) target = $region36
          $region35: #{forward.51} parent=31 // pred_region
            // Predicated region
            $region37: #{forward.51} parent=35 // pred_check
              _
            $region38: #{forward.51} parent=35 // pred_check_branch
              %218 = sbr.rel (0) target = $region40
            $region39: #{forward.51} parent=35 // pred_region
              loop: start=0, step=1, limit=1
              $region41: #{forward.51} parent=39 // loop_pre_header
                _
              $region42: #{forward.51} parent=39 // loop_header
                %s220 = sphi 0, %s224
                %p221 = scmp.ge.s32.totalorder %s220, 1
                %s225 = sphi %s214, %s214
                %s226 = sphi %s211, %s211
              $region43: #{forward.51} parent=39 // loop_header_branch
                %223 = sbr.rel (%p221) target = $region47
              $region44: #{forward.51} parent=39 // loop_body
                %v227 = vld [vmem:[%s225] sm:$0xff]
                %228 = vst [vmem:[%s226] sm:$0xff] %v227
                %v229 = vld [vmem:[%s225 + $0x8] sm:$0xff]
                %230 = vst [vmem:[%s226 + $0x8] sm:$0xff] %v229
                %v231 = vld [vmem:[%s225 + $0x40] sm:$0xff]
                %232 = vst [vmem:[%s226 + $0x10] sm:$0xff] %v231
                %v233 = vld [vmem:[%s225 + $0x48] sm:$0xff]
                %234 = vst [vmem:[%s226 + $0x18] sm:$0xff] %v233
                %v235 = vld [vmem:[%s225 + $0x80] sm:$0xff]
                %236 = vst [vmem:[%s226 + $0x20] sm:$0xff] %v235
                %v237 = vld [vmem:[%s225 + $0x88] sm:$0xff]
                %238 = vst [vmem:[%s226 + $0x28] sm:$0xff] %v237
                %v239 = vld [vmem:[%s225 + $0xc0] sm:$0xff]
                %240 = vst [vmem:[%s226 + $0x30] sm:$0xff] %v239
                %v241 = vld [vmem:[%s225 + $0xc8] sm:$0xff]
                %242 = vst [vmem:[%s226 + $0x38] sm:$0xff] %v241
              $region45: #{forward.51} parent=39 // loop_footer
                %s224 = sadd.s32 1, %s220
              $region46: #{forward.51} parent=39 // loop_footer_branch
                %219 = sbr.rel target = $region42
              $region47: #{forward.51} parent=39 // loop_exit
                _
            $region40: #{forward.51} parent=35 // pred_fallthru
              _
            // Predicated region
            $region48: #{forward.51} parent=35 // pred_check
              _
            $region49: #{forward.51} parent=35 // pred_check_branch
              %244 = sbr.rel target = $region51
            $region50: #{forward.51} parent=35 // pred_region
              _
            $region51: #{forward.51} parent=35 // pred_fallthru
              _
          $region36: #{forward.51} parent=31 // pred_fallthru
            _
          %245 = vnop
        $region32: #{forward.51} parent=27 // pred_fallthru
          _
        // Predicated region
        $region52: #{forward.51} parent=27 // pred_check
          %p246 = pneg %p137
        $region53: #{forward.51} parent=27 // pred_check_branch
          %248 = sbr.rel (%p246) target = $region55
        $region54: #{forward.51} parent=27 // pred_region
          %s249 = smul.u32 4, %s19
          %p250 = scmp.lt.s32.totalorder %s249, 15
          %s251 = scalar_select %p250, %s249, 15
          %s252 = scalar_lea.vmem %s4, %s251
          %s253 = smul.u32 4, %s19
        $region55: #{forward.51} parent=27 // pred_fallthru
          _
      $region28: #{forward.51} parent=5 // pred_fallthru
        _
      %p254 = scmp.le.s32.totalorder 1, %s11
      %p255 = scmp.lt.s32.totalorder %s11, 5
      %p256 = pnand %p254, %p255
      %p257 = pneg %p256
      // Predicated region
      $region56: #{forward.51} parent=5 // pred_check
        _
      $region57: #{forward.51} parent=5 // pred_check_branch
        %259 = sbr.rel (%p256) target = $region59
      $region58: #{forward.51} parent=5 // pred_region
        %s260 = ssub.s32 %s11, 1
        %s261 = sand.u32 %s104, 1
        %s262 = sand.u32 %s104, 1
        %s263 = smul.addr %s262, 64
        %s264 = scalar_lea.vmem [#allocation2], %s263
        // Predicated region
        $region60: #{forward.51} parent=58 // pred_check
          %p265 = pneg %p117
        $region61: #{forward.51} parent=58 // pred_check_branch
          %267 = sbr.rel (%p265) target = $region63
        $region62: #{forward.51} parent=58 // pred_region
          _
        $region63: #{forward.51} parent=58 // pred_fallthru
          _
        %s268 = smul.u32 2, %s20
        %p269 = scmp.lt.s32.totalorder %s268, 1
        %s270 = scalar_select %p269, %s268, 1
        %s271 = smul.addr %s270, 8
        %s272 = scalar_lea.vmem %s0, %s271
        %p273 = pneg %p49
        %p274 = pneg %p46
        %p275 = pneg %p70
        %p276 = pneg %p67
        %p277 = pneg %p91
        %p278 = pneg %p88
        %s279 = sand.u32 %s104, 1
        %s280 = sand.u32 %s104, 1
        %s281 = smul.addr %s280, 64
        %s282 = scalar_lea.vmem [#allocation2], %s281
        %p283 = pneg %p117
        %p284 = pneg %p114
        %s285 = smul.u32 4, %s21
        %p286 = scmp.lt.s32.totalorder %s285, 15
        %s287 = scalar_select %p286, %s285, 15
        %s288 = scalar_lea.vmem %s4, %s287
        %p289 = pneg %p143
        %p290 = pneg %p140
        %p291 = pneg %p171
        %p292 = pneg %p168
        %s293 = sand.u32 %s158, 1
        %s294 = sand.u32 %s158, 1
        %s295 = smul.addr %s294, 64
        %s296 = scalar_lea.vmem [#allocation3], %s295
        %s297 = smul.u32 2, %s20
        %p298 = scmp.lt.s32.totalorder %s297, 1
        %s299 = scalar_select %p298, %s297, 1
        %s300 = smul.addr %s299, 8
        %s301 = scalar_lea.vmem %s0, %s300
        %s302 = smul.u32 2, %s20
        %s303 = smul.u32 4, %s21
        %s304 = smul.u32 4, %s21
        %p305 = scmp.lt.s32.totalorder %s304, 15
        %s306 = scalar_select %p305, %s304, 15
        %s307 = scalar_lea.vmem %s4, %s306
        %s308 = smul.u32 4, %s21
        %s309 = smul.u32 2, %s20
        %s310 = smul.u32 4, %s21
        %v312 = vld [vmem:[%s301] sm:$0xff]
        %v313 = vld [vmem:[%s301 + $0x8] sm:$0xff]
        %vm314 = vcmask 261120
        %v315 = vsel %vm314, %v312, 0.0
        %316 = vadd.xlane.f32.xlu0 %v315
        %v317 = vpop.xlane.xlu0 %316
        %v318 = vsel %vm314, %v313, 0.0
        %319 = vadd.xlane.f32.xlu0 %v318
        %v320 = vpop.xlane.xlu0 %319
        %v321 = vrcp.pop 32.0
        %v322 = vmul.f32 %v317, %v321
        %v323 = vmul.f32 %v320, %v321
        %v324 = vsub.f32 %v312, %v322
        %v325 = vsub.f32 %v313, %v323
        %v326 = vmul.f32 %v324, %v324
        %v327 = vmul.f32 %v325, %v325
        %v328 = vsel %vm314, %v326, 0.0
        %329 = vadd.xlane.f32.xlu0 %v328
        %v330 = vpop.xlane.xlu0 %329
        %v331 = vsel %vm314, %v327, 0.0
        %332 = vadd.xlane.f32.xlu0 %v331
        %v333 = vpop.xlane.xlu0 %332
        %v334 = vmul.f32 %v330, %v321
        %v335 = vmul.f32 %v333, %v321
        %v336 = vadd.f32 %v334, 1e-05
        %v337 = vadd.f32 %v335, 1e-05
        %v338 = vrsqrt.pop %v336
        %v339 = vrsqrt.pop %v337
        %v340 = vmul.f32 %v324, %v338
        %v341 = vmul.f32 %v325, %v339
        %v342 = vld [vmem:[%s1] sm:$0x1]
        %v344 = vlaneseq
        %v345 = vshrl.u32 %v344, 7
        %v346 = vsub.s32 0, %v345
        %v347 = vrot.slane %v342, %v346
        %v349 = vmul.f32 %v340, %v347
        %v350 = vmul.f32 %v341, %v347
        %v351 = vld [vmem:[%s2] sm:$0x1]
        %v353 = vlaneseq
        %v354 = vshrl.u32 %v353, 7
        %v355 = vsub.s32 0, %v354
        %v356 = vrot.slane %v351, %v355
        %v358 = vadd.f32 %v349, %v356
        %v359 = vadd.f32 %v350, %v356
        %v360 = vpack.c.bf16 %v359, %v358
        %v361 = vld [vmem:[%s264] sm:$0xff]
        %v362 = vld [vmem:[%s264 + $0x8] sm:$0xff]
        %v363 = vld [vmem:[%s264 + $0x10] sm:$0xff]
        %v364 = vld [vmem:[%s264 + $0x18] sm:$0xff]
        %v365 = vld [vmem:[%s264 + $0x20] sm:$0xff]
        %v366 = vld [vmem:[%s264 + $0x28] sm:$0xff]
        %v367 = vld [vmem:[%s264 + $0x30] sm:$0xff]
        %v368 = vld [vmem:[%s264 + $0x38] sm:$0xff]
        %v369 = vld [vmem:[%s307] sm:$0xf]
        %v371 = vlaneseq
        %v372 = vshrl.u32 %v371, 7
        %v373 = vsub.s32 0, %v372
        %v374 = vrot.slane %v369, %v373
        %v375 = vlaneseq
        %v376 = vshrl.u32 %v375, 7
        %v377 = vsub.s32 1, %v376
        %v378 = vrot.slane %v369, %v377
        %v379 = vlaneseq
        %v380 = vshrl.u32 %v379, 7
        %v381 = vsub.s32 2, %v380
        %v382 = vrot.slane %v369, %v381
        %v383 = vlaneseq
        %v384 = vshrl.u32 %v383, 7
        %v385 = vsub.s32 3, %v384
        %v386 = vrot.slane %v369, %v385
        %v399 = vunpack.c.l.b16 %v361
        %v400 = vunpack.c.h.b16 %v361
        %v401 = vunpack.c.l.b16 %v362
        %v402 = vunpack.c.h.b16 %v362
        %v403 = vunpack.c.l.b16 %v363
        %v404 = vunpack.c.h.b16 %v363
        %v405 = vunpack.c.l.b16 %v364
        %v406 = vunpack.c.h.b16 %v364
        %v407 = vunpack.c.l.b16 %v365
        %v408 = vunpack.c.h.b16 %v365
        %v409 = vunpack.c.l.b16 %v366
        %v410 = vunpack.c.h.b16 %v366
        %v411 = vunpack.c.l.b16 %v367
        %v412 = vunpack.c.h.b16 %v367
        %v413 = vunpack.c.l.b16 %v368
        %v414 = vunpack.c.h.b16 %v368
        %v415 = vpack.c.b16 %v403, %v399
        %v416 = vpack.c.b16 %v404, %v400
        %v417 = vpack.c.b16 %v405, %v401
        %v418 = vpack.c.b16 %v406, %v402
        %v419 = vpack.c.b16 %v411, %v407
        %v420 = vpack.c.b16 %v412, %v408
        %v421 = vpack.c.b16 %v413, %v409
        %v422 = vpack.c.b16 %v414, %v410
        %v432 = vsel %vm314, %v360, 0
        %434 = vmatprep.subr.bf16.mxu0 %v416
        %435 = vmatpush1.bf16.msra.mxu0 %v415
        %436 = vmatprep.subr.bf16.mxu0 %v420
        %437 = vmatpush1.bf16.msra.mxu0 %v419
        %438 = vmatprep.subr.bf16.mxu0 0
        %439 = vmatpush1.bf16.msra.mxu0 0
        %440 = vmatprep.subr.bf16.mxu0 0
        %441 = vmatpush1.bf16.msra.mxu0 0
        %442 = vmatprep.subr.bf16.mxu0 0
        %443 = vmatpush1.bf16.msra.mxu0 0
        %444 = vmatprep.subr.bf16.mxu0 0
        %445 = vmatpush1.bf16.msra.mxu0 0
        %446 = vmatprep.subr.bf16.mxu0 0
        %447 = vmatpush1.bf16.msra.mxu0 0
        %448 = vmatprep.subr.bf16.mxu0 0
        %449 = vmatpush1.bf16.msra.mxu0 0
        %450 = vmatprep.subr.bf16.mxu0 0
        %451 = vmatpush1.bf16.msra.mxu0 0
        %452 = vmatprep.subr.bf16.mxu0 0
        %453 = vmatpush1.bf16.msra.mxu0 0
        %454 = vmatprep.subr.bf16.mxu0 0
        %455 = vmatpush1.bf16.msra.mxu0 0
        %456 = vmatprep.subr.bf16.mxu0 0
        %457 = vmatpush1.bf16.msra.mxu0 0
        %458 = vmatprep.subr.bf16.mxu0 0
        %459 = vmatpush1.bf16.msra.mxu0 0
        %460 = vmatprep.subr.bf16.mxu0 0
        %461 = vmatpush1.bf16.msra.mxu0 0
        %462 = vmatprep.subr.bf16.mxu0 0
        %463 = vmatpush1.bf16.msra.mxu0 0
        %464 = vmatprep.subr.bf16.mxu0 0
        %465 = vmatpush1.bf16.msra.mxu0 0
        %466 = vmatprep.mubr.bf16.mxu0 0
        %467 = vmatmul.mubr.bf16.gmra.mrb[0].mxu0 %v432
        %v468 = vpop.f32.mrb[0].mxu0
        %v469 = vadd.f32 %v374, %v468
        %v470 = vpop.f32.mrb[0].mxu0
        %v471 = vadd.f32 %v378, %v470
        %v472 = vpop.f32.mrb[0].mxu0
        %v473 = vadd.f32 %v374, %v472
        %v474 = vpop.f32.mrb[0].mxu0
        %v475 = vadd.f32 %v378, %v474
        %476 = vdwg.mxu0
        %477 = vmatprep.subr.bf16.mxu0 %v418
        %478 = vmatpush1.bf16.msra.mxu0 %v417
        %479 = vmatprep.subr.bf16.mxu0 %v422
        %480 = vmatpush1.bf16.msra.mxu0 %v421
        %481 = vmatprep.subr.bf16.mxu0 0
        %482 = vmatpush1.bf16.msra.mxu0 0
        %483 = vmatprep.subr.bf16.mxu0 0
        %484 = vmatpush1.bf16.msra.mxu0 0
        %485 = vmatprep.subr.bf16.mxu0 0
        %486 = vmatpush1.bf16.msra.mxu0 0
        %487 = vmatprep.subr.bf16.mxu0 0
        %488 = vmatpush1.bf16.msra.mxu0 0
        %489 = vmatprep.subr.bf16.mxu0 0
        %490 = vmatpush1.bf16.msra.mxu0 0
        %491 = vmatprep.subr.bf16.mxu0 0
        %492 = vmatpush1.bf16.msra.mxu0 0
        %493 = vmatprep.subr.bf16.mxu0 0
        %494 = vmatpush1.bf16.msra.mxu0 0
        %495 = vmatprep.subr.bf16.mxu0 0
        %496 = vmatpush1.bf16.msra.mxu0 0
        %497 = vmatprep.subr.bf16.mxu0 0
        %498 = vmatpush1.bf16.msra.mxu0 0
        %499 = vmatprep.subr.bf16.mxu0 0
        %500 = vmatpush1.bf16.msra.mxu0 0
        %501 = vmatprep.subr.bf16.mxu0 0
        %502 = vmatpush1.bf16.msra.mxu0 0
        %503 = vmatprep.subr.bf16.mxu0 0
        %504 = vmatpush1.bf16.msra.mxu0 0
        %505 = vmatprep.subr.bf16.mxu0 0
        %506 = vmatpush1.bf16.msra.mxu0 0
        %507 = vmatprep.subr.bf16.mxu0 0
        %508 = vmatpush1.bf16.msra.mxu0 0
        %509 = vmatprep.mubr.bf16.mxu0 0
        %510 = vmatmul.mubr.bf16.gmra.mrb[0].mxu0 %v432
        %v511 = vpop.f32.mrb[0].mxu0
        %v512 = vadd.f32 %v382, %v511
        %v513 = vpop.f32.mrb[0].mxu0
        %v514 = vadd.f32 %v386, %v513
        %v515 = vpop.f32.mrb[0].mxu0
        %v516 = vadd.f32 %v382, %v515
        %v517 = vpop.f32.mrb[0].mxu0
        %v518 = vadd.f32 %v386, %v517
        %519 = vdwg.mxu0
        %v520 = vmax.f32 %v469, 0.0
        %v521 = vmax.f32 %v471, 0.0
        %v522 = vmax.f32 %v512, 0.0
        %v523 = vmax.f32 %v514, 0.0
        %v524 = vmax.f32 %v473, 0.0
        %v525 = vmax.f32 %v475, 0.0
        %v526 = vmax.f32 %v516, 0.0
        %v527 = vmax.f32 %v518, 0.0
        %528 = vst [vmem:[%s296] sm:$0xff] %v520
        %529 = vst [vmem:[%s296 + $0x8] sm:$0xff] %v521
        %530 = vst [vmem:[%s296 + $0x10] sm:$0xff] %v522
        %531 = vst [vmem:[%s296 + $0x18] sm:$0xff] %v523
        %532 = vst [vmem:[%s296 + $0x20] sm:$0xff] %v524
        %533 = vst [vmem:[%s296 + $0x28] sm:$0xff] %v525
        %534 = vst [vmem:[%s296 + $0x30] sm:$0xff] %v526
        %535 = vst [vmem:[%s296 + $0x38] sm:$0xff] %v527
        %s536 = sand.u32 %s158, 1
        %s537 = sand.u32 %s158, 1
        %s538 = smul.addr %s537, 64
        %s539 = scalar_lea.vmem [#allocation3], %s538
        // Predicated region
        $region64: #{forward.51} parent=58 // pred_check
          %p540 = pneg %p168
        $region65: #{forward.51} parent=58 // pred_check_branch
          %542 = sbr.rel (%p540) target = $region67
        $region66: #{forward.51} parent=58 // pred_region
          %s543 = smul.u32 2, %s20
          %s544 = smul.u32 4, %s21
          %s545 = smul.addr %s543, 16
          %s546 = sadd.s32 %s544, %s545
          %s547 = smul.addr %s546, 8
          %s548 = scalar_lea.vmem %s5, %s547
          // Predicated region
          $region68: #{forward.51} parent=66 // pred_check
            _
          $region69: #{forward.51} parent=66 // pred_check_branch
            %550 = sbr.rel (0) target = $region71
          $region70: #{forward.51} parent=66 // pred_region
            // Predicated region
            $region72: #{forward.51} parent=70 // pred_check
              _
            $region73: #{forward.51} parent=70 // pred_check_branch
              %552 = sbr.rel (0) target = $region75
            $region74: #{forward.51} parent=70 // pred_region
              loop: start=0, step=1, limit=1
              $region76: #{forward.51} parent=74 // loop_pre_header
                _
              $region77: #{forward.51} parent=74 // loop_header
                %s554 = sphi 0, %s558
                %p555 = scmp.ge.s32.totalorder %s554, 1
                %s559 = sphi %s539, %s539
                %s560 = sphi %s548, %s548
              $region78: #{forward.51} parent=74 // loop_header_branch
                %557 = sbr.rel (%p555) target = $region82
              $region79: #{forward.51} parent=74 // loop_body
                %v561 = vld [vmem:[%s559] sm:$0xff]
                %562 = vst [vmem:[%s560] sm:$0xff] %v561
                %v563 = vld [vmem:[%s559 + $0x8] sm:$0xff]
                %564 = vst [vmem:[%s560 + $0x8] sm:$0xff] %v563
                %v565 = vld [vmem:[%s559 + $0x10] sm:$0xff]
                %566 = vst [vmem:[%s560 + $0x10] sm:$0xff] %v565
                %v567 = vld [vmem:[%s559 + $0x18] sm:$0xff]
                %568 = vst [vmem:[%s560 + $0x18] sm:$0xff] %v567
                %v569 = vld [vmem:[%s559 + $0x20] sm:$0xff]
                %570 = vst [vmem:[%s560 + $0x80] sm:$0xff] %v569
                %v571 = vld [vmem:[%s559 + $0x28] sm:$0xff]
                %572 = vst [vmem:[%s560 + $0x88] sm:$0xff] %v571
                %v573 = vld [vmem:[%s559 + $0x30] sm:$0xff]
                %574 = vst [vmem:[%s560 + $0x90] sm:$0xff] %v573
                %v575 = vld [vmem:[%s559 + $0x38] sm:$0xff]
                %576 = vst [vmem:[%s560 + $0x98] sm:$0xff] %v575
              $region80: #{forward.51} parent=74 // loop_footer
                %s558 = sadd.s32 1, %s554
              $region81: #{forward.51} parent=74 // loop_footer_branch
                %553 = sbr.rel target = $region77
              $region82: #{forward.51} parent=74 // loop_exit
                _
            $region75: #{forward.51} parent=70 // pred_fallthru
              _
            // Predicated region
            $region83: #{forward.51} parent=70 // pred_check
              _
            $region84: #{forward.51} parent=70 // pred_check_branch
              %578 = sbr.rel target = $region86
            $region85: #{forward.51} parent=70 // pred_region
              _
            $region86: #{forward.51} parent=70 // pred_fallthru
              _
          $region71: #{forward.51} parent=66 // pred_fallthru
            _
          %579 = vnop
        $region67: #{forward.51} parent=58 // pred_fallthru
          _
      $region59: #{forward.51} parent=5 // pred_fallthru
        _
      %p580 = scmp.le.s32.totalorder 2, %s11
      // Predicated region
      $region87: #{forward.51} parent=5 // pred_check
        %p581 = pneg %p580
      $region88: #{forward.51} parent=5 // pred_check_branch
        %583 = sbr.rel (%p581) target = $region90
      $region89: #{forward.51} parent=5 // pred_region
        %s584 = ssub.s32 %s11, 2
        // Predicated region
        $region91: #{forward.51} parent=89 // pred_check
          %p585 = pneg %p174
        $region92: #{forward.51} parent=89 // pred_check_branch
          %587 = sbr.rel (%p585) target = $region94
        $region93: #{forward.51} parent=89 // pred_region
          %s588 = sand.u32 %s159, 1
          %s589 = sand.u32 %s159, 1
          %s590 = smul.addr %s589, 64
          %s591 = scalar_lea.vmem [#allocation3], %s590
        $region94: #{forward.51} parent=89 // pred_fallthru
          _
      $region90: #{forward.51} parent=5 // pred_fallthru
        _
    $region6: #{forward.51} parent=1 // loop_footer
      %s15 = sadd.s32 1, %s11
    $region7: #{forward.51} parent=1 // loop_footer_branch
      %10 = sbr.rel target = $region3
    $region8: #{forward.51} parent=1 // loop_exit
      _

// kernel: forward.52
$region0: #{forward.52}
  #allocation0 [shape = 'u32[]', space=smem, size = 0x4, offset = 0x4, fixed_abs, tag = 'smem constant byte address 0x4 - core index']
  #allocation1 [shape = 'u32[144,128]{1,0:T(1,128)}', space=vmem, size = 0x12000, scoped, tag = 'internal scratch']
  #allocation2 [shape = 'f32[16,128]{1,0:T(8,128)}', space=vmem, size = 0x2000, scoped, tag = 'scratch operand']
  %s0 = inlined_call_operand.vmem [shape: bf16[16,2048], index: 0, kind: input, shape index: {}]
  %s1 = inlined_call_operand.vmem [shape: bf16[2048,128], index: 1, kind: input, shape index: {}]
  %s2 = inlined_call_operand.vmem [shape: f32[1,128], index: 2, kind: input, shape index: {}]
  %s3 = inlined_call_operand.vmem [shape: f32[16,128], index: 3, kind: input, shape index: {}]
  %s4 = inlined_call_operand.vmem [shape: f32[16,128], index: 4, kind: output, shape index: {}]
  %s5 = sld [smem:[#allocation0]]
  $region80: #{forward.52} parent=0
    _
  %s7 = ssub.s32 1, %s5
  %s8 = scalar_select 0, %s7, %s5
  $region1: #{forward.52} parent=0
    #allocation3 [shape = 'u8[32768]{0}', space=vmem, size = 0x8000, scoped, tag = 'input window, operand 0']
    loop: start=0, step=1, limit=6
    $region2: #{forward.52} parent=1 // loop_pre_header
      _
    $region3: #{forward.52} parent=1 // loop_header
      %s10 = sphi 0, %s14
      %p11 = scmp.ge.s32.totalorder %s10, 6
      %s17 = sphi 0, %s36
      %s18 = sphi 0, %s32
      %s19 = sphi 0, %s28
      %s20 = sphi 0, %s17
      %s21 = sphi 0, %s18
      %s22 = sphi 0, %s19
      %s23 = sphi 0, %s20
      %s24 = sphi 0, %s21
      %s25 = sphi 0, %s22
      %s41 = sphi 0, %s43
      %s44 = sphi 0, %s41
      %s45 = sphi 0, %s44
      %s61 = sphi 0, %s45
      %s69 = sphi 0, %s71
      %s72 = sphi 0, %s69
      %s73 = sphi 0, %s72
      %s89 = sphi 0, %s73
      %s95 = sphi 0, %s97
      %s98 = sphi 0, %s95
      %s99 = sphi 0, %s98
      %s115 = sphi 0, %s99
      %s123 = sphi 0, %s125
      %s126 = sphi 0, %s123
      %s127 = sphi 0, %s126
      %s143 = sphi 0, %s127
      %s151 = sphi 0, %s153
      %s154 = sphi 0, %s151
      %s155 = sphi 0, %s154
      %s171 = sphi 0, %s155
    $region4: #{forward.52} parent=1 // loop_header_branch
      %13 = sbr.rel (%p11) target = $region8
    $region5: #{forward.52} parent=1 // loop_body
      %s15 = ssub.s32 %s10, 1
      %s16 = ssub.s32 %s10, 2
      %s26 = sadd.s32 1, %s19
      %p27 = scmp.ge.s32.totalorder %s26, 4
      %s28 = scalar_select %p27, 0, %s26
      %s29 = sadd.s32 1, %s18
      %s30 = scalar_select %p27, %s29, %s18
      %p31 = scmp.ge.s32.totalorder %s30, 1
      %s32 = scalar_select %p31, 0, %s30
      %s33 = sadd.s32 1, %s17
      %s34 = scalar_select %p31, %s33, %s17
      %p35 = scmp.ge.s32.totalorder %s34, 1
      %s36 = scalar_select %p35, 0, %s34
      %s37 = ssub.s32 %s17, %s36
      %s38 = ssub.s32 %s19, %s28
      %s39 = sor.u32 %s37, %s38
      %p40 = scmp.eq.s32.totalorder %s39, 0
      %s42 = sadd.s32 %s41, 1
      %s43 = scalar_select %p40, %s41, %s42
      %p46 = pneg %p40
      %p47 = scmp.eq.s32.totalorder %s10, 3
      %p48 = por %p46, %p47
      %p49 = scmp.ne.s32.totalorder %s41, %s44
      %p50 = scmp.eq.s32.totalorder %s10, 0
      %p51 = por %p49, %p50
      %p52 = scmp.ne.s32.totalorder %s41, %s44
      %p53 = scmp.eq.s32.totalorder %s15, 3
      %p54 = por %p52, %p53
      %p55 = scmp.ne.s32.totalorder %s44, %s45
      %p56 = scmp.eq.s32.totalorder %s15, 0
      %p57 = por %p55, %p56
      %p58 = scmp.ne.s32.totalorder %s44, %s45
      %p59 = scmp.eq.s32.totalorder %s16, 3
      %p60 = por %p58, %p59
      %p62 = scmp.ne.s32.totalorder %s45, %s61
      %p63 = scmp.eq.s32.totalorder %s16, 0
      %p64 = por %p62, %p63
      %s65 = ssub.s32 %s19, %s28
      %s66 = ssub.s32 %s18, %s32
      %s67 = sor.u32 %s65, %s66
      %p68 = scmp.eq.s32.totalorder %s67, 0
      %s70 = sadd.s32 %s69, 1
      %s71 = scalar_select %p68, %s69, %s70
      %p74 = pneg %p68
      %p75 = scmp.eq.s32.totalorder %s10, 3
      %p76 = por %p74, %p75
      %p77 = scmp.ne.s32.totalorder %s69, %s72
      %p78 = scmp.eq.s32.totalorder %s10, 0
      %p79 = por %p77, %p78
      %p80 = scmp.ne.s32.totalorder %s69, %s72
      %p81 = scmp.eq.s32.totalorder %s15, 3
      %p82 = por %p80, %p81
      %p83 = scmp.ne.s32.totalorder %s72, %s73
      %p84 = scmp.eq.s32.totalorder %s15, 0
      %p85 = por %p83, %p84
      %p86 = scmp.ne.s32.totalorder %s72, %s73
      %p87 = scmp.eq.s32.totalorder %s16, 3
      %p88 = por %p86, %p87
      %p90 = scmp.ne.s32.totalorder %s73, %s89
      %p91 = scmp.eq.s32.totalorder %s16, 0
      %p92 = por %p90, %p91
      %s93 = ssub.s32 %s18, %s32
      %p94 = scmp.eq.s32.totalorder %s93, 0
      %s96 = sadd.s32 %s95, 1
      %s97 = scalar_select %p94, %s95, %s96
      %p100 = pneg %p94
      %p101 = scmp.eq.s32.totalorder %s10, 3
      %p102 = por %p100, %p101
      %p103 = scmp.ne.s32.totalorder %s95, %s98
      %p104 = scmp.eq.s32.totalorder %s10, 0
      %p105 = por %p103, %p104
      %p106 = scmp.ne.s32.totalorder %s95, %s98
      %p107 = scmp.eq.s32.totalorder %s15, 3
      %p108 = por %p106, %p107
      %p109 = scmp.ne.s32.totalorder %s98, %s99
      %p110 = scmp.eq.s32.totalorder %s15, 0
      %p111 = por %p109, %p110
      %p112 = scmp.ne.s32.totalorder %s98, %s99
      %p113 = scmp.eq.s32.totalorder %s16, 3
      %p114 = por %p112, %p113
      %p116 = scmp.ne.s32.totalorder %s99, %s115
      %p117 = scmp.eq.s32.totalorder %s16, 0
      %p118 = por %p116, %p117
      %s119 = ssub.s32 %s17, %s36
      %s120 = ssub.s32 %s18, %s32
      %s121 = sor.u32 %s119, %s120
      %p122 = scmp.eq.s32.totalorder %s121, 0
      %s124 = sadd.s32 %s123, 1
      %s125 = scalar_select %p122, %s123, %s124
      %p128 = pneg %p122
      %p129 = scmp.eq.s32.totalorder %s10, 3
      %p130 = por %p128, %p129
      %p131 = scmp.ne.s32.totalorder %s123, %s126
      %p132 = scmp.eq.s32.totalorder %s10, 0
      %p133 = por %p131, %p132
      %p134 = scmp.ne.s32.totalorder %s123, %s126
      %p135 = scmp.eq.s32.totalorder %s15, 3
      %p136 = por %p134, %p135
      %p137 = scmp.ne.s32.totalorder %s126, %s127
      %p138 = scmp.eq.s32.totalorder %s15, 0
      %p139 = por %p137, %p138
      %p140 = scmp.ne.s32.totalorder %s126, %s127
      %p141 = scmp.eq.s32.totalorder %s16, 3
      %p142 = por %p140, %p141
      %p144 = scmp.ne.s32.totalorder %s127, %s143
      %p145 = scmp.eq.s32.totalorder %s16, 0
      %p146 = por %p144, %p145
      %s147 = ssub.s32 %s17, %s36
      %s148 = ssub.s32 %s18, %s32
      %s149 = sor.u32 %s147, %s148
      %p150 = scmp.eq.s32.totalorder %s149, 0
      %s152 = sadd.s32 %s151, 1
      %s153 = scalar_select %p150, %s151, %s152
      %p156 = pneg %p150
      %p157 = scmp.eq.s32.totalorder %s10, 3
      %p158 = por %p156, %p157
      %p159 = scmp.ne.s32.totalorder %s151, %s154
      %p160 = scmp.eq.s32.totalorder %s10, 0
      %p161 = por %p159, %p160
      %p162 = scmp.ne.s32.totalorder %s151, %s154
      %p163 = scmp.eq.s32.totalorder %s15, 3
      %p164 = por %p162, %p163
      %p165 = scmp.ne.s32.totalorder %s154, %s155
      %p166 = scmp.eq.s32.totalorder %s15, 0
      %p167 = por %p165, %p166
      %p168 = scmp.ne.s32.totalorder %s154, %s155
      %p169 = scmp.eq.s32.totalorder %s16, 3
      %p170 = por %p168, %p169
      %p172 = scmp.ne.s32.totalorder %s155, %s171
      %p173 = scmp.eq.s32.totalorder %s16, 0
      %p174 = por %p172, %p173
      %p175 = scmp.le.s32.totalorder 1, %s10
      %p176 = scmp.lt.s32.totalorder %s10, 5
      %p177 = pnand %p175, %p176
      %p178 = pneg %p177
      // Predicated region
      $region9: #{forward.52} parent=5 // pred_check
        _
      $region10: #{forward.52} parent=5 // pred_check_branch
        %180 = sbr.rel (%p177) target = $region12
      $region11: #{forward.52} parent=5 // pred_region
        %s181 = ssub.s32 %s10, 1
        // Predicated region
        $region13: #{forward.52} parent=11 // pred_check
          %p182 = pneg %p111
        $region14: #{forward.52} parent=11 // pred_check_branch
          %184 = sbr.rel (%p182) target = $region16
        $region15: #{forward.52} parent=11 // pred_region
          %p185 = scmp.lt.s32.totalorder %s21, 0
          %s186 = scalar_select %p185, %s21, 0
          %s187 = scalar_lea.vmem %s2, %s186
        $region16: #{forward.52} parent=11 // pred_fallthru
          _
        // Predicated region
        $region17: #{forward.52} parent=11 // pred_check
          %p188 = pneg %p139
        $region18: #{forward.52} parent=11 // pred_check_branch
          %190 = sbr.rel (%p188) target = $region20
        $region19: #{forward.52} parent=11 // pred_region
          %s191 = smul.u32 2, %s20
          %p192 = scmp.lt.s32.totalorder %s191, 1
          %s193 = scalar_select %p192, %s191, 1
          %p194 = scmp.lt.s32.totalorder %s21, 0
          %s195 = scalar_select %p194, %s21, 0
          %s196 = sadd.s32 %s195, %s193
          %s197 = smul.addr %s196, 8
          %s198 = scalar_lea.vmem %s3, %s197
          %s199 = smul.u32 2, %s20
        $region20: #{forward.52} parent=11 // pred_fallthru
          _
      $region12: #{forward.52} parent=5 // pred_fallthru
        _
      %p200 = scmp.lt.s32.totalorder %s10, 4
      // Predicated region
      $region21: #{forward.52} parent=5 // pred_check
        %p201 = pneg %p200
      $region22: #{forward.52} parent=5 // pred_check_branch
        %203 = sbr.rel (%p201) target = $region24
      $region23: #{forward.52} parent=5 // pred_region
        // Predicated region
        $region25: #{forward.52} parent=23 // pred_check
          %p204 = pneg %p51
        $region26: #{forward.52} parent=23 // pred_check_branch
          %206 = sbr.rel (%p204) target = $region28
        $region27: #{forward.52} parent=23 // pred_region
          %s207 = sand.u32 %s41, 1
          %s208 = sand.u32 %s41, 1
          %s209 = smul.addr %s208, 32
          %s210 = scalar_lea.vmem [#allocation3], %s209
          %s211 = smul.u32 2, %s17
          %s212 = smul.u32 4, %s19
          %s213 = smul.addr %s211, 16
          %s214 = sadd.s32 %s212, %s213
          %s215 = smul.addr %s214, 4
          %s216 = scalar_lea.vmem %s0, %s215
          // Predicated region
          $region29: #{forward.52} parent=27 // pred_check
            _
          $region30: #{forward.52} parent=27 // pred_check_branch
            %218 = sbr.rel (0) target = $region32
          $region31: #{forward.52} parent=27 // pred_region
            // Predicated region
            $region33: #{forward.52} parent=31 // pred_check
              _
            $region34: #{forward.52} parent=31 // pred_check_branch
              %220 = sbr.rel (0) target = $region36
            $region35: #{forward.52} parent=31 // pred_region
              loop: start=0, step=1, limit=1
              $region37: #{forward.52} parent=35 // loop_pre_header
                _
              $region38: #{forward.52} parent=35 // loop_header
                %s222 = sphi 0, %s226
                %p223 = scmp.ge.s32.totalorder %s222, 1
                %s227 = sphi %s216, %s216
                %s228 = sphi %s210, %s210
              $region39: #{forward.52} parent=35 // loop_header_branch
                %225 = sbr.rel (%p223) target = $region43
              $region40: #{forward.52} parent=35 // loop_body
                %v229 = vld [vmem:[%s227] sm:$0xff]
                %230 = vst [vmem:[%s228] sm:$0xff] %v229
                %v231 = vld [vmem:[%s227 + $0x8] sm:$0xff]
                %232 = vst [vmem:[%s228 + $0x8] sm:$0xff] %v231
                %v233 = vld [vmem:[%s227 + $0x40] sm:$0xff]
                %234 = vst [vmem:[%s228 + $0x10] sm:$0xff] %v233
                %v235 = vld [vmem:[%s227 + $0x48] sm:$0xff]
                %236 = vst [vmem:[%s228 + $0x18] sm:$0xff] %v235
              $region41: #{forward.52} parent=35 // loop_footer
                %s226 = sadd.s32 1, %s222
              $region42: #{forward.52} parent=35 // loop_footer_branch
                %221 = sbr.rel target = $region38
              $region43: #{forward.52} parent=35 // loop_exit
                _
            $region36: #{forward.52} parent=31 // pred_fallthru
              _
            // Predicated region
            $region44: #{forward.52} parent=31 // pred_check
              _
            $region45: #{forward.52} parent=31 // pred_check_branch
              %238 = sbr.rel target = $region47
            $region46: #{forward.52} parent=31 // pred_region
              _
            $region47: #{forward.52} parent=31 // pred_fallthru
              _
          $region32: #{forward.52} parent=27 // pred_fallthru
            _
          %239 = vnop
        $region28: #{forward.52} parent=23 // pred_fallthru
          _
        // Predicated region
        $region48: #{forward.52} parent=23 // pred_check
          %p240 = pneg %p79
        $region49: #{forward.52} parent=23 // pred_check_branch
          %242 = sbr.rel (%p240) target = $region51
        $region50: #{forward.52} parent=23 // pred_region
          %s243 = smul.u32 64, %s19
          %p244 = scmp.lt.s32.totalorder %s243, 255
          %s245 = scalar_select %p244, %s243, 255
          %p246 = scmp.lt.s32.totalorder %s18, 0
          %s247 = scalar_select %p246, %s18, 0
          %s248 = sadd.s32 %s247, %s245
          %s249 = smul.addr %s248, 4
          %s250 = scalar_lea.vmem %s1, %s249
          %s251 = smul.u32 64, %s19
        $region51: #{forward.52} parent=23 // pred_fallthru
          _
      $region24: #{forward.52} parent=5 // pred_fallthru
        _
      %p252 = scmp.le.s32.totalorder 1, %s10
      %p253 = scmp.lt.s32.totalorder %s10, 5
      %p254 = pnand %p252, %p253
      %p255 = pneg %p254
      // Predicated region
      $region52: #{forward.52} parent=5 // pred_check
        _
      $region53: #{forward.52} parent=5 // pred_check_branch
        %257 = sbr.rel (%p254) target = $region55
      $region54: #{forward.52} parent=5 // pred_region
        %s258 = ssub.s32 %s10, 1
        %s259 = sand.u32 %s44, 1
        %s260 = sand.u32 %s44, 1
        %s261 = smul.addr %s260, 32
        %s262 = scalar_lea.vmem [#allocation3], %s261
        // Predicated region
        $region56: #{forward.52} parent=54 // pred_check
          %p263 = pneg %p57
        $region57: #{forward.52} parent=54 // pred_check_branch
          %265 = sbr.rel (%p263) target = $region59
        $region58: #{forward.52} parent=54 // pred_region
          _
        $region59: #{forward.52} parent=54 // pred_fallthru
          _
        %s266 = sand.u32 %s44, 1
        %s267 = sand.u32 %s44, 1
        %s268 = smul.addr %s267, 32
        %s269 = scalar_lea.vmem [#allocation3], %s268
        %p270 = pneg %p57
        %p271 = pneg %p54
        %s272 = smul.u32 64, %s22
        %p273 = scmp.lt.s32.totalorder %s272, 255
        %s274 = scalar_select %p273, %s272, 255
        %p275 = scmp.lt.s32.totalorder %s21, 0
        %s276 = scalar_select %p275, %s21, 0
        %s277 = sadd.s32 %s276, %s274
        %s278 = smul.addr %s277, 4
        %s279 = scalar_lea.vmem %s1, %s278
        %p280 = pneg %p85
        %p281 = pneg %p82
        %p282 = scmp.lt.s32.totalorder %s21, 0
        %s283 = scalar_select %p282, %s21, 0
        %s284 = scalar_lea.vmem %s2, %s283
        %p285 = pneg %p111
        %p286 = pneg %p108
        %s287 = smul.u32 2, %s20
        %p288 = scmp.lt.s32.totalorder %s287, 1
        %s289 = scalar_select %p288, %s287, 1
        %p290 = scmp.lt.s32.totalorder %s21, 0
        %s291 = scalar_select %p290, %s21, 0
        %s292 = sadd.s32 %s291, %s289
        %s293 = smul.addr %s292, 8
        %s294 = scalar_lea.vmem %s3, %s293
        %p295 = pneg %p139
        %p296 = pneg %p136
        %p297 = pneg %p167
        %p298 = pneg %p164
        %s299 = smul.u32 2, %s20
        %p300 = scmp.lt.s32.totalorder %s299, 1
        %s301 = scalar_select %p300, %s299, 1
        %p302 = scmp.lt.s32.totalorder %s21, 0
        %s303 = scalar_select %p302, %s21, 0
        %s304 = sadd.s32 %s303, %s301
        %s305 = smul.addr %s304, 8
        %s306 = scalar_lea.vmem %s4, %s305
        %s307 = smul.u32 2, %s20
        %s308 = smul.u32 4, %s22
        %s309 = smul.u32 64, %s22
        %p310 = scmp.lt.s32.totalorder %s309, 255
        %s311 = scalar_select %p310, %s309, 255
        %p312 = scmp.lt.s32.totalorder %s21, 0
        %s313 = scalar_select %p312, %s21, 0
        %s314 = sadd.s32 %s313, %s311
        %s315 = smul.addr %s314, 4
        %s316 = scalar_lea.vmem %s1, %s315
        %s317 = smul.u32 64, %s22
        %p318 = scmp.lt.s32.totalorder %s21, 0
        %s319 = scalar_select %p318, %s21, 0
        %s320 = scalar_lea.vmem %s2, %s319
        %s321 = smul.u32 2, %s20
        %p322 = scmp.lt.s32.totalorder %s321, 1
        %s323 = scalar_select %p322, %s321, 1
        %p324 = scmp.lt.s32.totalorder %s21, 0
        %s325 = scalar_select %p324, %s21, 0
        %s326 = sadd.s32 %s325, %s323
        %s327 = smul.addr %s326, 8
        %s328 = scalar_lea.vmem %s3, %s327
        %s329 = smul.u32 2, %s20
        %s330 = smul.u32 2, %s20
        %p331 = scmp.lt.s32.totalorder %s330, 1
        %s332 = scalar_select %p331, %s330, 1
        %p333 = scmp.lt.s32.totalorder %s21, 0
        %s334 = scalar_select %p333, %s21, 0
        %s335 = sadd.s32 %s334, %s332
        %s336 = smul.addr %s335, 8
        %s337 = scalar_lea.vmem %s4, %s336
        %s338 = smul.u32 2, %s20
        %p340 = scmp.eq.s32.totalorder %s22, 0
        // Predicated region
        $region60: #{forward.52} parent=54 // pred_check
          %p341 = pneg %p340
        $region61: #{forward.52} parent=54 // pred_check_branch
          %343 = sbr.rel (%p341) target = $region63
        $region62: #{forward.52} parent=54 // pred_region
          %344 = vst [vmem:[#allocation2] sm:$0xff] 0.0
          %345 = vst [vmem:[#allocation2 + $0x8] sm:$0xff] 0.0
        $region63: #{forward.52} parent=54 // pred_fallthru
          _
        %v346 = vld [vmem:[#allocation2] sm:$0xff]
        %v347 = vld [vmem:[#allocation2 + $0x8] sm:$0xff]
        %v348 = vld [vmem:[%s262] sm:$0xff]
        %v349 = vld [vmem:[%s262 + $0x8] sm:$0xff]
        %v350 = vld [vmem:[%s262 + $0x10] sm:$0xff]
        %v351 = vld [vmem:[%s262 + $0x18] sm:$0xff]
        %v352 = vld [vmem:[%s316] sm:$0xf]
        %v353 = vld [vmem:[%s316 + $0x4] sm:$0xf]
        %v354 = vld [vmem:[%s316 + $0x8] sm:$0xf]
        %v355 = vld [vmem:[%s316 + $0xc] sm:$0xf]
        %v356 = vld [vmem:[%s316 + $0x10] sm:$0xf]
        %v357 = vld [vmem:[%s316 + $0x14] sm:$0xf]
        %v358 = vld [vmem:[%s316 + $0x18] sm:$0xf]
        %v359 = vld [vmem:[%s316 + $0x1c] sm:$0xf]
        %v360 = vld [vmem:[%s316 + $0x20] sm:$0xf]
        %v361 = vld [vmem:[%s316 + $0x24] sm:$0xf]
        %v362 = vld [vmem:[%s316 + $0x28] sm:$0xf]
        %v363 = vld [vmem:[%s316 + $0x2c] sm:$0xf]
        %v364 = vld [vmem:[%s316 + $0x30] sm:$0xf]
        %v365 = vld [vmem:[%s316 + $0x34] sm:$0xf]
        %v366 = vld [vmem:[%s316 + $0x38] sm:$0xf]
        %v367 = vld [vmem:[%s316 + $0x3c] sm:$0xf]
        %v368 = vld [vmem:[%s316 + $0x40] sm:$0xf]
        %v369 = vld [vmem:[%s316 + $0x44] sm:$0xf]
        %v370 = vld [vmem:[%s316 + $0x48] sm:$0xf]
        %v371 = vld [vmem:[%s316 + $0x4c] sm:$0xf]
        %v372 = vld [vmem:[%s316 + $0x50] sm:$0xf]
        %v373 = vld [vmem:[%s316 + $0x54] sm:$0xf]
        %v374 = vld [vmem:[%s316 + $0x58] sm:$0xf]
        %v375 = vld [vmem:[%s316 + $0x5c] sm:$0xf]
        %v376 = vld [vmem:[%s316 + $0x60] sm:$0xf]
        %v377 = vld [vmem:[%s316 + $0x64] sm:$0xf]
        %v378 = vld [vmem:[%s316 + $0x68] sm:$0xf]
        %v379 = vld [vmem:[%s316 + $0x6c] sm:$0xf]
        %v380 = vld [vmem:[%s316 + $0x70] sm:$0xf]
        %v381 = vld [vmem:[%s316 + $0x74] sm:$0xf]
        %v382 = vld [vmem:[%s316 + $0x78] sm:$0xf]
        %v383 = vld [vmem:[%s316 + $0x7c] sm:$0xf]
        %v384 = vld [vmem:[%s316 + $0x80] sm:$0xf]
        %v385 = vld [vmem:[%s316 + $0x84] sm:$0xf]
        %v386 = vld [vmem:[%s316 + $0x88] sm:$0xf]
        %v387 = vld [vmem:[%s316 + $0x8c] sm:$0xf]
        %v388 = vld [vmem:[%s316 + $0x90] sm:$0xf]
        %v389 = vld [vmem:[%s316 + $0x94] sm:$0xf]
        %v390 = vld [vmem:[%s316 + $0x98] sm:$0xf]
        %v391 = vld [vmem:[%s316 + $0x9c] sm:$0xf]
        %v392 = vld [vmem:[%s316 + $0xa0] sm:$0xf]
        %v393 = vld [vmem:[%s316 + $0xa4] sm:$0xf]
        %v394 = vld [vmem:[%s316 + $0xa8] sm:$0xf]
        %v395 = vld [vmem:[%s316 + $0xac] sm:$0xf]
        %v396 = vld [vmem:[%s316 + $0xb0] sm:$0xf]
        %v397 = vld [vmem:[%s316 + $0xb4] sm:$0xf]
        %v398 = vld [vmem:[%s316 + $0xb8] sm:$0xf]
        %v399 = vld [vmem:[%s316 + $0xbc] sm:$0xf]
        %v400 = vld [vmem:[%s316 + $0xc0] sm:$0xf]
        %v401 = vld [vmem:[%s316 + $0xc4] sm:$0xf]
        %v402 = vld [vmem:[%s316 + $0xc8] sm:$0xf]
        %v403 = vld [vmem:[%s316 + $0xcc] sm:$0xf]
        %v404 = vld [vmem:[%s316 + $0xd0] sm:$0xf]
        %v405 = vld [vmem:[%s316 + $0xd4] sm:$0xf]
        %v406 = vld [vmem:[%s316 + $0xd8] sm:$0xf]
        %v407 = vld [vmem:[%s316 + $0xdc] sm:$0xf]
        %v408 = vld [vmem:[%s316 + $0xe0] sm:$0xf]
        %v409 = vld [vmem:[%s316 + $0xe4] sm:$0xf]
        %v410 = vld [vmem:[%s316 + $0xe8] sm:$0xf]
        %v411 = vld [vmem:[%s316 + $0xec] sm:$0xf]
        %v412 = vld [vmem:[%s316 + $0xf0] sm:$0xf]
        %v413 = vld [vmem:[%s316 + $0xf4] sm:$0xf]
        %v414 = vld [vmem:[%s316 + $0xf8] sm:$0xf]
        %v415 = vld [vmem:[%s316 + $0xfc] sm:$0xf]
        %v420 = vunpack.c.l.b16 %v348
        %v421 = vunpack.c.h.b16 %v348
        %v422 = vunpack.c.l.b16 %v349
        %v423 = vunpack.c.h.b16 %v349
        %v424 = vunpack.c.l.b16 %v350
        %v425 = vunpack.c.h.b16 %v350
        %v426 = vunpack.c.l.b16 %v351
        %v427 = vunpack.c.h.b16 %v351
        %v428 = vpack.c.b16 %v424, %v420
        %v429 = vpack.c.b16 %v425, %v421
        %v430 = vpack.c.b16 %v426, %v422
        %v431 = vpack.c.b16 %v427, %v423
        %v500 = vunpack.c.l.b16 %v352
        %v501 = vunpack.c.l.b16 %v353
        %v502 = vunpack.c.l.b16 %v354
        %v503 = vunpack.c.l.b16 %v355
        %v504 = vunpack.c.l.b16 %v356
        %v505 = vunpack.c.l.b16 %v357
        %v506 = vunpack.c.l.b16 %v358
        %v507 = vunpack.c.l.b16 %v359
        %v508 = vunpack.c.l.b16 %v360
        %v509 = vunpack.c.l.b16 %v361
        %v510 = vunpack.c.l.b16 %v362
        %v511 = vunpack.c.l.b16 %v363
        %v512 = vunpack.c.l.b16 %v364
        %v513 = vunpack.c.l.b16 %v365
        %v514 = vunpack.c.l.b16 %v366
        %v515 = vunpack.c.l.b16 %v367
        %v516 = vunpack.c.l.b16 %v368
        %v517 = vunpack.c.l.b16 %v369
        %v518 = vunpack.c.l.b16 %v370
        %v519 = vunpack.c.l.b16 %v371
        %v520 = vunpack.c.l.b16 %v372
        %v521 = vunpack.c.l.b16 %v373
        %v522 = vunpack.c.l.b16 %v374
        %v523 = vunpack.c.l.b16 %v375
        %v524 = vunpack.c.l.b16 %v376
        %v525 = vunpack.c.l.b16 %v377
        %v526 = vunpack.c.l.b16 %v378
        %v527 = vunpack.c.l.b16 %v379
        %v528 = vunpack.c.l.b16 %v380
        %v529 = vunpack.c.l.b16 %v381
        %v530 = vunpack.c.l.b16 %v382
        %v531 = vunpack.c.l.b16 %v383
        %v532 = vunpack.c.l.b16 %v384
        %v533 = vunpack.c.l.b16 %v385
        %v534 = vunpack.c.l.b16 %v386
        %v535 = vunpack.c.l.b16 %v387
        %v536 = vunpack.c.l.b16 %v388
        %v537 = vunpack.c.l.b16 %v389
        %v538 = vunpack.c.l.b16 %v390
        %v539 = vunpack.c.l.b16 %v391
        %v540 = vunpack.c.l.b16 %v392
        %v541 = vunpack.c.l.b16 %v393
        %v542 = vunpack.c.l.b16 %v394
        %v543 = vunpack.c.l.b16 %v395
        %v544 = vunpack.c.l.b16 %v396
        %v545 = vunpack.c.l.b16 %v397
        %v546 = vunpack.c.l.b16 %v398
        %v547 = vunpack.c.l.b16 %v399
        %v548 = vunpack.c.l.b16 %v400
        %v549 = vunpack.c.l.b16 %v401
        %v550 = vunpack.c.l.b16 %v402
        %v551 = vunpack.c.l.b16 %v403
        %v552 = vunpack.c.l.b16 %v404
        %v553 = vunpack.c.l.b16 %v405
        %v554 = vunpack.c.l.b16 %v406
        %v555 = vunpack.c.l.b16 %v407
        %v556 = vunpack.c.l.b16 %v408
        %v557 = vunpack.c.l.b16 %v409
        %v558 = vunpack.c.l.b16 %v410
        %v559 = vunpack.c.l.b16 %v411
        %v560 = vunpack.c.l.b16 %v412
        %v561 = vunpack.c.l.b16 %v413
        %v562 = vunpack.c.l.b16 %v414
        %v563 = vunpack.c.l.b16 %v415
        %v564 = vpack.c.b16 %v501, %v500
        %v565 = vpack.c.b16 %v503, %v502
        %v566 = vpack.c.b16 %v505, %v504
        %v567 = vpack.c.b16 %v507, %v506
        %v568 = vpack.c.b16 %v509, %v508
        %v569 = vpack.c.b16 %v511, %v510
        %v570 = vpack.c.b16 %v513, %v512
        %v571 = vpack.c.b16 %v515, %v514
        %v572 = vpack.c.b16 %v517, %v516
        %v573 = vpack.c.b16 %v519, %v518
        %v574 = vpack.c.b16 %v521, %v520
        %v575 = vpack.c.b16 %v523, %v522
        %v576 = vpack.c.b16 %v525, %v524
        %v577 = vpack.c.b16 %v527, %v526
        %v578 = vpack.c.b16 %v529, %v528
        %v579 = vpack.c.b16 %v531, %v530
        %v580 = vpack.c.b16 %v533, %v532
        %v581 = vpack.c.b16 %v535, %v534
        %v582 = vpack.c.b16 %v537, %v536
        %v583 = vpack.c.b16 %v539, %v538
        %v584 = vpack.c.b16 %v541, %v540
        %v585 = vpack.c.b16 %v543, %v542
        %v586 = vpack.c.b16 %v545, %v544
        %v587 = vpack.c.b16 %v547, %v546
        %v588 = vpack.c.b16 %v549, %v548
        %v589 = vpack.c.b16 %v551, %v550
        %v590 = vpack.c.b16 %v553, %v552
        %v591 = vpack.c.b16 %v555, %v554
        %v592 = vpack.c.b16 %v557, %v556
        %v593 = vpack.c.b16 %v559, %v558
        %v594 = vpack.c.b16 %v561, %v560
        %v595 = vpack.c.b16 %v563, %v562
        %628 = vmatprep.subr.bf16.mxu0 0
        %629 = vmatpush1.bf16.msra.mxu0 %v564
        %630 = vmatprep.subr.bf16.mxu0 0
        %631 = vmatpush1.bf16.msra.mxu0 %v565
        %632 = vmatprep.subr.bf16.mxu0 0
        %633 = vmatpush1.bf16.msra.mxu0 %v566
        %634 = vmatprep.subr.bf16.mxu0 0
        %635 = vmatpush1.bf16.msra.mxu0 %v567
        %636 = vmatprep.subr.bf16.mxu0 0
        %637 = vmatpush1.bf16.msra.mxu0 %v568
        %638 = vmatprep.subr.bf16.mxu0 0
        %639 = vmatpush1.bf16.msra.mxu0 %v569
        %640 = vmatprep.subr.bf16.mxu0 0
        %641 = vmatpush1.bf16.msra.mxu0 %v570
        %642 = vmatprep.subr.bf16.mxu0 0
        %643 = vmatpush1.bf16.msra.mxu0 %v571
        %644 = vmatprep.subr.bf16.mxu0 0
        %645 = vmatpush1.bf16.msra.mxu0 %v572
        %646 = vmatprep.subr.bf16.mxu0 0
        %647 = vmatpush1.bf16.msra.mxu0 %v573
        %648 = vmatprep.subr.bf16.mxu0 0
        %649 = vmatpush1.bf16.msra.mxu0 %v574
        %650 = vmatprep.subr.bf16.mxu0 0
        %651 = vmatpush1.bf16.msra.mxu0 %v575
        %652 = vmatprep.subr.bf16.mxu0 0
        %653 = vmatpush1.bf16.msra.mxu0 %v576
        %654 = vmatprep.subr.bf16.mxu0 0
        %655 = vmatpush1.bf16.msra.mxu0 %v577
        %656 = vmatprep.subr.bf16.mxu0 0
        %657 = vmatpush1.bf16.msra.mxu0 %v578
        %658 = vmatprep.subr.bf16.mxu0 0
        %659 = vmatpush1.bf16.msra.mxu0 %v579
        %660 = vmatprep.mubr.bf16.mxu0 %v429
        %661 = vmatmul.mubr.bf16.gmra.mrb[0].mxu0 %v428
        %v662 = vpop.f32.mrb[0].mxu0
        %v663 = vadd.f32 0.0, %v662
        %v664 = vpop.f32.mrb[0].mxu0
        %v665 = vpop.f32.mrb[0].mxu0
        %v666 = vadd.f32 0.0, %v665
        %v667 = vpop.f32.mrb[0].mxu0
        %668 = vdwg.mxu0
        %669 = vmatprep.subr.bf16.mxu0 0
        %670 = vmatpush1.bf16.msra.mxu0 %v580
        %671 = vmatprep.subr.bf16.mxu0 0
        %672 = vmatpush1.bf16.msra.mxu0 %v581
        %673 = vmatprep.subr.bf16.mxu0 0
        %674 = vmatpush1.bf16.msra.mxu0 %v582
        %675 = vmatprep.subr.bf16.mxu0 0
        %676 = vmatpush1.bf16.msra.mxu0 %v583
        %677 = vmatprep.subr.bf16.mxu0 0
        %678 = vmatpush1.bf16.msra.mxu0 %v584
        %679 = vmatprep.subr.bf16.mxu0 0
        %680 = vmatpush1.bf16.msra.mxu0 %v585
        %681 = vmatprep.subr.bf16.mxu0 0
        %682 = vmatpush1.bf16.msra.mxu0 %v586
        %683 = vmatprep.subr.bf16.mxu0 0
        %684 = vmatpush1.bf16.msra.mxu0 %v587
        %685 = vmatprep.subr.bf16.mxu0 0
        %686 = vmatpush1.bf16.msra.mxu0 %v588
        %687 = vmatprep.subr.bf16.mxu0 0
        %688 = vmatpush1.bf16.msra.mxu0 %v589
        %689 = vmatprep.subr.bf16.mxu0 0
        %690 = vmatpush1.bf16.msra.mxu0 %v590
        %691 = vmatprep.subr.bf16.mxu0 0
        %692 = vmatpush1.bf16.msra.mxu0 %v591
        %693 = vmatprep.subr.bf16.mxu0 0
        %694 = vmatpush1.bf16.msra.mxu0 %v592
        %695 = vmatprep.subr.bf16.mxu0 0
        %696 = vmatpush1.bf16.msra.mxu0 %v593
        %697 = vmatprep.subr.bf16.mxu0 0
        %698 = vmatpush1.bf16.msra.mxu0 %v594
        %699 = vmatprep.subr.bf16.mxu0 0
        %700 = vmatpush1.bf16.msra.mxu0 %v595
        %701 = vmatprep.mubr.bf16.mxu0 %v431
        %702 = vmatmul.mubr.bf16.gmra.mrb[0].mxu0 %v430
        %v703 = vpop.f32.mrb[0].mxu0
        %v704 = vadd.f32 %v663, %v703
        %v705 = vpop.f32.mrb[0].mxu0
        %v706 = vpop.f32.mrb[0].mxu0
        %v707 = vadd.f32 %v666, %v706
        %v708 = vpop.f32.mrb[0].mxu0
        %709 = vdwg.mxu0
        %v710 = vadd.f32 %v346, %v704
        %v711 = vadd.f32 %v347, %v707
        %712 = vst [vmem:[#allocation2] sm:$0xff] %v710
        %713 = vst [vmem:[#allocation2 + $0x8] sm:$0xff] %v711
        %p714 = scmp.eq.s32.totalorder %s22, 3
        // Predicated region
        $region64: #{forward.52} parent=54 // pred_check
          %p715 = pneg %p714
        $region65: #{forward.52} parent=54 // pred_check_branch
          %717 = sbr.rel (%p715) target = $region67
        $region66: #{forward.52} parent=54 // pred_region
          %v718 = vld [vmem:[#allocation2] sm:$0xff]
          %v719 = vld [vmem:[#allocation2 + $0x8] sm:$0xff]
          %v720 = vld [vmem:[%s320] sm:$0x1]
          %v722 = vlaneseq
          %v723 = vshrl.u32 %v722, 7
          %v724 = vsub.s32 0, %v723
          %v725 = vrot.slane %v720, %v724
          %v727 = vadd.f32 %v718, %v725
          %v728 = vadd.f32 %v719, %v725
          %v729 = vld [vmem:[%s328] sm:$0xff]
          %v730 = vld [vmem:[%s328 + $0x8] sm:$0xff]
          %v731 = vadd.f32 %v727, %v729
          %v732 = vadd.f32 %v728, %v730
          %733 = vst [vmem:[%s337] sm:$0xff] %v731
          %734 = vst [vmem:[%s337 + $0x8] sm:$0xff] %v732
        $region67: #{forward.52} parent=54 // pred_fallthru
          _
        %s735 = smul.u32 2, %s20
        %p736 = scmp.lt.s32.totalorder %s735, 1
        %s737 = scalar_select %p736, %s735, 1
        %p738 = scmp.lt.s32.totalorder %s21, 0
        %s739 = scalar_select %p738, %s21, 0
        %s740 = sadd.s32 %s739, %s737
        %s741 = smul.addr %s740, 8
        %s742 = scalar_lea.vmem %s4, %s741
        // Predicated region
        $region68: #{forward.52} parent=54 // pred_check
          %p743 = pneg %p164
        $region69: #{forward.52} parent=54 // pred_check_branch
          %745 = sbr.rel (%p743) target = $region71
        $region70: #{forward.52} parent=54 // pred_region
          %s746 = smul.u32 2, %s20
        $region71: #{forward.52} parent=54 // pred_fallthru
          _
        // Predicated region
        $region72: #{forward.52} parent=54 // pred_check
          %p747 = pneg %p164
        $region73: #{forward.52} parent=54 // pred_check_branch
          %749 = sbr.rel (%p747) target = $region75
        $region74: #{forward.52} parent=54 // pred_region
          %s750 = smul.u32 2, %s20
          %p751 = scmp.lt.s32.totalorder %s750, 1
          %s752 = scalar_select %p751, %s750, 1
          %p753 = scmp.lt.s32.totalorder %s21, 0
          %s754 = scalar_select %p753, %s21, 0
          %s755 = sadd.s32 %s754, %s752
          %s756 = smul.addr %s755, 8
          %s757 = scalar_lea.vmem %s4, %s756
        $region75: #{forward.52} parent=54 // pred_fallthru
          _
      $region55: #{forward.52} parent=5 // pred_fallthru
        _
      %p758 = scmp.le.s32.totalorder 2, %s10
      // Predicated region
      $region76: #{forward.52} parent=5 // pred_check
        %p759 = pneg %p758
      $region77: #{forward.52} parent=5 // pred_check_branch
        %761 = sbr.rel (%p759) target = $region79
      $region78: #{forward.52} parent=5 // pred_region
        %s762 = ssub.s32 %s10, 2
      $region79: #{forward.52} parent=5 // pred_fallthru
        _
    $region6: #{forward.52} parent=1 // loop_footer
      %s14 = sadd.s32 1, %s10
    $region7: #{forward.52} parent=1 // loop_footer_branch
      %9 = sbr.rel target = $region3
    $region8: #{forward.52} parent=1 // loop_exit
      _

// kernel: forward.53
$region0: #{forward.53}
  #allocation0 [shape = 'u32[]', space=smem, size = 0x4, offset = 0x4, fixed_abs, tag = 'smem constant byte address 0x4 - core index']
  #allocation1 [shape = 'u32[144,128]{1,0:T(1,128)}', space=vmem, size = 0x12000, scoped, tag = 'internal scratch']
  #allocation2 [shape = 'f32[16,128]{1,0:T(8,128)}', space=vmem, size = 0x2000, scoped, tag = 'scratch operand']
  %s0 = inlined_call_operand.vmem [shape: bf16[16,128], index: 0, kind: input, shape index: {}]
  %s1 = inlined_call_operand.vmem [shape: bf16[128,128], index: 1, kind: input, shape index: {}]
  %s2 = inlined_call_operand.vmem [shape: f32[1,128], index: 2, kind: input, shape index: {}]
  %s3 = inlined_call_operand.vmem [shape: f32[16,128], index: 3, kind: output, shape index: {}]
  %s4 = sld [smem:[#allocation0]]
  $region30: #{forward.53} parent=0
    _
  %s6 = ssub.s32 1, %s4
  %s7 = scalar_select 0, %s6, %s4
  // Predicated region
  $region2: #{forward.53} parent=0 // pred_check
    _
  $region3: #{forward.53} parent=0 // pred_check_branch
    %9 = sbr.rel (0) target = $region5
  $region4: #{forward.53} parent=0 // pred_region
    _
  $region5: #{forward.53} parent=0 // pred_fallthru
    _
  // Predicated region
  $region6: #{forward.53} parent=0 // pred_check
    _
  $region7: #{forward.53} parent=0 // pred_check_branch
    %11 = sbr.rel (0) target = $region9
  $region8: #{forward.53} parent=0 // pred_region
    _
  $region9: #{forward.53} parent=0 // pred_fallthru
    _
  // Predicated region
  $region10: #{forward.53} parent=0 // pred_check
    _
  $region11: #{forward.53} parent=0 // pred_check_branch
    %13 = sbr.rel (0) target = $region13
  $region12: #{forward.53} parent=0 // pred_region
    _
  $region13: #{forward.53} parent=0 // pred_fallthru
    _
  %p15 = scmp.eq.s32.totalorder 0, 0
  // Predicated region
  $region14: #{forward.53} parent=0 // pred_check
    %p16 = pneg %p15
  $region15: #{forward.53} parent=0 // pred_check_branch
    %18 = sbr.rel (%p16) target = $region17
  $region16: #{forward.53} parent=0 // pred_region
    %19 = vst [vmem:[#allocation2] sm:$0xff] 0.0
    %20 = vst [vmem:[#allocation2 + $0x8] sm:$0xff] 0.0
  $region17: #{forward.53} parent=0 // pred_fallthru
    _
  %v21 = vld [vmem:[#allocation2] sm:$0xff]
  %v22 = vld [vmem:[#allocation2 + $0x8] sm:$0xff]
  %v23 = vld [vmem:[%s0] sm:$0xf]
  %v24 = vld [vmem:[%s0 + $0x4] sm:$0xf]
  %v25 = vld [vmem:[%s1] sm:$0xf]
  %v26 = vld [vmem:[%s1 + $0x4] sm:$0xf]
  %v27 = vld [vmem:[%s1 + $0x8] sm:$0xf]
  %v28 = vld [vmem:[%s1 + $0xc] sm:$0xf]
  %v29 = vld [vmem:[%s1 + $0x10] sm:$0xf]
  %v30 = vld [vmem:[%s1 + $0x14] sm:$0xf]
  %v31 = vld [vmem:[%s1 + $0x18] sm:$0xf]
  %v32 = vld [vmem:[%s1 + $0x1c] sm:$0xf]
  %v33 = vld [vmem:[%s1 + $0x20] sm:$0xf]
  %v34 = vld [vmem:[%s1 + $0x24] sm:$0xf]
  %v35 = vld [vmem:[%s1 + $0x28] sm:$0xf]
  %v36 = vld [vmem:[%s1 + $0x2c] sm:$0xf]
  %v37 = vld [vmem:[%s1 + $0x30] sm:$0xf]
  %v38 = vld [vmem:[%s1 + $0x34] sm:$0xf]
  %v39 = vld [vmem:[%s1 + $0x38] sm:$0xf]
  %v40 = vld [vmem:[%s1 + $0x3c] sm:$0xf]
  %v43 = vunpack.c.l.b16 %v23
  %v44 = vunpack.c.l.b16 %v24
  %v45 = vpack.c.b16 %v44, %v43
  %v63 = vunpack.c.l.b16 %v25
  %v64 = vunpack.c.l.b16 %v26
  %v65 = vunpack.c.l.b16 %v27
  %v66 = vunpack.c.l.b16 %v28
  %v67 = vunpack.c.l.b16 %v29
  %v68 = vunpack.c.l.b16 %v30
  %v69 = vunpack.c.l.b16 %v31
  %v70 = vunpack.c.l.b16 %v32
  %v71 = vunpack.c.l.b16 %v33
  %v72 = vunpack.c.l.b16 %v34
  %v73 = vunpack.c.l.b16 %v35
  %v74 = vunpack.c.l.b16 %v36
  %v75 = vunpack.c.l.b16 %v37
  %v76 = vunpack.c.l.b16 %v38
  %v77 = vunpack.c.l.b16 %v39
  %v78 = vunpack.c.l.b16 %v40
  %v79 = vpack.c.b16 %v64, %v63
  %v80 = vpack.c.b16 %v66, %v65
  %v81 = vpack.c.b16 %v68, %v67
  %v82 = vpack.c.b16 %v70, %v69
  %v83 = vpack.c.b16 %v72, %v71
  %v84 = vpack.c.b16 %v74, %v73
  %v85 = vpack.c.b16 %v76, %v75
  %v86 = vpack.c.b16 %v78, %v77
  %95 = vmatprep.subr.bf16.mxu0 0
  %96 = vmatpush1.bf16.msra.mxu0 %v79
  %97 = vmatprep.subr.bf16.mxu0 0
  %98 = vmatpush1.bf16.msra.mxu0 %v80
  %99 = vmatprep.subr.bf16.mxu0 0
  %100 = vmatpush1.bf16.msra.mxu0 %v81
  %101 = vmatprep.subr.bf16.mxu0 0
  %102 = vmatpush1.bf16.msra.mxu0 %v82
  %103 = vmatprep.subr.bf16.mxu0 0
  %104 = vmatpush1.bf16.msra.mxu0 %v83
  %105 = vmatprep.subr.bf16.mxu0 0
  %106 = vmatpush1.bf16.msra.mxu0 %v84
  %107 = vmatprep.subr.bf16.mxu0 0
  %108 = vmatpush1.bf16.msra.mxu0 %v85
  %109 = vmatprep.subr.bf16.mxu0 0
  %110 = vmatpush1.bf16.msra.mxu0 %v86
  %111 = vmatprep.subr.bf16.mxu0 0
  %112 = vmatpush1.bf16.msra.mxu0 0
  %113 = vmatprep.subr.bf16.mxu0 0
  %114 = vmatpush1.bf16.msra.mxu0 0
  %115 = vmatprep.subr.bf16.mxu0 0
  %116 = vmatpush1.bf16.msra.mxu0 0
  %117 = vmatprep.subr.bf16.mxu0 0
  %118 = vmatpush1.bf16.msra.mxu0 0
  %119 = vmatprep.subr.bf16.mxu0 0
  %120 = vmatpush1.bf16.msra.mxu0 0
  %121 = vmatprep.subr.bf16.mxu0 0
  %122 = vmatpush1.bf16.msra.mxu0 0
  %123 = vmatprep.subr.bf16.mxu0 0
  %124 = vmatpush1.bf16.msra.mxu0 0
  %125 = vmatprep.subr.bf16.mxu0 0
  %126 = vmatpush1.bf16.msra.mxu0 0
  %127 = vmatprep.mubr.bf16.mxu0 0
  %128 = vmatmul.mubr.bf16.gmra.mrb[0].mxu0 %v45
  %v129 = vpop.f32.mrb[0].mxu0
  %v130 = vadd.f32 0.0, %v129
  %v131 = vpop.f32.mrb[0].mxu0
  %v132 = vpop.f32.mrb[0].mxu0
  %v133 = vadd.f32 0.0, %v132
  %v134 = vpop.f32.mrb[0].mxu0
  %135 = vdwg.mxu0
  %v136 = vadd.f32 %v21, %v130
  %v137 = vadd.f32 %v22, %v133
  %138 = vst [vmem:[#allocation2] sm:$0xff] %v136
  %139 = vst [vmem:[#allocation2 + $0x8] sm:$0xff] %v137
  // Predicated region
  $region18: #{forward.53} parent=0 // pred_check
    %p140 = pneg %p15
  $region19: #{forward.53} parent=0 // pred_check_branch
    %142 = sbr.rel (%p140) target = $region21
  $region20: #{forward.53} parent=0 // pred_region
    %v143 = vld [vmem:[#allocation2] sm:$0xff]
    %v144 = vld [vmem:[#allocation2 + $0x8] sm:$0xff]
    %v145 = vld [vmem:[%s2] sm:$0x1]
    %v147 = vlaneseq
    %v148 = vshrl.u32 %v147, 7
    %v149 = vsub.s32 0, %v148
    %v150 = vrot.slane %v145, %v149
    %v152 = vadd.f32 %v143, %v150
    %v153 = vadd.f32 %v144, %v150
    %154 = vst [vmem:[%s3] sm:$0xff] %v152
    %155 = vst [vmem:[%s3 + $0x8] sm:$0xff] %v153
  $region21: #{forward.53} parent=0 // pred_fallthru
    _
  // Predicated region
  $region22: #{forward.53} parent=0 // pred_check
    _
  $region23: #{forward.53} parent=0 // pred_check_branch
    %157 = sbr.rel (0) target = $region25
  $region24: #{forward.53} parent=0 // pred_region
    _
  $region25: #{forward.53} parent=0 // pred_fallthru
    _
  // Predicated region
  $region26: #{forward.53} parent=0 // pred_check
    _
  $region27: #{forward.53} parent=0 // pred_check_branch
    %159 = sbr.rel (0) target = $region29
  $region28: #{forward.53} parent=0 // pred_region
    _
  $region29: #{forward.53} parent=0 // pred_fallthru
    _

</llo_original>
